<compile_context>
chip_gen: v6e
topology: v6e:2x2x1
jax: 0.10.0
libtpu: 0.0.40
codegen_flags: <defaults>
</compile_context>

<pallas_src>
import functools
import math

import jax
import jax.numpy as jnp
import numpy as np
from jax.experimental import pallas as pl
from jax.experimental.pallas import tpu as pltpu

_CORES = 2  # leading grid axis: spatial split for v7x's 2 TensorCores (serializes harmlessly on 1-TC chips)


def _dice_sums_kernel(logits_ref, tgt_ref, mask_ref, out_ref, acc_ref,
                      *, apply_softmax, dense_labels, num_classes):
    """Accumulates 6 raw per-channel sums (over batch AND space) for norpf_dice_loss.

    acc_ref (C, 8) columns:
      0: A  = sum(p * t * ig)      1: F = sum(p * t * ig * ptm)
      2: B  = sum(p * ig)          3: G = sum(p * ig * ptm)
      4: C4 = sum(t * ig)          5: H = sum(t * ig * ptm)
      6,7: unused padding
    mask_ref rows: 0 = ignore mask, 1 = ignore * positive_target_mask (both from batch elem 0,
    exactly as the torch reference).  Everything else (dense_weight / needs*global_weight
    scaling, bg_mask sum, U = sum((1-t)*ig) = E_sum - C4) is O(C) epilogue work in JAX.
    """
    s_idx = pl.program_id(1)
    n_idx = pl.program_id(2)

    @pl.when(jnp.logical_and(s_idx == 0, n_idx == 0))
    def _():
        acc_ref[...] = jnp.zeros_like(acc_ref)

    x = logits_ref[0].astype(jnp.float32)                        # (C, TS), cast on load
    if apply_softmax:
        m = jnp.max(x, axis=0, keepdims=True)                    # XLU
        e = jnp.exp(x - m)                                       # EUP
        d = jnp.sum(e, axis=0, keepdims=True)                    # XLU
        inv = pl.reciprocal(d, approx=True)                      # EUP
        inv = inv * (2.0 - d * inv)                              # one Newton step -> ~f32 exact
        p = e * inv
    else:
        p = x

    if dense_labels:
        labels = tgt_ref[0].astype(jnp.int32)                    # (1, TS)
        cls = jax.lax.broadcasted_iota(jnp.int32, (num_classes, labels.shape[-1]), 0)
        onehot = cls == labels                                   # one-hot built in-kernel
        t = onehot.astype(jnp.float32)
        pt = jnp.where(onehot, p, 0.0)
    else:
        t = tgt_ref[0].astype(jnp.float32)                       # (C, TS) soft labels
        pt = p * t

    # All spatial reductions go through the (idle) MXU: contract the TS axis of the three
    # (C, TS) planes against the resident (2, TS) mask operand (A @ B^T form).
    masks = mask_ref[...].astype(jnp.float32)                    # (2, TS): [ig, ig*ptm]
    dn = (((1,), (1,)), ((), ()))
    prec = jax.lax.Precision.HIGHEST
    d_pt = jax.lax.dot_general(pt, masks, dn, precision=prec,
                               preferred_element_type=jnp.float32)   # (C, 2) = [A, F]
    d_p = jax.lax.dot_general(p, masks, dn, precision=prec,
                              preferred_element_type=jnp.float32)    # (C, 2) = [B, G]
    d_t = jax.lax.dot_general(t, masks, dn, precision=prec,
                              preferred_element_type=jnp.float32)    # (C, 2) = [C4, H]

    acc_ref[...] += jnp.concatenate(
        [d_pt, d_p, d_t, jnp.zeros((num_classes, 2), jnp.float32)], axis=1)   # (C, 8)

    @pl.when(jnp.logical_and(s_idx == pl.num_programs(1) - 1,
                             n_idx == pl.num_programs(2) - 1))
    def _():
        out_ref[0] = acc_ref[...]


def _pick_spatial_tile(S, C, cores):
    """Pick spatial tile (lanes) and padded spatial extent (multiple of cores*TS)."""
    # 16384 lanes keeps the logits block <= ~256 KiB f32 (small live-temporary set, far below
    # every generation's scoped-VMEM default incl. v5e's 16 MiB) while still amortizing the
    # ~0.35us per-grid-step overhead at small C where per-step HBM bytes are only ~4*C*TS.
    cap = max(128, min(16384, (1 << 20) // (4 * max(C, 1))))
    cap = (cap // 128) * 128
    for cand in (16384, 8192, 4096, 2048, 1024, 512, 256, 128):
        if cand <= cap and S % (cores * cand) == 0:
            return cand, S
    # No clean divisor: pad S up to a multiple of cores*TS (masks are zero on the pad).
    ts = min(cap, ((S + 127) // 128) * 128)
    step = cores * ts
    return ts, ((S + step - 1) // step) * step


def norpf_dice_loss_pallas(output, target, weight=1.0, class_weight=1.0, *,
                           apply_softmax=True):
    f32 = jnp.float32
    N, C = output.shape[0], output.shape[1]
    spatial = tuple(output.shape[2:])
    S = int(math.prod(spatial)) if spatial else 1

    weight = jnp.broadcast_to(jnp.asarray(weight, f32), (C,))
    class_weight = jnp.broadcast_to(jnp.asarray(class_weight, f32), (C,))

    # --- target handling (no one-hot volume materialized for dense labels) ---
    # NOTE: ignore / positive-target masks come from batch element 0 only, exactly as in the
    # torch reference (onehot_target[0][-1] and (weight*onehot)[0][1:-1]).
    if target.shape == output.shape:
        dense_labels = False
        soft = target.reshape(N, C, S)
        t0 = soft[0].astype(f32)                                    # (C, S)
        ignore_s = 1.0 - t0[C - 1]                                  # (S,)
        ptm_s = (weight[1:C - 1, None] * t0[1:C - 1]).sum(axis=0)   # (S,)
        tgt_arr = soft                                              # native dtype
    elif target.shape[0] == N and tuple(target.shape[1:]) == spatial:
        dense_labels = True
        labels = target.reshape(N, S).astype(jnp.int32)
        labels0 = labels[0]
        ignore_s = (labels0 != C - 1).astype(f32)
        interior = (labels0 >= 1) & (labels0 <= C - 2)
        ptm_s = jnp.where(interior, jnp.take(weight, labels0), 0.0).astype(f32)
        # Further HBM cut (unvalidated on this toolchain): store labels as int8 when C <= 128.
        tgt_arr = labels.reshape(N, 1, S)
    else:
        raise ValueError(
            f"Target shape {target.shape} is not compatible with output shape {output.shape}.")

    # Scalar spatial sums (O(S) on 1-D arrays; no need to burn kernel bandwidth).
    E_sum = N * jnp.sum(ignore_s)                 # sum over batch+spatial of ignore
    I_sum = N * jnp.sum(ignore_s * ptm_s)         # sum of ignore * ptm
    J_sum = N * jnp.sum(ptm_s)                    # sum of ptm

    # --- spatial tiling / padding ---
    TS, S_pad = _pick_spatial_tile(S, C, _CORES)
    logits = output.reshape(N, C, S)              # keep native dtype (bf16 stays bf16)
    masks = jnp.stack([ignore_s, ignore_s * ptm_s], axis=0).astype(f32)   # (2, S)
    if S_pad != S:
        pad = S_pad - S
        logits = jnp.pad(logits, ((0, 0), (0, 0), (0, pad)))
        tgt_arr = jnp.pad(tgt_arr, ((0, 0), (0, 0), (0, pad)))
        masks = jnp.pad(masks, ((0, 0), (0, pad)))

    spc = S_pad // TS // _CORES                   # spatial tiles per core
    grid = (_CORES, spc, N)                       # batch innermost -> masks stay resident

    kernel = functools.partial(_dice_sums_kernel, apply_softmax=apply_softmax,
                               dense_labels=dense_labels, num_classes=C)
    spatial_map = lambda c, s, n: (n, 0, c * spc + s)
    if dense_labels:
        tgt_spec = pl.BlockSpec((1, 1, TS), spatial_map)
    else:
        tgt_spec = pl.BlockSpec((1, C, TS), spatial_map)

    partials = pl.pallas_call(
        kernel,
        out_shape=jax.ShapeDtypeStruct((_CORES, C, 8), jnp.float32),
        grid_spec=pltpu.PrefetchScalarGridSpec(
            num_scalar_prefetch=0,
            grid=grid,
            in_specs=[
                pl.BlockSpec((1, C, TS), spatial_map),                      # logits (native dtype)
                tgt_spec,                                                   # labels / soft target
                pl.BlockSpec((2, TS), lambda c, s, n: (0, c * spc + s)),    # masks: resident over n
            ],
            out_specs=pl.BlockSpec((1, C, 8), lambda c, s, n: (c, 0, 0)),   # written once per core
            scratch_shapes=[pltpu.VMEM((C, 8), jnp.float32)],
        ),
        # Leading core axis is parallel (v7x megacore); spatial+batch are the reduction.
        compiler_params=pltpu.CompilerParams(
            dimension_semantics=("parallel", "arbitrary", "arbitrary")),
    )(logits, tgt_arr, masks)

    sums = jnp.sum(partials.astype(f32), axis=0)                 # (C, 8)
    A, F = sums[:, 0], sums[:, 1]
    B, G = sums[:, 2], sums[:, 3]
    C4, H = sums[:, 4], sums[:, 5]
    U = E_sum - C4                                               # sum((1-t)*ig), recovered algebraically

    # --- O(C) epilogue, mirrors the torch reference arithmetic ---
    global_weight = (class_weight > 0).astype(f32)
    weight_eff = weight * global_weight                          # dense_weight per channel
    needs = (weight_eff.sum() == 0).astype(f32)                  # needs_positive_target_mark
    gwn = needs * global_weight

    inter = weight_eff * A
    inter2 = weight_eff * (E_sum - B - C4 + A) + gwn * (I_sum - G - H + F)
    denom = weight_eff * (B + C4)
    denom2 = weight_eff * (2.0 * E_sum - B - C4) + gwn * (2.0 * I_sum - G - H)
    bgm_sum = weight_eff * float(N * S) + gwn * J_sum            # sum(bg_mask), analytic

    numerator = 2.0 * class_weight * inter
    numerator2 = 2.0 * inter2
    denominator = class_weight * denom
    denominator2 = denom2

    no_tp = (numerator == 0).astype(f32)
    numerator = numerator + (1.0 - weight_eff)
    denominator = denominator + (1.0 - weight_eff)

    bg_mask_empty = (bgm_sum == 0).astype(f32)
    numerator2 = numerator2 * (1.0 - bg_mask_empty) + bg_mask_empty
    denominator2 = denominator2 * (1.0 - bg_mask_empty) + bg_mask_empty

    target_empty = (C4 == 0).astype(f32)
    numerator = numerator * (1.0 - target_empty) + target_empty
    denominator = denominator * (1.0 - target_empty) + target_empty

    bg_target_empty = (U == 0).astype(f32)
    numerator2 = numerator2 * (1.0 - bg_target_empty) + bg_target_empty
    denominator2 = denominator2 * (1.0 - bg_target_empty) + bg_target_empty

    # TODO(synk): torch reference drops into print/IPython.embed() on zero denominators or NaN
    # loss; those host-side debug branches are intentionally not translated.
    loss_per_channel = 1.0 + no_tp - (numerator / denominator
                                      + no_tp * numerator2 / denominator2)
    weighted_loss = loss_per_channel[1:-1].sum() / (class_weight[1:-1] > 0).sum().astype(f32)

    # torch: `if weight.sum() == 0: return probs.sum() * 0`
    weighted_loss = jnp.where(weight.sum() == 0, jnp.zeros((), f32), weighted_loss)
    return weighted_loss


class NorpfDiceLossPallas:
    """JAX/Pallas equivalent of the PyTorch NorpfDiceLoss module."""

    def __init__(self, apply_softmax=True, weight=1.0, class_weight=1.0):
        self.apply_softmax = apply_softmax
        self.weight = weight
        self.class_weight = class_weight

    def __call__(self, output, target):
        return norpf_dice_loss_pallas(
            output, target, self.weight, self.class_weight,
            apply_softmax=self.apply_softmax)


def _norpf_dice_loss_reference(output, target, weight, class_weight, apply_softmax=True):
    """Pure-JAX transcription of the torch reference (5-D NCDHW inputs)."""
    f32 = jnp.float32
    out = output.astype(f32)
    probs = jax.nn.softmax(out, axis=1) if apply_softmax else out
    N, C = probs.shape[:2]
    weight = jnp.broadcast_to(jnp.asarray(weight, f32), (C,))
    class_weight = jnp.broadcast_to(jnp.asarray(class_weight, f32), (C,))
    if target.shape == probs.shape:
        onehot = target.astype(f32)
    else:
        onehot = jax.nn.one_hot(target, C, axis=1, dtype=f32)
    ignore = (1.0 - onehot[0, -1])[None, None]
    bg_probs = 1.0 - probs
    bg_target = 1.0 - onehot
    gw = (class_weight > 0).astype(f32)
    wb = weight.reshape(1, C, 1, 1, 1)
    ptm = (wb * onehot)[0][1:-1].sum(axis=0)[None, None]
    weight_e = weight * gw
    dw = weight_e.reshape(1, C, 1, 1, 1)
    cs = lambda x: x.sum(axis=(0, 2, 3, 4))
    target_empty = (cs(onehot * ignore) == 0).astype(f32)
    bg_target_empty = (cs(bg_target * ignore) == 0).astype(f32)
    needs = (dw.sum() == 0).astype(f32)
    bg_mask = jnp.ones_like(bg_probs) * dw + needs * ptm * gw.reshape(1, C, 1, 1, 1)
    numerator = 2.0 * class_weight * cs(probs * onehot * ignore * dw)
    numerator2 = 2.0 * cs(bg_probs * bg_target * ignore * bg_mask)
    denominator = class_weight * cs((probs + onehot) * ignore * dw)
    denominator2 = cs((bg_probs + bg_target) * ignore * bg_mask)
    no_tp = (numerator == 0).astype(f32)
    numerator = numerator + (1.0 - weight_e)
    denominator = denominator + (1.0 - weight_e)
    bg_mask_empty = (bg_mask.sum(axis=(0, 2, 3, 4)) == 0).astype(f32)
    numerator2 = numerator2 * (1.0 - bg_mask_empty) + bg_mask_empty
    denominator2 = denominator2 * (1.0 - bg_mask_empty) + bg_mask_empty
    numerator = numerator * (1.0 - target_empty) + target_empty
    denominator = denominator * (1.0 - target_empty) + target_empty
    numerator2 = numerator2 * (1.0 - bg_target_empty) + bg_target_empty
    denominator2 = denominator2 * (1.0 - bg_target_empty) + bg_target_empty
    loss_pc = 1.0 + no_tp - (numerator / denominator + no_tp * numerator2 / denominator2)
    wl = loss_pc[1:-1].sum() / (class_weight[1:-1] > 0).sum().astype(f32)
    return jnp.where(weight.sum() == 0, jnp.zeros((), f32), wl)


if __name__ == "__main__":
    key = jax.random.PRNGKey(0)
    N, C, D, H, W = 2, 4, 8, 16, 16

    k_out, k_tgt = jax.random.split(key)
    output = jax.random.normal(k_out, (N, C, D, H, W), dtype=jnp.float32)
    target = jax.random.randint(k_tgt, (N, D, H, W), 0, C, dtype=jnp.int32)

    weight = jnp.array([1.0, 1.0, 1.0, 1.0], dtype=jnp.float32)
    class_weight = jnp.array([1.0, 1.0, 1.0, 1.0], dtype=jnp.float32)

    loss_mod = NorpfDiceLossPallas(apply_softmax=True, weight=weight,
                                   class_weight=class_weight)
    loss = loss_mod(output, target)
    jax.block_until_ready(loss)
    ref = _norpf_dice_loss_reference(output, target, weight, class_weight)
    np.testing.assert_allclose(np.asarray(loss), np.asarray(ref), rtol=1e-4, atol=1e-4)

    # exercise the needs_positive_target_mark / positive-target-mask (gwn) branch
    w2 = jnp.array([0.0, 1.0, 0.0, 0.0], dtype=jnp.float32)
    cw2 = jnp.array([1.0, 0.0, 1.0, 1.0], dtype=jnp.float32)
    loss2 = norpf_dice_loss_pallas(output, target, w2, cw2)
    ref2 = _norpf_dice_loss_reference(output, target, w2, cw2)
    np.testing.assert_allclose(np.asarray(loss2), np.asarray(ref2), rtol=1e-4, atol=1e-4)

    # exercise the soft (already one-hot) target path with bf16 logits kept in HBM
    soft_target = jax.nn.one_hot(target, C, axis=1, dtype=jnp.float32)
    out_bf16 = output.astype(jnp.bfloat16)
    loss3 = norpf_dice_loss_pallas(out_bf16, soft_target, weight, class_weight)
    ref3 = _norpf_dice_loss_reference(out_bf16, soft_target, weight, class_weight)
    np.testing.assert_allclose(np.asarray(loss3), np.asarray(ref3), rtol=1e-3, atol=1e-3)

    # exercise the padded-spatial fallback (S not a multiple of 2*128)
    out_odd = jax.random.normal(k_out, (N, C, 3, 5, 7), dtype=jnp.float32)
    tgt_odd = jax.random.randint(k_tgt, (N, 3, 5, 7), 0, C, dtype=jnp.int32)
    loss4 = norpf_dice_loss_pallas(out_odd, tgt_odd, weight, class_weight)
    ref4 = _norpf_dice_loss_reference(out_odd, tgt_odd, weight, class_weight)
    np.testing.assert_allclose(np.asarray(loss4), np.asarray(ref4), rtol=1e-4, atol=1e-4)

    print("KERNEL_OK")
</pallas_src>

<mosaic_0001>
module attributes {stable_mosaic.version = 11 : i64} {
  func.func @_dice_sums_kernel(%arg0: i32, %arg1: i32, %arg2: i32, %arg3: memref<1x4x1024xf32, #tpu.memory_space<vmem>>, %arg4: memref<1x1x1024xi32, #tpu.memory_space<vmem>>, %arg5: memref<2x1024xf32, #tpu.memory_space<vmem>>, %arg6: memref<1x4x8xf32, #tpu.memory_space<vmem>>, %arg7: memref<4x8xf32, #tpu.memory_space<vmem>>) attributes {dimension_semantics = [#tpu.dimension_semantics<parallel>, #tpu.dimension_semantics<arbitrary>, #tpu.dimension_semantics<arbitrary>], iteration_bounds = array<i64: 2, 1, 2>, scalar_prefetch = 0 : i64, scratch_operands = 1 : i64, tpu.core_type = #tpu.core_type<tc>, window_params = [{transform_indices = @transform_0, window_bounds = array<i64: 1, 4, 1024>}, {transform_indices = @transform_1, window_bounds = array<i64: 1, 1, 1024>}, {transform_indices = @transform_2, window_bounds = array<i64: 2, 1024>}, {transform_indices = @transform_3, window_bounds = array<i64: 1, 4, 8>}]} {
    %c0_i32 = arith.constant 0 : i32
    %0 = arith.cmpi eq, %arg1, %c0_i32 : i32
    %c0_i32_0 = arith.constant 0 : i32
    %1 = arith.cmpi eq, %arg2, %c0_i32_0 : i32
    %2 = arith.andi %0, %1 : i1
    %3 = arith.extui %2 : i1 to i32
    %c0_i32_1 = arith.constant 0 : i32
    %4 = arith.cmpi ne, %3, %c0_i32_1 : i32
    scf.if %4 {
      %cst_22 = arith.constant 0.000000e+00 : f32
      %44 = vector.broadcast %cst_22 : f32 to vector<4x8xf32>
      %c0_23 = arith.constant 0 : index
      %c0_24 = arith.constant 0 : index
      %45 = vector.load %arg7[%c0_23, %c0_24] : memref<4x8xf32, #tpu.memory_space<vmem>>, vector<4x8xf32>
      tpu.vector_store %arg7[%c0_23, %c0_24], %44 {strides = array<i32>} : memref<4x8xf32, #tpu.memory_space<vmem>>, vector<4x8xf32>,
    } else {
    }
    %c0 = arith.constant 0 : index
    %c0_2 = arith.constant 0 : index
    %c0_3 = arith.constant 0 : index
    %5 = vector.load %arg3[%c0, %c0_2, %c0_3] : memref<1x4x1024xf32, #tpu.memory_space<vmem>>, vector<1x4x1024xf32>
    %6 = vector.shape_cast %5 : vector<1x4x1024xf32> to vector<4x1024xf32>
    %cst = arith.constant dense<0xFF800000> : vector<1024xf32>
    %7 = vector.multi_reduction <maximumf>, %6, %cst [0] : vector<4x1024xf32> to vector<1024xf32>
    %8 = vector.shape_cast %7 : vector<1024xf32> to vector<1x1024xf32>
    %9 = vector.broadcast %8 : vector<1x1024xf32> to vector<4x1024xf32>
    %10 = arith.subf %6, %9 : vector<4x1024xf32>
    %11 = math.exp %10 : vector<4x1024xf32>
    %cst_4 = arith.constant dense<0.000000e+00> : vector<1024xf32>
    %12 = vector.multi_reduction <add>, %11, %cst_4 [0] : vector<4x1024xf32> to vector<1024xf32>
    %13 = vector.shape_cast %12 : vector<1024xf32> to vector<1x1024xf32>
    %14 = tpu.reciprocal %13 {approx = true} : vector<1x1024xf32> -> vector<1x1024xf32>
    %15 = arith.mulf %13, %14 : vector<1x1024xf32>
    %cst_5 = arith.constant 2.000000e+00 : f32
    %16 = vector.broadcast %cst_5 : f32 to vector<1x1024xf32>
    %17 = arith.subf %16, %15 : vector<1x1024xf32>
    %18 = arith.mulf %14, %17 : vector<1x1024xf32>
    %19 = vector.broadcast %18 : vector<1x1024xf32> to vector<4x1024xf32>
    %20 = arith.mulf %11, %19 : vector<4x1024xf32>
    %c0_6 = arith.constant 0 : index
    %c0_7 = arith.constant 0 : index
    %c0_8 = arith.constant 0 : index
    %21 = vector.load %arg4[%c0_6, %c0_7, %c0_8] : memref<1x1x1024xi32, #tpu.memory_space<vmem>>, vector<1x1x1024xi32>
    %22 = vector.shape_cast %21 : vector<1x1x1024xi32> to vector<1x1024xi32>
    %23 = tpu.iota {dimensions = array<i32: 0>} : vector<4x1024xi32>
    %24 = vector.broadcast %22 : vector<1x1024xi32> to vector<4x1024xi32>
    %25 = arith.cmpi eq, %23, %24 : vector<4x1024xi32>
    %26 = arith.extui %25 : vector<4x1024xi1> to vector<4x1024xi32>
    %27 = arith.sitofp %26 : vector<4x1024xi32> to vector<4x1024xf32>
    %cst_9 = arith.constant 0.000000e+00 : f32
    %28 = vector.broadcast %cst_9 : f32 to vector<4x1024xf32>
    %29 = arith.select %25, %20, %28 : vector<4x1024xi1>, vector<4x1024xf32>
    %c0_10 = arith.constant 0 : index
    %c0_11 = arith.constant 0 : index
    %30 = vector.load %arg5[%c0_10, %c0_11] : memref<2x1024xf32, #tpu.memory_space<vmem>>, vector<2x1024xf32>
    %cst_12 = arith.constant dense<0.000000e+00> : vector<4x2xf32>
    %31 = tpu.matmul %29, %30, %cst_12 {dimension_numbers = #tpu.dot_dimension_numbers<[1], [1], [0], [0], [0, 0, 1, 0], [], []>, precision = #tpu.contract_precision<fp32>} : vector<4x1024xf32>, vector<2x1024xf32>, vector<4x2xf32> -> vector<4x2xf32>
    %cst_13 = arith.constant dense<0.000000e+00> : vector<4x2xf32>
    %32 = tpu.matmul %20, %30, %cst_13 {dimension_numbers = #tpu.dot_dimension_numbers<[1], [1], [0], [0], [0, 0, 1, 0], [], []>, precision = #tpu.contract_precision<fp32>} : vector<4x1024xf32>, vector<2x1024xf32>, vector<4x2xf32> -> vector<4x2xf32>
    %cst_14 = arith.constant dense<0.000000e+00> : vector<4x2xf32>
    %33 = tpu.matmul %27, %30, %cst_14 {dimension_numbers = #tpu.dot_dimension_numbers<[1], [1], [0], [0], [0, 0, 1, 0], [], []>, precision = #tpu.contract_precision<fp32>} : vector<4x1024xf32>, vector<2x1024xf32>, vector<4x2xf32> -> vector<4x2xf32>
    %c0_15 = arith.constant 0 : index
    %c0_16 = arith.constant 0 : index
    %34 = vector.load %arg7[%c0_15, %c0_16] : memref<4x8xf32, #tpu.memory_space<vmem>>, vector<4x8xf32>
    %cst_17 = arith.constant 0.000000e+00 : f32
    %35 = vector.broadcast %cst_17 : f32 to vector<4x2xf32>
    %36 = tpu.concatenate %31, %32, %33, %35 in 1 : vector<4x2xf32>, vector<4x2xf32>, vector<4x2xf32>, vector<4x2xf32> -> vector<4x8xf32>
    %37 = arith.addf %34, %36 : vector<4x8xf32>
    %c0_18 = arith.constant 0 : index
    %c0_19 = arith.constant 0 : index
    %38 = vector.load %arg7[%c0_18, %c0_19] : memref<4x8xf32, #tpu.memory_space<vmem>>, vector<4x8xf32>
    tpu.vector_store %arg7[%c0_18, %c0_19], %37 {strides = array<i32>} : memref<4x8xf32, #tpu.memory_space<vmem>>, vector<4x8xf32>,
    %c0_i32_20 = arith.constant 0 : i32
    %39 = arith.cmpi eq, %arg1, %c0_i32_20 : i32
    %c1_i32 = arith.constant 1 : i32
    %40 = arith.cmpi eq, %arg2, %c1_i32 : i32
    %41 = arith.andi %39, %40 : i1
    %42 = arith.extui %41 : i1 to i32
    %c0_i32_21 = arith.constant 0 : i32
    %43 = arith.cmpi ne, %42, %c0_i32_21 : i32
    scf.if %43 {
      %c0_22 = arith.constant 0 : index
      %c0_23 = arith.constant 0 : index
      %44 = vector.load %arg7[%c0_22, %c0_23] : memref<4x8xf32, #tpu.memory_space<vmem>>, vector<4x8xf32>
      %c0_24 = arith.constant 0 : index
      %c0_25 = arith.constant 0 : index
      %c0_26 = arith.constant 0 : index
      %45 = vector.load %arg6[%c0_24, %c0_25, %c0_26] : memref<1x4x8xf32, #tpu.memory_space<vmem>>, vector<1x4x8xf32>
      %46 = vector.shape_cast %45 : vector<1x4x8xf32> to vector<4x8xf32>
      %47 = vector.shape_cast %44 : vector<4x8xf32> to vector<1x4x8xf32>
      tpu.vector_store %arg6[%c0_24, %c0_25, %c0_26], %47 {strides = array<i32>} : memref<1x4x8xf32, #tpu.memory_space<vmem>>, vector<1x4x8xf32>,
    } else {
    }
    return
  }
  func.func @transform_0(%arg0: i32, %arg1: i32, %arg2: i32) -> (i32, i32, i32) {
    %c1_i32 = arith.constant 1 : i32
    %0 = arith.muli %arg0, %c1_i32 : i32
    %1 = arith.addi %0, %arg1 : i32
    %c0_i32 = arith.constant 0 : i32
    %c0_i32_0 = arith.constant 0 : i32
    return %arg2, %c0_i32, %1 : i32, i32, i32
  }
  func.func @transform_1(%arg0: i32, %arg1: i32, %arg2: i32) -> (i32, i32, i32) {
    %c1_i32 = arith.constant 1 : i32
    %0 = arith.muli %arg0, %c1_i32 : i32
    %1 = arith.addi %0, %arg1 : i32
    %c0_i32 = arith.constant 0 : i32
    %c0_i32_0 = arith.constant 0 : i32
    return %arg2, %c0_i32, %1 : i32, i32, i32
  }
  func.func @transform_2(%arg0: i32, %arg1: i32, %arg2: i32) -> (i32, i32) {
    %c1_i32 = arith.constant 1 : i32
    %0 = arith.muli %arg0, %c1_i32 : i32
    %1 = arith.addi %0, %arg1 : i32
    %c0_i32 = arith.constant 0 : i32
    %c0_i32_0 = arith.constant 0 : i32
    return %c0_i32, %1 : i32, i32
  }
  func.func @transform_3(%arg0: i32, %arg1: i32, %arg2: i32) -> (i32, i32, i32) {
    %c0_i32 = arith.constant 0 : i32
    %c0_i32_0 = arith.constant 0 : i32
    %c0_i32_1 = arith.constant 0 : i32
    return %arg0, %c0_i32, %c0_i32_0 : i32, i32, i32
  }
}

</mosaic_0001>

<llo_original>
// kernel: tpu_custom_call.1
$region0: #{tpu_custom_call.1}
  #allocation0 [shape = 'u32[]', space=smem, size = 0x4, offset = 0x4, fixed_abs, tag = 'smem constant byte address 0x4 - core index']
  #allocation1 [shape = 'u32[144,128]{1,0:T(1,128)}', space=vmem, size = 0x12000, scoped, tag = 'internal scratch']
  #allocation2 [shape = 'f32[4,8]{1,0:T(4,128)}', space=vmem, size = 0x800, scoped, tag = 'scratch operand']
  %s0 = inlined_call_operand.hbm [shape: f32[2,4,2048], index: 0, kind: input, shape index: {}]
  %s1 = inlined_call_operand.hbm [shape: s32[2,1,2048], index: 1, kind: input, shape index: {}]
  %s2 = inlined_call_operand.hbm [shape: f32[2,2048], index: 2, kind: input, shape index: {}]
  %s3 = inlined_call_operand.hbm [shape: f32[2,4,8], index: 3, kind: output, shape index: {}]
  %s4 = sld [smem:[#allocation0]]
  $region65: #{tpu_custom_call.1} parent=0
    _
  %s6 = ssub.s32 1, %s4
  %s7 = scalar_select 0, %s6, %s4
  $region1: #{tpu_custom_call.1} parent=0
    #allocation3 [shape = 'u8[32768]{0}', space=vmem, size = 0x8000, scoped, tag = 'input window, operand 0']
    #allocation4 [shape = 's32[2]{0}', space=sflag, size = 0x8, scoped, tag = 'scoped memory for tpu_custom_call.1']
    #allocation5 [shape = 's32[2]{0}', space=sflag, size = 0x8, scoped, tag = 'scoped memory for tpu_custom_call.1']
    #allocation6 [shape = 'u8[8192]{0}', space=vmem, size = 0x2000, scoped, tag = 'input window, operand 1']
    #allocation7 [shape = 's32[2]{0}', space=sflag, size = 0x8, scoped, tag = 'scoped memory for tpu_custom_call.1']
    #allocation8 [shape = 'u8[16384]{0}', space=vmem, size = 0x4000, scoped, tag = 'input window, operand 2']
    #allocation9 [shape = 'u8[4096]{0}', space=vmem, size = 0x1000, scoped, tag = 'output window, operand 0']
    %8 = vsyncpa [#allocation4], 0
    %s9 = scalar_lea.sflag [#allocation4], 1
    %10 = vsyncpa %s9, 0
    %11 = vsyncpa [#allocation7], 0
    %s12 = scalar_lea.sflag [#allocation7], 1
    %13 = vsyncpa %s12, 0
    %14 = vsyncpa [#allocation5], 0
    %s15 = scalar_lea.sflag [#allocation5], 1
    %16 = vsyncpa %s15, 0
    loop: start=0, step=1, limit=6
    $region2: #{tpu_custom_call.1} parent=1 // loop_pre_header
      _
    $region3: #{tpu_custom_call.1} parent=1 // loop_header
      %s18 = sphi 0, %s22
      %p19 = scmp.ge.s32.totalorder %s18, 6
      %s25 = sphi 0, %s44
      %s26 = sphi 0, %s40
      %s27 = sphi 0, %s36
      %s28 = sphi 0, %s25
      %s29 = sphi 0, %s26
      %s30 = sphi 0, %s27
      %s31 = sphi 0, %s28
      %s32 = sphi 0, %s29
      %s33 = sphi 0, %s30
      %s51 = sphi 0, %s53
      %s54 = sphi 0, %s51
      %s55 = sphi 0, %s54
      %s71 = sphi 0, %s55
      %s81 = sphi 0, %s83
      %s84 = sphi 0, %s81
      %s85 = sphi 0, %s84
      %s101 = sphi 0, %s85
      %s109 = sphi 0, %s111
      %s112 = sphi 0, %s109
      %s113 = sphi 0, %s112
      %s129 = sphi 0, %s113
      %s135 = sphi 0, %s137
      %s138 = sphi 0, %s135
      %s139 = sphi 0, %s138
      %s155 = sphi 0, %s139
    $region4: #{tpu_custom_call.1} parent=1 // loop_header_branch
      %21 = sbr.rel (%p19) target = $region8
    $region5: #{tpu_custom_call.1} parent=1 // loop_body
      %s23 = ssub.s32 %s18, 1
      %s24 = ssub.s32 %s18, 2
      %s34 = sadd.s32 1, %s27
      %p35 = scmp.ge.s32.totalorder %s34, 2
      %s36 = scalar_select %p35, 0, %s34
      %s37 = sadd.s32 1, %s26
      %s38 = scalar_select %p35, %s37, %s26
      %p39 = scmp.ge.s32.totalorder %s38, 1
      %s40 = scalar_select %p39, 0, %s38
      %s41 = sadd.s32 1, %s25
      %s42 = scalar_select %p39, %s41, %s25
      %p43 = scmp.ge.s32.totalorder %s42, 2
      %s44 = scalar_select %p43, 0, %s42
      %s45 = sadd.s32 %s25, %s26
      %s46 = sadd.s32 %s44, %s40
      %s47 = ssub.s32 %s27, %s36
      %s48 = ssub.s32 %s45, %s46
      %s49 = sor.u32 %s47, %s48
      %p50 = scmp.eq.s32.totalorder %s49, 0
      %s52 = sadd.s32 %s51, 1
      %s53 = scalar_select %p50, %s51, %s52
      %p56 = pneg %p50
      %p57 = scmp.eq.s32.totalorder %s18, 3
      %p58 = por %p56, %p57
      %p59 = scmp.ne.s32.totalorder %s51, %s54
      %p60 = scmp.eq.s32.totalorder %s18, 0
      %p61 = por %p59, %p60
      %p62 = scmp.ne.s32.totalorder %s51, %s54
      %p63 = scmp.eq.s32.totalorder %s23, 3
      %p64 = por %p62, %p63
      %p65 = scmp.ne.s32.totalorder %s54, %s55
      %p66 = scmp.eq.s32.totalorder %s23, 0
      %p67 = por %p65, %p66
      %p68 = scmp.ne.s32.totalorder %s54, %s55
      %p69 = scmp.eq.s32.totalorder %s24, 3
      %p70 = por %p68, %p69
      %p72 = scmp.ne.s32.totalorder %s55, %s71
      %p73 = scmp.eq.s32.totalorder %s24, 0
      %p74 = por %p72, %p73
      %s75 = sadd.s32 %s25, %s26
      %s76 = sadd.s32 %s44, %s40
      %s77 = ssub.s32 %s27, %s36
      %s78 = ssub.s32 %s75, %s76
      %s79 = sor.u32 %s77, %s78
      %p80 = scmp.eq.s32.totalorder %s79, 0
      %s82 = sadd.s32 %s81, 1
      %s83 = scalar_select %p80, %s81, %s82
      %p86 = pneg %p80
      %p87 = scmp.eq.s32.totalorder %s18, 3
      %p88 = por %p86, %p87
      %p89 = scmp.ne.s32.totalorder %s81, %s84
      %p90 = scmp.eq.s32.totalorder %s18, 0
      %p91 = por %p89, %p90
      %p92 = scmp.ne.s32.totalorder %s81, %s84
      %p93 = scmp.eq.s32.totalorder %s23, 3
      %p94 = por %p92, %p93
      %p95 = scmp.ne.s32.totalorder %s84, %s85
      %p96 = scmp.eq.s32.totalorder %s23, 0
      %p97 = por %p95, %p96
      %p98 = scmp.ne.s32.totalorder %s84, %s85
      %p99 = scmp.eq.s32.totalorder %s24, 3
      %p100 = por %p98, %p99
      %p102 = scmp.ne.s32.totalorder %s85, %s101
      %p103 = scmp.eq.s32.totalorder %s24, 0
      %p104 = por %p102, %p103
      %s105 = sadd.s32 %s25, %s26
      %s106 = sadd.s32 %s44, %s40
      %s107 = ssub.s32 %s105, %s106
      %p108 = scmp.eq.s32.totalorder %s107, 0
      %s110 = sadd.s32 %s109, 1
      %s111 = scalar_select %p108, %s109, %s110
      %p114 = pneg %p108
      %p115 = scmp.eq.s32.totalorder %s18, 3
      %p116 = por %p114, %p115
      %p117 = scmp.ne.s32.totalorder %s109, %s112
      %p118 = scmp.eq.s32.totalorder %s18, 0
      %p119 = por %p117, %p118
      %p120 = scmp.ne.s32.totalorder %s109, %s112
      %p121 = scmp.eq.s32.totalorder %s23, 3
      %p122 = por %p120, %p121
      %p123 = scmp.ne.s32.totalorder %s112, %s113
      %p124 = scmp.eq.s32.totalorder %s23, 0
      %p125 = por %p123, %p124
      %p126 = scmp.ne.s32.totalorder %s112, %s113
      %p127 = scmp.eq.s32.totalorder %s24, 3
      %p128 = por %p126, %p127
      %p130 = scmp.ne.s32.totalorder %s113, %s129
      %p131 = scmp.eq.s32.totalorder %s24, 0
      %p132 = por %p130, %p131
      %s133 = ssub.s32 %s25, %s44
      %p134 = scmp.eq.s32.totalorder %s133, 0
      %s136 = sadd.s32 %s135, 1
      %s137 = scalar_select %p134, %s135, %s136
      %p140 = pneg %p134
      %p141 = scmp.eq.s32.totalorder %s18, 3
      %p142 = por %p140, %p141
      %p143 = scmp.ne.s32.totalorder %s135, %s138
      %p144 = scmp.eq.s32.totalorder %s18, 0
      %p145 = por %p143, %p144
      %p146 = scmp.ne.s32.totalorder %s135, %s138
      %p147 = scmp.eq.s32.totalorder %s23, 3
      %p148 = por %p146, %p147
      %p149 = scmp.ne.s32.totalorder %s138, %s139
      %p150 = scmp.eq.s32.totalorder %s23, 0
      %p151 = por %p149, %p150
      %p152 = scmp.ne.s32.totalorder %s138, %s139
      %p153 = scmp.eq.s32.totalorder %s24, 3
      %p154 = por %p152, %p153
      %p156 = scmp.ne.s32.totalorder %s139, %s155
      %p157 = scmp.eq.s32.totalorder %s24, 0
      %p158 = por %p156, %p157
      %p159 = scmp.le.s32.totalorder 1, %s18
      %p160 = scmp.lt.s32.totalorder %s18, 5
      %p161 = pnand %p159, %p160
      %p162 = pneg %p161
      // Predicated region
      $region9: #{tpu_custom_call.1} parent=5 // pred_check
        _
      $region10: #{tpu_custom_call.1} parent=5 // pred_check_branch
        %164 = sbr.rel (%p161) target = $region12
      $region11: #{tpu_custom_call.1} parent=5 // pred_region
        %s165 = ssub.s32 %s18, 1
      $region12: #{tpu_custom_call.1} parent=5 // pred_fallthru
        _
      %p166 = scmp.lt.s32.totalorder %s18, 4
      // Predicated region
      $region13: #{tpu_custom_call.1} parent=5 // pred_check
        %p167 = pneg %p166
      $region14: #{tpu_custom_call.1} parent=5 // pred_check_branch
        %169 = sbr.rel (%p167) target = $region16
      $region15: #{tpu_custom_call.1} parent=5 // pred_region
        // Predicated region
        $region17: #{tpu_custom_call.1} parent=15 // pred_check
          %p170 = pneg %p61
        $region18: #{tpu_custom_call.1} parent=15 // pred_check_branch
          %172 = sbr.rel (%p170) target = $region20
        $region19: #{tpu_custom_call.1} parent=15 // pred_region
          %s173 = sand.u32 %s51, 1
          %s174 = scalar_lea.sflag [#allocation4], %s173
          %s175 = sand.u32 %s51, 1
          %s176 = smul.addr %s175, 32
          %s177 = scalar_lea.vmem [#allocation3], %s176
          %s178 = sadd.s32 %s25, %s26
          %s179 = smul.u32 8, %s178
          %s181 = ssub.s32 512, 512
          %182 = vsyncadd %s174, %s181
          %s183 = smul.addr %s27, 16
          %s184 = sadd.s32 %s179, %s183
          %s185 = smul.addr %s184, 64
          %s186 = scalar_lea.hbm %s0, %s185
          %s188 = sshll.u32 %s177, 4
          %s189 = int_to_ptr.vmem [resolvable:$true] %s188
          %191 = dma.hbm_to_vmem [thread:$0]  %s186, 512, %s189, %s174
        $region20: #{tpu_custom_call.1} parent=15 // pred_fallthru
          _
        // Predicated region
        $region21: #{tpu_custom_call.1} parent=15 // pred_check
          %p192 = pneg %p91
        $region22: #{tpu_custom_call.1} parent=15 // pred_check_branch
          %194 = sbr.rel (%p192) target = $region24
        $region23: #{tpu_custom_call.1} parent=15 // pred_region
          %s195 = sand.u32 %s18, 1
          %s196 = scalar_lea.sflag [#allocation7], %s195
          %s197 = sand.u32 %s81, 1
          %s198 = smul.addr %s197, 8
          %s199 = scalar_lea.vmem [#allocation6], %s198
          %s200 = sadd.s32 %s25, %s26
          %s201 = smul.u32 8, %s200
          %s203 = ssub.s32 128, 128
          %204 = vsyncadd %s196, %s203
          %s205 = smul.addr %s27, 16
          %s206 = sadd.s32 %s201, %s205
          %s207 = smul.addr %s206, 16
          %s208 = scalar_lea.hbm %s1, %s207
          %s210 = sshll.u32 %s199, 4
          %s211 = int_to_ptr.vmem [resolvable:$true] %s210
          %213 = dma.hbm_to_vmem [thread:$0]  %s208, 128, %s211, %s196
        $region24: #{tpu_custom_call.1} parent=15 // pred_fallthru
          _
        // Predicated region
        $region25: #{tpu_custom_call.1} parent=15 // pred_check
          %p214 = pneg %p119
        $region26: #{tpu_custom_call.1} parent=15 // pred_check_branch
          %216 = sbr.rel (%p214) target = $region28
        $region27: #{tpu_custom_call.1} parent=15 // pred_region
          %s217 = sand.u32 %s18, 1
          %s218 = scalar_lea.sflag [#allocation7], %s217
          %s219 = sand.u32 %s109, 1
          %s220 = smul.addr %s219, 16
          %s221 = scalar_lea.vmem [#allocation8], %s220
          %s222 = sadd.s32 %s25, %s26
          %s223 = smul.u32 8, %s222
          %s225 = ssub.s32 256, 256
          %226 = vsyncadd %s218, %s225
          %s227 = smul.addr %s223, 32
          %s228 = scalar_lea.hbm %s2, %s227
          %s230 = sshll.u32 %s221, 4
          %s231 = int_to_ptr.vmem [resolvable:$true] %s230
          %233 = dma.hbm_to_vmem [thread:$0]  %s228, 256, %s231, %s218
        $region28: #{tpu_custom_call.1} parent=15 // pred_fallthru
          _
      $region16: #{tpu_custom_call.1} parent=5 // pred_fallthru
        _
      %p234 = scmp.le.s32.totalorder 1, %s18
      %p235 = scmp.lt.s32.totalorder %s18, 5
      %p236 = pnand %p234, %p235
      %p237 = pneg %p236
      // Predicated region
      $region29: #{tpu_custom_call.1} parent=5 // pred_check
        _
      $region30: #{tpu_custom_call.1} parent=5 // pred_check_branch
        %239 = sbr.rel (%p236) target = $region32
      $region31: #{tpu_custom_call.1} parent=5 // pred_region
        %s240 = ssub.s32 %s18, 1
        %s241 = sand.u32 %s54, 1
        %s242 = scalar_lea.sflag [#allocation4], %s241
        %s243 = sand.u32 %s54, 1
        %s244 = smul.addr %s243, 32
        %s245 = scalar_lea.vmem [#allocation3], %s244
        // Predicated region
        $region33: #{tpu_custom_call.1} parent=31 // pred_check
          %p246 = pneg %p67
        $region34: #{tpu_custom_call.1} parent=31 // pred_check_branch
          %248 = sbr.rel (%p246) target = $region36
        $region35: #{tpu_custom_call.1} parent=31 // pred_region
          %249 = dma.done %s242, 512
        $region36: #{tpu_custom_call.1} parent=31 // pred_fallthru
          _
        %s250 = sand.u32 %s23, 1
        %s251 = scalar_lea.sflag [#allocation7], %s250
        %s252 = sand.u32 %s84, 1
        %s253 = smul.addr %s252, 8
        %s254 = scalar_lea.vmem [#allocation6], %s253
        // Predicated region
        $region37: #{tpu_custom_call.1} parent=31 // pred_check
          %p255 = pneg %p97
        $region38: #{tpu_custom_call.1} parent=31 // pred_check_branch
          %257 = sbr.rel (%p255) target = $region40
        $region39: #{tpu_custom_call.1} parent=31 // pred_region
          %258 = dma.done %s251, 128
        $region40: #{tpu_custom_call.1} parent=31 // pred_fallthru
          _
        %s259 = sand.u32 %s23, 1
        %s260 = scalar_lea.sflag [#allocation7], %s259
        %s261 = sand.u32 %s112, 1
        %s262 = smul.addr %s261, 16
        %s263 = scalar_lea.vmem [#allocation8], %s262
        // Predicated region
        $region41: #{tpu_custom_call.1} parent=31 // pred_check
          %p264 = pneg %p125
        $region42: #{tpu_custom_call.1} parent=31 // pred_check_branch
          %266 = sbr.rel (%p264) target = $region44
        $region43: #{tpu_custom_call.1} parent=31 // pred_region
          %267 = dma.done %s260, 256
        $region44: #{tpu_custom_call.1} parent=31 // pred_fallthru
          _
        %s268 = sand.u32 %s54, 1
        %s269 = scalar_lea.sflag [#allocation4], %s268
        %s270 = sand.u32 %s54, 1
        %s271 = smul.addr %s270, 32
        %s272 = scalar_lea.vmem [#allocation3], %s271
        %p273 = pneg %p67
        %p274 = pneg %p64
        %s275 = sand.u32 %s23, 1
        %s276 = scalar_lea.sflag [#allocation7], %s275
        %s277 = sand.u32 %s84, 1
        %s278 = smul.addr %s277, 8
        %s279 = scalar_lea.vmem [#allocation6], %s278
        %p280 = pneg %p97
        %p281 = pneg %p94
        %s282 = sand.u32 %s23, 1
        %s283 = scalar_lea.sflag [#allocation7], %s282
        %s284 = sand.u32 %s112, 1
        %s285 = smul.addr %s284, 16
        %s286 = scalar_lea.vmem [#allocation8], %s285
        %p287 = pneg %p125
        %p288 = pneg %p122
        %p289 = pneg %p151
        %p290 = pneg %p148
        %s291 = sand.u32 %s138, 1
        %s292 = scalar_lea.sflag [#allocation5], %s291
        %s293 = sand.u32 %s138, 1
        %s294 = smul.addr %s293, 4
        %s295 = scalar_lea.vmem [#allocation9], %s294
        %s296 = sadd.s32 %s28, %s29
        %s297 = smul.u32 8, %s296
        %s298 = sadd.s32 %s28, %s29
        %s299 = smul.u32 8, %s298
        %s300 = sadd.s32 %s28, %s29
        %s301 = smul.u32 8, %s300
        %p302 = scmp.eq.s32.totalorder %s29, 0
        %p303 = scmp.eq.s32.totalorder %s30, 0
        %p304 = pnand %p302, %p303
        %p305 = pneg %p304
        // Predicated region
        $region45: #{tpu_custom_call.1} parent=31 // pred_check
          _
        $region46: #{tpu_custom_call.1} parent=31 // pred_check_branch
          %307 = sbr.rel (%p304) target = $region48
        $region47: #{tpu_custom_call.1} parent=31 // pred_region
          %vm308 = vcmask 60416
          %309 = vst.msk [vmem:[#allocation2] sm:$0xf] %vm308, 0.0
        $region48: #{tpu_custom_call.1} parent=31 // pred_fallthru
          _
        %v310 = vld [vmem:[%s245] sm:$0xff]
        %v311 = vld [vmem:[%s245 + $0x8] sm:$0xff]
        %v312 = vld [vmem:[%s245 + $0x10] sm:$0xff]
        %v313 = vld [vmem:[%s245 + $0x18] sm:$0xff]
        %v318 = vcombine.high %v310, %v310
        %v319 = vcombine.high %v311, %v311
        %v320 = vcombine.high %v312, %v312
        %v321 = vcombine.high %v313, %v313
        %vm326 = vcmask 1043456
        %v327 = vsel %vm326, %v310, -inf
        %v328 = vrot.slane %v327, 4
        %v329 = vmax.f32 %v327, %v328
        %v330 = vrot.slane %v329, 2
        %v331 = vmax.f32 %v329, %v330
        %v332 = vrot.slane %v331, 1
        %v333 = vmax.f32 %v331, %v332
        %v334 = vsel %vm326, %v318, -inf
        %v335 = vrot.slane %v334, 4
        %v336 = vmax.f32 %v334, %v335
        %v337 = vrot.slane %v336, 2
        %v338 = vmax.f32 %v336, %v337
        %v339 = vrot.slane %v338, 1
        %v340 = vmax.f32 %v338, %v339
        %v341 = vsel %vm326, %v311, -inf
        %v342 = vrot.slane %v341, 4
        %v343 = vmax.f32 %v341, %v342
        %v344 = vrot.slane %v343, 2
        %v345 = vmax.f32 %v343, %v344
        %v346 = vrot.slane %v345, 1
        %v347 = vmax.f32 %v345, %v346
        %v348 = vsel %vm326, %v319, -inf
        %v349 = vrot.slane %v348, 4
        %v350 = vmax.f32 %v348, %v349
        %v351 = vrot.slane %v350, 2
        %v352 = vmax.f32 %v350, %v351
        %v353 = vrot.slane %v352, 1
        %v354 = vmax.f32 %v352, %v353
        %v355 = vsel %vm326, %v312, -inf
        %v356 = vrot.slane %v355, 4
        %v357 = vmax.f32 %v355, %v356
        %v358 = vrot.slane %v357, 2
        %v359 = vmax.f32 %v357, %v358
        %v360 = vrot.slane %v359, 1
        %v361 = vmax.f32 %v359, %v360
        %v362 = vsel %vm326, %v320, -inf
        %v363 = vrot.slane %v362, 4
        %v364 = vmax.f32 %v362, %v363
        %v365 = vrot.slane %v364, 2
        %v366 = vmax.f32 %v364, %v365
        %v367 = vrot.slane %v366, 1
        %v368 = vmax.f32 %v366, %v367
        %v369 = vsel %vm326, %v313, -inf
        %v370 = vrot.slane %v369, 4
        %v371 = vmax.f32 %v369, %v370
        %v372 = vrot.slane %v371, 2
        %v373 = vmax.f32 %v371, %v372
        %v374 = vrot.slane %v373, 1
        %v375 = vmax.f32 %v373, %v374
        %v376 = vsel %vm326, %v321, -inf
        %v377 = vrot.slane %v376, 4
        %v378 = vmax.f32 %v376, %v377
        %v379 = vrot.slane %v378, 2
        %v380 = vmax.f32 %v378, %v379
        %v381 = vrot.slane %v380, 1
        %v382 = vmax.f32 %v380, %v381
        %v391 = vcombine.low %v333, %v340
        %v392 = vcombine.low %v347, %v354
        %v393 = vcombine.low %v361, %v368
        %v394 = vcombine.low %v375, %v382
        %v399 = vsub.f32 %v310, %v391
        %v400 = vsub.f32 %v311, %v392
        %v401 = vsub.f32 %v312, %v393
        %v402 = vsub.f32 %v313, %v394
        %v403 = vmul.f32 %v399, 1.442695
        %v404 = vpow.pop %v403
        %v405 = vmul.f32 %v400, 1.442695
        %v406 = vpow.pop %v405
        %v407 = vmul.f32 %v401, 1.442695
        %v408 = vpow.pop %v407
        %v409 = vmul.f32 %v402, 1.442695
        %v410 = vpow.pop %v409
        %v415 = vcombine.high %v404, %v404
        %v416 = vcombine.high %v406, %v406
        %v417 = vcombine.high %v408, %v408
        %v418 = vcombine.high %v410, %v410
        %v423 = vsel %vm326, %v404, 0.0
        %v424 = vrot.slane %v423, 4
        %v425 = vadd.f32 %v423, %v424
        %v426 = vrot.slane %v425, 2
        %v427 = vadd.f32 %v425, %v426
        %v428 = vrot.slane %v427, 1
        %v429 = vadd.f32 %v427, %v428
        %v430 = vsel %vm326, %v415, 0.0
        %v431 = vrot.slane %v430, 4
        %v432 = vadd.f32 %v430, %v431
        %v433 = vrot.slane %v432, 2
        %v434 = vadd.f32 %v432, %v433
        %v435 = vrot.slane %v434, 1
        %v436 = vadd.f32 %v434, %v435
        %v437 = vsel %vm326, %v406, 0.0
        %v438 = vrot.slane %v437, 4
        %v439 = vadd.f32 %v437, %v438
        %v440 = vrot.slane %v439, 2
        %v441 = vadd.f32 %v439, %v440
        %v442 = vrot.slane %v441, 1
        %v443 = vadd.f32 %v441, %v442
        %v444 = vsel %vm326, %v416, 0.0
        %v445 = vrot.slane %v444, 4
        %v446 = vadd.f32 %v444, %v445
        %v447 = vrot.slane %v446, 2
        %v448 = vadd.f32 %v446, %v447
        %v449 = vrot.slane %v448, 1
        %v450 = vadd.f32 %v448, %v449
        %v451 = vsel %vm326, %v408, 0.0
        %v452 = vrot.slane %v451, 4
        %v453 = vadd.f32 %v451, %v452
        %v454 = vrot.slane %v453, 2
        %v455 = vadd.f32 %v453, %v454
        %v456 = vrot.slane %v455, 1
        %v457 = vadd.f32 %v455, %v456
        %v458 = vsel %vm326, %v417, 0.0
        %v459 = vrot.slane %v458, 4
        %v460 = vadd.f32 %v458, %v459
        %v461 = vrot.slane %v460, 2
        %v462 = vadd.f32 %v460, %v461
        %v463 = vrot.slane %v462, 1
        %v464 = vadd.f32 %v462, %v463
        %v465 = vsel %vm326, %v410, 0.0
        %v466 = vrot.slane %v465, 4
        %v467 = vadd.f32 %v465, %v466
        %v468 = vrot.slane %v467, 2
        %v469 = vadd.f32 %v467, %v468
        %v470 = vrot.slane %v469, 1
        %v471 = vadd.f32 %v469, %v470
        %v472 = vsel %vm326, %v418, 0.0
        %v473 = vrot.slane %v472, 4
        %v474 = vadd.f32 %v472, %v473
        %v475 = vrot.slane %v474, 2
        %v476 = vadd.f32 %v474, %v475
        %v477 = vrot.slane %v476, 1
        %v478 = vadd.f32 %v476, %v477
        %v479 = vrcp.pop %v429
        %v480 = vrcp.pop %v436
        %v481 = vrcp.pop %v443
        %v482 = vrcp.pop %v450
        %v483 = vrcp.pop %v457
        %v484 = vrcp.pop %v464
        %v485 = vrcp.pop %v471
        %v486 = vrcp.pop %v478
        %v487 = vmul.f32 %v429, %v479
        %v488 = vmul.f32 %v436, %v480
        %v489 = vmul.f32 %v443, %v481
        %v490 = vmul.f32 %v450, %v482
        %v491 = vmul.f32 %v457, %v483
        %v492 = vmul.f32 %v464, %v484
        %v493 = vmul.f32 %v471, %v485
        %v494 = vmul.f32 %v478, %v486
        %v495 = vsub.f32 2.0, %v487
        %v496 = vsub.f32 2.0, %v488
        %v497 = vsub.f32 2.0, %v489
        %v498 = vsub.f32 2.0, %v490
        %v499 = vsub.f32 2.0, %v491
        %v500 = vsub.f32 2.0, %v492
        %v501 = vsub.f32 2.0, %v493
        %v502 = vsub.f32 2.0, %v494
        %v503 = vmul.f32 %v479, %v495
        %v504 = vmul.f32 %v480, %v496
        %v505 = vmul.f32 %v481, %v497
        %v506 = vmul.f32 %v482, %v498
        %v507 = vmul.f32 %v483, %v499
        %v508 = vmul.f32 %v484, %v500
        %v509 = vmul.f32 %v485, %v501
        %v510 = vmul.f32 %v486, %v502
        %v519 = vcombine.low %v503, %v504
        %v520 = vcombine.low %v505, %v506
        %v521 = vcombine.low %v507, %v508
        %v522 = vcombine.low %v509, %v510
        %v527 = vmul.f32 %v404, %v519
        %v528 = vmul.f32 %v406, %v520
        %v529 = vmul.f32 %v408, %v521
        %v530 = vmul.f32 %v410, %v522
        %v531 = vld [vmem:[%s254] sm:$0xff]
        %v532 = vlaneseq
        %v533 = vshrl.u32 %v532, 7
        %v534 = vlaneseq
        %v535 = vshrl.u32 %v534, 7
        %v536 = vsub.s32 0, %v535
        %v537 = vrot.slane %v531, %v536
        %v538 = vlaneseq
        %v539 = vshrl.u32 %v538, 7
        %v540 = vsub.s32 1, %v539
        %v541 = vrot.slane %v531, %v540
        %v542 = vlaneseq
        %v543 = vshrl.u32 %v542, 7
        %v544 = vsub.s32 2, %v543
        %v545 = vrot.slane %v531, %v544
        %v546 = vlaneseq
        %v547 = vshrl.u32 %v546, 7
        %v548 = vsub.s32 3, %v547
        %v549 = vrot.slane %v531, %v548
        %v550 = vlaneseq
        %v551 = vshrl.u32 %v550, 7
        %v552 = vsub.s32 4, %v551
        %v553 = vrot.slane %v531, %v552
        %v554 = vlaneseq
        %v555 = vshrl.u32 %v554, 7
        %v556 = vsub.s32 5, %v555
        %v557 = vrot.slane %v531, %v556
        %v558 = vlaneseq
        %v559 = vshrl.u32 %v558, 7
        %v560 = vsub.s32 6, %v559
        %v561 = vrot.slane %v531, %v560
        %v562 = vlaneseq
        %v563 = vshrl.u32 %v562, 7
        %v564 = vsub.s32 7, %v563
        %v565 = vrot.slane %v531, %v564
        %vm566 = vcmp.eq.s32.totalorder %v533, %v537
        %vm567 = vcmp.eq.s32.totalorder %v533, %v541
        %vm568 = vcmp.eq.s32.totalorder %v533, %v545
        %vm569 = vcmp.eq.s32.totalorder %v533, %v549
        %vm570 = vcmp.eq.s32.totalorder %v533, %v553
        %vm571 = vcmp.eq.s32.totalorder %v533, %v557
        %vm572 = vcmp.eq.s32.totalorder %v533, %v561
        %vm573 = vcmp.eq.s32.totalorder %v533, %v565
        %v574 = vsel %vm566, 1, 0
        %v575 = vsel %vm567, 1, 0
        %v576 = vsel %vm568, 1, 0
        %v577 = vsel %vm569, 1, 0
        %v578 = vsel %vm570, 1, 0
        %v579 = vsel %vm571, 1, 0
        %v580 = vsel %vm572, 1, 0
        %v581 = vsel %vm573, 1, 0
        %v582 = vcvt.s32.f32 %v574
        %v583 = vcvt.s32.f32 %v575
        %v584 = vcvt.s32.f32 %v576
        %v585 = vcvt.s32.f32 %v577
        %v586 = vcvt.s32.f32 %v578
        %v587 = vcvt.s32.f32 %v579
        %v588 = vcvt.s32.f32 %v580
        %v589 = vcvt.s32.f32 %v581
        %v594 = vcombine.high %v527, %v527
        %v595 = vcombine.high %v528, %v528
        %v596 = vcombine.high %v529, %v529
        %v597 = vcombine.high %v530, %v530
        %v602 = vsel %vm566, %v527, 0.0
        %v603 = vsel %vm567, %v594, 0.0
        %v604 = vsel %vm568, %v528, 0.0
        %v605 = vsel %vm569, %v595, 0.0
        %v606 = vsel %vm570, %v529, 0.0
        %v607 = vsel %vm571, %v596, 0.0
        %v608 = vsel %vm572, %v530, 0.0
        %v609 = vsel %vm573, %v597, 0.0
        %v610 = vld [vmem:[%s263] sm:$0xff]
        %v611 = vld [vmem:[%s263 + $0x8] sm:$0xff]
        %v614 = vcombine.high %v610, %v610
        %v616 = vunpack.c.l.s4 1983009808
        %v617 = vunpack.c.0.s8 %v616
        %v618 = vlaneseq
        %v619 = vshrl.u32 %v618, 7
        %v620 = vsub.s32 %v617, %v619
        %v621 = vrot.slane %v610, %v620
        %v623 = vunpack.c.l.s4 1983009808
        %v624 = vunpack.c.0.s8 %v623
        %v625 = vlaneseq
        %v626 = vshrl.u32 %v625, 7
        %v627 = vsub.s32 %v624, %v626
        %v628 = vrot.slane %v614, %v627
        %v629 = vcombine.high %v621, %v621
        %v630 = vcombine.high %v628, %v628
        %v631 = vcombine.high %v611, %v611
        %v633 = vunpack.c.l.s4 1983009808
        %v634 = vunpack.c.0.s8 %v633
        %v635 = vlaneseq
        %v636 = vshrl.u32 %v635, 7
        %v637 = vsub.s32 %v634, %v636
        %v638 = vrot.slane %v611, %v637
        %v640 = vunpack.c.l.s4 1983009808
        %v641 = vunpack.c.0.s8 %v640
        %v642 = vlaneseq
        %v643 = vshrl.u32 %v642, 7
        %v644 = vsub.s32 %v641, %v643
        %v645 = vrot.slane %v631, %v644
        %v646 = vcombine.high %v638, %v638
        %v647 = vcombine.high %v645, %v645
        %656 = vmatprep.subr.mxu0 0.0
        %657 = vmatpush1.xpose.msra.mxu0 0.0
        %658 = vmatprep.subr.mxu0 0.0
        %659 = vmatpush1.xpose.msra.mxu0 0.0
        %660 = vmatprep.subr.mxu0 0.0
        %661 = vmatpush1.xpose.msra.mxu0 0.0
        %662 = vmatprep.subr.mxu0 0.0
        %663 = vmatpush1.xpose.msra.mxu0 0.0
        %664 = vmatprep.subr.mxu0 0.0
        %665 = vmatpush1.xpose.msra.mxu0 0.0
        %666 = vmatprep.subr.mxu0 0.0
        %667 = vmatpush1.xpose.msra.mxu0 0.0
        %668 = vmatprep.subr.mxu0 0.0
        %669 = vmatpush1.xpose.msra.mxu0 0.0
        %670 = vmatprep.subr.mxu0 0.0
        %671 = vmatpush1.xpose.msra.mxu0 0.0
        %672 = vmatprep.subr.mxu0 0.0
        %673 = vmatpush1.xpose.msra.mxu0 0.0
        %674 = vmatprep.subr.mxu0 0.0
        %675 = vmatpush1.xpose.msra.mxu0 0.0
        %676 = vmatprep.subr.mxu0 0.0
        %677 = vmatpush1.xpose.msra.mxu0 0.0
        %678 = vmatprep.subr.mxu0 0.0
        %679 = vmatpush1.xpose.msra.mxu0 0.0
        %680 = vmatprep.subr.mxu0 0.0
        %681 = vmatpush1.xpose.msra.mxu0 0.0
        %682 = vmatprep.subr.mxu0 0.0
        %683 = vmatpush1.xpose.msra.mxu0 0.0
        %684 = vmatprep.subr.mxu0 0.0
        %685 = vmatpush1.xpose.msra.mxu0 0.0
        %v686 = vand.u32 %v629, 4294901760
        %687 = vmatprep.subr.mxu0 %v686
        %v688 = vand.u32 %v621, 4294901760
        %689 = vmatpush1.xpose.msra.mxu0 %v688
        %690 = vmatprep.subr.mxu0 0.0
        %691 = vmatpush2.xpose.msra.mxu0 0.0
        %692 = vmatprep.subr.mxu0 0.0
        %693 = vmatpush2.xpose.msra.mxu0 0.0
        %694 = vmatprep.subr.mxu0 0.0
        %695 = vmatpush2.xpose.msra.mxu0 0.0
        %696 = vmatprep.subr.mxu0 0.0
        %697 = vmatpush2.xpose.msra.mxu0 0.0
        %698 = vmatprep.subr.mxu0 0.0
        %699 = vmatpush2.xpose.msra.mxu0 0.0
        %700 = vmatprep.subr.mxu0 0.0
        %701 = vmatpush2.xpose.msra.mxu0 0.0
        %702 = vmatprep.subr.mxu0 0.0
        %703 = vmatpush2.xpose.msra.mxu0 0.0
        %704 = vmatprep.subr.mxu0 0.0
        %705 = vmatpush2.xpose.msra.mxu0 0.0
        %706 = vmatprep.subr.mxu0 0.0
        %707 = vmatpush2.xpose.msra.mxu0 0.0
        %708 = vmatprep.subr.mxu0 0.0
        %709 = vmatpush2.xpose.msra.mxu0 0.0
        %710 = vmatprep.subr.mxu0 0.0
        %711 = vmatpush2.xpose.msra.mxu0 0.0
        %712 = vmatprep.subr.mxu0 0.0
        %713 = vmatpush2.xpose.msra.mxu0 0.0
        %714 = vmatprep.subr.mxu0 0.0
        %715 = vmatpush2.xpose.msra.mxu0 0.0
        %716 = vmatprep.subr.mxu0 0.0
        %717 = vmatpush2.xpose.msra.mxu0 0.0
        %718 = vmatprep.subr.mxu0 0.0
        %719 = vmatpush2.xpose.msra.mxu0 0.0
        %720 = vmatprep.subr.mxu0 0.0
        %721 = vmatpush2.xpose.msra.mxu0 0.0
        %v722 = vand.u32 %v603, 4294901760
        %v723 = vsub.f32 %v603, %v722
        %v724 = vand.u32 %v723, 4294901760
        %v725 = vsub.f32 %v723, %v724
        %v726 = vand.u32 %v725, 4294901760
        %727 = vmatprep.mubr.f32.mxu0 %v726
        %v728 = vand.u32 %v602, 4294901760
        %v729 = vsub.f32 %v602, %v728
        %v730 = vand.u32 %v729, 4294901760
        %v731 = vsub.f32 %v729, %v730
        %v732 = vand.u32 %v731, 4294901760
        %733 = vmatmul.mubr.f32.gmra.mxu0 %v732
        %v734 = vpop.f32.mrf.mxu0
        %v735 = vadd.f32 0.0, %v734
        %v736 = vpop.f32.mrf.mxu0
        %737 = vdwg.mxu0
        %738 = vmatprep.subr.mxu0 0.0
        %739 = vmatpush1.xpose.msra.mxu0 0.0
        %740 = vmatprep.subr.mxu0 0.0
        %741 = vmatpush1.xpose.msra.mxu0 0.0
        %742 = vmatprep.subr.mxu0 0.0
        %743 = vmatpush1.xpose.msra.mxu0 0.0
        %744 = vmatprep.subr.mxu0 0.0
        %745 = vmatpush1.xpose.msra.mxu0 0.0
        %746 = vmatprep.subr.mxu0 0.0
        %747 = vmatpush1.xpose.msra.mxu0 0.0
        %748 = vmatprep.subr.mxu0 0.0
        %749 = vmatpush1.xpose.msra.mxu0 0.0
        %750 = vmatprep.subr.mxu0 0.0
        %751 = vmatpush1.xpose.msra.mxu0 0.0
        %752 = vmatprep.subr.mxu0 0.0
        %753 = vmatpush1.xpose.msra.mxu0 0.0
        %754 = vmatprep.subr.mxu0 0.0
        %755 = vmatpush1.xpose.msra.mxu0 0.0
        %756 = vmatprep.subr.mxu0 0.0
        %757 = vmatpush1.xpose.msra.mxu0 0.0
        %758 = vmatprep.subr.mxu0 0.0
        %759 = vmatpush1.xpose.msra.mxu0 0.0
        %760 = vmatprep.subr.mxu0 0.0
        %761 = vmatpush1.xpose.msra.mxu0 0.0
        %762 = vmatprep.subr.mxu0 0.0
        %763 = vmatpush1.xpose.msra.mxu0 0.0
        %764 = vmatprep.subr.mxu0 0.0
        %765 = vmatpush1.xpose.msra.mxu0 0.0
        %766 = vmatprep.subr.mxu0 0.0
        %767 = vmatpush1.xpose.msra.mxu0 0.0
        %v768 = vand.u32 %v629, 4294901760
        %v769 = vsub.f32 %v629, %v768
        %v770 = vand.u32 %v769, 4294901760
        %v771 = vsub.f32 %v769, %v770
        %v772 = vand.u32 %v771, 4294901760
        %773 = vmatprep.subr.mxu0 %v772
        %v774 = vand.u32 %v621, 4294901760
        %v775 = vsub.f32 %v621, %v774
        %v776 = vand.u32 %v775, 4294901760
        %v777 = vsub.f32 %v775, %v776
        %v778 = vand.u32 %v777, 4294901760
        %779 = vmatpush1.xpose.msra.mxu0 %v778
        %780 = vmatprep.subr.mxu0 0.0
        %781 = vmatpush2.xpose.msra.mxu0 0.0
        %782 = vmatprep.subr.mxu0 0.0
        %783 = vmatpush2.xpose.msra.mxu0 0.0
        %784 = vmatprep.subr.mxu0 0.0
        %785 = vmatpush2.xpose.msra.mxu0 0.0
        %786 = vmatprep.subr.mxu0 0.0
        %787 = vmatpush2.xpose.msra.mxu0 0.0
        %788 = vmatprep.subr.mxu0 0.0
        %789 = vmatpush2.xpose.msra.mxu0 0.0
        %790 = vmatprep.subr.mxu0 0.0
        %791 = vmatpush2.xpose.msra.mxu0 0.0
        %792 = vmatprep.subr.mxu0 0.0
        %793 = vmatpush2.xpose.msra.mxu0 0.0
        %794 = vmatprep.subr.mxu0 0.0
        %795 = vmatpush2.xpose.msra.mxu0 0.0
        %796 = vmatprep.subr.mxu0 0.0
        %797 = vmatpush2.xpose.msra.mxu0 0.0
        %798 = vmatprep.subr.mxu0 0.0
        %799 = vmatpush2.xpose.msra.mxu0 0.0
        %800 = vmatprep.subr.mxu0 0.0
        %801 = vmatpush2.xpose.msra.mxu0 0.0
        %802 = vmatprep.subr.mxu0 0.0
        %803 = vmatpush2.xpose.msra.mxu0 0.0
        %804 = vmatprep.subr.mxu0 0.0
        %805 = vmatpush2.xpose.msra.mxu0 0.0
        %806 = vmatprep.subr.mxu0 0.0
        %807 = vmatpush2.xpose.msra.mxu0 0.0
        %808 = vmatprep.subr.mxu0 0.0
        %809 = vmatpush2.xpose.msra.mxu0 0.0
        %810 = vmatprep.subr.mxu0 0.0
        %811 = vmatpush2.xpose.msra.mxu0 0.0
        %v812 = vand.u32 %v603, 4294901760
        %813 = vmatprep.mubr.f32.mxu0 %v812
        %v814 = vand.u32 %v602, 4294901760
        %815 = vmatmul.mubr.f32.gmra.mxu0 %v814
        %v816 = vpop.f32.mrf.mxu0
        %v817 = vadd.f32 %v735, %v816
        %v818 = vpop.f32.mrf.mxu0
        %819 = vdwg.mxu0
        %820 = vmatprep.subr.mxu0 0.0
        %821 = vmatpush1.xpose.msra.mxu0 0.0
        %822 = vmatprep.subr.mxu0 0.0
        %823 = vmatpush1.xpose.msra.mxu0 0.0
        %824 = vmatprep.subr.mxu0 0.0
        %825 = vmatpush1.xpose.msra.mxu0 0.0
        %826 = vmatprep.subr.mxu0 0.0
        %827 = vmatpush1.xpose.msra.mxu0 0.0
        %828 = vmatprep.subr.mxu0 0.0
        %829 = vmatpush1.xpose.msra.mxu0 0.0
        %830 = vmatprep.subr.mxu0 0.0
        %831 = vmatpush1.xpose.msra.mxu0 0.0
        %832 = vmatprep.subr.mxu0 0.0
        %833 = vmatpush1.xpose.msra.mxu0 0.0
        %834 = vmatprep.subr.mxu0 0.0
        %835 = vmatpush1.xpose.msra.mxu0 0.0
        %836 = vmatprep.subr.mxu0 0.0
        %837 = vmatpush1.xpose.msra.mxu0 0.0
        %838 = vmatprep.subr.mxu0 0.0
        %839 = vmatpush1.xpose.msra.mxu0 0.0
        %840 = vmatprep.subr.mxu0 0.0
        %841 = vmatpush1.xpose.msra.mxu0 0.0
        %842 = vmatprep.subr.mxu0 0.0
        %843 = vmatpush1.xpose.msra.mxu0 0.0
        %844 = vmatprep.subr.mxu0 0.0
        %845 = vmatpush1.xpose.msra.mxu0 0.0
        %846 = vmatprep.subr.mxu0 0.0
        %847 = vmatpush1.xpose.msra.mxu0 0.0
        %848 = vmatprep.subr.mxu0 0.0
        %849 = vmatpush1.xpose.msra.mxu0 0.0
        %v850 = vand.u32 %v629, 4294901760
        %v851 = vsub.f32 %v629, %v850
        %852 = vmatprep.subr.mxu0 %v851
        %v853 = vand.u32 %v621, 4294901760
        %v854 = vsub.f32 %v621, %v853
        %855 = vmatpush1.xpose.msra.mxu0 %v854
        %856 = vmatprep.subr.mxu0 0.0
        %857 = vmatpush2.xpose.msra.mxu0 0.0
        %858 = vmatprep.subr.mxu0 0.0
        %859 = vmatpush2.xpose.msra.mxu0 0.0
        %860 = vmatprep.subr.mxu0 0.0
        %861 = vmatpush2.xpose.msra.mxu0 0.0
        %862 = vmatprep.subr.mxu0 0.0
        %863 = vmatpush2.xpose.msra.mxu0 0.0
        %864 = vmatprep.subr.mxu0 0.0
        %865 = vmatpush2.xpose.msra.mxu0 0.0
        %866 = vmatprep.subr.mxu0 0.0
        %867 = vmatpush2.xpose.msra.mxu0 0.0
        %868 = vmatprep.subr.mxu0 0.0
        %869 = vmatpush2.xpose.msra.mxu0 0.0
        %870 = vmatprep.subr.mxu0 0.0
        %871 = vmatpush2.xpose.msra.mxu0 0.0
        %872 = vmatprep.subr.mxu0 0.0
        %873 = vmatpush2.xpose.msra.mxu0 0.0
        %874 = vmatprep.subr.mxu0 0.0
        %875 = vmatpush2.xpose.msra.mxu0 0.0
        %876 = vmatprep.subr.mxu0 0.0
        %877 = vmatpush2.xpose.msra.mxu0 0.0
        %878 = vmatprep.subr.mxu0 0.0
        %879 = vmatpush2.xpose.msra.mxu0 0.0
        %880 = vmatprep.subr.mxu0 0.0
        %881 = vmatpush2.xpose.msra.mxu0 0.0
        %882 = vmatprep.subr.mxu0 0.0
        %883 = vmatpush2.xpose.msra.mxu0 0.0
        %884 = vmatprep.subr.mxu0 0.0
        %885 = vmatpush2.xpose.msra.mxu0 0.0
        %886 = vmatprep.subr.mxu0 0.0
        %887 = vmatpush2.xpose.msra.mxu0 0.0
        %v888 = vand.u32 %v603, 4294901760
        %v889 = vsub.f32 %v603, %v888
        %890 = vmatprep.mubr.f32.mxu0 %v889
        %v891 = vand.u32 %v602, 4294901760
        %v892 = vsub.f32 %v602, %v891
        %893 = vmatmul.mubr.f32.gmra.mxu0 %v892
        %v894 = vpop.f32.mrf.mxu0
        %v895 = vadd.f32 %v817, %v894
        %v896 = vpop.f32.mrf.mxu0
        %897 = vdwg.mxu0
        %898 = vmatprep.subr.mxu0 0.0
        %899 = vmatpush1.xpose.msra.mxu0 0.0
        %900 = vmatprep.subr.mxu0 0.0
        %901 = vmatpush1.xpose.msra.mxu0 0.0
        %902 = vmatprep.subr.mxu0 0.0
        %903 = vmatpush1.xpose.msra.mxu0 0.0
        %904 = vmatprep.subr.mxu0 0.0
        %905 = vmatpush1.xpose.msra.mxu0 0.0
        %906 = vmatprep.subr.mxu0 0.0
        %907 = vmatpush1.xpose.msra.mxu0 0.0
        %908 = vmatprep.subr.mxu0 0.0
        %909 = vmatpush1.xpose.msra.mxu0 0.0
        %910 = vmatprep.subr.mxu0 0.0
        %911 = vmatpush1.xpose.msra.mxu0 0.0
        %912 = vmatprep.subr.mxu0 0.0
        %913 = vmatpush1.xpose.msra.mxu0 0.0
        %914 = vmatprep.subr.mxu0 0.0
        %915 = vmatpush1.xpose.msra.mxu0 0.0
        %916 = vmatprep.subr.mxu0 0.0
        %917 = vmatpush1.xpose.msra.mxu0 0.0
        %918 = vmatprep.subr.mxu0 0.0
        %919 = vmatpush1.xpose.msra.mxu0 0.0
        %920 = vmatprep.subr.mxu0 0.0
        %921 = vmatpush1.xpose.msra.mxu0 0.0
        %922 = vmatprep.subr.mxu0 0.0
        %923 = vmatpush1.xpose.msra.mxu0 0.0
        %924 = vmatprep.subr.mxu0 0.0
        %925 = vmatpush1.xpose.msra.mxu0 0.0
        %926 = vmatprep.subr.mxu0 0.0
        %927 = vmatpush1.xpose.msra.mxu0 0.0
        %v928 = vand.u32 %v629, 4294901760
        %929 = vmatprep.subr.mxu0 %v928
        %v930 = vand.u32 %v621, 4294901760
        %931 = vmatpush1.xpose.msra.mxu0 %v930
        %932 = vmatprep.subr.mxu0 0.0
        %933 = vmatpush2.xpose.msra.mxu0 0.0
        %934 = vmatprep.subr.mxu0 0.0
        %935 = vmatpush2.xpose.msra.mxu0 0.0
        %936 = vmatprep.subr.mxu0 0.0
        %937 = vmatpush2.xpose.msra.mxu0 0.0
        %938 = vmatprep.subr.mxu0 0.0
        %939 = vmatpush2.xpose.msra.mxu0 0.0
        %940 = vmatprep.subr.mxu0 0.0
        %941 = vmatpush2.xpose.msra.mxu0 0.0
        %942 = vmatprep.subr.mxu0 0.0
        %943 = vmatpush2.xpose.msra.mxu0 0.0
        %944 = vmatprep.subr.mxu0 0.0
        %945 = vmatpush2.xpose.msra.mxu0 0.0
        %946 = vmatprep.subr.mxu0 0.0
        %947 = vmatpush2.xpose.msra.mxu0 0.0
        %948 = vmatprep.subr.mxu0 0.0
        %949 = vmatpush2.xpose.msra.mxu0 0.0
        %950 = vmatprep.subr.mxu0 0.0
        %951 = vmatpush2.xpose.msra.mxu0 0.0
        %952 = vmatprep.subr.mxu0 0.0
        %953 = vmatpush2.xpose.msra.mxu0 0.0
        %954 = vmatprep.subr.mxu0 0.0
        %955 = vmatpush2.xpose.msra.mxu0 0.0
        %956 = vmatprep.subr.mxu0 0.0
        %957 = vmatpush2.xpose.msra.mxu0 0.0
        %958 = vmatprep.subr.mxu0 0.0
        %959 = vmatpush2.xpose.msra.mxu0 0.0
        %960 = vmatprep.subr.mxu0 0.0
        %961 = vmatpush2.xpose.msra.mxu0 0.0
        %962 = vmatprep.subr.mxu0 0.0
        %963 = vmatpush2.xpose.msra.mxu0 0.0
        %v964 = vand.u32 %v603, 4294901760
        %v965 = vsub.f32 %v603, %v964
        %v966 = vand.u32 %v965, 4294901760
        %967 = vmatprep.mubr.f32.mxu0 %v966
        %v968 = vand.u32 %v602, 4294901760
        %v969 = vsub.f32 %v602, %v968
        %v970 = vand.u32 %v969, 4294901760
        %971 = vmatmul.mubr.f32.gmra.mxu0 %v970
        %v972 = vpop.f32.mrf.mxu0
        %v973 = vadd.f32 %v895, %v972
        %v974 = vpop.f32.mrf.mxu0
        %975 = vdwg.mxu0
        %976 = vmatprep.subr.mxu0 0.0
        %977 = vmatpush1.xpose.msra.mxu0 0.0
        %978 = vmatprep.subr.mxu0 0.0
        %979 = vmatpush1.xpose.msra.mxu0 0.0
        %980 = vmatprep.subr.mxu0 0.0
        %981 = vmatpush1.xpose.msra.mxu0 0.0
        %982 = vmatprep.subr.mxu0 0.0
        %983 = vmatpush1.xpose.msra.mxu0 0.0
        %984 = vmatprep.subr.mxu0 0.0
        %985 = vmatpush1.xpose.msra.mxu0 0.0
        %986 = vmatprep.subr.mxu0 0.0
        %987 = vmatpush1.xpose.msra.mxu0 0.0
        %988 = vmatprep.subr.mxu0 0.0
        %989 = vmatpush1.xpose.msra.mxu0 0.0
        %990 = vmatprep.subr.mxu0 0.0
        %991 = vmatpush1.xpose.msra.mxu0 0.0
        %992 = vmatprep.subr.mxu0 0.0
        %993 = vmatpush1.xpose.msra.mxu0 0.0
        %994 = vmatprep.subr.mxu0 0.0
        %995 = vmatpush1.xpose.msra.mxu0 0.0
        %996 = vmatprep.subr.mxu0 0.0
        %997 = vmatpush1.xpose.msra.mxu0 0.0
        %998 = vmatprep.subr.mxu0 0.0
        %999 = vmatpush1.xpose.msra.mxu0 0.0
        %1000 = vmatprep.subr.mxu0 0.0
        %1001 = vmatpush1.xpose.msra.mxu0 0.0
        %1002 = vmatprep.subr.mxu0 0.0
        %1003 = vmatpush1.xpose.msra.mxu0 0.0
        %1004 = vmatprep.subr.mxu0 0.0
        %1005 = vmatpush1.xpose.msra.mxu0 0.0
        %v1006 = vand.u32 %v629, 4294901760
        %v1007 = vsub.f32 %v629, %v1006
        %v1008 = vand.u32 %v1007, 4294901760
        %1009 = vmatprep.subr.mxu0 %v1008
        %v1010 = vand.u32 %v621, 4294901760
        %v1011 = vsub.f32 %v621, %v1010
        %v1012 = vand.u32 %v1011, 4294901760
        %1013 = vmatpush1.xpose.msra.mxu0 %v1012
        %1014 = vmatprep.subr.mxu0 0.0
        %1015 = vmatpush2.xpose.msra.mxu0 0.0
        %1016 = vmatprep.subr.mxu0 0.0
        %1017 = vmatpush2.xpose.msra.mxu0 0.0
        %1018 = vmatprep.subr.mxu0 0.0
        %1019 = vmatpush2.xpose.msra.mxu0 0.0
        %1020 = vmatprep.subr.mxu0 0.0
        %1021 = vmatpush2.xpose.msra.mxu0 0.0
        %1022 = vmatprep.subr.mxu0 0.0
        %1023 = vmatpush2.xpose.msra.mxu0 0.0
        %1024 = vmatprep.subr.mxu0 0.0
        %1025 = vmatpush2.xpose.msra.mxu0 0.0
        %1026 = vmatprep.subr.mxu0 0.0
        %1027 = vmatpush2.xpose.msra.mxu0 0.0
        %1028 = vmatprep.subr.mxu0 0.0
        %1029 = vmatpush2.xpose.msra.mxu0 0.0
        %1030 = vmatprep.subr.mxu0 0.0
        %1031 = vmatpush2.xpose.msra.mxu0 0.0
        %1032 = vmatprep.subr.mxu0 0.0
        %1033 = vmatpush2.xpose.msra.mxu0 0.0
        %1034 = vmatprep.subr.mxu0 0.0
        %1035 = vmatpush2.xpose.msra.mxu0 0.0
        %1036 = vmatprep.subr.mxu0 0.0
        %1037 = vmatpush2.xpose.msra.mxu0 0.0
        %1038 = vmatprep.subr.mxu0 0.0
        %1039 = vmatpush2.xpose.msra.mxu0 0.0
        %1040 = vmatprep.subr.mxu0 0.0
        %1041 = vmatpush2.xpose.msra.mxu0 0.0
        %1042 = vmatprep.subr.mxu0 0.0
        %1043 = vmatpush2.xpose.msra.mxu0 0.0
        %1044 = vmatprep.subr.mxu0 0.0
        %1045 = vmatpush2.xpose.msra.mxu0 0.0
        %v1046 = vand.u32 %v603, 4294901760
        %1047 = vmatprep.mubr.f32.mxu0 %v1046
        %v1048 = vand.u32 %v602, 4294901760
        %1049 = vmatmul.mubr.f32.gmra.mxu0 %v1048
        %v1050 = vpop.f32.mrf.mxu0
        %v1051 = vadd.f32 %v973, %v1050
        %v1052 = vpop.f32.mrf.mxu0
        %1053 = vdwg.mxu0
        %1054 = vmatprep.subr.mxu0 0.0
        %1055 = vmatpush1.xpose.msra.mxu0 0.0
        %1056 = vmatprep.subr.mxu0 0.0
        %1057 = vmatpush1.xpose.msra.mxu0 0.0
        %1058 = vmatprep.subr.mxu0 0.0
        %1059 = vmatpush1.xpose.msra.mxu0 0.0
        %1060 = vmatprep.subr.mxu0 0.0
        %1061 = vmatpush1.xpose.msra.mxu0 0.0
        %1062 = vmatprep.subr.mxu0 0.0
        %1063 = vmatpush1.xpose.msra.mxu0 0.0
        %1064 = vmatprep.subr.mxu0 0.0
        %1065 = vmatpush1.xpose.msra.mxu0 0.0
        %1066 = vmatprep.subr.mxu0 0.0
        %1067 = vmatpush1.xpose.msra.mxu0 0.0
        %1068 = vmatprep.subr.mxu0 0.0
        %1069 = vmatpush1.xpose.msra.mxu0 0.0
        %1070 = vmatprep.subr.mxu0 0.0
        %1071 = vmatpush1.xpose.msra.mxu0 0.0
        %1072 = vmatprep.subr.mxu0 0.0
        %1073 = vmatpush1.xpose.msra.mxu0 0.0
        %1074 = vmatprep.subr.mxu0 0.0
        %1075 = vmatpush1.xpose.msra.mxu0 0.0
        %1076 = vmatprep.subr.mxu0 0.0
        %1077 = vmatpush1.xpose.msra.mxu0 0.0
        %1078 = vmatprep.subr.mxu0 0.0
        %1079 = vmatpush1.xpose.msra.mxu0 0.0
        %1080 = vmatprep.subr.mxu0 0.0
        %1081 = vmatpush1.xpose.msra.mxu0 0.0
        %1082 = vmatprep.subr.mxu0 0.0
        %1083 = vmatpush1.xpose.msra.mxu0 0.0
        %v1084 = vand.u32 %v629, 4294901760
        %1085 = vmatprep.subr.mxu0 %v1084
        %v1086 = vand.u32 %v621, 4294901760
        %1087 = vmatpush1.xpose.msra.mxu0 %v1086
        %1088 = vmatprep.subr.mxu0 0.0
        %1089 = vmatpush2.xpose.msra.mxu0 0.0
        %1090 = vmatprep.subr.mxu0 0.0
        %1091 = vmatpush2.xpose.msra.mxu0 0.0
        %1092 = vmatprep.subr.mxu0 0.0
        %1093 = vmatpush2.xpose.msra.mxu0 0.0
        %1094 = vmatprep.subr.mxu0 0.0
        %1095 = vmatpush2.xpose.msra.mxu0 0.0
        %1096 = vmatprep.subr.mxu0 0.0
        %1097 = vmatpush2.xpose.msra.mxu0 0.0
        %1098 = vmatprep.subr.mxu0 0.0
        %1099 = vmatpush2.xpose.msra.mxu0 0.0
        %1100 = vmatprep.subr.mxu0 0.0
        %1101 = vmatpush2.xpose.msra.mxu0 0.0
        %1102 = vmatprep.subr.mxu0 0.0
        %1103 = vmatpush2.xpose.msra.mxu0 0.0
        %1104 = vmatprep.subr.mxu0 0.0
        %1105 = vmatpush2.xpose.msra.mxu0 0.0
        %1106 = vmatprep.subr.mxu0 0.0
        %1107 = vmatpush2.xpose.msra.mxu0 0.0
        %1108 = vmatprep.subr.mxu0 0.0
        %1109 = vmatpush2.xpose.msra.mxu0 0.0
        %1110 = vmatprep.subr.mxu0 0.0
        %1111 = vmatpush2.xpose.msra.mxu0 0.0
        %1112 = vmatprep.subr.mxu0 0.0
        %1113 = vmatpush2.xpose.msra.mxu0 0.0
        %1114 = vmatprep.subr.mxu0 0.0
        %1115 = vmatpush2.xpose.msra.mxu0 0.0
        %1116 = vmatprep.subr.mxu0 0.0
        %1117 = vmatpush2.xpose.msra.mxu0 0.0
        %1118 = vmatprep.subr.mxu0 0.0
        %1119 = vmatpush2.xpose.msra.mxu0 0.0
        %v1120 = vand.u32 %v603, 4294901760
        %1121 = vmatprep.mubr.f32.mxu0 %v1120
        %v1122 = vand.u32 %v602, 4294901760
        %1123 = vmatmul.mubr.f32.gmra.mxu0 %v1122
        %v1124 = vpop.f32.mrf.mxu0
        %v1125 = vadd.f32 %v1051, %v1124
        %v1126 = vpop.f32.mrf.mxu0
        %1127 = vdwg.mxu0
        %1128 = vmatprep.subr.mxu0 0.0
        %1129 = vmatpush1.xpose.msra.mxu0 0.0
        %1130 = vmatprep.subr.mxu0 0.0
        %1131 = vmatpush1.xpose.msra.mxu0 0.0
        %1132 = vmatprep.subr.mxu0 0.0
        %1133 = vmatpush1.xpose.msra.mxu0 0.0
        %1134 = vmatprep.subr.mxu0 0.0
        %1135 = vmatpush1.xpose.msra.mxu0 0.0
        %1136 = vmatprep.subr.mxu0 0.0
        %1137 = vmatpush1.xpose.msra.mxu0 0.0
        %1138 = vmatprep.subr.mxu0 0.0
        %1139 = vmatpush1.xpose.msra.mxu0 0.0
        %1140 = vmatprep.subr.mxu0 0.0
        %1141 = vmatpush1.xpose.msra.mxu0 0.0
        %1142 = vmatprep.subr.mxu0 0.0
        %1143 = vmatpush1.xpose.msra.mxu0 0.0
        %1144 = vmatprep.subr.mxu0 0.0
        %1145 = vmatpush1.xpose.msra.mxu0 0.0
        %1146 = vmatprep.subr.mxu0 0.0
        %1147 = vmatpush1.xpose.msra.mxu0 0.0
        %1148 = vmatprep.subr.mxu0 0.0
        %1149 = vmatpush1.xpose.msra.mxu0 0.0
        %1150 = vmatprep.subr.mxu0 0.0
        %1151 = vmatpush1.xpose.msra.mxu0 0.0
        %1152 = vmatprep.subr.mxu0 0.0
        %1153 = vmatpush1.xpose.msra.mxu0 0.0
        %1154 = vmatprep.subr.mxu0 0.0
        %1155 = vmatpush1.xpose.msra.mxu0 0.0
        %1156 = vmatprep.subr.mxu0 0.0
        %1157 = vmatpush1.xpose.msra.mxu0 0.0
        %v1158 = vand.u32 %v630, 4294901760
        %1159 = vmatprep.subr.mxu0 %v1158
        %v1160 = vand.u32 %v628, 4294901760
        %1161 = vmatpush1.xpose.msra.mxu0 %v1160
        %1162 = vmatprep.subr.mxu0 0.0
        %1163 = vmatpush2.xpose.msra.mxu0 0.0
        %1164 = vmatprep.subr.mxu0 0.0
        %1165 = vmatpush2.xpose.msra.mxu0 0.0
        %1166 = vmatprep.subr.mxu0 0.0
        %1167 = vmatpush2.xpose.msra.mxu0 0.0
        %1168 = vmatprep.subr.mxu0 0.0
        %1169 = vmatpush2.xpose.msra.mxu0 0.0
        %1170 = vmatprep.subr.mxu0 0.0
        %1171 = vmatpush2.xpose.msra.mxu0 0.0
        %1172 = vmatprep.subr.mxu0 0.0
        %1173 = vmatpush2.xpose.msra.mxu0 0.0
        %1174 = vmatprep.subr.mxu0 0.0
        %1175 = vmatpush2.xpose.msra.mxu0 0.0
        %1176 = vmatprep.subr.mxu0 0.0
        %1177 = vmatpush2.xpose.msra.mxu0 0.0
        %1178 = vmatprep.subr.mxu0 0.0
        %1179 = vmatpush2.xpose.msra.mxu0 0.0
        %1180 = vmatprep.subr.mxu0 0.0
        %1181 = vmatpush2.xpose.msra.mxu0 0.0
        %1182 = vmatprep.subr.mxu0 0.0
        %1183 = vmatpush2.xpose.msra.mxu0 0.0
        %1184 = vmatprep.subr.mxu0 0.0
        %1185 = vmatpush2.xpose.msra.mxu0 0.0
        %1186 = vmatprep.subr.mxu0 0.0
        %1187 = vmatpush2.xpose.msra.mxu0 0.0
        %1188 = vmatprep.subr.mxu0 0.0
        %1189 = vmatpush2.xpose.msra.mxu0 0.0
        %1190 = vmatprep.subr.mxu0 0.0
        %1191 = vmatpush2.xpose.msra.mxu0 0.0
        %1192 = vmatprep.subr.mxu0 0.0
        %1193 = vmatpush2.xpose.msra.mxu0 0.0
        %v1194 = vand.u32 %v605, 4294901760
        %v1195 = vsub.f32 %v605, %v1194
        %v1196 = vand.u32 %v1195, 4294901760
        %v1197 = vsub.f32 %v1195, %v1196
        %v1198 = vand.u32 %v1197, 4294901760
        %1199 = vmatprep.mubr.f32.mxu0 %v1198
        %v1200 = vand.u32 %v604, 4294901760
        %v1201 = vsub.f32 %v604, %v1200
        %v1202 = vand.u32 %v1201, 4294901760
        %v1203 = vsub.f32 %v1201, %v1202
        %v1204 = vand.u32 %v1203, 4294901760
        %1205 = vmatmul.mubr.f32.gmra.mxu0 %v1204
        %v1206 = vpop.f32.mrf.mxu0
        %v1207 = vadd.f32 %v1125, %v1206
        %v1208 = vpop.f32.mrf.mxu0
        %1209 = vdwg.mxu0
        %1210 = vmatprep.subr.mxu0 0.0
        %1211 = vmatpush1.xpose.msra.mxu0 0.0
        %1212 = vmatprep.subr.mxu0 0.0
        %1213 = vmatpush1.xpose.msra.mxu0 0.0
        %1214 = vmatprep.subr.mxu0 0.0
        %1215 = vmatpush1.xpose.msra.mxu0 0.0
        %1216 = vmatprep.subr.mxu0 0.0
        %1217 = vmatpush1.xpose.msra.mxu0 0.0
        %1218 = vmatprep.subr.mxu0 0.0
        %1219 = vmatpush1.xpose.msra.mxu0 0.0
        %1220 = vmatprep.subr.mxu0 0.0
        %1221 = vmatpush1.xpose.msra.mxu0 0.0
        %1222 = vmatprep.subr.mxu0 0.0
        %1223 = vmatpush1.xpose.msra.mxu0 0.0
        %1224 = vmatprep.subr.mxu0 0.0
        %1225 = vmatpush1.xpose.msra.mxu0 0.0
        %1226 = vmatprep.subr.mxu0 0.0
        %1227 = vmatpush1.xpose.msra.mxu0 0.0
        %1228 = vmatprep.subr.mxu0 0.0
        %1229 = vmatpush1.xpose.msra.mxu0 0.0
        %1230 = vmatprep.subr.mxu0 0.0
        %1231 = vmatpush1.xpose.msra.mxu0 0.0
        %1232 = vmatprep.subr.mxu0 0.0
        %1233 = vmatpush1.xpose.msra.mxu0 0.0
        %1234 = vmatprep.subr.mxu0 0.0
        %1235 = vmatpush1.xpose.msra.mxu0 0.0
        %1236 = vmatprep.subr.mxu0 0.0
        %1237 = vmatpush1.xpose.msra.mxu0 0.0
        %1238 = vmatprep.subr.mxu0 0.0
        %1239 = vmatpush1.xpose.msra.mxu0 0.0
        %v1240 = vand.u32 %v630, 4294901760
        %v1241 = vsub.f32 %v630, %v1240
        %v1242 = vand.u32 %v1241, 4294901760
        %v1243 = vsub.f32 %v1241, %v1242
        %v1244 = vand.u32 %v1243, 4294901760
        %1245 = vmatprep.subr.mxu0 %v1244
        %v1246 = vand.u32 %v628, 4294901760
        %v1247 = vsub.f32 %v628, %v1246
        %v1248 = vand.u32 %v1247, 4294901760
        %v1249 = vsub.f32 %v1247, %v1248
        %v1250 = vand.u32 %v1249, 4294901760
        %1251 = vmatpush1.xpose.msra.mxu0 %v1250
        %1252 = vmatprep.subr.mxu0 0.0
        %1253 = vmatpush2.xpose.msra.mxu0 0.0
        %1254 = vmatprep.subr.mxu0 0.0
        %1255 = vmatpush2.xpose.msra.mxu0 0.0
        %1256 = vmatprep.subr.mxu0 0.0
        %1257 = vmatpush2.xpose.msra.mxu0 0.0
        %1258 = vmatprep.subr.mxu0 0.0
        %1259 = vmatpush2.xpose.msra.mxu0 0.0
        %1260 = vmatprep.subr.mxu0 0.0
        %1261 = vmatpush2.xpose.msra.mxu0 0.0
        %1262 = vmatprep.subr.mxu0 0.0
        %1263 = vmatpush2.xpose.msra.mxu0 0.0
        %1264 = vmatprep.subr.mxu0 0.0
        %1265 = vmatpush2.xpose.msra.mxu0 0.0
        %1266 = vmatprep.subr.mxu0 0.0
        %1267 = vmatpush2.xpose.msra.mxu0 0.0
        %1268 = vmatprep.subr.mxu0 0.0
        %1269 = vmatpush2.xpose.msra.mxu0 0.0
        %1270 = vmatprep.subr.mxu0 0.0
        %1271 = vmatpush2.xpose.msra.mxu0 0.0
        %1272 = vmatprep.subr.mxu0 0.0
        %1273 = vmatpush2.xpose.msra.mxu0 0.0
        %1274 = vmatprep.subr.mxu0 0.0
        %1275 = vmatpush2.xpose.msra.mxu0 0.0
        %1276 = vmatprep.subr.mxu0 0.0
        %1277 = vmatpush2.xpose.msra.mxu0 0.0
        %1278 = vmatprep.subr.mxu0 0.0
        %1279 = vmatpush2.xpose.msra.mxu0 0.0
        %1280 = vmatprep.subr.mxu0 0.0
        %1281 = vmatpush2.xpose.msra.mxu0 0.0
        %1282 = vmatprep.subr.mxu0 0.0
        %1283 = vmatpush2.xpose.msra.mxu0 0.0
        %v1284 = vand.u32 %v605, 4294901760
        %1285 = vmatprep.mubr.f32.mxu0 %v1284
        %v1286 = vand.u32 %v604, 4294901760
        %1287 = vmatmul.mubr.f32.gmra.mxu0 %v1286
        %v1288 = vpop.f32.mrf.mxu0
        %v1289 = vadd.f32 %v1207, %v1288
        %v1290 = vpop.f32.mrf.mxu0
        %1291 = vdwg.mxu0
        %1292 = vmatprep.subr.mxu0 0.0
        %1293 = vmatpush1.xpose.msra.mxu0 0.0
        %1294 = vmatprep.subr.mxu0 0.0
        %1295 = vmatpush1.xpose.msra.mxu0 0.0
        %1296 = vmatprep.subr.mxu0 0.0
        %1297 = vmatpush1.xpose.msra.mxu0 0.0
        %1298 = vmatprep.subr.mxu0 0.0
        %1299 = vmatpush1.xpose.msra.mxu0 0.0
        %1300 = vmatprep.subr.mxu0 0.0
        %1301 = vmatpush1.xpose.msra.mxu0 0.0
        %1302 = vmatprep.subr.mxu0 0.0
        %1303 = vmatpush1.xpose.msra.mxu0 0.0
        %1304 = vmatprep.subr.mxu0 0.0
        %1305 = vmatpush1.xpose.msra.mxu0 0.0
        %1306 = vmatprep.subr.mxu0 0.0
        %1307 = vmatpush1.xpose.msra.mxu0 0.0
        %1308 = vmatprep.subr.mxu0 0.0
        %1309 = vmatpush1.xpose.msra.mxu0 0.0
        %1310 = vmatprep.subr.mxu0 0.0
        %1311 = vmatpush1.xpose.msra.mxu0 0.0
        %1312 = vmatprep.subr.mxu0 0.0
        %1313 = vmatpush1.xpose.msra.mxu0 0.0
        %1314 = vmatprep.subr.mxu0 0.0
        %1315 = vmatpush1.xpose.msra.mxu0 0.0
        %1316 = vmatprep.subr.mxu0 0.0
        %1317 = vmatpush1.xpose.msra.mxu0 0.0
        %1318 = vmatprep.subr.mxu0 0.0
        %1319 = vmatpush1.xpose.msra.mxu0 0.0
        %1320 = vmatprep.subr.mxu0 0.0
        %1321 = vmatpush1.xpose.msra.mxu0 0.0
        %v1322 = vand.u32 %v630, 4294901760
        %v1323 = vsub.f32 %v630, %v1322
        %1324 = vmatprep.subr.mxu0 %v1323
        %v1325 = vand.u32 %v628, 4294901760
        %v1326 = vsub.f32 %v628, %v1325
        %1327 = vmatpush1.xpose.msra.mxu0 %v1326
        %1328 = vmatprep.subr.mxu0 0.0
        %1329 = vmatpush2.xpose.msra.mxu0 0.0
        %1330 = vmatprep.subr.mxu0 0.0
        %1331 = vmatpush2.xpose.msra.mxu0 0.0
        %1332 = vmatprep.subr.mxu0 0.0
        %1333 = vmatpush2.xpose.msra.mxu0 0.0
        %1334 = vmatprep.subr.mxu0 0.0
        %1335 = vmatpush2.xpose.msra.mxu0 0.0
        %1336 = vmatprep.subr.mxu0 0.0
        %1337 = vmatpush2.xpose.msra.mxu0 0.0
        %1338 = vmatprep.subr.mxu0 0.0
        %1339 = vmatpush2.xpose.msra.mxu0 0.0
        %1340 = vmatprep.subr.mxu0 0.0
        %1341 = vmatpush2.xpose.msra.mxu0 0.0
        %1342 = vmatprep.subr.mxu0 0.0
        %1343 = vmatpush2.xpose.msra.mxu0 0.0
        %1344 = vmatprep.subr.mxu0 0.0
        %1345 = vmatpush2.xpose.msra.mxu0 0.0
        %1346 = vmatprep.subr.mxu0 0.0
        %1347 = vmatpush2.xpose.msra.mxu0 0.0
        %1348 = vmatprep.subr.mxu0 0.0
        %1349 = vmatpush2.xpose.msra.mxu0 0.0
        %1350 = vmatprep.subr.mxu0 0.0
        %1351 = vmatpush2.xpose.msra.mxu0 0.0
        %1352 = vmatprep.subr.mxu0 0.0
        %1353 = vmatpush2.xpose.msra.mxu0 0.0
        %1354 = vmatprep.subr.mxu0 0.0
        %1355 = vmatpush2.xpose.msra.mxu0 0.0
        %1356 = vmatprep.subr.mxu0 0.0
        %1357 = vmatpush2.xpose.msra.mxu0 0.0
        %1358 = vmatprep.subr.mxu0 0.0
        %1359 = vmatpush2.xpose.msra.mxu0 0.0
        %v1360 = vand.u32 %v605, 4294901760
        %v1361 = vsub.f32 %v605, %v1360
        %1362 = vmatprep.mubr.f32.mxu0 %v1361
        %v1363 = vand.u32 %v604, 4294901760
        %v1364 = vsub.f32 %v604, %v1363
        %1365 = vmatmul.mubr.f32.gmra.mxu0 %v1364
        %v1366 = vpop.f32.mrf.mxu0
        %v1367 = vadd.f32 %v1289, %v1366
        %v1368 = vpop.f32.mrf.mxu0
        %1369 = vdwg.mxu0
        %1370 = vmatprep.subr.mxu0 0.0
        %1371 = vmatpush1.xpose.msra.mxu0 0.0
        %1372 = vmatprep.subr.mxu0 0.0
        %1373 = vmatpush1.xpose.msra.mxu0 0.0
        %1374 = vmatprep.subr.mxu0 0.0
        %1375 = vmatpush1.xpose.msra.mxu0 0.0
        %1376 = vmatprep.subr.mxu0 0.0
        %1377 = vmatpush1.xpose.msra.mxu0 0.0
        %1378 = vmatprep.subr.mxu0 0.0
        %1379 = vmatpush1.xpose.msra.mxu0 0.0
        %1380 = vmatprep.subr.mxu0 0.0
        %1381 = vmatpush1.xpose.msra.mxu0 0.0
        %1382 = vmatprep.subr.mxu0 0.0
        %1383 = vmatpush1.xpose.msra.mxu0 0.0
        %1384 = vmatprep.subr.mxu0 0.0
        %1385 = vmatpush1.xpose.msra.mxu0 0.0
        %1386 = vmatprep.subr.mxu0 0.0
        %1387 = vmatpush1.xpose.msra.mxu0 0.0
        %1388 = vmatprep.subr.mxu0 0.0
        %1389 = vmatpush1.xpose.msra.mxu0 0.0
        %1390 = vmatprep.subr.mxu0 0.0
        %1391 = vmatpush1.xpose.msra.mxu0 0.0
        %1392 = vmatprep.subr.mxu0 0.0
        %1393 = vmatpush1.xpose.msra.mxu0 0.0
        %1394 = vmatprep.subr.mxu0 0.0
        %1395 = vmatpush1.xpose.msra.mxu0 0.0
        %1396 = vmatprep.subr.mxu0 0.0
        %1397 = vmatpush1.xpose.msra.mxu0 0.0
        %1398 = vmatprep.subr.mxu0 0.0
        %1399 = vmatpush1.xpose.msra.mxu0 0.0
        %v1400 = vand.u32 %v630, 4294901760
        %1401 = vmatprep.subr.mxu0 %v1400
        %v1402 = vand.u32 %v628, 4294901760
        %1403 = vmatpush1.xpose.msra.mxu0 %v1402
        %1404 = vmatprep.subr.mxu0 0.0
        %1405 = vmatpush2.xpose.msra.mxu0 0.0
        %1406 = vmatprep.subr.mxu0 0.0
        %1407 = vmatpush2.xpose.msra.mxu0 0.0
        %1408 = vmatprep.subr.mxu0 0.0
        %1409 = vmatpush2.xpose.msra.mxu0 0.0
        %1410 = vmatprep.subr.mxu0 0.0
        %1411 = vmatpush2.xpose.msra.mxu0 0.0
        %1412 = vmatprep.subr.mxu0 0.0
        %1413 = vmatpush2.xpose.msra.mxu0 0.0
        %1414 = vmatprep.subr.mxu0 0.0
        %1415 = vmatpush2.xpose.msra.mxu0 0.0
        %1416 = vmatprep.subr.mxu0 0.0
        %1417 = vmatpush2.xpose.msra.mxu0 0.0
        %1418 = vmatprep.subr.mxu0 0.0
        %1419 = vmatpush2.xpose.msra.mxu0 0.0
        %1420 = vmatprep.subr.mxu0 0.0
        %1421 = vmatpush2.xpose.msra.mxu0 0.0
        %1422 = vmatprep.subr.mxu0 0.0
        %1423 = vmatpush2.xpose.msra.mxu0 0.0
        %1424 = vmatprep.subr.mxu0 0.0
        %1425 = vmatpush2.xpose.msra.mxu0 0.0
        %1426 = vmatprep.subr.mxu0 0.0
        %1427 = vmatpush2.xpose.msra.mxu0 0.0
        %1428 = vmatprep.subr.mxu0 0.0
        %1429 = vmatpush2.xpose.msra.mxu0 0.0
        %1430 = vmatprep.subr.mxu0 0.0
        %1431 = vmatpush2.xpose.msra.mxu0 0.0
        %1432 = vmatprep.subr.mxu0 0.0
        %1433 = vmatpush2.xpose.msra.mxu0 0.0
        %1434 = vmatprep.subr.mxu0 0.0
        %1435 = vmatpush2.xpose.msra.mxu0 0.0
        %v1436 = vand.u32 %v605, 4294901760
        %v1437 = vsub.f32 %v605, %v1436
        %v1438 = vand.u32 %v1437, 4294901760
        %1439 = vmatprep.mubr.f32.mxu0 %v1438
        %v1440 = vand.u32 %v604, 4294901760
        %v1441 = vsub.f32 %v604, %v1440
        %v1442 = vand.u32 %v1441, 4294901760
        %1443 = vmatmul.mubr.f32.gmra.mxu0 %v1442
        %v1444 = vpop.f32.mrf.mxu0
        %v1445 = vadd.f32 %v1367, %v1444
        %v1446 = vpop.f32.mrf.mxu0
        %1447 = vdwg.mxu0
        %1448 = vmatprep.subr.mxu0 0.0
        %1449 = vmatpush1.xpose.msra.mxu0 0.0
        %1450 = vmatprep.subr.mxu0 0.0
        %1451 = vmatpush1.xpose.msra.mxu0 0.0
        %1452 = vmatprep.subr.mxu0 0.0
        %1453 = vmatpush1.xpose.msra.mxu0 0.0
        %1454 = vmatprep.subr.mxu0 0.0
        %1455 = vmatpush1.xpose.msra.mxu0 0.0
        %1456 = vmatprep.subr.mxu0 0.0
        %1457 = vmatpush1.xpose.msra.mxu0 0.0
        %1458 = vmatprep.subr.mxu0 0.0
        %1459 = vmatpush1.xpose.msra.mxu0 0.0
        %1460 = vmatprep.subr.mxu0 0.0
        %1461 = vmatpush1.xpose.msra.mxu0 0.0
        %1462 = vmatprep.subr.mxu0 0.0
        %1463 = vmatpush1.xpose.msra.mxu0 0.0
        %1464 = vmatprep.subr.mxu0 0.0
        %1465 = vmatpush1.xpose.msra.mxu0 0.0
        %1466 = vmatprep.subr.mxu0 0.0
        %1467 = vmatpush1.xpose.msra.mxu0 0.0
        %1468 = vmatprep.subr.mxu0 0.0
        %1469 = vmatpush1.xpose.msra.mxu0 0.0
        %1470 = vmatprep.subr.mxu0 0.0
        %1471 = vmatpush1.xpose.msra.mxu0 0.0
        %1472 = vmatprep.subr.mxu0 0.0
        %1473 = vmatpush1.xpose.msra.mxu0 0.0
        %1474 = vmatprep.subr.mxu0 0.0
        %1475 = vmatpush1.xpose.msra.mxu0 0.0
        %1476 = vmatprep.subr.mxu0 0.0
        %1477 = vmatpush1.xpose.msra.mxu0 0.0
        %v1478 = vand.u32 %v630, 4294901760
        %v1479 = vsub.f32 %v630, %v1478
        %v1480 = vand.u32 %v1479, 4294901760
        %1481 = vmatprep.subr.mxu0 %v1480
        %v1482 = vand.u32 %v628, 4294901760
        %v1483 = vsub.f32 %v628, %v1482
        %v1484 = vand.u32 %v1483, 4294901760
        %1485 = vmatpush1.xpose.msra.mxu0 %v1484
        %1486 = vmatprep.subr.mxu0 0.0
        %1487 = vmatpush2.xpose.msra.mxu0 0.0
        %1488 = vmatprep.subr.mxu0 0.0
        %1489 = vmatpush2.xpose.msra.mxu0 0.0
        %1490 = vmatprep.subr.mxu0 0.0
        %1491 = vmatpush2.xpose.msra.mxu0 0.0
        %1492 = vmatprep.subr.mxu0 0.0
        %1493 = vmatpush2.xpose.msra.mxu0 0.0
        %1494 = vmatprep.subr.mxu0 0.0
        %1495 = vmatpush2.xpose.msra.mxu0 0.0
        %1496 = vmatprep.subr.mxu0 0.0
        %1497 = vmatpush2.xpose.msra.mxu0 0.0
        %1498 = vmatprep.subr.mxu0 0.0
        %1499 = vmatpush2.xpose.msra.mxu0 0.0
        %1500 = vmatprep.subr.mxu0 0.0
        %1501 = vmatpush2.xpose.msra.mxu0 0.0
        %1502 = vmatprep.subr.mxu0 0.0
        %1503 = vmatpush2.xpose.msra.mxu0 0.0
        %1504 = vmatprep.subr.mxu0 0.0
        %1505 = vmatpush2.xpose.msra.mxu0 0.0
        %1506 = vmatprep.subr.mxu0 0.0
        %1507 = vmatpush2.xpose.msra.mxu0 0.0
        %1508 = vmatprep.subr.mxu0 0.0
        %1509 = vmatpush2.xpose.msra.mxu0 0.0
        %1510 = vmatprep.subr.mxu0 0.0
        %1511 = vmatpush2.xpose.msra.mxu0 0.0
        %1512 = vmatprep.subr.mxu0 0.0
        %1513 = vmatpush2.xpose.msra.mxu0 0.0
        %1514 = vmatprep.subr.mxu0 0.0
        %1515 = vmatpush2.xpose.msra.mxu0 0.0
        %1516 = vmatprep.subr.mxu0 0.0
        %1517 = vmatpush2.xpose.msra.mxu0 0.0
        %v1518 = vand.u32 %v605, 4294901760
        %1519 = vmatprep.mubr.f32.mxu0 %v1518
        %v1520 = vand.u32 %v604, 4294901760
        %1521 = vmatmul.mubr.f32.gmra.mxu0 %v1520
        %v1522 = vpop.f32.mrf.mxu0
        %v1523 = vadd.f32 %v1445, %v1522
        %v1524 = vpop.f32.mrf.mxu0
        %1525 = vdwg.mxu0
        %1526 = vmatprep.subr.mxu0 0.0
        %1527 = vmatpush1.xpose.msra.mxu0 0.0
        %1528 = vmatprep.subr.mxu0 0.0
        %1529 = vmatpush1.xpose.msra.mxu0 0.0
        %1530 = vmatprep.subr.mxu0 0.0
        %1531 = vmatpush1.xpose.msra.mxu0 0.0
        %1532 = vmatprep.subr.mxu0 0.0
        %1533 = vmatpush1.xpose.msra.mxu0 0.0
        %1534 = vmatprep.subr.mxu0 0.0
        %1535 = vmatpush1.xpose.msra.mxu0 0.0
        %1536 = vmatprep.subr.mxu0 0.0
        %1537 = vmatpush1.xpose.msra.mxu0 0.0
        %1538 = vmatprep.subr.mxu0 0.0
        %1539 = vmatpush1.xpose.msra.mxu0 0.0
        %1540 = vmatprep.subr.mxu0 0.0
        %1541 = vmatpush1.xpose.msra.mxu0 0.0
        %1542 = vmatprep.subr.mxu0 0.0
        %1543 = vmatpush1.xpose.msra.mxu0 0.0
        %1544 = vmatprep.subr.mxu0 0.0
        %1545 = vmatpush1.xpose.msra.mxu0 0.0
        %1546 = vmatprep.subr.mxu0 0.0
        %1547 = vmatpush1.xpose.msra.mxu0 0.0
        %1548 = vmatprep.subr.mxu0 0.0
        %1549 = vmatpush1.xpose.msra.mxu0 0.0
        %1550 = vmatprep.subr.mxu0 0.0
        %1551 = vmatpush1.xpose.msra.mxu0 0.0
        %1552 = vmatprep.subr.mxu0 0.0
        %1553 = vmatpush1.xpose.msra.mxu0 0.0
        %1554 = vmatprep.subr.mxu0 0.0
        %1555 = vmatpush1.xpose.msra.mxu0 0.0
        %v1556 = vand.u32 %v630, 4294901760
        %1557 = vmatprep.subr.mxu0 %v1556
        %v1558 = vand.u32 %v628, 4294901760
        %1559 = vmatpush1.xpose.msra.mxu0 %v1558
        %1560 = vmatprep.subr.mxu0 0.0
        %1561 = vmatpush2.xpose.msra.mxu0 0.0
        %1562 = vmatprep.subr.mxu0 0.0
        %1563 = vmatpush2.xpose.msra.mxu0 0.0
        %1564 = vmatprep.subr.mxu0 0.0
        %1565 = vmatpush2.xpose.msra.mxu0 0.0
        %1566 = vmatprep.subr.mxu0 0.0
        %1567 = vmatpush2.xpose.msra.mxu0 0.0
        %1568 = vmatprep.subr.mxu0 0.0
        %1569 = vmatpush2.xpose.msra.mxu0 0.0
        %1570 = vmatprep.subr.mxu0 0.0
        %1571 = vmatpush2.xpose.msra.mxu0 0.0
        %1572 = vmatprep.subr.mxu0 0.0
        %1573 = vmatpush2.xpose.msra.mxu0 0.0
        %1574 = vmatprep.subr.mxu0 0.0
        %1575 = vmatpush2.xpose.msra.mxu0 0.0
        %1576 = vmatprep.subr.mxu0 0.0
        %1577 = vmatpush2.xpose.msra.mxu0 0.0
        %1578 = vmatprep.subr.mxu0 0.0
        %1579 = vmatpush2.xpose.msra.mxu0 0.0
        %1580 = vmatprep.subr.mxu0 0.0
        %1581 = vmatpush2.xpose.msra.mxu0 0.0
        %1582 = vmatprep.subr.mxu0 0.0
        %1583 = vmatpush2.xpose.msra.mxu0 0.0
        %1584 = vmatprep.subr.mxu0 0.0
        %1585 = vmatpush2.xpose.msra.mxu0 0.0
        %1586 = vmatprep.subr.mxu0 0.0
        %1587 = vmatpush2.xpose.msra.mxu0 0.0
        %1588 = vmatprep.subr.mxu0 0.0
        %1589 = vmatpush2.xpose.msra.mxu0 0.0
        %1590 = vmatprep.subr.mxu0 0.0
        %1591 = vmatpush2.xpose.msra.mxu0 0.0
        %v1592 = vand.u32 %v605, 4294901760
        %1593 = vmatprep.mubr.f32.mxu0 %v1592
        %v1594 = vand.u32 %v604, 4294901760
        %1595 = vmatmul.mubr.f32.gmra.mxu0 %v1594
        %v1596 = vpop.f32.mrf.mxu0
        %v1597 = vadd.f32 %v1523, %v1596
        %v1598 = vpop.f32.mrf.mxu0
        %1599 = vdwg.mxu0
        %1600 = vmatprep.subr.mxu0 0.0
        %1601 = vmatpush1.xpose.msra.mxu0 0.0
        %1602 = vmatprep.subr.mxu0 0.0
        %1603 = vmatpush1.xpose.msra.mxu0 0.0
        %1604 = vmatprep.subr.mxu0 0.0
        %1605 = vmatpush1.xpose.msra.mxu0 0.0
        %1606 = vmatprep.subr.mxu0 0.0
        %1607 = vmatpush1.xpose.msra.mxu0 0.0
        %1608 = vmatprep.subr.mxu0 0.0
        %1609 = vmatpush1.xpose.msra.mxu0 0.0
        %1610 = vmatprep.subr.mxu0 0.0
        %1611 = vmatpush1.xpose.msra.mxu0 0.0
        %1612 = vmatprep.subr.mxu0 0.0
        %1613 = vmatpush1.xpose.msra.mxu0 0.0
        %1614 = vmatprep.subr.mxu0 0.0
        %1615 = vmatpush1.xpose.msra.mxu0 0.0
        %1616 = vmatprep.subr.mxu0 0.0
        %1617 = vmatpush1.xpose.msra.mxu0 0.0
        %1618 = vmatprep.subr.mxu0 0.0
        %1619 = vmatpush1.xpose.msra.mxu0 0.0
        %1620 = vmatprep.subr.mxu0 0.0
        %1621 = vmatpush1.xpose.msra.mxu0 0.0
        %1622 = vmatprep.subr.mxu0 0.0
        %1623 = vmatpush1.xpose.msra.mxu0 0.0
        %1624 = vmatprep.subr.mxu0 0.0
        %1625 = vmatpush1.xpose.msra.mxu0 0.0
        %1626 = vmatprep.subr.mxu0 0.0
        %1627 = vmatpush1.xpose.msra.mxu0 0.0
        %1628 = vmatprep.subr.mxu0 0.0
        %1629 = vmatpush1.xpose.msra.mxu0 0.0
        %v1630 = vand.u32 %v646, 4294901760
        %1631 = vmatprep.subr.mxu0 %v1630
        %v1632 = vand.u32 %v638, 4294901760
        %1633 = vmatpush1.xpose.msra.mxu0 %v1632
        %1634 = vmatprep.subr.mxu0 0.0
        %1635 = vmatpush2.xpose.msra.mxu0 0.0
        %1636 = vmatprep.subr.mxu0 0.0
        %1637 = vmatpush2.xpose.msra.mxu0 0.0
        %1638 = vmatprep.subr.mxu0 0.0
        %1639 = vmatpush2.xpose.msra.mxu0 0.0
        %1640 = vmatprep.subr.mxu0 0.0
        %1641 = vmatpush2.xpose.msra.mxu0 0.0
        %1642 = vmatprep.subr.mxu0 0.0
        %1643 = vmatpush2.xpose.msra.mxu0 0.0
        %1644 = vmatprep.subr.mxu0 0.0
        %1645 = vmatpush2.xpose.msra.mxu0 0.0
        %1646 = vmatprep.subr.mxu0 0.0
        %1647 = vmatpush2.xpose.msra.mxu0 0.0
        %1648 = vmatprep.subr.mxu0 0.0
        %1649 = vmatpush2.xpose.msra.mxu0 0.0
        %1650 = vmatprep.subr.mxu0 0.0
        %1651 = vmatpush2.xpose.msra.mxu0 0.0
        %1652 = vmatprep.subr.mxu0 0.0
        %1653 = vmatpush2.xpose.msra.mxu0 0.0
        %1654 = vmatprep.subr.mxu0 0.0
        %1655 = vmatpush2.xpose.msra.mxu0 0.0
        %1656 = vmatprep.subr.mxu0 0.0
        %1657 = vmatpush2.xpose.msra.mxu0 0.0
        %1658 = vmatprep.subr.mxu0 0.0
        %1659 = vmatpush2.xpose.msra.mxu0 0.0
        %1660 = vmatprep.subr.mxu0 0.0
        %1661 = vmatpush2.xpose.msra.mxu0 0.0
        %1662 = vmatprep.subr.mxu0 0.0
        %1663 = vmatpush2.xpose.msra.mxu0 0.0
        %1664 = vmatprep.subr.mxu0 0.0
        %1665 = vmatpush2.xpose.msra.mxu0 0.0
        %v1666 = vand.u32 %v607, 4294901760
        %v1667 = vsub.f32 %v607, %v1666
        %v1668 = vand.u32 %v1667, 4294901760
        %v1669 = vsub.f32 %v1667, %v1668
        %v1670 = vand.u32 %v1669, 4294901760
        %1671 = vmatprep.mubr.f32.mxu0 %v1670
        %v1672 = vand.u32 %v606, 4294901760
        %v1673 = vsub.f32 %v606, %v1672
        %v1674 = vand.u32 %v1673, 4294901760
        %v1675 = vsub.f32 %v1673, %v1674
        %v1676 = vand.u32 %v1675, 4294901760
        %1677 = vmatmul.mubr.f32.gmra.mxu0 %v1676
        %v1678 = vpop.f32.mrf.mxu0
        %v1679 = vadd.f32 %v1597, %v1678
        %v1680 = vpop.f32.mrf.mxu0
        %1681 = vdwg.mxu0
        %1682 = vmatprep.subr.mxu0 0.0
        %1683 = vmatpush1.xpose.msra.mxu0 0.0
        %1684 = vmatprep.subr.mxu0 0.0
        %1685 = vmatpush1.xpose.msra.mxu0 0.0
        %1686 = vmatprep.subr.mxu0 0.0
        %1687 = vmatpush1.xpose.msra.mxu0 0.0
        %1688 = vmatprep.subr.mxu0 0.0
        %1689 = vmatpush1.xpose.msra.mxu0 0.0
        %1690 = vmatprep.subr.mxu0 0.0
        %1691 = vmatpush1.xpose.msra.mxu0 0.0
        %1692 = vmatprep.subr.mxu0 0.0
        %1693 = vmatpush1.xpose.msra.mxu0 0.0
        %1694 = vmatprep.subr.mxu0 0.0
        %1695 = vmatpush1.xpose.msra.mxu0 0.0
        %1696 = vmatprep.subr.mxu0 0.0
        %1697 = vmatpush1.xpose.msra.mxu0 0.0
        %1698 = vmatprep.subr.mxu0 0.0
        %1699 = vmatpush1.xpose.msra.mxu0 0.0
        %1700 = vmatprep.subr.mxu0 0.0
        %1701 = vmatpush1.xpose.msra.mxu0 0.0
        %1702 = vmatprep.subr.mxu0 0.0
        %1703 = vmatpush1.xpose.msra.mxu0 0.0
        %1704 = vmatprep.subr.mxu0 0.0
        %1705 = vmatpush1.xpose.msra.mxu0 0.0
        %1706 = vmatprep.subr.mxu0 0.0
        %1707 = vmatpush1.xpose.msra.mxu0 0.0
        %1708 = vmatprep.subr.mxu0 0.0
        %1709 = vmatpush1.xpose.msra.mxu0 0.0
        %1710 = vmatprep.subr.mxu0 0.0
        %1711 = vmatpush1.xpose.msra.mxu0 0.0
        %v1712 = vand.u32 %v646, 4294901760
        %v1713 = vsub.f32 %v646, %v1712
        %v1714 = vand.u32 %v1713, 4294901760
        %v1715 = vsub.f32 %v1713, %v1714
        %v1716 = vand.u32 %v1715, 4294901760
        %1717 = vmatprep.subr.mxu0 %v1716
        %v1718 = vand.u32 %v638, 4294901760
        %v1719 = vsub.f32 %v638, %v1718
        %v1720 = vand.u32 %v1719, 4294901760
        %v1721 = vsub.f32 %v1719, %v1720
        %v1722 = vand.u32 %v1721, 4294901760
        %1723 = vmatpush1.xpose.msra.mxu0 %v1722
        %1724 = vmatprep.subr.mxu0 0.0
        %1725 = vmatpush2.xpose.msra.mxu0 0.0
        %1726 = vmatprep.subr.mxu0 0.0
        %1727 = vmatpush2.xpose.msra.mxu0 0.0
        %1728 = vmatprep.subr.mxu0 0.0
        %1729 = vmatpush2.xpose.msra.mxu0 0.0
        %1730 = vmatprep.subr.mxu0 0.0
        %1731 = vmatpush2.xpose.msra.mxu0 0.0
        %1732 = vmatprep.subr.mxu0 0.0
        %1733 = vmatpush2.xpose.msra.mxu0 0.0
        %1734 = vmatprep.subr.mxu0 0.0
        %1735 = vmatpush2.xpose.msra.mxu0 0.0
        %1736 = vmatprep.subr.mxu0 0.0
        %1737 = vmatpush2.xpose.msra.mxu0 0.0
        %1738 = vmatprep.subr.mxu0 0.0
        %1739 = vmatpush2.xpose.msra.mxu0 0.0
        %1740 = vmatprep.subr.mxu0 0.0
        %1741 = vmatpush2.xpose.msra.mxu0 0.0
        %1742 = vmatprep.subr.mxu0 0.0
        %1743 = vmatpush2.xpose.msra.mxu0 0.0
        %1744 = vmatprep.subr.mxu0 0.0
        %1745 = vmatpush2.xpose.msra.mxu0 0.0
        %1746 = vmatprep.subr.mxu0 0.0
        %1747 = vmatpush2.xpose.msra.mxu0 0.0
        %1748 = vmatprep.subr.mxu0 0.0
        %1749 = vmatpush2.xpose.msra.mxu0 0.0
        %1750 = vmatprep.subr.mxu0 0.0
        %1751 = vmatpush2.xpose.msra.mxu0 0.0
        %1752 = vmatprep.subr.mxu0 0.0
        %1753 = vmatpush2.xpose.msra.mxu0 0.0
        %1754 = vmatprep.subr.mxu0 0.0
        %1755 = vmatpush2.xpose.msra.mxu0 0.0
        %v1756 = vand.u32 %v607, 4294901760
        %1757 = vmatprep.mubr.f32.mxu0 %v1756
        %v1758 = vand.u32 %v606, 4294901760
        %1759 = vmatmul.mubr.f32.gmra.mxu0 %v1758
        %v1760 = vpop.f32.mrf.mxu0
        %v1761 = vadd.f32 %v1679, %v1760
        %v1762 = vpop.f32.mrf.mxu0
        %1763 = vdwg.mxu0
        %1764 = vmatprep.subr.mxu0 0.0
        %1765 = vmatpush1.xpose.msra.mxu0 0.0
        %1766 = vmatprep.subr.mxu0 0.0
        %1767 = vmatpush1.xpose.msra.mxu0 0.0
        %1768 = vmatprep.subr.mxu0 0.0
        %1769 = vmatpush1.xpose.msra.mxu0 0.0
        %1770 = vmatprep.subr.mxu0 0.0
        %1771 = vmatpush1.xpose.msra.mxu0 0.0
        %1772 = vmatprep.subr.mxu0 0.0
        %1773 = vmatpush1.xpose.msra.mxu0 0.0
        %1774 = vmatprep.subr.mxu0 0.0
        %1775 = vmatpush1.xpose.msra.mxu0 0.0
        %1776 = vmatprep.subr.mxu0 0.0
        %1777 = vmatpush1.xpose.msra.mxu0 0.0
        %1778 = vmatprep.subr.mxu0 0.0
        %1779 = vmatpush1.xpose.msra.mxu0 0.0
        %1780 = vmatprep.subr.mxu0 0.0
        %1781 = vmatpush1.xpose.msra.mxu0 0.0
        %1782 = vmatprep.subr.mxu0 0.0
        %1783 = vmatpush1.xpose.msra.mxu0 0.0
        %1784 = vmatprep.subr.mxu0 0.0
        %1785 = vmatpush1.xpose.msra.mxu0 0.0
        %1786 = vmatprep.subr.mxu0 0.0
        %1787 = vmatpush1.xpose.msra.mxu0 0.0
        %1788 = vmatprep.subr.mxu0 0.0
        %1789 = vmatpush1.xpose.msra.mxu0 0.0
        %1790 = vmatprep.subr.mxu0 0.0
        %1791 = vmatpush1.xpose.msra.mxu0 0.0
        %1792 = vmatprep.subr.mxu0 0.0
        %1793 = vmatpush1.xpose.msra.mxu0 0.0
        %v1794 = vand.u32 %v646, 4294901760
        %v1795 = vsub.f32 %v646, %v1794
        %1796 = vmatprep.subr.mxu0 %v1795
        %v1797 = vand.u32 %v638, 4294901760
        %v1798 = vsub.f32 %v638, %v1797
        %1799 = vmatpush1.xpose.msra.mxu0 %v1798
        %1800 = vmatprep.subr.mxu0 0.0
        %1801 = vmatpush2.xpose.msra.mxu0 0.0
        %1802 = vmatprep.subr.mxu0 0.0
        %1803 = vmatpush2.xpose.msra.mxu0 0.0
        %1804 = vmatprep.subr.mxu0 0.0
        %1805 = vmatpush2.xpose.msra.mxu0 0.0
        %1806 = vmatprep.subr.mxu0 0.0
        %1807 = vmatpush2.xpose.msra.mxu0 0.0
        %1808 = vmatprep.subr.mxu0 0.0
        %1809 = vmatpush2.xpose.msra.mxu0 0.0
        %1810 = vmatprep.subr.mxu0 0.0
        %1811 = vmatpush2.xpose.msra.mxu0 0.0
        %1812 = vmatprep.subr.mxu0 0.0
        %1813 = vmatpush2.xpose.msra.mxu0 0.0
        %1814 = vmatprep.subr.mxu0 0.0
        %1815 = vmatpush2.xpose.msra.mxu0 0.0
        %1816 = vmatprep.subr.mxu0 0.0
        %1817 = vmatpush2.xpose.msra.mxu0 0.0
        %1818 = vmatprep.subr.mxu0 0.0
        %1819 = vmatpush2.xpose.msra.mxu0 0.0
        %1820 = vmatprep.subr.mxu0 0.0
        %1821 = vmatpush2.xpose.msra.mxu0 0.0
        %1822 = vmatprep.subr.mxu0 0.0
        %1823 = vmatpush2.xpose.msra.mxu0 0.0
        %1824 = vmatprep.subr.mxu0 0.0
        %1825 = vmatpush2.xpose.msra.mxu0 0.0
        %1826 = vmatprep.subr.mxu0 0.0
        %1827 = vmatpush2.xpose.msra.mxu0 0.0
        %1828 = vmatprep.subr.mxu0 0.0
        %1829 = vmatpush2.xpose.msra.mxu0 0.0
        %1830 = vmatprep.subr.mxu0 0.0
        %1831 = vmatpush2.xpose.msra.mxu0 0.0
        %v1832 = vand.u32 %v607, 4294901760
        %v1833 = vsub.f32 %v607, %v1832
        %1834 = vmatprep.mubr.f32.mxu0 %v1833
        %v1835 = vand.u32 %v606, 4294901760
        %v1836 = vsub.f32 %v606, %v1835
        %1837 = vmatmul.mubr.f32.gmra.mxu0 %v1836
        %v1838 = vpop.f32.mrf.mxu0
        %v1839 = vadd.f32 %v1761, %v1838
        %v1840 = vpop.f32.mrf.mxu0
        %1841 = vdwg.mxu0
        %1842 = vmatprep.subr.mxu0 0.0
        %1843 = vmatpush1.xpose.msra.mxu0 0.0
        %1844 = vmatprep.subr.mxu0 0.0
        %1845 = vmatpush1.xpose.msra.mxu0 0.0
        %1846 = vmatprep.subr.mxu0 0.0
        %1847 = vmatpush1.xpose.msra.mxu0 0.0
        %1848 = vmatprep.subr.mxu0 0.0
        %1849 = vmatpush1.xpose.msra.mxu0 0.0
        %1850 = vmatprep.subr.mxu0 0.0
        %1851 = vmatpush1.xpose.msra.mxu0 0.0
        %1852 = vmatprep.subr.mxu0 0.0
        %1853 = vmatpush1.xpose.msra.mxu0 0.0
        %1854 = vmatprep.subr.mxu0 0.0
        %1855 = vmatpush1.xpose.msra.mxu0 0.0
        %1856 = vmatprep.subr.mxu0 0.0
        %1857 = vmatpush1.xpose.msra.mxu0 0.0
        %1858 = vmatprep.subr.mxu0 0.0
        %1859 = vmatpush1.xpose.msra.mxu0 0.0
        %1860 = vmatprep.subr.mxu0 0.0
        %1861 = vmatpush1.xpose.msra.mxu0 0.0
        %1862 = vmatprep.subr.mxu0 0.0
        %1863 = vmatpush1.xpose.msra.mxu0 0.0
        %1864 = vmatprep.subr.mxu0 0.0
        %1865 = vmatpush1.xpose.msra.mxu0 0.0
        %1866 = vmatprep.subr.mxu0 0.0
        %1867 = vmatpush1.xpose.msra.mxu0 0.0
        %1868 = vmatprep.subr.mxu0 0.0
        %1869 = vmatpush1.xpose.msra.mxu0 0.0
        %1870 = vmatprep.subr.mxu0 0.0
        %1871 = vmatpush1.xpose.msra.mxu0 0.0
        %v1872 = vand.u32 %v646, 4294901760
        %1873 = vmatprep.subr.mxu0 %v1872
        %v1874 = vand.u32 %v638, 4294901760
        %1875 = vmatpush1.xpose.msra.mxu0 %v1874
        %1876 = vmatprep.subr.mxu0 0.0
        %1877 = vmatpush2.xpose.msra.mxu0 0.0
        %1878 = vmatprep.subr.mxu0 0.0
        %1879 = vmatpush2.xpose.msra.mxu0 0.0
        %1880 = vmatprep.subr.mxu0 0.0
        %1881 = vmatpush2.xpose.msra.mxu0 0.0
        %1882 = vmatprep.subr.mxu0 0.0
        %1883 = vmatpush2.xpose.msra.mxu0 0.0
        %1884 = vmatprep.subr.mxu0 0.0
        %1885 = vmatpush2.xpose.msra.mxu0 0.0
        %1886 = vmatprep.subr.mxu0 0.0
        %1887 = vmatpush2.xpose.msra.mxu0 0.0
        %1888 = vmatprep.subr.mxu0 0.0
        %1889 = vmatpush2.xpose.msra.mxu0 0.0
        %1890 = vmatprep.subr.mxu0 0.0
        %1891 = vmatpush2.xpose.msra.mxu0 0.0
        %1892 = vmatprep.subr.mxu0 0.0
        %1893 = vmatpush2.xpose.msra.mxu0 0.0
        %1894 = vmatprep.subr.mxu0 0.0
        %1895 = vmatpush2.xpose.msra.mxu0 0.0
        %1896 = vmatprep.subr.mxu0 0.0
        %1897 = vmatpush2.xpose.msra.mxu0 0.0
        %1898 = vmatprep.subr.mxu0 0.0
        %1899 = vmatpush2.xpose.msra.mxu0 0.0
        %1900 = vmatprep.subr.mxu0 0.0
        %1901 = vmatpush2.xpose.msra.mxu0 0.0
        %1902 = vmatprep.subr.mxu0 0.0
        %1903 = vmatpush2.xpose.msra.mxu0 0.0
        %1904 = vmatprep.subr.mxu0 0.0
        %1905 = vmatpush2.xpose.msra.mxu0 0.0
        %1906 = vmatprep.subr.mxu0 0.0
        %1907 = vmatpush2.xpose.msra.mxu0 0.0
        %v1908 = vand.u32 %v607, 4294901760
        %v1909 = vsub.f32 %v607, %v1908
        %v1910 = vand.u32 %v1909, 4294901760
        %1911 = vmatprep.mubr.f32.mxu0 %v1910
        %v1912 = vand.u32 %v606, 4294901760
        %v1913 = vsub.f32 %v606, %v1912
        %v1914 = vand.u32 %v1913, 4294901760
        %1915 = vmatmul.mubr.f32.gmra.mxu0 %v1914
        %v1916 = vpop.f32.mrf.mxu0
        %v1917 = vadd.f32 %v1839, %v1916
        %v1918 = vpop.f32.mrf.mxu0
        %1919 = vdwg.mxu0
        %1920 = vmatprep.subr.mxu0 0.0
        %1921 = vmatpush1.xpose.msra.mxu0 0.0
        %1922 = vmatprep.subr.mxu0 0.0
        %1923 = vmatpush1.xpose.msra.mxu0 0.0
        %1924 = vmatprep.subr.mxu0 0.0
        %1925 = vmatpush1.xpose.msra.mxu0 0.0
        %1926 = vmatprep.subr.mxu0 0.0
        %1927 = vmatpush1.xpose.msra.mxu0 0.0
        %1928 = vmatprep.subr.mxu0 0.0
        %1929 = vmatpush1.xpose.msra.mxu0 0.0
        %1930 = vmatprep.subr.mxu0 0.0
        %1931 = vmatpush1.xpose.msra.mxu0 0.0
        %1932 = vmatprep.subr.mxu0 0.0
        %1933 = vmatpush1.xpose.msra.mxu0 0.0
        %1934 = vmatprep.subr.mxu0 0.0
        %1935 = vmatpush1.xpose.msra.mxu0 0.0
        %1936 = vmatprep.subr.mxu0 0.0
        %1937 = vmatpush1.xpose.msra.mxu0 0.0
        %1938 = vmatprep.subr.mxu0 0.0
        %1939 = vmatpush1.xpose.msra.mxu0 0.0
        %1940 = vmatprep.subr.mxu0 0.0
        %1941 = vmatpush1.xpose.msra.mxu0 0.0
        %1942 = vmatprep.subr.mxu0 0.0
        %1943 = vmatpush1.xpose.msra.mxu0 0.0
        %1944 = vmatprep.subr.mxu0 0.0
        %1945 = vmatpush1.xpose.msra.mxu0 0.0
        %1946 = vmatprep.subr.mxu0 0.0
        %1947 = vmatpush1.xpose.msra.mxu0 0.0
        %1948 = vmatprep.subr.mxu0 0.0
        %1949 = vmatpush1.xpose.msra.mxu0 0.0
        %v1950 = vand.u32 %v646, 4294901760
        %v1951 = vsub.f32 %v646, %v1950
        %v1952 = vand.u32 %v1951, 4294901760
        %1953 = vmatprep.subr.mxu0 %v1952
        %v1954 = vand.u32 %v638, 4294901760
        %v1955 = vsub.f32 %v638, %v1954
        %v1956 = vand.u32 %v1955, 4294901760
        %1957 = vmatpush1.xpose.msra.mxu0 %v1956
        %1958 = vmatprep.subr.mxu0 0.0
        %1959 = vmatpush2.xpose.msra.mxu0 0.0
        %1960 = vmatprep.subr.mxu0 0.0
        %1961 = vmatpush2.xpose.msra.mxu0 0.0
        %1962 = vmatprep.subr.mxu0 0.0
        %1963 = vmatpush2.xpose.msra.mxu0 0.0
        %1964 = vmatprep.subr.mxu0 0.0
        %1965 = vmatpush2.xpose.msra.mxu0 0.0
        %1966 = vmatprep.subr.mxu0 0.0
        %1967 = vmatpush2.xpose.msra.mxu0 0.0
        %1968 = vmatprep.subr.mxu0 0.0
        %1969 = vmatpush2.xpose.msra.mxu0 0.0
        %1970 = vmatprep.subr.mxu0 0.0
        %1971 = vmatpush2.xpose.msra.mxu0 0.0
        %1972 = vmatprep.subr.mxu0 0.0
        %1973 = vmatpush2.xpose.msra.mxu0 0.0
        %1974 = vmatprep.subr.mxu0 0.0
        %1975 = vmatpush2.xpose.msra.mxu0 0.0
        %1976 = vmatprep.subr.mxu0 0.0
        %1977 = vmatpush2.xpose.msra.mxu0 0.0
        %1978 = vmatprep.subr.mxu0 0.0
        %1979 = vmatpush2.xpose.msra.mxu0 0.0
        %1980 = vmatprep.subr.mxu0 0.0
        %1981 = vmatpush2.xpose.msra.mxu0 0.0
        %1982 = vmatprep.subr.mxu0 0.0
        %1983 = vmatpush2.xpose.msra.mxu0 0.0
        %1984 = vmatprep.subr.mxu0 0.0
        %1985 = vmatpush2.xpose.msra.mxu0 0.0
        %1986 = vmatprep.subr.mxu0 0.0
        %1987 = vmatpush2.xpose.msra.mxu0 0.0
        %1988 = vmatprep.subr.mxu0 0.0
        %1989 = vmatpush2.xpose.msra.mxu0 0.0
        %v1990 = vand.u32 %v607, 4294901760
        %1991 = vmatprep.mubr.f32.mxu0 %v1990
        %v1992 = vand.u32 %v606, 4294901760
        %1993 = vmatmul.mubr.f32.gmra.mxu0 %v1992
        %v1994 = vpop.f32.mrf.mxu0
        %v1995 = vadd.f32 %v1917, %v1994
        %v1996 = vpop.f32.mrf.mxu0
        %1997 = vdwg.mxu0
        %1998 = vmatprep.subr.mxu0 0.0
        %1999 = vmatpush1.xpose.msra.mxu0 0.0
        %2000 = vmatprep.subr.mxu0 0.0
        %2001 = vmatpush1.xpose.msra.mxu0 0.0
        %2002 = vmatprep.subr.mxu0 0.0
        %2003 = vmatpush1.xpose.msra.mxu0 0.0
        %2004 = vmatprep.subr.mxu0 0.0
        %2005 = vmatpush1.xpose.msra.mxu0 0.0
        %2006 = vmatprep.subr.mxu0 0.0
        %2007 = vmatpush1.xpose.msra.mxu0 0.0
        %2008 = vmatprep.subr.mxu0 0.0
        %2009 = vmatpush1.xpose.msra.mxu0 0.0
        %2010 = vmatprep.subr.mxu0 0.0
        %2011 = vmatpush1.xpose.msra.mxu0 0.0
        %2012 = vmatprep.subr.mxu0 0.0
        %2013 = vmatpush1.xpose.msra.mxu0 0.0
        %2014 = vmatprep.subr.mxu0 0.0
        %2015 = vmatpush1.xpose.msra.mxu0 0.0
        %2016 = vmatprep.subr.mxu0 0.0
        %2017 = vmatpush1.xpose.msra.mxu0 0.0
        %2018 = vmatprep.subr.mxu0 0.0
        %2019 = vmatpush1.xpose.msra.mxu0 0.0
        %2020 = vmatprep.subr.mxu0 0.0
        %2021 = vmatpush1.xpose.msra.mxu0 0.0
        %2022 = vmatprep.subr.mxu0 0.0
        %2023 = vmatpush1.xpose.msra.mxu0 0.0
        %2024 = vmatprep.subr.mxu0 0.0
        %2025 = vmatpush1.xpose.msra.mxu0 0.0
        %2026 = vmatprep.subr.mxu0 0.0
        %2027 = vmatpush1.xpose.msra.mxu0 0.0
        %v2028 = vand.u32 %v646, 4294901760
        %2029 = vmatprep.subr.mxu0 %v2028
        %v2030 = vand.u32 %v638, 4294901760
        %2031 = vmatpush1.xpose.msra.mxu0 %v2030
        %2032 = vmatprep.subr.mxu0 0.0
        %2033 = vmatpush2.xpose.msra.mxu0 0.0
        %2034 = vmatprep.subr.mxu0 0.0
        %2035 = vmatpush2.xpose.msra.mxu0 0.0
        %2036 = vmatprep.subr.mxu0 0.0
        %2037 = vmatpush2.xpose.msra.mxu0 0.0
        %2038 = vmatprep.subr.mxu0 0.0
        %2039 = vmatpush2.xpose.msra.mxu0 0.0
        %2040 = vmatprep.subr.mxu0 0.0
        %2041 = vmatpush2.xpose.msra.mxu0 0.0
        %2042 = vmatprep.subr.mxu0 0.0
        %2043 = vmatpush2.xpose.msra.mxu0 0.0
        %2044 = vmatprep.subr.mxu0 0.0
        %2045 = vmatpush2.xpose.msra.mxu0 0.0
        %2046 = vmatprep.subr.mxu0 0.0
        %2047 = vmatpush2.xpose.msra.mxu0 0.0
        %2048 = vmatprep.subr.mxu0 0.0
        %2049 = vmatpush2.xpose.msra.mxu0 0.0
        %2050 = vmatprep.subr.mxu0 0.0
        %2051 = vmatpush2.xpose.msra.mxu0 0.0
        %2052 = vmatprep.subr.mxu0 0.0
        %2053 = vmatpush2.xpose.msra.mxu0 0.0
        %2054 = vmatprep.subr.mxu0 0.0
        %2055 = vmatpush2.xpose.msra.mxu0 0.0
        %2056 = vmatprep.subr.mxu0 0.0
        %2057 = vmatpush2.xpose.msra.mxu0 0.0
        %2058 = vmatprep.subr.mxu0 0.0
        %2059 = vmatpush2.xpose.msra.mxu0 0.0
        %2060 = vmatprep.subr.mxu0 0.0
        %2061 = vmatpush2.xpose.msra.mxu0 0.0
        %2062 = vmatprep.subr.mxu0 0.0
        %2063 = vmatpush2.xpose.msra.mxu0 0.0
        %v2064 = vand.u32 %v607, 4294901760
        %2065 = vmatprep.mubr.f32.mxu0 %v2064
        %v2066 = vand.u32 %v606, 4294901760
        %2067 = vmatmul.mubr.f32.gmra.mxu0 %v2066
        %v2068 = vpop.f32.mrf.mxu0
        %v2069 = vadd.f32 %v1995, %v2068
        %v2070 = vpop.f32.mrf.mxu0
        %2071 = vdwg.mxu0
        %2072 = vmatprep.subr.mxu0 0.0
        %2073 = vmatpush1.xpose.msra.mxu0 0.0
        %2074 = vmatprep.subr.mxu0 0.0
        %2075 = vmatpush1.xpose.msra.mxu0 0.0
        %2076 = vmatprep.subr.mxu0 0.0
        %2077 = vmatpush1.xpose.msra.mxu0 0.0
        %2078 = vmatprep.subr.mxu0 0.0
        %2079 = vmatpush1.xpose.msra.mxu0 0.0
        %2080 = vmatprep.subr.mxu0 0.0
        %2081 = vmatpush1.xpose.msra.mxu0 0.0
        %2082 = vmatprep.subr.mxu0 0.0
        %2083 = vmatpush1.xpose.msra.mxu0 0.0
        %2084 = vmatprep.subr.mxu0 0.0
        %2085 = vmatpush1.xpose.msra.mxu0 0.0
        %2086 = vmatprep.subr.mxu0 0.0
        %2087 = vmatpush1.xpose.msra.mxu0 0.0
        %2088 = vmatprep.subr.mxu0 0.0
        %2089 = vmatpush1.xpose.msra.mxu0 0.0
        %2090 = vmatprep.subr.mxu0 0.0
        %2091 = vmatpush1.xpose.msra.mxu0 0.0
        %2092 = vmatprep.subr.mxu0 0.0
        %2093 = vmatpush1.xpose.msra.mxu0 0.0
        %2094 = vmatprep.subr.mxu0 0.0
        %2095 = vmatpush1.xpose.msra.mxu0 0.0
        %2096 = vmatprep.subr.mxu0 0.0
        %2097 = vmatpush1.xpose.msra.mxu0 0.0
        %2098 = vmatprep.subr.mxu0 0.0
        %2099 = vmatpush1.xpose.msra.mxu0 0.0
        %2100 = vmatprep.subr.mxu0 0.0
        %2101 = vmatpush1.xpose.msra.mxu0 0.0
        %v2102 = vand.u32 %v647, 4294901760
        %2103 = vmatprep.subr.mxu0 %v2102
        %v2104 = vand.u32 %v645, 4294901760
        %2105 = vmatpush1.xpose.msra.mxu0 %v2104
        %2106 = vmatprep.subr.mxu0 0.0
        %2107 = vmatpush2.xpose.msra.mxu0 0.0
        %2108 = vmatprep.subr.mxu0 0.0
        %2109 = vmatpush2.xpose.msra.mxu0 0.0
        %2110 = vmatprep.subr.mxu0 0.0
        %2111 = vmatpush2.xpose.msra.mxu0 0.0
        %2112 = vmatprep.subr.mxu0 0.0
        %2113 = vmatpush2.xpose.msra.mxu0 0.0
        %2114 = vmatprep.subr.mxu0 0.0
        %2115 = vmatpush2.xpose.msra.mxu0 0.0
        %2116 = vmatprep.subr.mxu0 0.0
        %2117 = vmatpush2.xpose.msra.mxu0 0.0
        %2118 = vmatprep.subr.mxu0 0.0
        %2119 = vmatpush2.xpose.msra.mxu0 0.0
        %2120 = vmatprep.subr.mxu0 0.0
        %2121 = vmatpush2.xpose.msra.mxu0 0.0
        %2122 = vmatprep.subr.mxu0 0.0
        %2123 = vmatpush2.xpose.msra.mxu0 0.0
        %2124 = vmatprep.subr.mxu0 0.0
        %2125 = vmatpush2.xpose.msra.mxu0 0.0
        %2126 = vmatprep.subr.mxu0 0.0
        %2127 = vmatpush2.xpose.msra.mxu0 0.0
        %2128 = vmatprep.subr.mxu0 0.0
        %2129 = vmatpush2.xpose.msra.mxu0 0.0
        %2130 = vmatprep.subr.mxu0 0.0
        %2131 = vmatpush2.xpose.msra.mxu0 0.0
        %2132 = vmatprep.subr.mxu0 0.0
        %2133 = vmatpush2.xpose.msra.mxu0 0.0
        %2134 = vmatprep.subr.mxu0 0.0
        %2135 = vmatpush2.xpose.msra.mxu0 0.0
        %2136 = vmatprep.subr.mxu0 0.0
        %2137 = vmatpush2.xpose.msra.mxu0 0.0
        %v2138 = vand.u32 %v609, 4294901760
        %v2139 = vsub.f32 %v609, %v2138
        %v2140 = vand.u32 %v2139, 4294901760
        %v2141 = vsub.f32 %v2139, %v2140
        %v2142 = vand.u32 %v2141, 4294901760
        %2143 = vmatprep.mubr.f32.mxu0 %v2142
        %v2144 = vand.u32 %v608, 4294901760
        %v2145 = vsub.f32 %v608, %v2144
        %v2146 = vand.u32 %v2145, 4294901760
        %v2147 = vsub.f32 %v2145, %v2146
        %v2148 = vand.u32 %v2147, 4294901760
        %2149 = vmatmul.mubr.f32.gmra.mxu0 %v2148
        %v2150 = vpop.f32.mrf.mxu0
        %v2151 = vadd.f32 %v2069, %v2150
        %v2152 = vpop.f32.mrf.mxu0
        %2153 = vdwg.mxu0
        %2154 = vmatprep.subr.mxu0 0.0
        %2155 = vmatpush1.xpose.msra.mxu0 0.0
        %2156 = vmatprep.subr.mxu0 0.0
        %2157 = vmatpush1.xpose.msra.mxu0 0.0
        %2158 = vmatprep.subr.mxu0 0.0
        %2159 = vmatpush1.xpose.msra.mxu0 0.0
        %2160 = vmatprep.subr.mxu0 0.0
        %2161 = vmatpush1.xpose.msra.mxu0 0.0
        %2162 = vmatprep.subr.mxu0 0.0
        %2163 = vmatpush1.xpose.msra.mxu0 0.0
        %2164 = vmatprep.subr.mxu0 0.0
        %2165 = vmatpush1.xpose.msra.mxu0 0.0
        %2166 = vmatprep.subr.mxu0 0.0
        %2167 = vmatpush1.xpose.msra.mxu0 0.0
        %2168 = vmatprep.subr.mxu0 0.0
        %2169 = vmatpush1.xpose.msra.mxu0 0.0
        %2170 = vmatprep.subr.mxu0 0.0
        %2171 = vmatpush1.xpose.msra.mxu0 0.0
        %2172 = vmatprep.subr.mxu0 0.0
        %2173 = vmatpush1.xpose.msra.mxu0 0.0
        %2174 = vmatprep.subr.mxu0 0.0
        %2175 = vmatpush1.xpose.msra.mxu0 0.0
        %2176 = vmatprep.subr.mxu0 0.0
        %2177 = vmatpush1.xpose.msra.mxu0 0.0
        %2178 = vmatprep.subr.mxu0 0.0
        %2179 = vmatpush1.xpose.msra.mxu0 0.0
        %2180 = vmatprep.subr.mxu0 0.0
        %2181 = vmatpush1.xpose.msra.mxu0 0.0
        %2182 = vmatprep.subr.mxu0 0.0
        %2183 = vmatpush1.xpose.msra.mxu0 0.0
        %v2184 = vand.u32 %v647, 4294901760
        %v2185 = vsub.f32 %v647, %v2184
        %v2186 = vand.u32 %v2185, 4294901760
        %v2187 = vsub.f32 %v2185, %v2186
        %v2188 = vand.u32 %v2187, 4294901760
        %2189 = vmatprep.subr.mxu0 %v2188
        %v2190 = vand.u32 %v645, 4294901760
        %v2191 = vsub.f32 %v645, %v2190
        %v2192 = vand.u32 %v2191, 4294901760
        %v2193 = vsub.f32 %v2191, %v2192
        %v2194 = vand.u32 %v2193, 4294901760
        %2195 = vmatpush1.xpose.msra.mxu0 %v2194
        %2196 = vmatprep.subr.mxu0 0.0
        %2197 = vmatpush2.xpose.msra.mxu0 0.0
        %2198 = vmatprep.subr.mxu0 0.0
        %2199 = vmatpush2.xpose.msra.mxu0 0.0
        %2200 = vmatprep.subr.mxu0 0.0
        %2201 = vmatpush2.xpose.msra.mxu0 0.0
        %2202 = vmatprep.subr.mxu0 0.0
        %2203 = vmatpush2.xpose.msra.mxu0 0.0
        %2204 = vmatprep.subr.mxu0 0.0
        %2205 = vmatpush2.xpose.msra.mxu0 0.0
        %2206 = vmatprep.subr.mxu0 0.0
        %2207 = vmatpush2.xpose.msra.mxu0 0.0
        %2208 = vmatprep.subr.mxu0 0.0
        %2209 = vmatpush2.xpose.msra.mxu0 0.0
        %2210 = vmatprep.subr.mxu0 0.0
        %2211 = vmatpush2.xpose.msra.mxu0 0.0
        %2212 = vmatprep.subr.mxu0 0.0
        %2213 = vmatpush2.xpose.msra.mxu0 0.0
        %2214 = vmatprep.subr.mxu0 0.0
        %2215 = vmatpush2.xpose.msra.mxu0 0.0
        %2216 = vmatprep.subr.mxu0 0.0
        %2217 = vmatpush2.xpose.msra.mxu0 0.0
        %2218 = vmatprep.subr.mxu0 0.0
        %2219 = vmatpush2.xpose.msra.mxu0 0.0
        %2220 = vmatprep.subr.mxu0 0.0
        %2221 = vmatpush2.xpose.msra.mxu0 0.0
        %2222 = vmatprep.subr.mxu0 0.0
        %2223 = vmatpush2.xpose.msra.mxu0 0.0
        %2224 = vmatprep.subr.mxu0 0.0
        %2225 = vmatpush2.xpose.msra.mxu0 0.0
        %2226 = vmatprep.subr.mxu0 0.0
        %2227 = vmatpush2.xpose.msra.mxu0 0.0
        %v2228 = vand.u32 %v609, 4294901760
        %2229 = vmatprep.mubr.f32.mxu0 %v2228
        %v2230 = vand.u32 %v608, 4294901760
        %2231 = vmatmul.mubr.f32.gmra.mxu0 %v2230
        %v2232 = vpop.f32.mrf.mxu0
        %v2233 = vadd.f32 %v2151, %v2232
        %v2234 = vpop.f32.mrf.mxu0
        %2235 = vdwg.mxu0
        %2236 = vmatprep.subr.mxu0 0.0
        %2237 = vmatpush1.xpose.msra.mxu0 0.0
        %2238 = vmatprep.subr.mxu0 0.0
        %2239 = vmatpush1.xpose.msra.mxu0 0.0
        %2240 = vmatprep.subr.mxu0 0.0
        %2241 = vmatpush1.xpose.msra.mxu0 0.0
        %2242 = vmatprep.subr.mxu0 0.0
        %2243 = vmatpush1.xpose.msra.mxu0 0.0
        %2244 = vmatprep.subr.mxu0 0.0
        %2245 = vmatpush1.xpose.msra.mxu0 0.0
        %2246 = vmatprep.subr.mxu0 0.0
        %2247 = vmatpush1.xpose.msra.mxu0 0.0
        %2248 = vmatprep.subr.mxu0 0.0
        %2249 = vmatpush1.xpose.msra.mxu0 0.0
        %2250 = vmatprep.subr.mxu0 0.0
        %2251 = vmatpush1.xpose.msra.mxu0 0.0
        %2252 = vmatprep.subr.mxu0 0.0
        %2253 = vmatpush1.xpose.msra.mxu0 0.0
        %2254 = vmatprep.subr.mxu0 0.0
        %2255 = vmatpush1.xpose.msra.mxu0 0.0
        %2256 = vmatprep.subr.mxu0 0.0
        %2257 = vmatpush1.xpose.msra.mxu0 0.0
        %2258 = vmatprep.subr.mxu0 0.0
        %2259 = vmatpush1.xpose.msra.mxu0 0.0
        %2260 = vmatprep.subr.mxu0 0.0
        %2261 = vmatpush1.xpose.msra.mxu0 0.0
        %2262 = vmatprep.subr.mxu0 0.0
        %2263 = vmatpush1.xpose.msra.mxu0 0.0
        %2264 = vmatprep.subr.mxu0 0.0
        %2265 = vmatpush1.xpose.msra.mxu0 0.0
        %v2266 = vand.u32 %v647, 4294901760
        %v2267 = vsub.f32 %v647, %v2266
        %2268 = vmatprep.subr.mxu0 %v2267
        %v2269 = vand.u32 %v645, 4294901760
        %v2270 = vsub.f32 %v645, %v2269
        %2271 = vmatpush1.xpose.msra.mxu0 %v2270
        %2272 = vmatprep.subr.mxu0 0.0
        %2273 = vmatpush2.xpose.msra.mxu0 0.0
        %2274 = vmatprep.subr.mxu0 0.0
        %2275 = vmatpush2.xpose.msra.mxu0 0.0
        %2276 = vmatprep.subr.mxu0 0.0
        %2277 = vmatpush2.xpose.msra.mxu0 0.0
        %2278 = vmatprep.subr.mxu0 0.0
        %2279 = vmatpush2.xpose.msra.mxu0 0.0
        %2280 = vmatprep.subr.mxu0 0.0
        %2281 = vmatpush2.xpose.msra.mxu0 0.0
        %2282 = vmatprep.subr.mxu0 0.0
        %2283 = vmatpush2.xpose.msra.mxu0 0.0
        %2284 = vmatprep.subr.mxu0 0.0
        %2285 = vmatpush2.xpose.msra.mxu0 0.0
        %2286 = vmatprep.subr.mxu0 0.0
        %2287 = vmatpush2.xpose.msra.mxu0 0.0
        %2288 = vmatprep.subr.mxu0 0.0
        %2289 = vmatpush2.xpose.msra.mxu0 0.0
        %2290 = vmatprep.subr.mxu0 0.0
        %2291 = vmatpush2.xpose.msra.mxu0 0.0
        %2292 = vmatprep.subr.mxu0 0.0
        %2293 = vmatpush2.xpose.msra.mxu0 0.0
        %2294 = vmatprep.subr.mxu0 0.0
        %2295 = vmatpush2.xpose.msra.mxu0 0.0
        %2296 = vmatprep.subr.mxu0 0.0
        %2297 = vmatpush2.xpose.msra.mxu0 0.0
        %2298 = vmatprep.subr.mxu0 0.0
        %2299 = vmatpush2.xpose.msra.mxu0 0.0
        %2300 = vmatprep.subr.mxu0 0.0
        %2301 = vmatpush2.xpose.msra.mxu0 0.0
        %2302 = vmatprep.subr.mxu0 0.0
        %2303 = vmatpush2.xpose.msra.mxu0 0.0
        %v2304 = vand.u32 %v609, 4294901760
        %v2305 = vsub.f32 %v609, %v2304
        %2306 = vmatprep.mubr.f32.mxu0 %v2305
        %v2307 = vand.u32 %v608, 4294901760
        %v2308 = vsub.f32 %v608, %v2307
        %2309 = vmatmul.mubr.f32.gmra.mxu0 %v2308
        %v2310 = vpop.f32.mrf.mxu0
        %v2311 = vadd.f32 %v2233, %v2310
        %v2312 = vpop.f32.mrf.mxu0
        %2313 = vdwg.mxu0
        %2314 = vmatprep.subr.mxu0 0.0
        %2315 = vmatpush1.xpose.msra.mxu0 0.0
        %2316 = vmatprep.subr.mxu0 0.0
        %2317 = vmatpush1.xpose.msra.mxu0 0.0
        %2318 = vmatprep.subr.mxu0 0.0
        %2319 = vmatpush1.xpose.msra.mxu0 0.0
        %2320 = vmatprep.subr.mxu0 0.0
        %2321 = vmatpush1.xpose.msra.mxu0 0.0
        %2322 = vmatprep.subr.mxu0 0.0
        %2323 = vmatpush1.xpose.msra.mxu0 0.0
        %2324 = vmatprep.subr.mxu0 0.0
        %2325 = vmatpush1.xpose.msra.mxu0 0.0
        %2326 = vmatprep.subr.mxu0 0.0
        %2327 = vmatpush1.xpose.msra.mxu0 0.0
        %2328 = vmatprep.subr.mxu0 0.0
        %2329 = vmatpush1.xpose.msra.mxu0 0.0
        %2330 = vmatprep.subr.mxu0 0.0
        %2331 = vmatpush1.xpose.msra.mxu0 0.0
        %2332 = vmatprep.subr.mxu0 0.0
        %2333 = vmatpush1.xpose.msra.mxu0 0.0
        %2334 = vmatprep.subr.mxu0 0.0
        %2335 = vmatpush1.xpose.msra.mxu0 0.0
        %2336 = vmatprep.subr.mxu0 0.0
        %2337 = vmatpush1.xpose.msra.mxu0 0.0
        %2338 = vmatprep.subr.mxu0 0.0
        %2339 = vmatpush1.xpose.msra.mxu0 0.0
        %2340 = vmatprep.subr.mxu0 0.0
        %2341 = vmatpush1.xpose.msra.mxu0 0.0
        %2342 = vmatprep.subr.mxu0 0.0
        %2343 = vmatpush1.xpose.msra.mxu0 0.0
        %v2344 = vand.u32 %v647, 4294901760
        %2345 = vmatprep.subr.mxu0 %v2344
        %v2346 = vand.u32 %v645, 4294901760
        %2347 = vmatpush1.xpose.msra.mxu0 %v2346
        %2348 = vmatprep.subr.mxu0 0.0
        %2349 = vmatpush2.xpose.msra.mxu0 0.0
        %2350 = vmatprep.subr.mxu0 0.0
        %2351 = vmatpush2.xpose.msra.mxu0 0.0
        %2352 = vmatprep.subr.mxu0 0.0
        %2353 = vmatpush2.xpose.msra.mxu0 0.0
        %2354 = vmatprep.subr.mxu0 0.0
        %2355 = vmatpush2.xpose.msra.mxu0 0.0
        %2356 = vmatprep.subr.mxu0 0.0
        %2357 = vmatpush2.xpose.msra.mxu0 0.0
        %2358 = vmatprep.subr.mxu0 0.0
        %2359 = vmatpush2.xpose.msra.mxu0 0.0
        %2360 = vmatprep.subr.mxu0 0.0
        %2361 = vmatpush2.xpose.msra.mxu0 0.0
        %2362 = vmatprep.subr.mxu0 0.0
        %2363 = vmatpush2.xpose.msra.mxu0 0.0
        %2364 = vmatprep.subr.mxu0 0.0
        %2365 = vmatpush2.xpose.msra.mxu0 0.0
        %2366 = vmatprep.subr.mxu0 0.0
        %2367 = vmatpush2.xpose.msra.mxu0 0.0
        %2368 = vmatprep.subr.mxu0 0.0
        %2369 = vmatpush2.xpose.msra.mxu0 0.0
        %2370 = vmatprep.subr.mxu0 0.0
        %2371 = vmatpush2.xpose.msra.mxu0 0.0
        %2372 = vmatprep.subr.mxu0 0.0
        %2373 = vmatpush2.xpose.msra.mxu0 0.0
        %2374 = vmatprep.subr.mxu0 0.0
        %2375 = vmatpush2.xpose.msra.mxu0 0.0
        %2376 = vmatprep.subr.mxu0 0.0
        %2377 = vmatpush2.xpose.msra.mxu0 0.0
        %2378 = vmatprep.subr.mxu0 0.0
        %2379 = vmatpush2.xpose.msra.mxu0 0.0
        %v2380 = vand.u32 %v609, 4294901760
        %v2381 = vsub.f32 %v609, %v2380
        %v2382 = vand.u32 %v2381, 4294901760
        %2383 = vmatprep.mubr.f32.mxu0 %v2382
        %v2384 = vand.u32 %v608, 4294901760
        %v2385 = vsub.f32 %v608, %v2384
        %v2386 = vand.u32 %v2385, 4294901760
        %2387 = vmatmul.mubr.f32.gmra.mxu0 %v2386
        %v2388 = vpop.f32.mrf.mxu0
        %v2389 = vadd.f32 %v2311, %v2388
        %v2390 = vpop.f32.mrf.mxu0
        %2391 = vdwg.mxu0
        %2392 = vmatprep.subr.mxu0 0.0
        %2393 = vmatpush1.xpose.msra.mxu0 0.0
        %2394 = vmatprep.subr.mxu0 0.0
        %2395 = vmatpush1.xpose.msra.mxu0 0.0
        %2396 = vmatprep.subr.mxu0 0.0
        %2397 = vmatpush1.xpose.msra.mxu0 0.0
        %2398 = vmatprep.subr.mxu0 0.0
        %2399 = vmatpush1.xpose.msra.mxu0 0.0
        %2400 = vmatprep.subr.mxu0 0.0
        %2401 = vmatpush1.xpose.msra.mxu0 0.0
        %2402 = vmatprep.subr.mxu0 0.0
        %2403 = vmatpush1.xpose.msra.mxu0 0.0
        %2404 = vmatprep.subr.mxu0 0.0
        %2405 = vmatpush1.xpose.msra.mxu0 0.0
        %2406 = vmatprep.subr.mxu0 0.0
        %2407 = vmatpush1.xpose.msra.mxu0 0.0
        %2408 = vmatprep.subr.mxu0 0.0
        %2409 = vmatpush1.xpose.msra.mxu0 0.0
        %2410 = vmatprep.subr.mxu0 0.0
        %2411 = vmatpush1.xpose.msra.mxu0 0.0
        %2412 = vmatprep.subr.mxu0 0.0
        %2413 = vmatpush1.xpose.msra.mxu0 0.0
        %2414 = vmatprep.subr.mxu0 0.0
        %2415 = vmatpush1.xpose.msra.mxu0 0.0
        %2416 = vmatprep.subr.mxu0 0.0
        %2417 = vmatpush1.xpose.msra.mxu0 0.0
        %2418 = vmatprep.subr.mxu0 0.0
        %2419 = vmatpush1.xpose.msra.mxu0 0.0
        %2420 = vmatprep.subr.mxu0 0.0
        %2421 = vmatpush1.xpose.msra.mxu0 0.0
        %v2422 = vand.u32 %v647, 4294901760
        %v2423 = vsub.f32 %v647, %v2422
        %v2424 = vand.u32 %v2423, 4294901760
        %2425 = vmatprep.subr.mxu0 %v2424
        %v2426 = vand.u32 %v645, 4294901760
        %v2427 = vsub.f32 %v645, %v2426
        %v2428 = vand.u32 %v2427, 4294901760
        %2429 = vmatpush1.xpose.msra.mxu0 %v2428
        %2430 = vmatprep.subr.mxu0 0.0
        %2431 = vmatpush2.xpose.msra.mxu0 0.0
        %2432 = vmatprep.subr.mxu0 0.0
        %2433 = vmatpush2.xpose.msra.mxu0 0.0
        %2434 = vmatprep.subr.mxu0 0.0
        %2435 = vmatpush2.xpose.msra.mxu0 0.0
        %2436 = vmatprep.subr.mxu0 0.0
        %2437 = vmatpush2.xpose.msra.mxu0 0.0
        %2438 = vmatprep.subr.mxu0 0.0
        %2439 = vmatpush2.xpose.msra.mxu0 0.0
        %2440 = vmatprep.subr.mxu0 0.0
        %2441 = vmatpush2.xpose.msra.mxu0 0.0
        %2442 = vmatprep.subr.mxu0 0.0
        %2443 = vmatpush2.xpose.msra.mxu0 0.0
        %2444 = vmatprep.subr.mxu0 0.0
        %2445 = vmatpush2.xpose.msra.mxu0 0.0
        %2446 = vmatprep.subr.mxu0 0.0
        %2447 = vmatpush2.xpose.msra.mxu0 0.0
        %2448 = vmatprep.subr.mxu0 0.0
        %2449 = vmatpush2.xpose.msra.mxu0 0.0
        %2450 = vmatprep.subr.mxu0 0.0
        %2451 = vmatpush2.xpose.msra.mxu0 0.0
        %2452 = vmatprep.subr.mxu0 0.0
        %2453 = vmatpush2.xpose.msra.mxu0 0.0
        %2454 = vmatprep.subr.mxu0 0.0
        %2455 = vmatpush2.xpose.msra.mxu0 0.0
        %2456 = vmatprep.subr.mxu0 0.0
        %2457 = vmatpush2.xpose.msra.mxu0 0.0
        %2458 = vmatprep.subr.mxu0 0.0
        %2459 = vmatpush2.xpose.msra.mxu0 0.0
        %2460 = vmatprep.subr.mxu0 0.0
        %2461 = vmatpush2.xpose.msra.mxu0 0.0
        %v2462 = vand.u32 %v609, 4294901760
        %2463 = vmatprep.mubr.f32.mxu0 %v2462
        %v2464 = vand.u32 %v608, 4294901760
        %2465 = vmatmul.mubr.f32.gmra.mxu0 %v2464
        %v2466 = vpop.f32.mrf.mxu0
        %v2467 = vadd.f32 %v2389, %v2466
        %v2468 = vpop.f32.mrf.mxu0
        %2469 = vdwg.mxu0
        %2470 = vmatprep.subr.mxu0 0.0
        %2471 = vmatpush1.xpose.msra.mxu0 0.0
        %2472 = vmatprep.subr.mxu0 0.0
        %2473 = vmatpush1.xpose.msra.mxu0 0.0
        %2474 = vmatprep.subr.mxu0 0.0
        %2475 = vmatpush1.xpose.msra.mxu0 0.0
        %2476 = vmatprep.subr.mxu0 0.0
        %2477 = vmatpush1.xpose.msra.mxu0 0.0
        %2478 = vmatprep.subr.mxu0 0.0
        %2479 = vmatpush1.xpose.msra.mxu0 0.0
        %2480 = vmatprep.subr.mxu0 0.0
        %2481 = vmatpush1.xpose.msra.mxu0 0.0
        %2482 = vmatprep.subr.mxu0 0.0
        %2483 = vmatpush1.xpose.msra.mxu0 0.0
        %2484 = vmatprep.subr.mxu0 0.0
        %2485 = vmatpush1.xpose.msra.mxu0 0.0
        %2486 = vmatprep.subr.mxu0 0.0
        %2487 = vmatpush1.xpose.msra.mxu0 0.0
        %2488 = vmatprep.subr.mxu0 0.0
        %2489 = vmatpush1.xpose.msra.mxu0 0.0
        %2490 = vmatprep.subr.mxu0 0.0
        %2491 = vmatpush1.xpose.msra.mxu0 0.0
        %2492 = vmatprep.subr.mxu0 0.0
        %2493 = vmatpush1.xpose.msra.mxu0 0.0
        %2494 = vmatprep.subr.mxu0 0.0
        %2495 = vmatpush1.xpose.msra.mxu0 0.0
        %2496 = vmatprep.subr.mxu0 0.0
        %2497 = vmatpush1.xpose.msra.mxu0 0.0
        %2498 = vmatprep.subr.mxu0 0.0
        %2499 = vmatpush1.xpose.msra.mxu0 0.0
        %v2500 = vand.u32 %v647, 4294901760
        %2501 = vmatprep.subr.mxu0 %v2500
        %v2502 = vand.u32 %v645, 4294901760
        %2503 = vmatpush1.xpose.msra.mxu0 %v2502
        %2504 = vmatprep.subr.mxu0 0.0
        %2505 = vmatpush2.xpose.msra.mxu0 0.0
        %2506 = vmatprep.subr.mxu0 0.0
        %2507 = vmatpush2.xpose.msra.mxu0 0.0
        %2508 = vmatprep.subr.mxu0 0.0
        %2509 = vmatpush2.xpose.msra.mxu0 0.0
        %2510 = vmatprep.subr.mxu0 0.0
        %2511 = vmatpush2.xpose.msra.mxu0 0.0
        %2512 = vmatprep.subr.mxu0 0.0
        %2513 = vmatpush2.xpose.msra.mxu0 0.0
        %2514 = vmatprep.subr.mxu0 0.0
        %2515 = vmatpush2.xpose.msra.mxu0 0.0
        %2516 = vmatprep.subr.mxu0 0.0
        %2517 = vmatpush2.xpose.msra.mxu0 0.0
        %2518 = vmatprep.subr.mxu0 0.0
        %2519 = vmatpush2.xpose.msra.mxu0 0.0
        %2520 = vmatprep.subr.mxu0 0.0
        %2521 = vmatpush2.xpose.msra.mxu0 0.0
        %2522 = vmatprep.subr.mxu0 0.0
        %2523 = vmatpush2.xpose.msra.mxu0 0.0
        %2524 = vmatprep.subr.mxu0 0.0
        %2525 = vmatpush2.xpose.msra.mxu0 0.0
        %2526 = vmatprep.subr.mxu0 0.0
        %2527 = vmatpush2.xpose.msra.mxu0 0.0
        %2528 = vmatprep.subr.mxu0 0.0
        %2529 = vmatpush2.xpose.msra.mxu0 0.0
        %2530 = vmatprep.subr.mxu0 0.0
        %2531 = vmatpush2.xpose.msra.mxu0 0.0
        %2532 = vmatprep.subr.mxu0 0.0
        %2533 = vmatpush2.xpose.msra.mxu0 0.0
        %2534 = vmatprep.subr.mxu0 0.0
        %2535 = vmatpush2.xpose.msra.mxu0 0.0
        %v2536 = vand.u32 %v609, 4294901760
        %2537 = vmatprep.mubr.f32.mxu0 %v2536
        %v2538 = vand.u32 %v608, 4294901760
        %2539 = vmatmul.mubr.f32.gmra.mxu0 %v2538
        %v2540 = vpop.f32.mrf.mxu0
        %v2541 = vadd.f32 %v2467, %v2540
        %v2542 = vpop.f32.mrf.mxu0
        %2543 = vdwg.mxu0
        %2544 = vmatprep.subr.mxu0 0.0
        %2545 = vmatpush1.xpose.msra.mxu0 0.0
        %2546 = vmatprep.subr.mxu0 0.0
        %2547 = vmatpush1.xpose.msra.mxu0 0.0
        %2548 = vmatprep.subr.mxu0 0.0
        %2549 = vmatpush1.xpose.msra.mxu0 0.0
        %2550 = vmatprep.subr.mxu0 0.0
        %2551 = vmatpush1.xpose.msra.mxu0 0.0
        %2552 = vmatprep.subr.mxu0 0.0
        %2553 = vmatpush1.xpose.msra.mxu0 0.0
        %2554 = vmatprep.subr.mxu0 0.0
        %2555 = vmatpush1.xpose.msra.mxu0 0.0
        %2556 = vmatprep.subr.mxu0 0.0
        %2557 = vmatpush1.xpose.msra.mxu0 0.0
        %2558 = vmatprep.subr.mxu0 0.0
        %2559 = vmatpush1.xpose.msra.mxu0 0.0
        %2560 = vmatprep.subr.mxu0 0.0
        %2561 = vmatpush1.xpose.msra.mxu0 0.0
        %2562 = vmatprep.subr.mxu0 0.0
        %2563 = vmatpush1.xpose.msra.mxu0 0.0
        %2564 = vmatprep.subr.mxu0 0.0
        %2565 = vmatpush1.xpose.msra.mxu0 0.0
        %2566 = vmatprep.subr.mxu0 0.0
        %2567 = vmatpush1.xpose.msra.mxu0 0.0
        %2568 = vmatprep.subr.mxu0 0.0
        %2569 = vmatpush1.xpose.msra.mxu0 0.0
        %2570 = vmatprep.subr.mxu0 0.0
        %2571 = vmatpush1.xpose.msra.mxu0 0.0
        %2572 = vmatprep.subr.mxu0 0.0
        %2573 = vmatpush1.xpose.msra.mxu0 0.0
        %v2574 = vand.u32 %v629, 4294901760
        %2575 = vmatprep.subr.mxu0 %v2574
        %v2576 = vand.u32 %v621, 4294901760
        %2577 = vmatpush1.xpose.msra.mxu0 %v2576
        %2578 = vmatprep.subr.mxu0 0.0
        %2579 = vmatpush2.xpose.msra.mxu0 0.0
        %2580 = vmatprep.subr.mxu0 0.0
        %2581 = vmatpush2.xpose.msra.mxu0 0.0
        %2582 = vmatprep.subr.mxu0 0.0
        %2583 = vmatpush2.xpose.msra.mxu0 0.0
        %2584 = vmatprep.subr.mxu0 0.0
        %2585 = vmatpush2.xpose.msra.mxu0 0.0
        %2586 = vmatprep.subr.mxu0 0.0
        %2587 = vmatpush2.xpose.msra.mxu0 0.0
        %2588 = vmatprep.subr.mxu0 0.0
        %2589 = vmatpush2.xpose.msra.mxu0 0.0
        %2590 = vmatprep.subr.mxu0 0.0
        %2591 = vmatpush2.xpose.msra.mxu0 0.0
        %2592 = vmatprep.subr.mxu0 0.0
        %2593 = vmatpush2.xpose.msra.mxu0 0.0
        %2594 = vmatprep.subr.mxu0 0.0
        %2595 = vmatpush2.xpose.msra.mxu0 0.0
        %2596 = vmatprep.subr.mxu0 0.0
        %2597 = vmatpush2.xpose.msra.mxu0 0.0
        %2598 = vmatprep.subr.mxu0 0.0
        %2599 = vmatpush2.xpose.msra.mxu0 0.0
        %2600 = vmatprep.subr.mxu0 0.0
        %2601 = vmatpush2.xpose.msra.mxu0 0.0
        %2602 = vmatprep.subr.mxu0 0.0
        %2603 = vmatpush2.xpose.msra.mxu0 0.0
        %2604 = vmatprep.subr.mxu0 0.0
        %2605 = vmatpush2.xpose.msra.mxu0 0.0
        %2606 = vmatprep.subr.mxu0 0.0
        %2607 = vmatpush2.xpose.msra.mxu0 0.0
        %2608 = vmatprep.subr.mxu0 0.0
        %2609 = vmatpush2.xpose.msra.mxu0 0.0
        %v2610 = vand.u32 %v594, 4294901760
        %v2611 = vsub.f32 %v594, %v2610
        %v2612 = vand.u32 %v2611, 4294901760
        %v2613 = vsub.f32 %v2611, %v2612
        %v2614 = vand.u32 %v2613, 4294901760
        %2615 = vmatprep.mubr.f32.mxu0 %v2614
        %v2616 = vand.u32 %v527, 4294901760
        %v2617 = vsub.f32 %v527, %v2616
        %v2618 = vand.u32 %v2617, 4294901760
        %v2619 = vsub.f32 %v2617, %v2618
        %v2620 = vand.u32 %v2619, 4294901760
        %2621 = vmatmul.mubr.f32.gmra.mxu0 %v2620
        %v2622 = vpop.f32.mrf.mxu0
        %v2623 = vadd.f32 0.0, %v2622
        %v2624 = vpop.f32.mrf.mxu0
        %2625 = vdwg.mxu0
        %2626 = vmatprep.subr.mxu0 0.0
        %2627 = vmatpush1.xpose.msra.mxu0 0.0
        %2628 = vmatprep.subr.mxu0 0.0
        %2629 = vmatpush1.xpose.msra.mxu0 0.0
        %2630 = vmatprep.subr.mxu0 0.0
        %2631 = vmatpush1.xpose.msra.mxu0 0.0
        %2632 = vmatprep.subr.mxu0 0.0
        %2633 = vmatpush1.xpose.msra.mxu0 0.0
        %2634 = vmatprep.subr.mxu0 0.0
        %2635 = vmatpush1.xpose.msra.mxu0 0.0
        %2636 = vmatprep.subr.mxu0 0.0
        %2637 = vmatpush1.xpose.msra.mxu0 0.0
        %2638 = vmatprep.subr.mxu0 0.0
        %2639 = vmatpush1.xpose.msra.mxu0 0.0
        %2640 = vmatprep.subr.mxu0 0.0
        %2641 = vmatpush1.xpose.msra.mxu0 0.0
        %2642 = vmatprep.subr.mxu0 0.0
        %2643 = vmatpush1.xpose.msra.mxu0 0.0
        %2644 = vmatprep.subr.mxu0 0.0
        %2645 = vmatpush1.xpose.msra.mxu0 0.0
        %2646 = vmatprep.subr.mxu0 0.0
        %2647 = vmatpush1.xpose.msra.mxu0 0.0
        %2648 = vmatprep.subr.mxu0 0.0
        %2649 = vmatpush1.xpose.msra.mxu0 0.0
        %2650 = vmatprep.subr.mxu0 0.0
        %2651 = vmatpush1.xpose.msra.mxu0 0.0
        %2652 = vmatprep.subr.mxu0 0.0
        %2653 = vmatpush1.xpose.msra.mxu0 0.0
        %2654 = vmatprep.subr.mxu0 0.0
        %2655 = vmatpush1.xpose.msra.mxu0 0.0
        %v2656 = vand.u32 %v629, 4294901760
        %v2657 = vsub.f32 %v629, %v2656
        %v2658 = vand.u32 %v2657, 4294901760
        %v2659 = vsub.f32 %v2657, %v2658
        %v2660 = vand.u32 %v2659, 4294901760
        %2661 = vmatprep.subr.mxu0 %v2660
        %v2662 = vand.u32 %v621, 4294901760
        %v2663 = vsub.f32 %v621, %v2662
        %v2664 = vand.u32 %v2663, 4294901760
        %v2665 = vsub.f32 %v2663, %v2664
        %v2666 = vand.u32 %v2665, 4294901760
        %2667 = vmatpush1.xpose.msra.mxu0 %v2666
        %2668 = vmatprep.subr.mxu0 0.0
        %2669 = vmatpush2.xpose.msra.mxu0 0.0
        %2670 = vmatprep.subr.mxu0 0.0
        %2671 = vmatpush2.xpose.msra.mxu0 0.0
        %2672 = vmatprep.subr.mxu0 0.0
        %2673 = vmatpush2.xpose.msra.mxu0 0.0
        %2674 = vmatprep.subr.mxu0 0.0
        %2675 = vmatpush2.xpose.msra.mxu0 0.0
        %2676 = vmatprep.subr.mxu0 0.0
        %2677 = vmatpush2.xpose.msra.mxu0 0.0
        %2678 = vmatprep.subr.mxu0 0.0
        %2679 = vmatpush2.xpose.msra.mxu0 0.0
        %2680 = vmatprep.subr.mxu0 0.0
        %2681 = vmatpush2.xpose.msra.mxu0 0.0
        %2682 = vmatprep.subr.mxu0 0.0
        %2683 = vmatpush2.xpose.msra.mxu0 0.0
        %2684 = vmatprep.subr.mxu0 0.0
        %2685 = vmatpush2.xpose.msra.mxu0 0.0
        %2686 = vmatprep.subr.mxu0 0.0
        %2687 = vmatpush2.xpose.msra.mxu0 0.0
        %2688 = vmatprep.subr.mxu0 0.0
        %2689 = vmatpush2.xpose.msra.mxu0 0.0
        %2690 = vmatprep.subr.mxu0 0.0
        %2691 = vmatpush2.xpose.msra.mxu0 0.0
        %2692 = vmatprep.subr.mxu0 0.0
        %2693 = vmatpush2.xpose.msra.mxu0 0.0
        %2694 = vmatprep.subr.mxu0 0.0
        %2695 = vmatpush2.xpose.msra.mxu0 0.0
        %2696 = vmatprep.subr.mxu0 0.0
        %2697 = vmatpush2.xpose.msra.mxu0 0.0
        %2698 = vmatprep.subr.mxu0 0.0
        %2699 = vmatpush2.xpose.msra.mxu0 0.0
        %v2700 = vand.u32 %v594, 4294901760
        %2701 = vmatprep.mubr.f32.mxu0 %v2700
        %v2702 = vand.u32 %v527, 4294901760
        %2703 = vmatmul.mubr.f32.gmra.mxu0 %v2702
        %v2704 = vpop.f32.mrf.mxu0
        %v2705 = vadd.f32 %v2623, %v2704
        %v2706 = vpop.f32.mrf.mxu0
        %2707 = vdwg.mxu0
        %2708 = vmatprep.subr.mxu0 0.0
        %2709 = vmatpush1.xpose.msra.mxu0 0.0
        %2710 = vmatprep.subr.mxu0 0.0
        %2711 = vmatpush1.xpose.msra.mxu0 0.0
        %2712 = vmatprep.subr.mxu0 0.0
        %2713 = vmatpush1.xpose.msra.mxu0 0.0
        %2714 = vmatprep.subr.mxu0 0.0
        %2715 = vmatpush1.xpose.msra.mxu0 0.0
        %2716 = vmatprep.subr.mxu0 0.0
        %2717 = vmatpush1.xpose.msra.mxu0 0.0
        %2718 = vmatprep.subr.mxu0 0.0
        %2719 = vmatpush1.xpose.msra.mxu0 0.0
        %2720 = vmatprep.subr.mxu0 0.0
        %2721 = vmatpush1.xpose.msra.mxu0 0.0
        %2722 = vmatprep.subr.mxu0 0.0
        %2723 = vmatpush1.xpose.msra.mxu0 0.0
        %2724 = vmatprep.subr.mxu0 0.0
        %2725 = vmatpush1.xpose.msra.mxu0 0.0
        %2726 = vmatprep.subr.mxu0 0.0
        %2727 = vmatpush1.xpose.msra.mxu0 0.0
        %2728 = vmatprep.subr.mxu0 0.0
        %2729 = vmatpush1.xpose.msra.mxu0 0.0
        %2730 = vmatprep.subr.mxu0 0.0
        %2731 = vmatpush1.xpose.msra.mxu0 0.0
        %2732 = vmatprep.subr.mxu0 0.0
        %2733 = vmatpush1.xpose.msra.mxu0 0.0
        %2734 = vmatprep.subr.mxu0 0.0
        %2735 = vmatpush1.xpose.msra.mxu0 0.0
        %2736 = vmatprep.subr.mxu0 0.0
        %2737 = vmatpush1.xpose.msra.mxu0 0.0
        %v2738 = vand.u32 %v629, 4294901760
        %v2739 = vsub.f32 %v629, %v2738
        %2740 = vmatprep.subr.mxu0 %v2739
        %v2741 = vand.u32 %v621, 4294901760
        %v2742 = vsub.f32 %v621, %v2741
        %2743 = vmatpush1.xpose.msra.mxu0 %v2742
        %2744 = vmatprep.subr.mxu0 0.0
        %2745 = vmatpush2.xpose.msra.mxu0 0.0
        %2746 = vmatprep.subr.mxu0 0.0
        %2747 = vmatpush2.xpose.msra.mxu0 0.0
        %2748 = vmatprep.subr.mxu0 0.0
        %2749 = vmatpush2.xpose.msra.mxu0 0.0
        %2750 = vmatprep.subr.mxu0 0.0
        %2751 = vmatpush2.xpose.msra.mxu0 0.0
        %2752 = vmatprep.subr.mxu0 0.0
        %2753 = vmatpush2.xpose.msra.mxu0 0.0
        %2754 = vmatprep.subr.mxu0 0.0
        %2755 = vmatpush2.xpose.msra.mxu0 0.0
        %2756 = vmatprep.subr.mxu0 0.0
        %2757 = vmatpush2.xpose.msra.mxu0 0.0
        %2758 = vmatprep.subr.mxu0 0.0
        %2759 = vmatpush2.xpose.msra.mxu0 0.0
        %2760 = vmatprep.subr.mxu0 0.0
        %2761 = vmatpush2.xpose.msra.mxu0 0.0
        %2762 = vmatprep.subr.mxu0 0.0
        %2763 = vmatpush2.xpose.msra.mxu0 0.0
        %2764 = vmatprep.subr.mxu0 0.0
        %2765 = vmatpush2.xpose.msra.mxu0 0.0
        %2766 = vmatprep.subr.mxu0 0.0
        %2767 = vmatpush2.xpose.msra.mxu0 0.0
        %2768 = vmatprep.subr.mxu0 0.0
        %2769 = vmatpush2.xpose.msra.mxu0 0.0
        %2770 = vmatprep.subr.mxu0 0.0
        %2771 = vmatpush2.xpose.msra.mxu0 0.0
        %2772 = vmatprep.subr.mxu0 0.0
        %2773 = vmatpush2.xpose.msra.mxu0 0.0
        %2774 = vmatprep.subr.mxu0 0.0
        %2775 = vmatpush2.xpose.msra.mxu0 0.0
        %v2776 = vand.u32 %v594, 4294901760
        %v2777 = vsub.f32 %v594, %v2776
        %2778 = vmatprep.mubr.f32.mxu0 %v2777
        %v2779 = vand.u32 %v527, 4294901760
        %v2780 = vsub.f32 %v527, %v2779
        %2781 = vmatmul.mubr.f32.gmra.mxu0 %v2780
        %v2782 = vpop.f32.mrf.mxu0
        %v2783 = vadd.f32 %v2705, %v2782
        %v2784 = vpop.f32.mrf.mxu0
        %2785 = vdwg.mxu0
        %2786 = vmatprep.subr.mxu0 0.0
        %2787 = vmatpush1.xpose.msra.mxu0 0.0
        %2788 = vmatprep.subr.mxu0 0.0
        %2789 = vmatpush1.xpose.msra.mxu0 0.0
        %2790 = vmatprep.subr.mxu0 0.0
        %2791 = vmatpush1.xpose.msra.mxu0 0.0
        %2792 = vmatprep.subr.mxu0 0.0
        %2793 = vmatpush1.xpose.msra.mxu0 0.0
        %2794 = vmatprep.subr.mxu0 0.0
        %2795 = vmatpush1.xpose.msra.mxu0 0.0
        %2796 = vmatprep.subr.mxu0 0.0
        %2797 = vmatpush1.xpose.msra.mxu0 0.0
        %2798 = vmatprep.subr.mxu0 0.0
        %2799 = vmatpush1.xpose.msra.mxu0 0.0
        %2800 = vmatprep.subr.mxu0 0.0
        %2801 = vmatpush1.xpose.msra.mxu0 0.0
        %2802 = vmatprep.subr.mxu0 0.0
        %2803 = vmatpush1.xpose.msra.mxu0 0.0
        %2804 = vmatprep.subr.mxu0 0.0
        %2805 = vmatpush1.xpose.msra.mxu0 0.0
        %2806 = vmatprep.subr.mxu0 0.0
        %2807 = vmatpush1.xpose.msra.mxu0 0.0
        %2808 = vmatprep.subr.mxu0 0.0
        %2809 = vmatpush1.xpose.msra.mxu0 0.0
        %2810 = vmatprep.subr.mxu0 0.0
        %2811 = vmatpush1.xpose.msra.mxu0 0.0
        %2812 = vmatprep.subr.mxu0 0.0
        %2813 = vmatpush1.xpose.msra.mxu0 0.0
        %2814 = vmatprep.subr.mxu0 0.0
        %2815 = vmatpush1.xpose.msra.mxu0 0.0
        %v2816 = vand.u32 %v629, 4294901760
        %2817 = vmatprep.subr.mxu0 %v2816
        %v2818 = vand.u32 %v621, 4294901760
        %2819 = vmatpush1.xpose.msra.mxu0 %v2818
        %2820 = vmatprep.subr.mxu0 0.0
        %2821 = vmatpush2.xpose.msra.mxu0 0.0
        %2822 = vmatprep.subr.mxu0 0.0
        %2823 = vmatpush2.xpose.msra.mxu0 0.0
        %2824 = vmatprep.subr.mxu0 0.0
        %2825 = vmatpush2.xpose.msra.mxu0 0.0
        %2826 = vmatprep.subr.mxu0 0.0
        %2827 = vmatpush2.xpose.msra.mxu0 0.0
        %2828 = vmatprep.subr.mxu0 0.0
        %2829 = vmatpush2.xpose.msra.mxu0 0.0
        %2830 = vmatprep.subr.mxu0 0.0
        %2831 = vmatpush2.xpose.msra.mxu0 0.0
        %2832 = vmatprep.subr.mxu0 0.0
        %2833 = vmatpush2.xpose.msra.mxu0 0.0
        %2834 = vmatprep.subr.mxu0 0.0
        %2835 = vmatpush2.xpose.msra.mxu0 0.0
        %2836 = vmatprep.subr.mxu0 0.0
        %2837 = vmatpush2.xpose.msra.mxu0 0.0
        %2838 = vmatprep.subr.mxu0 0.0
        %2839 = vmatpush2.xpose.msra.mxu0 0.0
        %2840 = vmatprep.subr.mxu0 0.0
        %2841 = vmatpush2.xpose.msra.mxu0 0.0
        %2842 = vmatprep.subr.mxu0 0.0
        %2843 = vmatpush2.xpose.msra.mxu0 0.0
        %2844 = vmatprep.subr.mxu0 0.0
        %2845 = vmatpush2.xpose.msra.mxu0 0.0
        %2846 = vmatprep.subr.mxu0 0.0
        %2847 = vmatpush2.xpose.msra.mxu0 0.0
        %2848 = vmatprep.subr.mxu0 0.0
        %2849 = vmatpush2.xpose.msra.mxu0 0.0
        %2850 = vmatprep.subr.mxu0 0.0
        %2851 = vmatpush2.xpose.msra.mxu0 0.0
        %v2852 = vand.u32 %v594, 4294901760
        %v2853 = vsub.f32 %v594, %v2852
        %v2854 = vand.u32 %v2853, 4294901760
        %2855 = vmatprep.mubr.f32.mxu0 %v2854
        %v2856 = vand.u32 %v527, 4294901760
        %v2857 = vsub.f32 %v527, %v2856
        %v2858 = vand.u32 %v2857, 4294901760
        %2859 = vmatmul.mubr.f32.gmra.mxu0 %v2858
        %v2860 = vpop.f32.mrf.mxu0
        %v2861 = vadd.f32 %v2783, %v2860
        %v2862 = vpop.f32.mrf.mxu0
        %2863 = vdwg.mxu0
        %2864 = vmatprep.subr.mxu0 0.0
        %2865 = vmatpush1.xpose.msra.mxu0 0.0
        %2866 = vmatprep.subr.mxu0 0.0
        %2867 = vmatpush1.xpose.msra.mxu0 0.0
        %2868 = vmatprep.subr.mxu0 0.0
        %2869 = vmatpush1.xpose.msra.mxu0 0.0
        %2870 = vmatprep.subr.mxu0 0.0
        %2871 = vmatpush1.xpose.msra.mxu0 0.0
        %2872 = vmatprep.subr.mxu0 0.0
        %2873 = vmatpush1.xpose.msra.mxu0 0.0
        %2874 = vmatprep.subr.mxu0 0.0
        %2875 = vmatpush1.xpose.msra.mxu0 0.0
        %2876 = vmatprep.subr.mxu0 0.0
        %2877 = vmatpush1.xpose.msra.mxu0 0.0
        %2878 = vmatprep.subr.mxu0 0.0
        %2879 = vmatpush1.xpose.msra.mxu0 0.0
        %2880 = vmatprep.subr.mxu0 0.0
        %2881 = vmatpush1.xpose.msra.mxu0 0.0
        %2882 = vmatprep.subr.mxu0 0.0
        %2883 = vmatpush1.xpose.msra.mxu0 0.0
        %2884 = vmatprep.subr.mxu0 0.0
        %2885 = vmatpush1.xpose.msra.mxu0 0.0
        %2886 = vmatprep.subr.mxu0 0.0
        %2887 = vmatpush1.xpose.msra.mxu0 0.0
        %2888 = vmatprep.subr.mxu0 0.0
        %2889 = vmatpush1.xpose.msra.mxu0 0.0
        %2890 = vmatprep.subr.mxu0 0.0
        %2891 = vmatpush1.xpose.msra.mxu0 0.0
        %2892 = vmatprep.subr.mxu0 0.0
        %2893 = vmatpush1.xpose.msra.mxu0 0.0
        %v2894 = vand.u32 %v629, 4294901760
        %v2895 = vsub.f32 %v629, %v2894
        %v2896 = vand.u32 %v2895, 4294901760
        %2897 = vmatprep.subr.mxu0 %v2896
        %v2898 = vand.u32 %v621, 4294901760
        %v2899 = vsub.f32 %v621, %v2898
        %v2900 = vand.u32 %v2899, 4294901760
        %2901 = vmatpush1.xpose.msra.mxu0 %v2900
        %2902 = vmatprep.subr.mxu0 0.0
        %2903 = vmatpush2.xpose.msra.mxu0 0.0
        %2904 = vmatprep.subr.mxu0 0.0
        %2905 = vmatpush2.xpose.msra.mxu0 0.0
        %2906 = vmatprep.subr.mxu0 0.0
        %2907 = vmatpush2.xpose.msra.mxu0 0.0
        %2908 = vmatprep.subr.mxu0 0.0
        %2909 = vmatpush2.xpose.msra.mxu0 0.0
        %2910 = vmatprep.subr.mxu0 0.0
        %2911 = vmatpush2.xpose.msra.mxu0 0.0
        %2912 = vmatprep.subr.mxu0 0.0
        %2913 = vmatpush2.xpose.msra.mxu0 0.0
        %2914 = vmatprep.subr.mxu0 0.0
        %2915 = vmatpush2.xpose.msra.mxu0 0.0
        %2916 = vmatprep.subr.mxu0 0.0
        %2917 = vmatpush2.xpose.msra.mxu0 0.0
        %2918 = vmatprep.subr.mxu0 0.0
        %2919 = vmatpush2.xpose.msra.mxu0 0.0
        %2920 = vmatprep.subr.mxu0 0.0
        %2921 = vmatpush2.xpose.msra.mxu0 0.0
        %2922 = vmatprep.subr.mxu0 0.0
        %2923 = vmatpush2.xpose.msra.mxu0 0.0
        %2924 = vmatprep.subr.mxu0 0.0
        %2925 = vmatpush2.xpose.msra.mxu0 0.0
        %2926 = vmatprep.subr.mxu0 0.0
        %2927 = vmatpush2.xpose.msra.mxu0 0.0
        %2928 = vmatprep.subr.mxu0 0.0
        %2929 = vmatpush2.xpose.msra.mxu0 0.0
        %2930 = vmatprep.subr.mxu0 0.0
        %2931 = vmatpush2.xpose.msra.mxu0 0.0
        %2932 = vmatprep.subr.mxu0 0.0
        %2933 = vmatpush2.xpose.msra.mxu0 0.0
        %v2934 = vand.u32 %v594, 4294901760
        %2935 = vmatprep.mubr.f32.mxu0 %v2934
        %v2936 = vand.u32 %v527, 4294901760
        %2937 = vmatmul.mubr.f32.gmra.mxu0 %v2936
        %v2938 = vpop.f32.mrf.mxu0
        %v2939 = vadd.f32 %v2861, %v2938
        %v2940 = vpop.f32.mrf.mxu0
        %2941 = vdwg.mxu0
        %2942 = vmatprep.subr.mxu0 0.0
        %2943 = vmatpush1.xpose.msra.mxu0 0.0
        %2944 = vmatprep.subr.mxu0 0.0
        %2945 = vmatpush1.xpose.msra.mxu0 0.0
        %2946 = vmatprep.subr.mxu0 0.0
        %2947 = vmatpush1.xpose.msra.mxu0 0.0
        %2948 = vmatprep.subr.mxu0 0.0
        %2949 = vmatpush1.xpose.msra.mxu0 0.0
        %2950 = vmatprep.subr.mxu0 0.0
        %2951 = vmatpush1.xpose.msra.mxu0 0.0
        %2952 = vmatprep.subr.mxu0 0.0
        %2953 = vmatpush1.xpose.msra.mxu0 0.0
        %2954 = vmatprep.subr.mxu0 0.0
        %2955 = vmatpush1.xpose.msra.mxu0 0.0
        %2956 = vmatprep.subr.mxu0 0.0
        %2957 = vmatpush1.xpose.msra.mxu0 0.0
        %2958 = vmatprep.subr.mxu0 0.0
        %2959 = vmatpush1.xpose.msra.mxu0 0.0
        %2960 = vmatprep.subr.mxu0 0.0
        %2961 = vmatpush1.xpose.msra.mxu0 0.0
        %2962 = vmatprep.subr.mxu0 0.0
        %2963 = vmatpush1.xpose.msra.mxu0 0.0
        %2964 = vmatprep.subr.mxu0 0.0
        %2965 = vmatpush1.xpose.msra.mxu0 0.0
        %2966 = vmatprep.subr.mxu0 0.0
        %2967 = vmatpush1.xpose.msra.mxu0 0.0
        %2968 = vmatprep.subr.mxu0 0.0
        %2969 = vmatpush1.xpose.msra.mxu0 0.0
        %2970 = vmatprep.subr.mxu0 0.0
        %2971 = vmatpush1.xpose.msra.mxu0 0.0
        %v2972 = vand.u32 %v629, 4294901760
        %2973 = vmatprep.subr.mxu0 %v2972
        %v2974 = vand.u32 %v621, 4294901760
        %2975 = vmatpush1.xpose.msra.mxu0 %v2974
        %2976 = vmatprep.subr.mxu0 0.0
        %2977 = vmatpush2.xpose.msra.mxu0 0.0
        %2978 = vmatprep.subr.mxu0 0.0
        %2979 = vmatpush2.xpose.msra.mxu0 0.0
        %2980 = vmatprep.subr.mxu0 0.0
        %2981 = vmatpush2.xpose.msra.mxu0 0.0
        %2982 = vmatprep.subr.mxu0 0.0
        %2983 = vmatpush2.xpose.msra.mxu0 0.0
        %2984 = vmatprep.subr.mxu0 0.0
        %2985 = vmatpush2.xpose.msra.mxu0 0.0
        %2986 = vmatprep.subr.mxu0 0.0
        %2987 = vmatpush2.xpose.msra.mxu0 0.0
        %2988 = vmatprep.subr.mxu0 0.0
        %2989 = vmatpush2.xpose.msra.mxu0 0.0
        %2990 = vmatprep.subr.mxu0 0.0
        %2991 = vmatpush2.xpose.msra.mxu0 0.0
        %2992 = vmatprep.subr.mxu0 0.0
        %2993 = vmatpush2.xpose.msra.mxu0 0.0
        %2994 = vmatprep.subr.mxu0 0.0
        %2995 = vmatpush2.xpose.msra.mxu0 0.0
        %2996 = vmatprep.subr.mxu0 0.0
        %2997 = vmatpush2.xpose.msra.mxu0 0.0
        %2998 = vmatprep.subr.mxu0 0.0
        %2999 = vmatpush2.xpose.msra.mxu0 0.0
        %3000 = vmatprep.subr.mxu0 0.0
        %3001 = vmatpush2.xpose.msra.mxu0 0.0
        %3002 = vmatprep.subr.mxu0 0.0
        %3003 = vmatpush2.xpose.msra.mxu0 0.0
        %3004 = vmatprep.subr.mxu0 0.0
        %3005 = vmatpush2.xpose.msra.mxu0 0.0
        %3006 = vmatprep.subr.mxu0 0.0
        %3007 = vmatpush2.xpose.msra.mxu0 0.0
        %v3008 = vand.u32 %v594, 4294901760
        %3009 = vmatprep.mubr.f32.mxu0 %v3008
        %v3010 = vand.u32 %v527, 4294901760
        %3011 = vmatmul.mubr.f32.gmra.mxu0 %v3010
        %v3012 = vpop.f32.mrf.mxu0
        %v3013 = vadd.f32 %v2939, %v3012
        %v3014 = vpop.f32.mrf.mxu0
        %3015 = vdwg.mxu0
        %3016 = vmatprep.subr.mxu0 0.0
        %3017 = vmatpush1.xpose.msra.mxu0 0.0
        %3018 = vmatprep.subr.mxu0 0.0
        %3019 = vmatpush1.xpose.msra.mxu0 0.0
        %3020 = vmatprep.subr.mxu0 0.0
        %3021 = vmatpush1.xpose.msra.mxu0 0.0
        %3022 = vmatprep.subr.mxu0 0.0
        %3023 = vmatpush1.xpose.msra.mxu0 0.0
        %3024 = vmatprep.subr.mxu0 0.0
        %3025 = vmatpush1.xpose.msra.mxu0 0.0
        %3026 = vmatprep.subr.mxu0 0.0
        %3027 = vmatpush1.xpose.msra.mxu0 0.0
        %3028 = vmatprep.subr.mxu0 0.0
        %3029 = vmatpush1.xpose.msra.mxu0 0.0
        %3030 = vmatprep.subr.mxu0 0.0
        %3031 = vmatpush1.xpose.msra.mxu0 0.0
        %3032 = vmatprep.subr.mxu0 0.0
        %3033 = vmatpush1.xpose.msra.mxu0 0.0
        %3034 = vmatprep.subr.mxu0 0.0
        %3035 = vmatpush1.xpose.msra.mxu0 0.0
        %3036 = vmatprep.subr.mxu0 0.0
        %3037 = vmatpush1.xpose.msra.mxu0 0.0
        %3038 = vmatprep.subr.mxu0 0.0
        %3039 = vmatpush1.xpose.msra.mxu0 0.0
        %3040 = vmatprep.subr.mxu0 0.0
        %3041 = vmatpush1.xpose.msra.mxu0 0.0
        %3042 = vmatprep.subr.mxu0 0.0
        %3043 = vmatpush1.xpose.msra.mxu0 0.0
        %3044 = vmatprep.subr.mxu0 0.0
        %3045 = vmatpush1.xpose.msra.mxu0 0.0
        %v3046 = vand.u32 %v630, 4294901760
        %3047 = vmatprep.subr.mxu0 %v3046
        %v3048 = vand.u32 %v628, 4294901760
        %3049 = vmatpush1.xpose.msra.mxu0 %v3048
        %3050 = vmatprep.subr.mxu0 0.0
        %3051 = vmatpush2.xpose.msra.mxu0 0.0
        %3052 = vmatprep.subr.mxu0 0.0
        %3053 = vmatpush2.xpose.msra.mxu0 0.0
        %3054 = vmatprep.subr.mxu0 0.0
        %3055 = vmatpush2.xpose.msra.mxu0 0.0
        %3056 = vmatprep.subr.mxu0 0.0
        %3057 = vmatpush2.xpose.msra.mxu0 0.0
        %3058 = vmatprep.subr.mxu0 0.0
        %3059 = vmatpush2.xpose.msra.mxu0 0.0
        %3060 = vmatprep.subr.mxu0 0.0
        %3061 = vmatpush2.xpose.msra.mxu0 0.0
        %3062 = vmatprep.subr.mxu0 0.0
        %3063 = vmatpush2.xpose.msra.mxu0 0.0
        %3064 = vmatprep.subr.mxu0 0.0
        %3065 = vmatpush2.xpose.msra.mxu0 0.0
        %3066 = vmatprep.subr.mxu0 0.0
        %3067 = vmatpush2.xpose.msra.mxu0 0.0
        %3068 = vmatprep.subr.mxu0 0.0
        %3069 = vmatpush2.xpose.msra.mxu0 0.0
        %3070 = vmatprep.subr.mxu0 0.0
        %3071 = vmatpush2.xpose.msra.mxu0 0.0
        %3072 = vmatprep.subr.mxu0 0.0
        %3073 = vmatpush2.xpose.msra.mxu0 0.0
        %3074 = vmatprep.subr.mxu0 0.0
        %3075 = vmatpush2.xpose.msra.mxu0 0.0
        %3076 = vmatprep.subr.mxu0 0.0
        %3077 = vmatpush2.xpose.msra.mxu0 0.0
        %3078 = vmatprep.subr.mxu0 0.0
        %3079 = vmatpush2.xpose.msra.mxu0 0.0
        %3080 = vmatprep.subr.mxu0 0.0
        %3081 = vmatpush2.xpose.msra.mxu0 0.0
        %v3082 = vand.u32 %v595, 4294901760
        %v3083 = vsub.f32 %v595, %v3082
        %v3084 = vand.u32 %v3083, 4294901760
        %v3085 = vsub.f32 %v3083, %v3084
        %v3086 = vand.u32 %v3085, 4294901760
        %3087 = vmatprep.mubr.f32.mxu0 %v3086
        %v3088 = vand.u32 %v528, 4294901760
        %v3089 = vsub.f32 %v528, %v3088
        %v3090 = vand.u32 %v3089, 4294901760
        %v3091 = vsub.f32 %v3089, %v3090
        %v3092 = vand.u32 %v3091, 4294901760
        %3093 = vmatmul.mubr.f32.gmra.mxu0 %v3092
        %v3094 = vpop.f32.mrf.mxu0
        %v3095 = vadd.f32 %v3013, %v3094
        %v3096 = vpop.f32.mrf.mxu0
        %3097 = vdwg.mxu0
        %3098 = vmatprep.subr.mxu0 0.0
        %3099 = vmatpush1.xpose.msra.mxu0 0.0
        %3100 = vmatprep.subr.mxu0 0.0
        %3101 = vmatpush1.xpose.msra.mxu0 0.0
        %3102 = vmatprep.subr.mxu0 0.0
        %3103 = vmatpush1.xpose.msra.mxu0 0.0
        %3104 = vmatprep.subr.mxu0 0.0
        %3105 = vmatpush1.xpose.msra.mxu0 0.0
        %3106 = vmatprep.subr.mxu0 0.0
        %3107 = vmatpush1.xpose.msra.mxu0 0.0
        %3108 = vmatprep.subr.mxu0 0.0
        %3109 = vmatpush1.xpose.msra.mxu0 0.0
        %3110 = vmatprep.subr.mxu0 0.0
        %3111 = vmatpush1.xpose.msra.mxu0 0.0
        %3112 = vmatprep.subr.mxu0 0.0
        %3113 = vmatpush1.xpose.msra.mxu0 0.0
        %3114 = vmatprep.subr.mxu0 0.0
        %3115 = vmatpush1.xpose.msra.mxu0 0.0
        %3116 = vmatprep.subr.mxu0 0.0
        %3117 = vmatpush1.xpose.msra.mxu0 0.0
        %3118 = vmatprep.subr.mxu0 0.0
        %3119 = vmatpush1.xpose.msra.mxu0 0.0
        %3120 = vmatprep.subr.mxu0 0.0
        %3121 = vmatpush1.xpose.msra.mxu0 0.0
        %3122 = vmatprep.subr.mxu0 0.0
        %3123 = vmatpush1.xpose.msra.mxu0 0.0
        %3124 = vmatprep.subr.mxu0 0.0
        %3125 = vmatpush1.xpose.msra.mxu0 0.0
        %3126 = vmatprep.subr.mxu0 0.0
        %3127 = vmatpush1.xpose.msra.mxu0 0.0
        %v3128 = vand.u32 %v630, 4294901760
        %v3129 = vsub.f32 %v630, %v3128
        %v3130 = vand.u32 %v3129, 4294901760
        %v3131 = vsub.f32 %v3129, %v3130
        %v3132 = vand.u32 %v3131, 4294901760
        %3133 = vmatprep.subr.mxu0 %v3132
        %v3134 = vand.u32 %v628, 4294901760
        %v3135 = vsub.f32 %v628, %v3134
        %v3136 = vand.u32 %v3135, 4294901760
        %v3137 = vsub.f32 %v3135, %v3136
        %v3138 = vand.u32 %v3137, 4294901760
        %3139 = vmatpush1.xpose.msra.mxu0 %v3138
        %3140 = vmatprep.subr.mxu0 0.0
        %3141 = vmatpush2.xpose.msra.mxu0 0.0
        %3142 = vmatprep.subr.mxu0 0.0
        %3143 = vmatpush2.xpose.msra.mxu0 0.0
        %3144 = vmatprep.subr.mxu0 0.0
        %3145 = vmatpush2.xpose.msra.mxu0 0.0
        %3146 = vmatprep.subr.mxu0 0.0
        %3147 = vmatpush2.xpose.msra.mxu0 0.0
        %3148 = vmatprep.subr.mxu0 0.0
        %3149 = vmatpush2.xpose.msra.mxu0 0.0
        %3150 = vmatprep.subr.mxu0 0.0
        %3151 = vmatpush2.xpose.msra.mxu0 0.0
        %3152 = vmatprep.subr.mxu0 0.0
        %3153 = vmatpush2.xpose.msra.mxu0 0.0
        %3154 = vmatprep.subr.mxu0 0.0
        %3155 = vmatpush2.xpose.msra.mxu0 0.0
        %3156 = vmatprep.subr.mxu0 0.0
        %3157 = vmatpush2.xpose.msra.mxu0 0.0
        %3158 = vmatprep.subr.mxu0 0.0
        %3159 = vmatpush2.xpose.msra.mxu0 0.0
        %3160 = vmatprep.subr.mxu0 0.0
        %3161 = vmatpush2.xpose.msra.mxu0 0.0
        %3162 = vmatprep.subr.mxu0 0.0
        %3163 = vmatpush2.xpose.msra.mxu0 0.0
        %3164 = vmatprep.subr.mxu0 0.0
        %3165 = vmatpush2.xpose.msra.mxu0 0.0
        %3166 = vmatprep.subr.mxu0 0.0
        %3167 = vmatpush2.xpose.msra.mxu0 0.0
        %3168 = vmatprep.subr.mxu0 0.0
        %3169 = vmatpush2.xpose.msra.mxu0 0.0
        %3170 = vmatprep.subr.mxu0 0.0
        %3171 = vmatpush2.xpose.msra.mxu0 0.0
        %v3172 = vand.u32 %v595, 4294901760
        %3173 = vmatprep.mubr.f32.mxu0 %v3172
        %v3174 = vand.u32 %v528, 4294901760
        %3175 = vmatmul.mubr.f32.gmra.mxu0 %v3174
        %v3176 = vpop.f32.mrf.mxu0
        %v3177 = vadd.f32 %v3095, %v3176
        %v3178 = vpop.f32.mrf.mxu0
        %3179 = vdwg.mxu0
        %3180 = vmatprep.subr.mxu0 0.0
        %3181 = vmatpush1.xpose.msra.mxu0 0.0
        %3182 = vmatprep.subr.mxu0 0.0
        %3183 = vmatpush1.xpose.msra.mxu0 0.0
        %3184 = vmatprep.subr.mxu0 0.0
        %3185 = vmatpush1.xpose.msra.mxu0 0.0
        %3186 = vmatprep.subr.mxu0 0.0
        %3187 = vmatpush1.xpose.msra.mxu0 0.0
        %3188 = vmatprep.subr.mxu0 0.0
        %3189 = vmatpush1.xpose.msra.mxu0 0.0
        %3190 = vmatprep.subr.mxu0 0.0
        %3191 = vmatpush1.xpose.msra.mxu0 0.0
        %3192 = vmatprep.subr.mxu0 0.0
        %3193 = vmatpush1.xpose.msra.mxu0 0.0
        %3194 = vmatprep.subr.mxu0 0.0
        %3195 = vmatpush1.xpose.msra.mxu0 0.0
        %3196 = vmatprep.subr.mxu0 0.0
        %3197 = vmatpush1.xpose.msra.mxu0 0.0
        %3198 = vmatprep.subr.mxu0 0.0
        %3199 = vmatpush1.xpose.msra.mxu0 0.0
        %3200 = vmatprep.subr.mxu0 0.0
        %3201 = vmatpush1.xpose.msra.mxu0 0.0
        %3202 = vmatprep.subr.mxu0 0.0
        %3203 = vmatpush1.xpose.msra.mxu0 0.0
        %3204 = vmatprep.subr.mxu0 0.0
        %3205 = vmatpush1.xpose.msra.mxu0 0.0
        %3206 = vmatprep.subr.mxu0 0.0
        %3207 = vmatpush1.xpose.msra.mxu0 0.0
        %3208 = vmatprep.subr.mxu0 0.0
        %3209 = vmatpush1.xpose.msra.mxu0 0.0
        %v3210 = vand.u32 %v630, 4294901760
        %v3211 = vsub.f32 %v630, %v3210
        %3212 = vmatprep.subr.mxu0 %v3211
        %v3213 = vand.u32 %v628, 4294901760
        %v3214 = vsub.f32 %v628, %v3213
        %3215 = vmatpush1.xpose.msra.mxu0 %v3214
        %3216 = vmatprep.subr.mxu0 0.0
        %3217 = vmatpush2.xpose.msra.mxu0 0.0
        %3218 = vmatprep.subr.mxu0 0.0
        %3219 = vmatpush2.xpose.msra.mxu0 0.0
        %3220 = vmatprep.subr.mxu0 0.0
        %3221 = vmatpush2.xpose.msra.mxu0 0.0
        %3222 = vmatprep.subr.mxu0 0.0
        %3223 = vmatpush2.xpose.msra.mxu0 0.0
        %3224 = vmatprep.subr.mxu0 0.0
        %3225 = vmatpush2.xpose.msra.mxu0 0.0
        %3226 = vmatprep.subr.mxu0 0.0
        %3227 = vmatpush2.xpose.msra.mxu0 0.0
        %3228 = vmatprep.subr.mxu0 0.0
        %3229 = vmatpush2.xpose.msra.mxu0 0.0
        %3230 = vmatprep.subr.mxu0 0.0
        %3231 = vmatpush2.xpose.msra.mxu0 0.0
        %3232 = vmatprep.subr.mxu0 0.0
        %3233 = vmatpush2.xpose.msra.mxu0 0.0
        %3234 = vmatprep.subr.mxu0 0.0
        %3235 = vmatpush2.xpose.msra.mxu0 0.0
        %3236 = vmatprep.subr.mxu0 0.0
        %3237 = vmatpush2.xpose.msra.mxu0 0.0
        %3238 = vmatprep.subr.mxu0 0.0
        %3239 = vmatpush2.xpose.msra.mxu0 0.0
        %3240 = vmatprep.subr.mxu0 0.0
        %3241 = vmatpush2.xpose.msra.mxu0 0.0
        %3242 = vmatprep.subr.mxu0 0.0
        %3243 = vmatpush2.xpose.msra.mxu0 0.0
        %3244 = vmatprep.subr.mxu0 0.0
        %3245 = vmatpush2.xpose.msra.mxu0 0.0
        %3246 = vmatprep.subr.mxu0 0.0
        %3247 = vmatpush2.xpose.msra.mxu0 0.0
        %v3248 = vand.u32 %v595, 4294901760
        %v3249 = vsub.f32 %v595, %v3248
        %3250 = vmatprep.mubr.f32.mxu0 %v3249
        %v3251 = vand.u32 %v528, 4294901760
        %v3252 = vsub.f32 %v528, %v3251
        %3253 = vmatmul.mubr.f32.gmra.mxu0 %v3252
        %v3254 = vpop.f32.mrf.mxu0
        %v3255 = vadd.f32 %v3177, %v3254
        %v3256 = vpop.f32.mrf.mxu0
        %3257 = vdwg.mxu0
        %3258 = vmatprep.subr.mxu0 0.0
        %3259 = vmatpush1.xpose.msra.mxu0 0.0
        %3260 = vmatprep.subr.mxu0 0.0
        %3261 = vmatpush1.xpose.msra.mxu0 0.0
        %3262 = vmatprep.subr.mxu0 0.0
        %3263 = vmatpush1.xpose.msra.mxu0 0.0
        %3264 = vmatprep.subr.mxu0 0.0
        %3265 = vmatpush1.xpose.msra.mxu0 0.0
        %3266 = vmatprep.subr.mxu0 0.0
        %3267 = vmatpush1.xpose.msra.mxu0 0.0
        %3268 = vmatprep.subr.mxu0 0.0
        %3269 = vmatpush1.xpose.msra.mxu0 0.0
        %3270 = vmatprep.subr.mxu0 0.0
        %3271 = vmatpush1.xpose.msra.mxu0 0.0
        %3272 = vmatprep.subr.mxu0 0.0
        %3273 = vmatpush1.xpose.msra.mxu0 0.0
        %3274 = vmatprep.subr.mxu0 0.0
        %3275 = vmatpush1.xpose.msra.mxu0 0.0
        %3276 = vmatprep.subr.mxu0 0.0
        %3277 = vmatpush1.xpose.msra.mxu0 0.0
        %3278 = vmatprep.subr.mxu0 0.0
        %3279 = vmatpush1.xpose.msra.mxu0 0.0
        %3280 = vmatprep.subr.mxu0 0.0
        %3281 = vmatpush1.xpose.msra.mxu0 0.0
        %3282 = vmatprep.subr.mxu0 0.0
        %3283 = vmatpush1.xpose.msra.mxu0 0.0
        %3284 = vmatprep.subr.mxu0 0.0
        %3285 = vmatpush1.xpose.msra.mxu0 0.0
        %3286 = vmatprep.subr.mxu0 0.0
        %3287 = vmatpush1.xpose.msra.mxu0 0.0
        %v3288 = vand.u32 %v630, 4294901760
        %3289 = vmatprep.subr.mxu0 %v3288
        %v3290 = vand.u32 %v628, 4294901760
        %3291 = vmatpush1.xpose.msra.mxu0 %v3290
        %3292 = vmatprep.subr.mxu0 0.0
        %3293 = vmatpush2.xpose.msra.mxu0 0.0
        %3294 = vmatprep.subr.mxu0 0.0
        %3295 = vmatpush2.xpose.msra.mxu0 0.0
        %3296 = vmatprep.subr.mxu0 0.0
        %3297 = vmatpush2.xpose.msra.mxu0 0.0
        %3298 = vmatprep.subr.mxu0 0.0
        %3299 = vmatpush2.xpose.msra.mxu0 0.0
        %3300 = vmatprep.subr.mxu0 0.0
        %3301 = vmatpush2.xpose.msra.mxu0 0.0
        %3302 = vmatprep.subr.mxu0 0.0
        %3303 = vmatpush2.xpose.msra.mxu0 0.0
        %3304 = vmatprep.subr.mxu0 0.0
        %3305 = vmatpush2.xpose.msra.mxu0 0.0
        %3306 = vmatprep.subr.mxu0 0.0
        %3307 = vmatpush2.xpose.msra.mxu0 0.0
        %3308 = vmatprep.subr.mxu0 0.0
        %3309 = vmatpush2.xpose.msra.mxu0 0.0
        %3310 = vmatprep.subr.mxu0 0.0
        %3311 = vmatpush2.xpose.msra.mxu0 0.0
        %3312 = vmatprep.subr.mxu0 0.0
        %3313 = vmatpush2.xpose.msra.mxu0 0.0
        %3314 = vmatprep.subr.mxu0 0.0
        %3315 = vmatpush2.xpose.msra.mxu0 0.0
        %3316 = vmatprep.subr.mxu0 0.0
        %3317 = vmatpush2.xpose.msra.mxu0 0.0
        %3318 = vmatprep.subr.mxu0 0.0
        %3319 = vmatpush2.xpose.msra.mxu0 0.0
        %3320 = vmatprep.subr.mxu0 0.0
        %3321 = vmatpush2.xpose.msra.mxu0 0.0
        %3322 = vmatprep.subr.mxu0 0.0
        %3323 = vmatpush2.xpose.msra.mxu0 0.0
        %v3324 = vand.u32 %v595, 4294901760
        %v3325 = vsub.f32 %v595, %v3324
        %v3326 = vand.u32 %v3325, 4294901760
        %3327 = vmatprep.mubr.f32.mxu0 %v3326
        %v3328 = vand.u32 %v528, 4294901760
        %v3329 = vsub.f32 %v528, %v3328
        %v3330 = vand.u32 %v3329, 4294901760
        %3331 = vmatmul.mubr.f32.gmra.mxu0 %v3330
        %v3332 = vpop.f32.mrf.mxu0
        %v3333 = vadd.f32 %v3255, %v3332
        %v3334 = vpop.f32.mrf.mxu0
        %3335 = vdwg.mxu0
        %3336 = vmatprep.subr.mxu0 0.0
        %3337 = vmatpush1.xpose.msra.mxu0 0.0
        %3338 = vmatprep.subr.mxu0 0.0
        %3339 = vmatpush1.xpose.msra.mxu0 0.0
        %3340 = vmatprep.subr.mxu0 0.0
        %3341 = vmatpush1.xpose.msra.mxu0 0.0
        %3342 = vmatprep.subr.mxu0 0.0
        %3343 = vmatpush1.xpose.msra.mxu0 0.0
        %3344 = vmatprep.subr.mxu0 0.0
        %3345 = vmatpush1.xpose.msra.mxu0 0.0
        %3346 = vmatprep.subr.mxu0 0.0
        %3347 = vmatpush1.xpose.msra.mxu0 0.0
        %3348 = vmatprep.subr.mxu0 0.0
        %3349 = vmatpush1.xpose.msra.mxu0 0.0
        %3350 = vmatprep.subr.mxu0 0.0
        %3351 = vmatpush1.xpose.msra.mxu0 0.0
        %3352 = vmatprep.subr.mxu0 0.0
        %3353 = vmatpush1.xpose.msra.mxu0 0.0
        %3354 = vmatprep.subr.mxu0 0.0
        %3355 = vmatpush1.xpose.msra.mxu0 0.0
        %3356 = vmatprep.subr.mxu0 0.0
        %3357 = vmatpush1.xpose.msra.mxu0 0.0
        %3358 = vmatprep.subr.mxu0 0.0
        %3359 = vmatpush1.xpose.msra.mxu0 0.0
        %3360 = vmatprep.subr.mxu0 0.0
        %3361 = vmatpush1.xpose.msra.mxu0 0.0
        %3362 = vmatprep.subr.mxu0 0.0
        %3363 = vmatpush1.xpose.msra.mxu0 0.0
        %3364 = vmatprep.subr.mxu0 0.0
        %3365 = vmatpush1.xpose.msra.mxu0 0.0
        %v3366 = vand.u32 %v630, 4294901760
        %v3367 = vsub.f32 %v630, %v3366
        %v3368 = vand.u32 %v3367, 4294901760
        %3369 = vmatprep.subr.mxu0 %v3368
        %v3370 = vand.u32 %v628, 4294901760
        %v3371 = vsub.f32 %v628, %v3370
        %v3372 = vand.u32 %v3371, 4294901760
        %3373 = vmatpush1.xpose.msra.mxu0 %v3372
        %3374 = vmatprep.subr.mxu0 0.0
        %3375 = vmatpush2.xpose.msra.mxu0 0.0
        %3376 = vmatprep.subr.mxu0 0.0
        %3377 = vmatpush2.xpose.msra.mxu0 0.0
        %3378 = vmatprep.subr.mxu0 0.0
        %3379 = vmatpush2.xpose.msra.mxu0 0.0
        %3380 = vmatprep.subr.mxu0 0.0
        %3381 = vmatpush2.xpose.msra.mxu0 0.0
        %3382 = vmatprep.subr.mxu0 0.0
        %3383 = vmatpush2.xpose.msra.mxu0 0.0
        %3384 = vmatprep.subr.mxu0 0.0
        %3385 = vmatpush2.xpose.msra.mxu0 0.0
        %3386 = vmatprep.subr.mxu0 0.0
        %3387 = vmatpush2.xpose.msra.mxu0 0.0
        %3388 = vmatprep.subr.mxu0 0.0
        %3389 = vmatpush2.xpose.msra.mxu0 0.0
        %3390 = vmatprep.subr.mxu0 0.0
        %3391 = vmatpush2.xpose.msra.mxu0 0.0
        %3392 = vmatprep.subr.mxu0 0.0
        %3393 = vmatpush2.xpose.msra.mxu0 0.0
        %3394 = vmatprep.subr.mxu0 0.0
        %3395 = vmatpush2.xpose.msra.mxu0 0.0
        %3396 = vmatprep.subr.mxu0 0.0
        %3397 = vmatpush2.xpose.msra.mxu0 0.0
        %3398 = vmatprep.subr.mxu0 0.0
        %3399 = vmatpush2.xpose.msra.mxu0 0.0
        %3400 = vmatprep.subr.mxu0 0.0
        %3401 = vmatpush2.xpose.msra.mxu0 0.0
        %3402 = vmatprep.subr.mxu0 0.0
        %3403 = vmatpush2.xpose.msra.mxu0 0.0
        %3404 = vmatprep.subr.mxu0 0.0
        %3405 = vmatpush2.xpose.msra.mxu0 0.0
        %v3406 = vand.u32 %v595, 4294901760
        %3407 = vmatprep.mubr.f32.mxu0 %v3406
        %v3408 = vand.u32 %v528, 4294901760
        %3409 = vmatmul.mubr.f32.gmra.mxu0 %v3408
        %v3410 = vpop.f32.mrf.mxu0
        %v3411 = vadd.f32 %v3333, %v3410
        %v3412 = vpop.f32.mrf.mxu0
        %3413 = vdwg.mxu0
        %3414 = vmatprep.subr.mxu0 0.0
        %3415 = vmatpush1.xpose.msra.mxu0 0.0
        %3416 = vmatprep.subr.mxu0 0.0
        %3417 = vmatpush1.xpose.msra.mxu0 0.0
        %3418 = vmatprep.subr.mxu0 0.0
        %3419 = vmatpush1.xpose.msra.mxu0 0.0
        %3420 = vmatprep.subr.mxu0 0.0
        %3421 = vmatpush1.xpose.msra.mxu0 0.0
        %3422 = vmatprep.subr.mxu0 0.0
        %3423 = vmatpush1.xpose.msra.mxu0 0.0
        %3424 = vmatprep.subr.mxu0 0.0
        %3425 = vmatpush1.xpose.msra.mxu0 0.0
        %3426 = vmatprep.subr.mxu0 0.0
        %3427 = vmatpush1.xpose.msra.mxu0 0.0
        %3428 = vmatprep.subr.mxu0 0.0
        %3429 = vmatpush1.xpose.msra.mxu0 0.0
        %3430 = vmatprep.subr.mxu0 0.0
        %3431 = vmatpush1.xpose.msra.mxu0 0.0
        %3432 = vmatprep.subr.mxu0 0.0
        %3433 = vmatpush1.xpose.msra.mxu0 0.0
        %3434 = vmatprep.subr.mxu0 0.0
        %3435 = vmatpush1.xpose.msra.mxu0 0.0
        %3436 = vmatprep.subr.mxu0 0.0
        %3437 = vmatpush1.xpose.msra.mxu0 0.0
        %3438 = vmatprep.subr.mxu0 0.0
        %3439 = vmatpush1.xpose.msra.mxu0 0.0
        %3440 = vmatprep.subr.mxu0 0.0
        %3441 = vmatpush1.xpose.msra.mxu0 0.0
        %3442 = vmatprep.subr.mxu0 0.0
        %3443 = vmatpush1.xpose.msra.mxu0 0.0
        %v3444 = vand.u32 %v630, 4294901760
        %3445 = vmatprep.subr.mxu0 %v3444
        %v3446 = vand.u32 %v628, 4294901760
        %3447 = vmatpush1.xpose.msra.mxu0 %v3446
        %3448 = vmatprep.subr.mxu0 0.0
        %3449 = vmatpush2.xpose.msra.mxu0 0.0
        %3450 = vmatprep.subr.mxu0 0.0
        %3451 = vmatpush2.xpose.msra.mxu0 0.0
        %3452 = vmatprep.subr.mxu0 0.0
        %3453 = vmatpush2.xpose.msra.mxu0 0.0
        %3454 = vmatprep.subr.mxu0 0.0
        %3455 = vmatpush2.xpose.msra.mxu0 0.0
        %3456 = vmatprep.subr.mxu0 0.0
        %3457 = vmatpush2.xpose.msra.mxu0 0.0
        %3458 = vmatprep.subr.mxu0 0.0
        %3459 = vmatpush2.xpose.msra.mxu0 0.0
        %3460 = vmatprep.subr.mxu0 0.0
        %3461 = vmatpush2.xpose.msra.mxu0 0.0
        %3462 = vmatprep.subr.mxu0 0.0
        %3463 = vmatpush2.xpose.msra.mxu0 0.0
        %3464 = vmatprep.subr.mxu0 0.0
        %3465 = vmatpush2.xpose.msra.mxu0 0.0
        %3466 = vmatprep.subr.mxu0 0.0
        %3467 = vmatpush2.xpose.msra.mxu0 0.0
        %3468 = vmatprep.subr.mxu0 0.0
        %3469 = vmatpush2.xpose.msra.mxu0 0.0
        %3470 = vmatprep.subr.mxu0 0.0
        %3471 = vmatpush2.xpose.msra.mxu0 0.0
        %3472 = vmatprep.subr.mxu0 0.0
        %3473 = vmatpush2.xpose.msra.mxu0 0.0
        %3474 = vmatprep.subr.mxu0 0.0
        %3475 = vmatpush2.xpose.msra.mxu0 0.0
        %3476 = vmatprep.subr.mxu0 0.0
        %3477 = vmatpush2.xpose.msra.mxu0 0.0
        %3478 = vmatprep.subr.mxu0 0.0
        %3479 = vmatpush2.xpose.msra.mxu0 0.0
        %v3480 = vand.u32 %v595, 4294901760
        %3481 = vmatprep.mubr.f32.mxu0 %v3480
        %v3482 = vand.u32 %v528, 4294901760
        %3483 = vmatmul.mubr.f32.gmra.mxu0 %v3482
        %v3484 = vpop.f32.mrf.mxu0
        %v3485 = vadd.f32 %v3411, %v3484
        %v3486 = vpop.f32.mrf.mxu0
        %3487 = vdwg.mxu0
        %3488 = vmatprep.subr.mxu0 0.0
        %3489 = vmatpush1.xpose.msra.mxu0 0.0
        %3490 = vmatprep.subr.mxu0 0.0
        %3491 = vmatpush1.xpose.msra.mxu0 0.0
        %3492 = vmatprep.subr.mxu0 0.0
        %3493 = vmatpush1.xpose.msra.mxu0 0.0
        %3494 = vmatprep.subr.mxu0 0.0
        %3495 = vmatpush1.xpose.msra.mxu0 0.0
        %3496 = vmatprep.subr.mxu0 0.0
        %3497 = vmatpush1.xpose.msra.mxu0 0.0
        %3498 = vmatprep.subr.mxu0 0.0
        %3499 = vmatpush1.xpose.msra.mxu0 0.0
        %3500 = vmatprep.subr.mxu0 0.0
        %3501 = vmatpush1.xpose.msra.mxu0 0.0
        %3502 = vmatprep.subr.mxu0 0.0
        %3503 = vmatpush1.xpose.msra.mxu0 0.0
        %3504 = vmatprep.subr.mxu0 0.0
        %3505 = vmatpush1.xpose.msra.mxu0 0.0
        %3506 = vmatprep.subr.mxu0 0.0
        %3507 = vmatpush1.xpose.msra.mxu0 0.0
        %3508 = vmatprep.subr.mxu0 0.0
        %3509 = vmatpush1.xpose.msra.mxu0 0.0
        %3510 = vmatprep.subr.mxu0 0.0
        %3511 = vmatpush1.xpose.msra.mxu0 0.0
        %3512 = vmatprep.subr.mxu0 0.0
        %3513 = vmatpush1.xpose.msra.mxu0 0.0
        %3514 = vmatprep.subr.mxu0 0.0
        %3515 = vmatpush1.xpose.msra.mxu0 0.0
        %3516 = vmatprep.subr.mxu0 0.0
        %3517 = vmatpush1.xpose.msra.mxu0 0.0
        %v3518 = vand.u32 %v646, 4294901760
        %3519 = vmatprep.subr.mxu0 %v3518
        %v3520 = vand.u32 %v638, 4294901760
        %3521 = vmatpush1.xpose.msra.mxu0 %v3520
        %3522 = vmatprep.subr.mxu0 0.0
        %3523 = vmatpush2.xpose.msra.mxu0 0.0
        %3524 = vmatprep.subr.mxu0 0.0
        %3525 = vmatpush2.xpose.msra.mxu0 0.0
        %3526 = vmatprep.subr.mxu0 0.0
        %3527 = vmatpush2.xpose.msra.mxu0 0.0
        %3528 = vmatprep.subr.mxu0 0.0
        %3529 = vmatpush2.xpose.msra.mxu0 0.0
        %3530 = vmatprep.subr.mxu0 0.0
        %3531 = vmatpush2.xpose.msra.mxu0 0.0
        %3532 = vmatprep.subr.mxu0 0.0
        %3533 = vmatpush2.xpose.msra.mxu0 0.0
        %3534 = vmatprep.subr.mxu0 0.0
        %3535 = vmatpush2.xpose.msra.mxu0 0.0
        %3536 = vmatprep.subr.mxu0 0.0
        %3537 = vmatpush2.xpose.msra.mxu0 0.0
        %3538 = vmatprep.subr.mxu0 0.0
        %3539 = vmatpush2.xpose.msra.mxu0 0.0
        %3540 = vmatprep.subr.mxu0 0.0
        %3541 = vmatpush2.xpose.msra.mxu0 0.0
        %3542 = vmatprep.subr.mxu0 0.0
        %3543 = vmatpush2.xpose.msra.mxu0 0.0
        %3544 = vmatprep.subr.mxu0 0.0
        %3545 = vmatpush2.xpose.msra.mxu0 0.0
        %3546 = vmatprep.subr.mxu0 0.0
        %3547 = vmatpush2.xpose.msra.mxu0 0.0
        %3548 = vmatprep.subr.mxu0 0.0
        %3549 = vmatpush2.xpose.msra.mxu0 0.0
        %3550 = vmatprep.subr.mxu0 0.0
        %3551 = vmatpush2.xpose.msra.mxu0 0.0
        %3552 = vmatprep.subr.mxu0 0.0
        %3553 = vmatpush2.xpose.msra.mxu0 0.0
        %v3554 = vand.u32 %v596, 4294901760
        %v3555 = vsub.f32 %v596, %v3554
        %v3556 = vand.u32 %v3555, 4294901760
        %v3557 = vsub.f32 %v3555, %v3556
        %v3558 = vand.u32 %v3557, 4294901760
        %3559 = vmatprep.mubr.f32.mxu0 %v3558
        %v3560 = vand.u32 %v529, 4294901760
        %v3561 = vsub.f32 %v529, %v3560
        %v3562 = vand.u32 %v3561, 4294901760
        %v3563 = vsub.f32 %v3561, %v3562
        %v3564 = vand.u32 %v3563, 4294901760
        %3565 = vmatmul.mubr.f32.gmra.mxu0 %v3564
        %v3566 = vpop.f32.mrf.mxu0
        %v3567 = vadd.f32 %v3485, %v3566
        %v3568 = vpop.f32.mrf.mxu0
        %3569 = vdwg.mxu0
        %3570 = vmatprep.subr.mxu0 0.0
        %3571 = vmatpush1.xpose.msra.mxu0 0.0
        %3572 = vmatprep.subr.mxu0 0.0
        %3573 = vmatpush1.xpose.msra.mxu0 0.0
        %3574 = vmatprep.subr.mxu0 0.0
        %3575 = vmatpush1.xpose.msra.mxu0 0.0
        %3576 = vmatprep.subr.mxu0 0.0
        %3577 = vmatpush1.xpose.msra.mxu0 0.0
        %3578 = vmatprep.subr.mxu0 0.0
        %3579 = vmatpush1.xpose.msra.mxu0 0.0
        %3580 = vmatprep.subr.mxu0 0.0
        %3581 = vmatpush1.xpose.msra.mxu0 0.0
        %3582 = vmatprep.subr.mxu0 0.0
        %3583 = vmatpush1.xpose.msra.mxu0 0.0
        %3584 = vmatprep.subr.mxu0 0.0
        %3585 = vmatpush1.xpose.msra.mxu0 0.0
        %3586 = vmatprep.subr.mxu0 0.0
        %3587 = vmatpush1.xpose.msra.mxu0 0.0
        %3588 = vmatprep.subr.mxu0 0.0
        %3589 = vmatpush1.xpose.msra.mxu0 0.0
        %3590 = vmatprep.subr.mxu0 0.0
        %3591 = vmatpush1.xpose.msra.mxu0 0.0
        %3592 = vmatprep.subr.mxu0 0.0
        %3593 = vmatpush1.xpose.msra.mxu0 0.0
        %3594 = vmatprep.subr.mxu0 0.0
        %3595 = vmatpush1.xpose.msra.mxu0 0.0
        %3596 = vmatprep.subr.mxu0 0.0
        %3597 = vmatpush1.xpose.msra.mxu0 0.0
        %3598 = vmatprep.subr.mxu0 0.0
        %3599 = vmatpush1.xpose.msra.mxu0 0.0
        %v3600 = vand.u32 %v646, 4294901760
        %v3601 = vsub.f32 %v646, %v3600
        %v3602 = vand.u32 %v3601, 4294901760
        %v3603 = vsub.f32 %v3601, %v3602
        %v3604 = vand.u32 %v3603, 4294901760
        %3605 = vmatprep.subr.mxu0 %v3604
        %v3606 = vand.u32 %v638, 4294901760
        %v3607 = vsub.f32 %v638, %v3606
        %v3608 = vand.u32 %v3607, 4294901760
        %v3609 = vsub.f32 %v3607, %v3608
        %v3610 = vand.u32 %v3609, 4294901760
        %3611 = vmatpush1.xpose.msra.mxu0 %v3610
        %3612 = vmatprep.subr.mxu0 0.0
        %3613 = vmatpush2.xpose.msra.mxu0 0.0
        %3614 = vmatprep.subr.mxu0 0.0
        %3615 = vmatpush2.xpose.msra.mxu0 0.0
        %3616 = vmatprep.subr.mxu0 0.0
        %3617 = vmatpush2.xpose.msra.mxu0 0.0
        %3618 = vmatprep.subr.mxu0 0.0
        %3619 = vmatpush2.xpose.msra.mxu0 0.0
        %3620 = vmatprep.subr.mxu0 0.0
        %3621 = vmatpush2.xpose.msra.mxu0 0.0
        %3622 = vmatprep.subr.mxu0 0.0
        %3623 = vmatpush2.xpose.msra.mxu0 0.0
        %3624 = vmatprep.subr.mxu0 0.0
        %3625 = vmatpush2.xpose.msra.mxu0 0.0
        %3626 = vmatprep.subr.mxu0 0.0
        %3627 = vmatpush2.xpose.msra.mxu0 0.0
        %3628 = vmatprep.subr.mxu0 0.0
        %3629 = vmatpush2.xpose.msra.mxu0 0.0
        %3630 = vmatprep.subr.mxu0 0.0
        %3631 = vmatpush2.xpose.msra.mxu0 0.0
        %3632 = vmatprep.subr.mxu0 0.0
        %3633 = vmatpush2.xpose.msra.mxu0 0.0
        %3634 = vmatprep.subr.mxu0 0.0
        %3635 = vmatpush2.xpose.msra.mxu0 0.0
        %3636 = vmatprep.subr.mxu0 0.0
        %3637 = vmatpush2.xpose.msra.mxu0 0.0
        %3638 = vmatprep.subr.mxu0 0.0
        %3639 = vmatpush2.xpose.msra.mxu0 0.0
        %3640 = vmatprep.subr.mxu0 0.0
        %3641 = vmatpush2.xpose.msra.mxu0 0.0
        %3642 = vmatprep.subr.mxu0 0.0
        %3643 = vmatpush2.xpose.msra.mxu0 0.0
        %v3644 = vand.u32 %v596, 4294901760
        %3645 = vmatprep.mubr.f32.mxu0 %v3644
        %v3646 = vand.u32 %v529, 4294901760
        %3647 = vmatmul.mubr.f32.gmra.mxu0 %v3646
        %v3648 = vpop.f32.mrf.mxu0
        %v3649 = vadd.f32 %v3567, %v3648
        %v3650 = vpop.f32.mrf.mxu0
        %3651 = vdwg.mxu0
        %3652 = vmatprep.subr.mxu0 0.0
        %3653 = vmatpush1.xpose.msra.mxu0 0.0
        %3654 = vmatprep.subr.mxu0 0.0
        %3655 = vmatpush1.xpose.msra.mxu0 0.0
        %3656 = vmatprep.subr.mxu0 0.0
        %3657 = vmatpush1.xpose.msra.mxu0 0.0
        %3658 = vmatprep.subr.mxu0 0.0
        %3659 = vmatpush1.xpose.msra.mxu0 0.0
        %3660 = vmatprep.subr.mxu0 0.0
        %3661 = vmatpush1.xpose.msra.mxu0 0.0
        %3662 = vmatprep.subr.mxu0 0.0
        %3663 = vmatpush1.xpose.msra.mxu0 0.0
        %3664 = vmatprep.subr.mxu0 0.0
        %3665 = vmatpush1.xpose.msra.mxu0 0.0
        %3666 = vmatprep.subr.mxu0 0.0
        %3667 = vmatpush1.xpose.msra.mxu0 0.0
        %3668 = vmatprep.subr.mxu0 0.0
        %3669 = vmatpush1.xpose.msra.mxu0 0.0
        %3670 = vmatprep.subr.mxu0 0.0
        %3671 = vmatpush1.xpose.msra.mxu0 0.0
        %3672 = vmatprep.subr.mxu0 0.0
        %3673 = vmatpush1.xpose.msra.mxu0 0.0
        %3674 = vmatprep.subr.mxu0 0.0
        %3675 = vmatpush1.xpose.msra.mxu0 0.0
        %3676 = vmatprep.subr.mxu0 0.0
        %3677 = vmatpush1.xpose.msra.mxu0 0.0
        %3678 = vmatprep.subr.mxu0 0.0
        %3679 = vmatpush1.xpose.msra.mxu0 0.0
        %3680 = vmatprep.subr.mxu0 0.0
        %3681 = vmatpush1.xpose.msra.mxu0 0.0
        %v3682 = vand.u32 %v646, 4294901760
        %v3683 = vsub.f32 %v646, %v3682
        %3684 = vmatprep.subr.mxu0 %v3683
        %v3685 = vand.u32 %v638, 4294901760
        %v3686 = vsub.f32 %v638, %v3685
        %3687 = vmatpush1.xpose.msra.mxu0 %v3686
        %3688 = vmatprep.subr.mxu0 0.0
        %3689 = vmatpush2.xpose.msra.mxu0 0.0
        %3690 = vmatprep.subr.mxu0 0.0
        %3691 = vmatpush2.xpose.msra.mxu0 0.0
        %3692 = vmatprep.subr.mxu0 0.0
        %3693 = vmatpush2.xpose.msra.mxu0 0.0
        %3694 = vmatprep.subr.mxu0 0.0
        %3695 = vmatpush2.xpose.msra.mxu0 0.0
        %3696 = vmatprep.subr.mxu0 0.0
        %3697 = vmatpush2.xpose.msra.mxu0 0.0
        %3698 = vmatprep.subr.mxu0 0.0
        %3699 = vmatpush2.xpose.msra.mxu0 0.0
        %3700 = vmatprep.subr.mxu0 0.0
        %3701 = vmatpush2.xpose.msra.mxu0 0.0
        %3702 = vmatprep.subr.mxu0 0.0
        %3703 = vmatpush2.xpose.msra.mxu0 0.0
        %3704 = vmatprep.subr.mxu0 0.0
        %3705 = vmatpush2.xpose.msra.mxu0 0.0
        %3706 = vmatprep.subr.mxu0 0.0
        %3707 = vmatpush2.xpose.msra.mxu0 0.0
        %3708 = vmatprep.subr.mxu0 0.0
        %3709 = vmatpush2.xpose.msra.mxu0 0.0
        %3710 = vmatprep.subr.mxu0 0.0
        %3711 = vmatpush2.xpose.msra.mxu0 0.0
        %3712 = vmatprep.subr.mxu0 0.0
        %3713 = vmatpush2.xpose.msra.mxu0 0.0
        %3714 = vmatprep.subr.mxu0 0.0
        %3715 = vmatpush2.xpose.msra.mxu0 0.0
        %3716 = vmatprep.subr.mxu0 0.0
        %3717 = vmatpush2.xpose.msra.mxu0 0.0
        %3718 = vmatprep.subr.mxu0 0.0
        %3719 = vmatpush2.xpose.msra.mxu0 0.0
        %v3720 = vand.u32 %v596, 4294901760
        %v3721 = vsub.f32 %v596, %v3720
        %3722 = vmatprep.mubr.f32.mxu0 %v3721
        %v3723 = vand.u32 %v529, 4294901760
        %v3724 = vsub.f32 %v529, %v3723
        %3725 = vmatmul.mubr.f32.gmra.mxu0 %v3724
        %v3726 = vpop.f32.mrf.mxu0
        %v3727 = vadd.f32 %v3649, %v3726
        %v3728 = vpop.f32.mrf.mxu0
        %3729 = vdwg.mxu0
        %3730 = vmatprep.subr.mxu0 0.0
        %3731 = vmatpush1.xpose.msra.mxu0 0.0
        %3732 = vmatprep.subr.mxu0 0.0
        %3733 = vmatpush1.xpose.msra.mxu0 0.0
        %3734 = vmatprep.subr.mxu0 0.0
        %3735 = vmatpush1.xpose.msra.mxu0 0.0
        %3736 = vmatprep.subr.mxu0 0.0
        %3737 = vmatpush1.xpose.msra.mxu0 0.0
        %3738 = vmatprep.subr.mxu0 0.0
        %3739 = vmatpush1.xpose.msra.mxu0 0.0
        %3740 = vmatprep.subr.mxu0 0.0
        %3741 = vmatpush1.xpose.msra.mxu0 0.0
        %3742 = vmatprep.subr.mxu0 0.0
        %3743 = vmatpush1.xpose.msra.mxu0 0.0
        %3744 = vmatprep.subr.mxu0 0.0
        %3745 = vmatpush1.xpose.msra.mxu0 0.0
        %3746 = vmatprep.subr.mxu0 0.0
        %3747 = vmatpush1.xpose.msra.mxu0 0.0
        %3748 = vmatprep.subr.mxu0 0.0
        %3749 = vmatpush1.xpose.msra.mxu0 0.0
        %3750 = vmatprep.subr.mxu0 0.0
        %3751 = vmatpush1.xpose.msra.mxu0 0.0
        %3752 = vmatprep.subr.mxu0 0.0
        %3753 = vmatpush1.xpose.msra.mxu0 0.0
        %3754 = vmatprep.subr.mxu0 0.0
        %3755 = vmatpush1.xpose.msra.mxu0 0.0
        %3756 = vmatprep.subr.mxu0 0.0
        %3757 = vmatpush1.xpose.msra.mxu0 0.0
        %3758 = vmatprep.subr.mxu0 0.0
        %3759 = vmatpush1.xpose.msra.mxu0 0.0
        %v3760 = vand.u32 %v646, 4294901760
        %3761 = vmatprep.subr.mxu0 %v3760
        %v3762 = vand.u32 %v638, 4294901760
        %3763 = vmatpush1.xpose.msra.mxu0 %v3762
        %3764 = vmatprep.subr.mxu0 0.0
        %3765 = vmatpush2.xpose.msra.mxu0 0.0
        %3766 = vmatprep.subr.mxu0 0.0
        %3767 = vmatpush2.xpose.msra.mxu0 0.0
        %3768 = vmatprep.subr.mxu0 0.0
        %3769 = vmatpush2.xpose.msra.mxu0 0.0
        %3770 = vmatprep.subr.mxu0 0.0
        %3771 = vmatpush2.xpose.msra.mxu0 0.0
        %3772 = vmatprep.subr.mxu0 0.0
        %3773 = vmatpush2.xpose.msra.mxu0 0.0
        %3774 = vmatprep.subr.mxu0 0.0
        %3775 = vmatpush2.xpose.msra.mxu0 0.0
        %3776 = vmatprep.subr.mxu0 0.0
        %3777 = vmatpush2.xpose.msra.mxu0 0.0
        %3778 = vmatprep.subr.mxu0 0.0
        %3779 = vmatpush2.xpose.msra.mxu0 0.0
        %3780 = vmatprep.subr.mxu0 0.0
        %3781 = vmatpush2.xpose.msra.mxu0 0.0
        %3782 = vmatprep.subr.mxu0 0.0
        %3783 = vmatpush2.xpose.msra.mxu0 0.0
        %3784 = vmatprep.subr.mxu0 0.0
        %3785 = vmatpush2.xpose.msra.mxu0 0.0
        %3786 = vmatprep.subr.mxu0 0.0
        %3787 = vmatpush2.xpose.msra.mxu0 0.0
        %3788 = vmatprep.subr.mxu0 0.0
        %3789 = vmatpush2.xpose.msra.mxu0 0.0
        %3790 = vmatprep.subr.mxu0 0.0
        %3791 = vmatpush2.xpose.msra.mxu0 0.0
        %3792 = vmatprep.subr.mxu0 0.0
        %3793 = vmatpush2.xpose.msra.mxu0 0.0
        %3794 = vmatprep.subr.mxu0 0.0
        %3795 = vmatpush2.xpose.msra.mxu0 0.0
        %v3796 = vand.u32 %v596, 4294901760
        %v3797 = vsub.f32 %v596, %v3796
        %v3798 = vand.u32 %v3797, 4294901760
        %3799 = vmatprep.mubr.f32.mxu0 %v3798
        %v3800 = vand.u32 %v529, 4294901760
        %v3801 = vsub.f32 %v529, %v3800
        %v3802 = vand.u32 %v3801, 4294901760
        %3803 = vmatmul.mubr.f32.gmra.mxu0 %v3802
        %v3804 = vpop.f32.mrf.mxu0
        %v3805 = vadd.f32 %v3727, %v3804
        %v3806 = vpop.f32.mrf.mxu0
        %3807 = vdwg.mxu0
        %3808 = vmatprep.subr.mxu0 0.0
        %3809 = vmatpush1.xpose.msra.mxu0 0.0
        %3810 = vmatprep.subr.mxu0 0.0
        %3811 = vmatpush1.xpose.msra.mxu0 0.0
        %3812 = vmatprep.subr.mxu0 0.0
        %3813 = vmatpush1.xpose.msra.mxu0 0.0
        %3814 = vmatprep.subr.mxu0 0.0
        %3815 = vmatpush1.xpose.msra.mxu0 0.0
        %3816 = vmatprep.subr.mxu0 0.0
        %3817 = vmatpush1.xpose.msra.mxu0 0.0
        %3818 = vmatprep.subr.mxu0 0.0
        %3819 = vmatpush1.xpose.msra.mxu0 0.0
        %3820 = vmatprep.subr.mxu0 0.0
        %3821 = vmatpush1.xpose.msra.mxu0 0.0
        %3822 = vmatprep.subr.mxu0 0.0
        %3823 = vmatpush1.xpose.msra.mxu0 0.0
        %3824 = vmatprep.subr.mxu0 0.0
        %3825 = vmatpush1.xpose.msra.mxu0 0.0
        %3826 = vmatprep.subr.mxu0 0.0
        %3827 = vmatpush1.xpose.msra.mxu0 0.0
        %3828 = vmatprep.subr.mxu0 0.0
        %3829 = vmatpush1.xpose.msra.mxu0 0.0
        %3830 = vmatprep.subr.mxu0 0.0
        %3831 = vmatpush1.xpose.msra.mxu0 0.0
        %3832 = vmatprep.subr.mxu0 0.0
        %3833 = vmatpush1.xpose.msra.mxu0 0.0
        %3834 = vmatprep.subr.mxu0 0.0
        %3835 = vmatpush1.xpose.msra.mxu0 0.0
        %3836 = vmatprep.subr.mxu0 0.0
        %3837 = vmatpush1.xpose.msra.mxu0 0.0
        %v3838 = vand.u32 %v646, 4294901760
        %v3839 = vsub.f32 %v646, %v3838
        %v3840 = vand.u32 %v3839, 4294901760
        %3841 = vmatprep.subr.mxu0 %v3840
        %v3842 = vand.u32 %v638, 4294901760
        %v3843 = vsub.f32 %v638, %v3842
        %v3844 = vand.u32 %v3843, 4294901760
        %3845 = vmatpush1.xpose.msra.mxu0 %v3844
        %3846 = vmatprep.subr.mxu0 0.0
        %3847 = vmatpush2.xpose.msra.mxu0 0.0
        %3848 = vmatprep.subr.mxu0 0.0
        %3849 = vmatpush2.xpose.msra.mxu0 0.0
        %3850 = vmatprep.subr.mxu0 0.0
        %3851 = vmatpush2.xpose.msra.mxu0 0.0
        %3852 = vmatprep.subr.mxu0 0.0
        %3853 = vmatpush2.xpose.msra.mxu0 0.0
        %3854 = vmatprep.subr.mxu0 0.0
        %3855 = vmatpush2.xpose.msra.mxu0 0.0
        %3856 = vmatprep.subr.mxu0 0.0
        %3857 = vmatpush2.xpose.msra.mxu0 0.0
        %3858 = vmatprep.subr.mxu0 0.0
        %3859 = vmatpush2.xpose.msra.mxu0 0.0
        %3860 = vmatprep.subr.mxu0 0.0
        %3861 = vmatpush2.xpose.msra.mxu0 0.0
        %3862 = vmatprep.subr.mxu0 0.0
        %3863 = vmatpush2.xpose.msra.mxu0 0.0
        %3864 = vmatprep.subr.mxu0 0.0
        %3865 = vmatpush2.xpose.msra.mxu0 0.0
        %3866 = vmatprep.subr.mxu0 0.0
        %3867 = vmatpush2.xpose.msra.mxu0 0.0
        %3868 = vmatprep.subr.mxu0 0.0
        %3869 = vmatpush2.xpose.msra.mxu0 0.0
        %3870 = vmatprep.subr.mxu0 0.0
        %3871 = vmatpush2.xpose.msra.mxu0 0.0
        %3872 = vmatprep.subr.mxu0 0.0
        %3873 = vmatpush2.xpose.msra.mxu0 0.0
        %3874 = vmatprep.subr.mxu0 0.0
        %3875 = vmatpush2.xpose.msra.mxu0 0.0
        %3876 = vmatprep.subr.mxu0 0.0
        %3877 = vmatpush2.xpose.msra.mxu0 0.0
        %v3878 = vand.u32 %v596, 4294901760
        %3879 = vmatprep.mubr.f32.mxu0 %v3878
        %v3880 = vand.u32 %v529, 4294901760
        %3881 = vmatmul.mubr.f32.gmra.mxu0 %v3880
        %v3882 = vpop.f32.mrf.mxu0
        %v3883 = vadd.f32 %v3805, %v3882
        %v3884 = vpop.f32.mrf.mxu0
        %3885 = vdwg.mxu0
        %3886 = vmatprep.subr.mxu0 0.0
        %3887 = vmatpush1.xpose.msra.mxu0 0.0
        %3888 = vmatprep.subr.mxu0 0.0
        %3889 = vmatpush1.xpose.msra.mxu0 0.0
        %3890 = vmatprep.subr.mxu0 0.0
        %3891 = vmatpush1.xpose.msra.mxu0 0.0
        %3892 = vmatprep.subr.mxu0 0.0
        %3893 = vmatpush1.xpose.msra.mxu0 0.0
        %3894 = vmatprep.subr.mxu0 0.0
        %3895 = vmatpush1.xpose.msra.mxu0 0.0
        %3896 = vmatprep.subr.mxu0 0.0
        %3897 = vmatpush1.xpose.msra.mxu0 0.0
        %3898 = vmatprep.subr.mxu0 0.0
        %3899 = vmatpush1.xpose.msra.mxu0 0.0
        %3900 = vmatprep.subr.mxu0 0.0
        %3901 = vmatpush1.xpose.msra.mxu0 0.0
        %3902 = vmatprep.subr.mxu0 0.0
        %3903 = vmatpush1.xpose.msra.mxu0 0.0
        %3904 = vmatprep.subr.mxu0 0.0
        %3905 = vmatpush1.xpose.msra.mxu0 0.0
        %3906 = vmatprep.subr.mxu0 0.0
        %3907 = vmatpush1.xpose.msra.mxu0 0.0
        %3908 = vmatprep.subr.mxu0 0.0
        %3909 = vmatpush1.xpose.msra.mxu0 0.0
        %3910 = vmatprep.subr.mxu0 0.0
        %3911 = vmatpush1.xpose.msra.mxu0 0.0
        %3912 = vmatprep.subr.mxu0 0.0
        %3913 = vmatpush1.xpose.msra.mxu0 0.0
        %3914 = vmatprep.subr.mxu0 0.0
        %3915 = vmatpush1.xpose.msra.mxu0 0.0
        %v3916 = vand.u32 %v646, 4294901760
        %3917 = vmatprep.subr.mxu0 %v3916
        %v3918 = vand.u32 %v638, 4294901760
        %3919 = vmatpush1.xpose.msra.mxu0 %v3918
        %3920 = vmatprep.subr.mxu0 0.0
        %3921 = vmatpush2.xpose.msra.mxu0 0.0
        %3922 = vmatprep.subr.mxu0 0.0
        %3923 = vmatpush2.xpose.msra.mxu0 0.0
        %3924 = vmatprep.subr.mxu0 0.0
        %3925 = vmatpush2.xpose.msra.mxu0 0.0
        %3926 = vmatprep.subr.mxu0 0.0
        %3927 = vmatpush2.xpose.msra.mxu0 0.0
        %3928 = vmatprep.subr.mxu0 0.0
        %3929 = vmatpush2.xpose.msra.mxu0 0.0
        %3930 = vmatprep.subr.mxu0 0.0
        %3931 = vmatpush2.xpose.msra.mxu0 0.0
        %3932 = vmatprep.subr.mxu0 0.0
        %3933 = vmatpush2.xpose.msra.mxu0 0.0
        %3934 = vmatprep.subr.mxu0 0.0
        %3935 = vmatpush2.xpose.msra.mxu0 0.0
        %3936 = vmatprep.subr.mxu0 0.0
        %3937 = vmatpush2.xpose.msra.mxu0 0.0
        %3938 = vmatprep.subr.mxu0 0.0
        %3939 = vmatpush2.xpose.msra.mxu0 0.0
        %3940 = vmatprep.subr.mxu0 0.0
        %3941 = vmatpush2.xpose.msra.mxu0 0.0
        %3942 = vmatprep.subr.mxu0 0.0
        %3943 = vmatpush2.xpose.msra.mxu0 0.0
        %3944 = vmatprep.subr.mxu0 0.0
        %3945 = vmatpush2.xpose.msra.mxu0 0.0
        %3946 = vmatprep.subr.mxu0 0.0
        %3947 = vmatpush2.xpose.msra.mxu0 0.0
        %3948 = vmatprep.subr.mxu0 0.0
        %3949 = vmatpush2.xpose.msra.mxu0 0.0
        %3950 = vmatprep.subr.mxu0 0.0
        %3951 = vmatpush2.xpose.msra.mxu0 0.0
        %v3952 = vand.u32 %v596, 4294901760
        %3953 = vmatprep.mubr.f32.mxu0 %v3952
        %v3954 = vand.u32 %v529, 4294901760
        %3955 = vmatmul.mubr.f32.gmra.mxu0 %v3954
        %v3956 = vpop.f32.mrf.mxu0
        %v3957 = vadd.f32 %v3883, %v3956
        %v3958 = vpop.f32.mrf.mxu0
        %3959 = vdwg.mxu0
        %3960 = vmatprep.subr.mxu0 0.0
        %3961 = vmatpush1.xpose.msra.mxu0 0.0
        %3962 = vmatprep.subr.mxu0 0.0
        %3963 = vmatpush1.xpose.msra.mxu0 0.0
        %3964 = vmatprep.subr.mxu0 0.0
        %3965 = vmatpush1.xpose.msra.mxu0 0.0
        %3966 = vmatprep.subr.mxu0 0.0
        %3967 = vmatpush1.xpose.msra.mxu0 0.0
        %3968 = vmatprep.subr.mxu0 0.0
        %3969 = vmatpush1.xpose.msra.mxu0 0.0
        %3970 = vmatprep.subr.mxu0 0.0
        %3971 = vmatpush1.xpose.msra.mxu0 0.0
        %3972 = vmatprep.subr.mxu0 0.0
        %3973 = vmatpush1.xpose.msra.mxu0 0.0
        %3974 = vmatprep.subr.mxu0 0.0
        %3975 = vmatpush1.xpose.msra.mxu0 0.0
        %3976 = vmatprep.subr.mxu0 0.0
        %3977 = vmatpush1.xpose.msra.mxu0 0.0
        %3978 = vmatprep.subr.mxu0 0.0
        %3979 = vmatpush1.xpose.msra.mxu0 0.0
        %3980 = vmatprep.subr.mxu0 0.0
        %3981 = vmatpush1.xpose.msra.mxu0 0.0
        %3982 = vmatprep.subr.mxu0 0.0
        %3983 = vmatpush1.xpose.msra.mxu0 0.0
        %3984 = vmatprep.subr.mxu0 0.0
        %3985 = vmatpush1.xpose.msra.mxu0 0.0
        %3986 = vmatprep.subr.mxu0 0.0
        %3987 = vmatpush1.xpose.msra.mxu0 0.0
        %3988 = vmatprep.subr.mxu0 0.0
        %3989 = vmatpush1.xpose.msra.mxu0 0.0
        %v3990 = vand.u32 %v647, 4294901760
        %3991 = vmatprep.subr.mxu0 %v3990
        %v3992 = vand.u32 %v645, 4294901760
        %3993 = vmatpush1.xpose.msra.mxu0 %v3992
        %3994 = vmatprep.subr.mxu0 0.0
        %3995 = vmatpush2.xpose.msra.mxu0 0.0
        %3996 = vmatprep.subr.mxu0 0.0
        %3997 = vmatpush2.xpose.msra.mxu0 0.0
        %3998 = vmatprep.subr.mxu0 0.0
        %3999 = vmatpush2.xpose.msra.mxu0 0.0
        %4000 = vmatprep.subr.mxu0 0.0
        %4001 = vmatpush2.xpose.msra.mxu0 0.0
        %4002 = vmatprep.subr.mxu0 0.0
        %4003 = vmatpush2.xpose.msra.mxu0 0.0
        %4004 = vmatprep.subr.mxu0 0.0
        %4005 = vmatpush2.xpose.msra.mxu0 0.0
        %4006 = vmatprep.subr.mxu0 0.0
        %4007 = vmatpush2.xpose.msra.mxu0 0.0
        %4008 = vmatprep.subr.mxu0 0.0
        %4009 = vmatpush2.xpose.msra.mxu0 0.0
        %4010 = vmatprep.subr.mxu0 0.0
        %4011 = vmatpush2.xpose.msra.mxu0 0.0
        %4012 = vmatprep.subr.mxu0 0.0
        %4013 = vmatpush2.xpose.msra.mxu0 0.0
        %4014 = vmatprep.subr.mxu0 0.0
        %4015 = vmatpush2.xpose.msra.mxu0 0.0
        %4016 = vmatprep.subr.mxu0 0.0
        %4017 = vmatpush2.xpose.msra.mxu0 0.0
        %4018 = vmatprep.subr.mxu0 0.0
        %4019 = vmatpush2.xpose.msra.mxu0 0.0
        %4020 = vmatprep.subr.mxu0 0.0
        %4021 = vmatpush2.xpose.msra.mxu0 0.0
        %4022 = vmatprep.subr.mxu0 0.0
        %4023 = vmatpush2.xpose.msra.mxu0 0.0
        %4024 = vmatprep.subr.mxu0 0.0
        %4025 = vmatpush2.xpose.msra.mxu0 0.0
        %v4026 = vand.u32 %v597, 4294901760
        %v4027 = vsub.f32 %v597, %v4026
        %v4028 = vand.u32 %v4027, 4294901760
        %v4029 = vsub.f32 %v4027, %v4028
        %v4030 = vand.u32 %v4029, 4294901760
        %4031 = vmatprep.mubr.f32.mxu0 %v4030
        %v4032 = vand.u32 %v530, 4294901760
        %v4033 = vsub.f32 %v530, %v4032
        %v4034 = vand.u32 %v4033, 4294901760
        %v4035 = vsub.f32 %v4033, %v4034
        %v4036 = vand.u32 %v4035, 4294901760
        %4037 = vmatmul.mubr.f32.gmra.mxu0 %v4036
        %v4038 = vpop.f32.mrf.mxu0
        %v4039 = vadd.f32 %v3957, %v4038
        %v4040 = vpop.f32.mrf.mxu0
        %4041 = vdwg.mxu0
        %4042 = vmatprep.subr.mxu0 0.0
        %4043 = vmatpush1.xpose.msra.mxu0 0.0
        %4044 = vmatprep.subr.mxu0 0.0
        %4045 = vmatpush1.xpose.msra.mxu0 0.0
        %4046 = vmatprep.subr.mxu0 0.0
        %4047 = vmatpush1.xpose.msra.mxu0 0.0
        %4048 = vmatprep.subr.mxu0 0.0
        %4049 = vmatpush1.xpose.msra.mxu0 0.0
        %4050 = vmatprep.subr.mxu0 0.0
        %4051 = vmatpush1.xpose.msra.mxu0 0.0
        %4052 = vmatprep.subr.mxu0 0.0
        %4053 = vmatpush1.xpose.msra.mxu0 0.0
        %4054 = vmatprep.subr.mxu0 0.0
        %4055 = vmatpush1.xpose.msra.mxu0 0.0
        %4056 = vmatprep.subr.mxu0 0.0
        %4057 = vmatpush1.xpose.msra.mxu0 0.0
        %4058 = vmatprep.subr.mxu0 0.0
        %4059 = vmatpush1.xpose.msra.mxu0 0.0
        %4060 = vmatprep.subr.mxu0 0.0
        %4061 = vmatpush1.xpose.msra.mxu0 0.0
        %4062 = vmatprep.subr.mxu0 0.0
        %4063 = vmatpush1.xpose.msra.mxu0 0.0
        %4064 = vmatprep.subr.mxu0 0.0
        %4065 = vmatpush1.xpose.msra.mxu0 0.0
        %4066 = vmatprep.subr.mxu0 0.0
        %4067 = vmatpush1.xpose.msra.mxu0 0.0
        %4068 = vmatprep.subr.mxu0 0.0
        %4069 = vmatpush1.xpose.msra.mxu0 0.0
        %4070 = vmatprep.subr.mxu0 0.0
        %4071 = vmatpush1.xpose.msra.mxu0 0.0
        %v4072 = vand.u32 %v647, 4294901760
        %v4073 = vsub.f32 %v647, %v4072
        %v4074 = vand.u32 %v4073, 4294901760
        %v4075 = vsub.f32 %v4073, %v4074
        %v4076 = vand.u32 %v4075, 4294901760
        %4077 = vmatprep.subr.mxu0 %v4076
        %v4078 = vand.u32 %v645, 4294901760
        %v4079 = vsub.f32 %v645, %v4078
        %v4080 = vand.u32 %v4079, 4294901760
        %v4081 = vsub.f32 %v4079, %v4080
        %v4082 = vand.u32 %v4081, 4294901760
        %4083 = vmatpush1.xpose.msra.mxu0 %v4082
        %4084 = vmatprep.subr.mxu0 0.0
        %4085 = vmatpush2.xpose.msra.mxu0 0.0
        %4086 = vmatprep.subr.mxu0 0.0
        %4087 = vmatpush2.xpose.msra.mxu0 0.0
        %4088 = vmatprep.subr.mxu0 0.0
        %4089 = vmatpush2.xpose.msra.mxu0 0.0
        %4090 = vmatprep.subr.mxu0 0.0
        %4091 = vmatpush2.xpose.msra.mxu0 0.0
        %4092 = vmatprep.subr.mxu0 0.0
        %4093 = vmatpush2.xpose.msra.mxu0 0.0
        %4094 = vmatprep.subr.mxu0 0.0
        %4095 = vmatpush2.xpose.msra.mxu0 0.0
        %4096 = vmatprep.subr.mxu0 0.0
        %4097 = vmatpush2.xpose.msra.mxu0 0.0
        %4098 = vmatprep.subr.mxu0 0.0
        %4099 = vmatpush2.xpose.msra.mxu0 0.0
        %4100 = vmatprep.subr.mxu0 0.0
        %4101 = vmatpush2.xpose.msra.mxu0 0.0
        %4102 = vmatprep.subr.mxu0 0.0
        %4103 = vmatpush2.xpose.msra.mxu0 0.0
        %4104 = vmatprep.subr.mxu0 0.0
        %4105 = vmatpush2.xpose.msra.mxu0 0.0
        %4106 = vmatprep.subr.mxu0 0.0
        %4107 = vmatpush2.xpose.msra.mxu0 0.0
        %4108 = vmatprep.subr.mxu0 0.0
        %4109 = vmatpush2.xpose.msra.mxu0 0.0
        %4110 = vmatprep.subr.mxu0 0.0
        %4111 = vmatpush2.xpose.msra.mxu0 0.0
        %4112 = vmatprep.subr.mxu0 0.0
        %4113 = vmatpush2.xpose.msra.mxu0 0.0
        %4114 = vmatprep.subr.mxu0 0.0
        %4115 = vmatpush2.xpose.msra.mxu0 0.0
        %v4116 = vand.u32 %v597, 4294901760
        %4117 = vmatprep.mubr.f32.mxu0 %v4116
        %v4118 = vand.u32 %v530, 4294901760
        %4119 = vmatmul.mubr.f32.gmra.mxu0 %v4118
        %v4120 = vpop.f32.mrf.mxu0
        %v4121 = vadd.f32 %v4039, %v4120
        %v4122 = vpop.f32.mrf.mxu0
        %4123 = vdwg.mxu0
        %4124 = vmatprep.subr.mxu0 0.0
        %4125 = vmatpush1.xpose.msra.mxu0 0.0
        %4126 = vmatprep.subr.mxu0 0.0
        %4127 = vmatpush1.xpose.msra.mxu0 0.0
        %4128 = vmatprep.subr.mxu0 0.0
        %4129 = vmatpush1.xpose.msra.mxu0 0.0
        %4130 = vmatprep.subr.mxu0 0.0
        %4131 = vmatpush1.xpose.msra.mxu0 0.0
        %4132 = vmatprep.subr.mxu0 0.0
        %4133 = vmatpush1.xpose.msra.mxu0 0.0
        %4134 = vmatprep.subr.mxu0 0.0
        %4135 = vmatpush1.xpose.msra.mxu0 0.0
        %4136 = vmatprep.subr.mxu0 0.0
        %4137 = vmatpush1.xpose.msra.mxu0 0.0
        %4138 = vmatprep.subr.mxu0 0.0
        %4139 = vmatpush1.xpose.msra.mxu0 0.0
        %4140 = vmatprep.subr.mxu0 0.0
        %4141 = vmatpush1.xpose.msra.mxu0 0.0
        %4142 = vmatprep.subr.mxu0 0.0
        %4143 = vmatpush1.xpose.msra.mxu0 0.0
        %4144 = vmatprep.subr.mxu0 0.0
        %4145 = vmatpush1.xpose.msra.mxu0 0.0
        %4146 = vmatprep.subr.mxu0 0.0
        %4147 = vmatpush1.xpose.msra.mxu0 0.0
        %4148 = vmatprep.subr.mxu0 0.0
        %4149 = vmatpush1.xpose.msra.mxu0 0.0
        %4150 = vmatprep.subr.mxu0 0.0
        %4151 = vmatpush1.xpose.msra.mxu0 0.0
        %4152 = vmatprep.subr.mxu0 0.0
        %4153 = vmatpush1.xpose.msra.mxu0 0.0
        %v4154 = vand.u32 %v647, 4294901760
        %v4155 = vsub.f32 %v647, %v4154
        %4156 = vmatprep.subr.mxu0 %v4155
        %v4157 = vand.u32 %v645, 4294901760
        %v4158 = vsub.f32 %v645, %v4157
        %4159 = vmatpush1.xpose.msra.mxu0 %v4158
        %4160 = vmatprep.subr.mxu0 0.0
        %4161 = vmatpush2.xpose.msra.mxu0 0.0
        %4162 = vmatprep.subr.mxu0 0.0
        %4163 = vmatpush2.xpose.msra.mxu0 0.0
        %4164 = vmatprep.subr.mxu0 0.0
        %4165 = vmatpush2.xpose.msra.mxu0 0.0
        %4166 = vmatprep.subr.mxu0 0.0
        %4167 = vmatpush2.xpose.msra.mxu0 0.0
        %4168 = vmatprep.subr.mxu0 0.0
        %4169 = vmatpush2.xpose.msra.mxu0 0.0
        %4170 = vmatprep.subr.mxu0 0.0
        %4171 = vmatpush2.xpose.msra.mxu0 0.0
        %4172 = vmatprep.subr.mxu0 0.0
        %4173 = vmatpush2.xpose.msra.mxu0 0.0
        %4174 = vmatprep.subr.mxu0 0.0
        %4175 = vmatpush2.xpose.msra.mxu0 0.0
        %4176 = vmatprep.subr.mxu0 0.0
        %4177 = vmatpush2.xpose.msra.mxu0 0.0
        %4178 = vmatprep.subr.mxu0 0.0
        %4179 = vmatpush2.xpose.msra.mxu0 0.0
        %4180 = vmatprep.subr.mxu0 0.0
        %4181 = vmatpush2.xpose.msra.mxu0 0.0
        %4182 = vmatprep.subr.mxu0 0.0
        %4183 = vmatpush2.xpose.msra.mxu0 0.0
        %4184 = vmatprep.subr.mxu0 0.0
        %4185 = vmatpush2.xpose.msra.mxu0 0.0
        %4186 = vmatprep.subr.mxu0 0.0
        %4187 = vmatpush2.xpose.msra.mxu0 0.0
        %4188 = vmatprep.subr.mxu0 0.0
        %4189 = vmatpush2.xpose.msra.mxu0 0.0
        %4190 = vmatprep.subr.mxu0 0.0
        %4191 = vmatpush2.xpose.msra.mxu0 0.0
        %v4192 = vand.u32 %v597, 4294901760
        %v4193 = vsub.f32 %v597, %v4192
        %4194 = vmatprep.mubr.f32.mxu0 %v4193
        %v4195 = vand.u32 %v530, 4294901760
        %v4196 = vsub.f32 %v530, %v4195
        %4197 = vmatmul.mubr.f32.gmra.mxu0 %v4196
        %v4198 = vpop.f32.mrf.mxu0
        %v4199 = vadd.f32 %v4121, %v4198
        %v4200 = vpop.f32.mrf.mxu0
        %4201 = vdwg.mxu0
        %4202 = vmatprep.subr.mxu0 0.0
        %4203 = vmatpush1.xpose.msra.mxu0 0.0
        %4204 = vmatprep.subr.mxu0 0.0
        %4205 = vmatpush1.xpose.msra.mxu0 0.0
        %4206 = vmatprep.subr.mxu0 0.0
        %4207 = vmatpush1.xpose.msra.mxu0 0.0
        %4208 = vmatprep.subr.mxu0 0.0
        %4209 = vmatpush1.xpose.msra.mxu0 0.0
        %4210 = vmatprep.subr.mxu0 0.0
        %4211 = vmatpush1.xpose.msra.mxu0 0.0
        %4212 = vmatprep.subr.mxu0 0.0
        %4213 = vmatpush1.xpose.msra.mxu0 0.0
        %4214 = vmatprep.subr.mxu0 0.0
        %4215 = vmatpush1.xpose.msra.mxu0 0.0
        %4216 = vmatprep.subr.mxu0 0.0
        %4217 = vmatpush1.xpose.msra.mxu0 0.0
        %4218 = vmatprep.subr.mxu0 0.0
        %4219 = vmatpush1.xpose.msra.mxu0 0.0
        %4220 = vmatprep.subr.mxu0 0.0
        %4221 = vmatpush1.xpose.msra.mxu0 0.0
        %4222 = vmatprep.subr.mxu0 0.0
        %4223 = vmatpush1.xpose.msra.mxu0 0.0
        %4224 = vmatprep.subr.mxu0 0.0
        %4225 = vmatpush1.xpose.msra.mxu0 0.0
        %4226 = vmatprep.subr.mxu0 0.0
        %4227 = vmatpush1.xpose.msra.mxu0 0.0
        %4228 = vmatprep.subr.mxu0 0.0
        %4229 = vmatpush1.xpose.msra.mxu0 0.0
        %4230 = vmatprep.subr.mxu0 0.0
        %4231 = vmatpush1.xpose.msra.mxu0 0.0
        %v4232 = vand.u32 %v647, 4294901760
        %4233 = vmatprep.subr.mxu0 %v4232
        %v4234 = vand.u32 %v645, 4294901760
        %4235 = vmatpush1.xpose.msra.mxu0 %v4234
        %4236 = vmatprep.subr.mxu0 0.0
        %4237 = vmatpush2.xpose.msra.mxu0 0.0
        %4238 = vmatprep.subr.mxu0 0.0
        %4239 = vmatpush2.xpose.msra.mxu0 0.0
        %4240 = vmatprep.subr.mxu0 0.0
        %4241 = vmatpush2.xpose.msra.mxu0 0.0
        %4242 = vmatprep.subr.mxu0 0.0
        %4243 = vmatpush2.xpose.msra.mxu0 0.0
        %4244 = vmatprep.subr.mxu0 0.0
        %4245 = vmatpush2.xpose.msra.mxu0 0.0
        %4246 = vmatprep.subr.mxu0 0.0
        %4247 = vmatpush2.xpose.msra.mxu0 0.0
        %4248 = vmatprep.subr.mxu0 0.0
        %4249 = vmatpush2.xpose.msra.mxu0 0.0
        %4250 = vmatprep.subr.mxu0 0.0
        %4251 = vmatpush2.xpose.msra.mxu0 0.0
        %4252 = vmatprep.subr.mxu0 0.0
        %4253 = vmatpush2.xpose.msra.mxu0 0.0
        %4254 = vmatprep.subr.mxu0 0.0
        %4255 = vmatpush2.xpose.msra.mxu0 0.0
        %4256 = vmatprep.subr.mxu0 0.0
        %4257 = vmatpush2.xpose.msra.mxu0 0.0
        %4258 = vmatprep.subr.mxu0 0.0
        %4259 = vmatpush2.xpose.msra.mxu0 0.0
        %4260 = vmatprep.subr.mxu0 0.0
        %4261 = vmatpush2.xpose.msra.mxu0 0.0
        %4262 = vmatprep.subr.mxu0 0.0
        %4263 = vmatpush2.xpose.msra.mxu0 0.0
        %4264 = vmatprep.subr.mxu0 0.0
        %4265 = vmatpush2.xpose.msra.mxu0 0.0
        %4266 = vmatprep.subr.mxu0 0.0
        %4267 = vmatpush2.xpose.msra.mxu0 0.0
        %v4268 = vand.u32 %v597, 4294901760
        %v4269 = vsub.f32 %v597, %v4268
        %v4270 = vand.u32 %v4269, 4294901760
        %4271 = vmatprep.mubr.f32.mxu0 %v4270
        %v4272 = vand.u32 %v530, 4294901760
        %v4273 = vsub.f32 %v530, %v4272
        %v4274 = vand.u32 %v4273, 4294901760
        %4275 = vmatmul.mubr.f32.gmra.mxu0 %v4274
        %v4276 = vpop.f32.mrf.mxu0
        %v4277 = vadd.f32 %v4199, %v4276
        %v4278 = vpop.f32.mrf.mxu0
        %4279 = vdwg.mxu0
        %4280 = vmatprep.subr.mxu0 0.0
        %4281 = vmatpush1.xpose.msra.mxu0 0.0
        %4282 = vmatprep.subr.mxu0 0.0
        %4283 = vmatpush1.xpose.msra.mxu0 0.0
        %4284 = vmatprep.subr.mxu0 0.0
        %4285 = vmatpush1.xpose.msra.mxu0 0.0
        %4286 = vmatprep.subr.mxu0 0.0
        %4287 = vmatpush1.xpose.msra.mxu0 0.0
        %4288 = vmatprep.subr.mxu0 0.0
        %4289 = vmatpush1.xpose.msra.mxu0 0.0
        %4290 = vmatprep.subr.mxu0 0.0
        %4291 = vmatpush1.xpose.msra.mxu0 0.0
        %4292 = vmatprep.subr.mxu0 0.0
        %4293 = vmatpush1.xpose.msra.mxu0 0.0
        %4294 = vmatprep.subr.mxu0 0.0
        %4295 = vmatpush1.xpose.msra.mxu0 0.0
        %4296 = vmatprep.subr.mxu0 0.0
        %4297 = vmatpush1.xpose.msra.mxu0 0.0
        %4298 = vmatprep.subr.mxu0 0.0
        %4299 = vmatpush1.xpose.msra.mxu0 0.0
        %4300 = vmatprep.subr.mxu0 0.0
        %4301 = vmatpush1.xpose.msra.mxu0 0.0
        %4302 = vmatprep.subr.mxu0 0.0
        %4303 = vmatpush1.xpose.msra.mxu0 0.0
        %4304 = vmatprep.subr.mxu0 0.0
        %4305 = vmatpush1.xpose.msra.mxu0 0.0
        %4306 = vmatprep.subr.mxu0 0.0
        %4307 = vmatpush1.xpose.msra.mxu0 0.0
        %4308 = vmatprep.subr.mxu0 0.0
        %4309 = vmatpush1.xpose.msra.mxu0 0.0
        %v4310 = vand.u32 %v647, 4294901760
        %v4311 = vsub.f32 %v647, %v4310
        %v4312 = vand.u32 %v4311, 4294901760
        %4313 = vmatprep.subr.mxu0 %v4312
        %v4314 = vand.u32 %v645, 4294901760
        %v4315 = vsub.f32 %v645, %v4314
        %v4316 = vand.u32 %v4315, 4294901760
        %4317 = vmatpush1.xpose.msra.mxu0 %v4316
        %4318 = vmatprep.subr.mxu0 0.0
        %4319 = vmatpush2.xpose.msra.mxu0 0.0
        %4320 = vmatprep.subr.mxu0 0.0
        %4321 = vmatpush2.xpose.msra.mxu0 0.0
        %4322 = vmatprep.subr.mxu0 0.0
        %4323 = vmatpush2.xpose.msra.mxu0 0.0
        %4324 = vmatprep.subr.mxu0 0.0
        %4325 = vmatpush2.xpose.msra.mxu0 0.0
        %4326 = vmatprep.subr.mxu0 0.0
        %4327 = vmatpush2.xpose.msra.mxu0 0.0
        %4328 = vmatprep.subr.mxu0 0.0
        %4329 = vmatpush2.xpose.msra.mxu0 0.0
        %4330 = vmatprep.subr.mxu0 0.0
        %4331 = vmatpush2.xpose.msra.mxu0 0.0
        %4332 = vmatprep.subr.mxu0 0.0
        %4333 = vmatpush2.xpose.msra.mxu0 0.0
        %4334 = vmatprep.subr.mxu0 0.0
        %4335 = vmatpush2.xpose.msra.mxu0 0.0
        %4336 = vmatprep.subr.mxu0 0.0
        %4337 = vmatpush2.xpose.msra.mxu0 0.0
        %4338 = vmatprep.subr.mxu0 0.0
        %4339 = vmatpush2.xpose.msra.mxu0 0.0
        %4340 = vmatprep.subr.mxu0 0.0
        %4341 = vmatpush2.xpose.msra.mxu0 0.0
        %4342 = vmatprep.subr.mxu0 0.0
        %4343 = vmatpush2.xpose.msra.mxu0 0.0
        %4344 = vmatprep.subr.mxu0 0.0
        %4345 = vmatpush2.xpose.msra.mxu0 0.0
        %4346 = vmatprep.subr.mxu0 0.0
        %4347 = vmatpush2.xpose.msra.mxu0 0.0
        %4348 = vmatprep.subr.mxu0 0.0
        %4349 = vmatpush2.xpose.msra.mxu0 0.0
        %v4350 = vand.u32 %v597, 4294901760
        %4351 = vmatprep.mubr.f32.mxu0 %v4350
        %v4352 = vand.u32 %v530, 4294901760
        %4353 = vmatmul.mubr.f32.gmra.mxu0 %v4352
        %v4354 = vpop.f32.mrf.mxu0
        %v4355 = vadd.f32 %v4277, %v4354
        %v4356 = vpop.f32.mrf.mxu0
        %4357 = vdwg.mxu0
        %4358 = vmatprep.subr.mxu0 0.0
        %4359 = vmatpush1.xpose.msra.mxu0 0.0
        %4360 = vmatprep.subr.mxu0 0.0
        %4361 = vmatpush1.xpose.msra.mxu0 0.0
        %4362 = vmatprep.subr.mxu0 0.0
        %4363 = vmatpush1.xpose.msra.mxu0 0.0
        %4364 = vmatprep.subr.mxu0 0.0
        %4365 = vmatpush1.xpose.msra.mxu0 0.0
        %4366 = vmatprep.subr.mxu0 0.0
        %4367 = vmatpush1.xpose.msra.mxu0 0.0
        %4368 = vmatprep.subr.mxu0 0.0
        %4369 = vmatpush1.xpose.msra.mxu0 0.0
        %4370 = vmatprep.subr.mxu0 0.0
        %4371 = vmatpush1.xpose.msra.mxu0 0.0
        %4372 = vmatprep.subr.mxu0 0.0
        %4373 = vmatpush1.xpose.msra.mxu0 0.0
        %4374 = vmatprep.subr.mxu0 0.0
        %4375 = vmatpush1.xpose.msra.mxu0 0.0
        %4376 = vmatprep.subr.mxu0 0.0
        %4377 = vmatpush1.xpose.msra.mxu0 0.0
        %4378 = vmatprep.subr.mxu0 0.0
        %4379 = vmatpush1.xpose.msra.mxu0 0.0
        %4380 = vmatprep.subr.mxu0 0.0
        %4381 = vmatpush1.xpose.msra.mxu0 0.0
        %4382 = vmatprep.subr.mxu0 0.0
        %4383 = vmatpush1.xpose.msra.mxu0 0.0
        %4384 = vmatprep.subr.mxu0 0.0
        %4385 = vmatpush1.xpose.msra.mxu0 0.0
        %4386 = vmatprep.subr.mxu0 0.0
        %4387 = vmatpush1.xpose.msra.mxu0 0.0
        %v4388 = vand.u32 %v647, 4294901760
        %4389 = vmatprep.subr.mxu0 %v4388
        %v4390 = vand.u32 %v645, 4294901760
        %4391 = vmatpush1.xpose.msra.mxu0 %v4390
        %4392 = vmatprep.subr.mxu0 0.0
        %4393 = vmatpush2.xpose.msra.mxu0 0.0
        %4394 = vmatprep.subr.mxu0 0.0
        %4395 = vmatpush2.xpose.msra.mxu0 0.0
        %4396 = vmatprep.subr.mxu0 0.0
        %4397 = vmatpush2.xpose.msra.mxu0 0.0
        %4398 = vmatprep.subr.mxu0 0.0
        %4399 = vmatpush2.xpose.msra.mxu0 0.0
        %4400 = vmatprep.subr.mxu0 0.0
        %4401 = vmatpush2.xpose.msra.mxu0 0.0
        %4402 = vmatprep.subr.mxu0 0.0
        %4403 = vmatpush2.xpose.msra.mxu0 0.0
        %4404 = vmatprep.subr.mxu0 0.0
        %4405 = vmatpush2.xpose.msra.mxu0 0.0
        %4406 = vmatprep.subr.mxu0 0.0
        %4407 = vmatpush2.xpose.msra.mxu0 0.0
        %4408 = vmatprep.subr.mxu0 0.0
        %4409 = vmatpush2.xpose.msra.mxu0 0.0
        %4410 = vmatprep.subr.mxu0 0.0
        %4411 = vmatpush2.xpose.msra.mxu0 0.0
        %4412 = vmatprep.subr.mxu0 0.0
        %4413 = vmatpush2.xpose.msra.mxu0 0.0
        %4414 = vmatprep.subr.mxu0 0.0
        %4415 = vmatpush2.xpose.msra.mxu0 0.0
        %4416 = vmatprep.subr.mxu0 0.0
        %4417 = vmatpush2.xpose.msra.mxu0 0.0
        %4418 = vmatprep.subr.mxu0 0.0
        %4419 = vmatpush2.xpose.msra.mxu0 0.0
        %4420 = vmatprep.subr.mxu0 0.0
        %4421 = vmatpush2.xpose.msra.mxu0 0.0
        %4422 = vmatprep.subr.mxu0 0.0
        %4423 = vmatpush2.xpose.msra.mxu0 0.0
        %v4424 = vand.u32 %v597, 4294901760
        %4425 = vmatprep.mubr.f32.mxu0 %v4424
        %v4426 = vand.u32 %v530, 4294901760
        %4427 = vmatmul.mubr.f32.gmra.mxu0 %v4426
        %v4428 = vpop.f32.mrf.mxu0
        %v4429 = vadd.f32 %v4355, %v4428
        %v4430 = vpop.f32.mrf.mxu0
        %4431 = vdwg.mxu0
        %4432 = vmatprep.subr.mxu0 0.0
        %4433 = vmatpush1.xpose.msra.mxu0 0.0
        %4434 = vmatprep.subr.mxu0 0.0
        %4435 = vmatpush1.xpose.msra.mxu0 0.0
        %4436 = vmatprep.subr.mxu0 0.0
        %4437 = vmatpush1.xpose.msra.mxu0 0.0
        %4438 = vmatprep.subr.mxu0 0.0
        %4439 = vmatpush1.xpose.msra.mxu0 0.0
        %4440 = vmatprep.subr.mxu0 0.0
        %4441 = vmatpush1.xpose.msra.mxu0 0.0
        %4442 = vmatprep.subr.mxu0 0.0
        %4443 = vmatpush1.xpose.msra.mxu0 0.0
        %4444 = vmatprep.subr.mxu0 0.0
        %4445 = vmatpush1.xpose.msra.mxu0 0.0
        %4446 = vmatprep.subr.mxu0 0.0
        %4447 = vmatpush1.xpose.msra.mxu0 0.0
        %4448 = vmatprep.subr.mxu0 0.0
        %4449 = vmatpush1.xpose.msra.mxu0 0.0
        %4450 = vmatprep.subr.mxu0 0.0
        %4451 = vmatpush1.xpose.msra.mxu0 0.0
        %4452 = vmatprep.subr.mxu0 0.0
        %4453 = vmatpush1.xpose.msra.mxu0 0.0
        %4454 = vmatprep.subr.mxu0 0.0
        %4455 = vmatpush1.xpose.msra.mxu0 0.0
        %4456 = vmatprep.subr.mxu0 0.0
        %4457 = vmatpush1.xpose.msra.mxu0 0.0
        %4458 = vmatprep.subr.mxu0 0.0
        %4459 = vmatpush1.xpose.msra.mxu0 0.0
        %4460 = vmatprep.subr.mxu0 0.0
        %4461 = vmatpush1.xpose.msra.mxu0 0.0
        %v4462 = vand.u32 %v629, 4294901760
        %4463 = vmatprep.subr.mxu0 %v4462
        %v4464 = vand.u32 %v621, 4294901760
        %4465 = vmatpush1.xpose.msra.mxu0 %v4464
        %4466 = vmatprep.subr.mxu0 0.0
        %4467 = vmatpush2.xpose.msra.mxu0 0.0
        %4468 = vmatprep.subr.mxu0 0.0
        %4469 = vmatpush2.xpose.msra.mxu0 0.0
        %4470 = vmatprep.subr.mxu0 0.0
        %4471 = vmatpush2.xpose.msra.mxu0 0.0
        %4472 = vmatprep.subr.mxu0 0.0
        %4473 = vmatpush2.xpose.msra.mxu0 0.0
        %4474 = vmatprep.subr.mxu0 0.0
        %4475 = vmatpush2.xpose.msra.mxu0 0.0
        %4476 = vmatprep.subr.mxu0 0.0
        %4477 = vmatpush2.xpose.msra.mxu0 0.0
        %4478 = vmatprep.subr.mxu0 0.0
        %4479 = vmatpush2.xpose.msra.mxu0 0.0
        %4480 = vmatprep.subr.mxu0 0.0
        %4481 = vmatpush2.xpose.msra.mxu0 0.0
        %4482 = vmatprep.subr.mxu0 0.0
        %4483 = vmatpush2.xpose.msra.mxu0 0.0
        %4484 = vmatprep.subr.mxu0 0.0
        %4485 = vmatpush2.xpose.msra.mxu0 0.0
        %4486 = vmatprep.subr.mxu0 0.0
        %4487 = vmatpush2.xpose.msra.mxu0 0.0
        %4488 = vmatprep.subr.mxu0 0.0
        %4489 = vmatpush2.xpose.msra.mxu0 0.0
        %4490 = vmatprep.subr.mxu0 0.0
        %4491 = vmatpush2.xpose.msra.mxu0 0.0
        %4492 = vmatprep.subr.mxu0 0.0
        %4493 = vmatpush2.xpose.msra.mxu0 0.0
        %4494 = vmatprep.subr.mxu0 0.0
        %4495 = vmatpush2.xpose.msra.mxu0 0.0
        %4496 = vmatprep.subr.mxu0 0.0
        %4497 = vmatpush2.xpose.msra.mxu0 0.0
        %v4498 = vand.u32 %v583, 4294901760
        %v4499 = vsub.f32 %v583, %v4498
        %v4500 = vand.u32 %v4499, 4294901760
        %v4501 = vsub.f32 %v4499, %v4500
        %v4502 = vand.u32 %v4501, 4294901760
        %4503 = vmatprep.mubr.f32.mxu0 %v4502
        %v4504 = vand.u32 %v582, 4294901760
        %v4505 = vsub.f32 %v582, %v4504
        %v4506 = vand.u32 %v4505, 4294901760
        %v4507 = vsub.f32 %v4505, %v4506
        %v4508 = vand.u32 %v4507, 4294901760
        %4509 = vmatmul.mubr.f32.gmra.mxu0 %v4508
        %v4510 = vpop.f32.mrf.mxu0
        %v4511 = vadd.f32 0.0, %v4510
        %v4512 = vpop.f32.mrf.mxu0
        %4513 = vdwg.mxu0
        %4514 = vmatprep.subr.mxu0 0.0
        %4515 = vmatpush1.xpose.msra.mxu0 0.0
        %4516 = vmatprep.subr.mxu0 0.0
        %4517 = vmatpush1.xpose.msra.mxu0 0.0
        %4518 = vmatprep.subr.mxu0 0.0
        %4519 = vmatpush1.xpose.msra.mxu0 0.0
        %4520 = vmatprep.subr.mxu0 0.0
        %4521 = vmatpush1.xpose.msra.mxu0 0.0
        %4522 = vmatprep.subr.mxu0 0.0
        %4523 = vmatpush1.xpose.msra.mxu0 0.0
        %4524 = vmatprep.subr.mxu0 0.0
        %4525 = vmatpush1.xpose.msra.mxu0 0.0
        %4526 = vmatprep.subr.mxu0 0.0
        %4527 = vmatpush1.xpose.msra.mxu0 0.0
        %4528 = vmatprep.subr.mxu0 0.0
        %4529 = vmatpush1.xpose.msra.mxu0 0.0
        %4530 = vmatprep.subr.mxu0 0.0
        %4531 = vmatpush1.xpose.msra.mxu0 0.0
        %4532 = vmatprep.subr.mxu0 0.0
        %4533 = vmatpush1.xpose.msra.mxu0 0.0
        %4534 = vmatprep.subr.mxu0 0.0
        %4535 = vmatpush1.xpose.msra.mxu0 0.0
        %4536 = vmatprep.subr.mxu0 0.0
        %4537 = vmatpush1.xpose.msra.mxu0 0.0
        %4538 = vmatprep.subr.mxu0 0.0
        %4539 = vmatpush1.xpose.msra.mxu0 0.0
        %4540 = vmatprep.subr.mxu0 0.0
        %4541 = vmatpush1.xpose.msra.mxu0 0.0
        %4542 = vmatprep.subr.mxu0 0.0
        %4543 = vmatpush1.xpose.msra.mxu0 0.0
        %v4544 = vand.u32 %v629, 4294901760
        %v4545 = vsub.f32 %v629, %v4544
        %v4546 = vand.u32 %v4545, 4294901760
        %v4547 = vsub.f32 %v4545, %v4546
        %v4548 = vand.u32 %v4547, 4294901760
        %4549 = vmatprep.subr.mxu0 %v4548
        %v4550 = vand.u32 %v621, 4294901760
        %v4551 = vsub.f32 %v621, %v4550
        %v4552 = vand.u32 %v4551, 4294901760
        %v4553 = vsub.f32 %v4551, %v4552
        %v4554 = vand.u32 %v4553, 4294901760
        %4555 = vmatpush1.xpose.msra.mxu0 %v4554
        %4556 = vmatprep.subr.mxu0 0.0
        %4557 = vmatpush2.xpose.msra.mxu0 0.0
        %4558 = vmatprep.subr.mxu0 0.0
        %4559 = vmatpush2.xpose.msra.mxu0 0.0
        %4560 = vmatprep.subr.mxu0 0.0
        %4561 = vmatpush2.xpose.msra.mxu0 0.0
        %4562 = vmatprep.subr.mxu0 0.0
        %4563 = vmatpush2.xpose.msra.mxu0 0.0
        %4564 = vmatprep.subr.mxu0 0.0
        %4565 = vmatpush2.xpose.msra.mxu0 0.0
        %4566 = vmatprep.subr.mxu0 0.0
        %4567 = vmatpush2.xpose.msra.mxu0 0.0
        %4568 = vmatprep.subr.mxu0 0.0
        %4569 = vmatpush2.xpose.msra.mxu0 0.0
        %4570 = vmatprep.subr.mxu0 0.0
        %4571 = vmatpush2.xpose.msra.mxu0 0.0
        %4572 = vmatprep.subr.mxu0 0.0
        %4573 = vmatpush2.xpose.msra.mxu0 0.0
        %4574 = vmatprep.subr.mxu0 0.0
        %4575 = vmatpush2.xpose.msra.mxu0 0.0
        %4576 = vmatprep.subr.mxu0 0.0
        %4577 = vmatpush2.xpose.msra.mxu0 0.0
        %4578 = vmatprep.subr.mxu0 0.0
        %4579 = vmatpush2.xpose.msra.mxu0 0.0
        %4580 = vmatprep.subr.mxu0 0.0
        %4581 = vmatpush2.xpose.msra.mxu0 0.0
        %4582 = vmatprep.subr.mxu0 0.0
        %4583 = vmatpush2.xpose.msra.mxu0 0.0
        %4584 = vmatprep.subr.mxu0 0.0
        %4585 = vmatpush2.xpose.msra.mxu0 0.0
        %4586 = vmatprep.subr.mxu0 0.0
        %4587 = vmatpush2.xpose.msra.mxu0 0.0
        %v4588 = vand.u32 %v583, 4294901760
        %4589 = vmatprep.mubr.f32.mxu0 %v4588
        %v4590 = vand.u32 %v582, 4294901760
        %4591 = vmatmul.mubr.f32.gmra.mxu0 %v4590
        %v4592 = vpop.f32.mrf.mxu0
        %v4593 = vadd.f32 %v4511, %v4592
        %v4594 = vpop.f32.mrf.mxu0
        %4595 = vdwg.mxu0
        %4596 = vmatprep.subr.mxu0 0.0
        %4597 = vmatpush1.xpose.msra.mxu0 0.0
        %4598 = vmatprep.subr.mxu0 0.0
        %4599 = vmatpush1.xpose.msra.mxu0 0.0
        %4600 = vmatprep.subr.mxu0 0.0
        %4601 = vmatpush1.xpose.msra.mxu0 0.0
        %4602 = vmatprep.subr.mxu0 0.0
        %4603 = vmatpush1.xpose.msra.mxu0 0.0
        %4604 = vmatprep.subr.mxu0 0.0
        %4605 = vmatpush1.xpose.msra.mxu0 0.0
        %4606 = vmatprep.subr.mxu0 0.0
        %4607 = vmatpush1.xpose.msra.mxu0 0.0
        %4608 = vmatprep.subr.mxu0 0.0
        %4609 = vmatpush1.xpose.msra.mxu0 0.0
        %4610 = vmatprep.subr.mxu0 0.0
        %4611 = vmatpush1.xpose.msra.mxu0 0.0
        %4612 = vmatprep.subr.mxu0 0.0
        %4613 = vmatpush1.xpose.msra.mxu0 0.0
        %4614 = vmatprep.subr.mxu0 0.0
        %4615 = vmatpush1.xpose.msra.mxu0 0.0
        %4616 = vmatprep.subr.mxu0 0.0
        %4617 = vmatpush1.xpose.msra.mxu0 0.0
        %4618 = vmatprep.subr.mxu0 0.0
        %4619 = vmatpush1.xpose.msra.mxu0 0.0
        %4620 = vmatprep.subr.mxu0 0.0
        %4621 = vmatpush1.xpose.msra.mxu0 0.0
        %4622 = vmatprep.subr.mxu0 0.0
        %4623 = vmatpush1.xpose.msra.mxu0 0.0
        %4624 = vmatprep.subr.mxu0 0.0
        %4625 = vmatpush1.xpose.msra.mxu0 0.0
        %v4626 = vand.u32 %v629, 4294901760
        %v4627 = vsub.f32 %v629, %v4626
        %4628 = vmatprep.subr.mxu0 %v4627
        %v4629 = vand.u32 %v621, 4294901760
        %v4630 = vsub.f32 %v621, %v4629
        %4631 = vmatpush1.xpose.msra.mxu0 %v4630
        %4632 = vmatprep.subr.mxu0 0.0
        %4633 = vmatpush2.xpose.msra.mxu0 0.0
        %4634 = vmatprep.subr.mxu0 0.0
        %4635 = vmatpush2.xpose.msra.mxu0 0.0
        %4636 = vmatprep.subr.mxu0 0.0
        %4637 = vmatpush2.xpose.msra.mxu0 0.0
        %4638 = vmatprep.subr.mxu0 0.0
        %4639 = vmatpush2.xpose.msra.mxu0 0.0
        %4640 = vmatprep.subr.mxu0 0.0
        %4641 = vmatpush2.xpose.msra.mxu0 0.0
        %4642 = vmatprep.subr.mxu0 0.0
        %4643 = vmatpush2.xpose.msra.mxu0 0.0
        %4644 = vmatprep.subr.mxu0 0.0
        %4645 = vmatpush2.xpose.msra.mxu0 0.0
        %4646 = vmatprep.subr.mxu0 0.0
        %4647 = vmatpush2.xpose.msra.mxu0 0.0
        %4648 = vmatprep.subr.mxu0 0.0
        %4649 = vmatpush2.xpose.msra.mxu0 0.0
        %4650 = vmatprep.subr.mxu0 0.0
        %4651 = vmatpush2.xpose.msra.mxu0 0.0
        %4652 = vmatprep.subr.mxu0 0.0
        %4653 = vmatpush2.xpose.msra.mxu0 0.0
        %4654 = vmatprep.subr.mxu0 0.0
        %4655 = vmatpush2.xpose.msra.mxu0 0.0
        %4656 = vmatprep.subr.mxu0 0.0
        %4657 = vmatpush2.xpose.msra.mxu0 0.0
        %4658 = vmatprep.subr.mxu0 0.0
        %4659 = vmatpush2.xpose.msra.mxu0 0.0
        %4660 = vmatprep.subr.mxu0 0.0
        %4661 = vmatpush2.xpose.msra.mxu0 0.0
        %4662 = vmatprep.subr.mxu0 0.0
        %4663 = vmatpush2.xpose.msra.mxu0 0.0
        %v4664 = vand.u32 %v583, 4294901760
        %v4665 = vsub.f32 %v583, %v4664
        %4666 = vmatprep.mubr.f32.mxu0 %v4665
        %v4667 = vand.u32 %v582, 4294901760
        %v4668 = vsub.f32 %v582, %v4667
        %4669 = vmatmul.mubr.f32.gmra.mxu0 %v4668
        %v4670 = vpop.f32.mrf.mxu0
        %v4671 = vadd.f32 %v4593, %v4670
        %v4672 = vpop.f32.mrf.mxu0
        %4673 = vdwg.mxu0
        %4674 = vmatprep.subr.mxu0 0.0
        %4675 = vmatpush1.xpose.msra.mxu0 0.0
        %4676 = vmatprep.subr.mxu0 0.0
        %4677 = vmatpush1.xpose.msra.mxu0 0.0
        %4678 = vmatprep.subr.mxu0 0.0
        %4679 = vmatpush1.xpose.msra.mxu0 0.0
        %4680 = vmatprep.subr.mxu0 0.0
        %4681 = vmatpush1.xpose.msra.mxu0 0.0
        %4682 = vmatprep.subr.mxu0 0.0
        %4683 = vmatpush1.xpose.msra.mxu0 0.0
        %4684 = vmatprep.subr.mxu0 0.0
        %4685 = vmatpush1.xpose.msra.mxu0 0.0
        %4686 = vmatprep.subr.mxu0 0.0
        %4687 = vmatpush1.xpose.msra.mxu0 0.0
        %4688 = vmatprep.subr.mxu0 0.0
        %4689 = vmatpush1.xpose.msra.mxu0 0.0
        %4690 = vmatprep.subr.mxu0 0.0
        %4691 = vmatpush1.xpose.msra.mxu0 0.0
        %4692 = vmatprep.subr.mxu0 0.0
        %4693 = vmatpush1.xpose.msra.mxu0 0.0
        %4694 = vmatprep.subr.mxu0 0.0
        %4695 = vmatpush1.xpose.msra.mxu0 0.0
        %4696 = vmatprep.subr.mxu0 0.0
        %4697 = vmatpush1.xpose.msra.mxu0 0.0
        %4698 = vmatprep.subr.mxu0 0.0
        %4699 = vmatpush1.xpose.msra.mxu0 0.0
        %4700 = vmatprep.subr.mxu0 0.0
        %4701 = vmatpush1.xpose.msra.mxu0 0.0
        %4702 = vmatprep.subr.mxu0 0.0
        %4703 = vmatpush1.xpose.msra.mxu0 0.0
        %v4704 = vand.u32 %v629, 4294901760
        %4705 = vmatprep.subr.mxu0 %v4704
        %v4706 = vand.u32 %v621, 4294901760
        %4707 = vmatpush1.xpose.msra.mxu0 %v4706
        %4708 = vmatprep.subr.mxu0 0.0
        %4709 = vmatpush2.xpose.msra.mxu0 0.0
        %4710 = vmatprep.subr.mxu0 0.0
        %4711 = vmatpush2.xpose.msra.mxu0 0.0
        %4712 = vmatprep.subr.mxu0 0.0
        %4713 = vmatpush2.xpose.msra.mxu0 0.0
        %4714 = vmatprep.subr.mxu0 0.0
        %4715 = vmatpush2.xpose.msra.mxu0 0.0
        %4716 = vmatprep.subr.mxu0 0.0
        %4717 = vmatpush2.xpose.msra.mxu0 0.0
        %4718 = vmatprep.subr.mxu0 0.0
        %4719 = vmatpush2.xpose.msra.mxu0 0.0
        %4720 = vmatprep.subr.mxu0 0.0
        %4721 = vmatpush2.xpose.msra.mxu0 0.0
        %4722 = vmatprep.subr.mxu0 0.0
        %4723 = vmatpush2.xpose.msra.mxu0 0.0
        %4724 = vmatprep.subr.mxu0 0.0
        %4725 = vmatpush2.xpose.msra.mxu0 0.0
        %4726 = vmatprep.subr.mxu0 0.0
        %4727 = vmatpush2.xpose.msra.mxu0 0.0
        %4728 = vmatprep.subr.mxu0 0.0
        %4729 = vmatpush2.xpose.msra.mxu0 0.0
        %4730 = vmatprep.subr.mxu0 0.0
        %4731 = vmatpush2.xpose.msra.mxu0 0.0
        %4732 = vmatprep.subr.mxu0 0.0
        %4733 = vmatpush2.xpose.msra.mxu0 0.0
        %4734 = vmatprep.subr.mxu0 0.0
        %4735 = vmatpush2.xpose.msra.mxu0 0.0
        %4736 = vmatprep.subr.mxu0 0.0
        %4737 = vmatpush2.xpose.msra.mxu0 0.0
        %4738 = vmatprep.subr.mxu0 0.0
        %4739 = vmatpush2.xpose.msra.mxu0 0.0
        %v4740 = vand.u32 %v583, 4294901760
        %v4741 = vsub.f32 %v583, %v4740
        %v4742 = vand.u32 %v4741, 4294901760
        %4743 = vmatprep.mubr.f32.mxu0 %v4742
        %v4744 = vand.u32 %v582, 4294901760
        %v4745 = vsub.f32 %v582, %v4744
        %v4746 = vand.u32 %v4745, 4294901760
        %4747 = vmatmul.mubr.f32.gmra.mxu0 %v4746
        %v4748 = vpop.f32.mrf.mxu0
        %v4749 = vadd.f32 %v4671, %v4748
        %v4750 = vpop.f32.mrf.mxu0
        %4751 = vdwg.mxu0
        %4752 = vmatprep.subr.mxu0 0.0
        %4753 = vmatpush1.xpose.msra.mxu0 0.0
        %4754 = vmatprep.subr.mxu0 0.0
        %4755 = vmatpush1.xpose.msra.mxu0 0.0
        %4756 = vmatprep.subr.mxu0 0.0
        %4757 = vmatpush1.xpose.msra.mxu0 0.0
        %4758 = vmatprep.subr.mxu0 0.0
        %4759 = vmatpush1.xpose.msra.mxu0 0.0
        %4760 = vmatprep.subr.mxu0 0.0
        %4761 = vmatpush1.xpose.msra.mxu0 0.0
        %4762 = vmatprep.subr.mxu0 0.0
        %4763 = vmatpush1.xpose.msra.mxu0 0.0
        %4764 = vmatprep.subr.mxu0 0.0
        %4765 = vmatpush1.xpose.msra.mxu0 0.0
        %4766 = vmatprep.subr.mxu0 0.0
        %4767 = vmatpush1.xpose.msra.mxu0 0.0
        %4768 = vmatprep.subr.mxu0 0.0
        %4769 = vmatpush1.xpose.msra.mxu0 0.0
        %4770 = vmatprep.subr.mxu0 0.0
        %4771 = vmatpush1.xpose.msra.mxu0 0.0
        %4772 = vmatprep.subr.mxu0 0.0
        %4773 = vmatpush1.xpose.msra.mxu0 0.0
        %4774 = vmatprep.subr.mxu0 0.0
        %4775 = vmatpush1.xpose.msra.mxu0 0.0
        %4776 = vmatprep.subr.mxu0 0.0
        %4777 = vmatpush1.xpose.msra.mxu0 0.0
        %4778 = vmatprep.subr.mxu0 0.0
        %4779 = vmatpush1.xpose.msra.mxu0 0.0
        %4780 = vmatprep.subr.mxu0 0.0
        %4781 = vmatpush1.xpose.msra.mxu0 0.0
        %v4782 = vand.u32 %v629, 4294901760
        %v4783 = vsub.f32 %v629, %v4782
        %v4784 = vand.u32 %v4783, 4294901760
        %4785 = vmatprep.subr.mxu0 %v4784
        %v4786 = vand.u32 %v621, 4294901760
        %v4787 = vsub.f32 %v621, %v4786
        %v4788 = vand.u32 %v4787, 4294901760
        %4789 = vmatpush1.xpose.msra.mxu0 %v4788
        %4790 = vmatprep.subr.mxu0 0.0
        %4791 = vmatpush2.xpose.msra.mxu0 0.0
        %4792 = vmatprep.subr.mxu0 0.0
        %4793 = vmatpush2.xpose.msra.mxu0 0.0
        %4794 = vmatprep.subr.mxu0 0.0
        %4795 = vmatpush2.xpose.msra.mxu0 0.0
        %4796 = vmatprep.subr.mxu0 0.0
        %4797 = vmatpush2.xpose.msra.mxu0 0.0
        %4798 = vmatprep.subr.mxu0 0.0
        %4799 = vmatpush2.xpose.msra.mxu0 0.0
        %4800 = vmatprep.subr.mxu0 0.0
        %4801 = vmatpush2.xpose.msra.mxu0 0.0
        %4802 = vmatprep.subr.mxu0 0.0
        %4803 = vmatpush2.xpose.msra.mxu0 0.0
        %4804 = vmatprep.subr.mxu0 0.0
        %4805 = vmatpush2.xpose.msra.mxu0 0.0
        %4806 = vmatprep.subr.mxu0 0.0
        %4807 = vmatpush2.xpose.msra.mxu0 0.0
        %4808 = vmatprep.subr.mxu0 0.0
        %4809 = vmatpush2.xpose.msra.mxu0 0.0
        %4810 = vmatprep.subr.mxu0 0.0
        %4811 = vmatpush2.xpose.msra.mxu0 0.0
        %4812 = vmatprep.subr.mxu0 0.0
        %4813 = vmatpush2.xpose.msra.mxu0 0.0
        %4814 = vmatprep.subr.mxu0 0.0
        %4815 = vmatpush2.xpose.msra.mxu0 0.0
        %4816 = vmatprep.subr.mxu0 0.0
        %4817 = vmatpush2.xpose.msra.mxu0 0.0
        %4818 = vmatprep.subr.mxu0 0.0
        %4819 = vmatpush2.xpose.msra.mxu0 0.0
        %4820 = vmatprep.subr.mxu0 0.0
        %4821 = vmatpush2.xpose.msra.mxu0 0.0
        %v4822 = vand.u32 %v583, 4294901760
        %4823 = vmatprep.mubr.f32.mxu0 %v4822
        %v4824 = vand.u32 %v582, 4294901760
        %4825 = vmatmul.mubr.f32.gmra.mxu0 %v4824
        %v4826 = vpop.f32.mrf.mxu0
        %v4827 = vadd.f32 %v4749, %v4826
        %v4828 = vpop.f32.mrf.mxu0
        %4829 = vdwg.mxu0
        %4830 = vmatprep.subr.mxu0 0.0
        %4831 = vmatpush1.xpose.msra.mxu0 0.0
        %4832 = vmatprep.subr.mxu0 0.0
        %4833 = vmatpush1.xpose.msra.mxu0 0.0
        %4834 = vmatprep.subr.mxu0 0.0
        %4835 = vmatpush1.xpose.msra.mxu0 0.0
        %4836 = vmatprep.subr.mxu0 0.0
        %4837 = vmatpush1.xpose.msra.mxu0 0.0
        %4838 = vmatprep.subr.mxu0 0.0
        %4839 = vmatpush1.xpose.msra.mxu0 0.0
        %4840 = vmatprep.subr.mxu0 0.0
        %4841 = vmatpush1.xpose.msra.mxu0 0.0
        %4842 = vmatprep.subr.mxu0 0.0
        %4843 = vmatpush1.xpose.msra.mxu0 0.0
        %4844 = vmatprep.subr.mxu0 0.0
        %4845 = vmatpush1.xpose.msra.mxu0 0.0
        %4846 = vmatprep.subr.mxu0 0.0
        %4847 = vmatpush1.xpose.msra.mxu0 0.0
        %4848 = vmatprep.subr.mxu0 0.0
        %4849 = vmatpush1.xpose.msra.mxu0 0.0
        %4850 = vmatprep.subr.mxu0 0.0
        %4851 = vmatpush1.xpose.msra.mxu0 0.0
        %4852 = vmatprep.subr.mxu0 0.0
        %4853 = vmatpush1.xpose.msra.mxu0 0.0
        %4854 = vmatprep.subr.mxu0 0.0
        %4855 = vmatpush1.xpose.msra.mxu0 0.0
        %4856 = vmatprep.subr.mxu0 0.0
        %4857 = vmatpush1.xpose.msra.mxu0 0.0
        %4858 = vmatprep.subr.mxu0 0.0
        %4859 = vmatpush1.xpose.msra.mxu0 0.0
        %v4860 = vand.u32 %v629, 4294901760
        %4861 = vmatprep.subr.mxu0 %v4860
        %v4862 = vand.u32 %v621, 4294901760
        %4863 = vmatpush1.xpose.msra.mxu0 %v4862
        %4864 = vmatprep.subr.mxu0 0.0
        %4865 = vmatpush2.xpose.msra.mxu0 0.0
        %4866 = vmatprep.subr.mxu0 0.0
        %4867 = vmatpush2.xpose.msra.mxu0 0.0
        %4868 = vmatprep.subr.mxu0 0.0
        %4869 = vmatpush2.xpose.msra.mxu0 0.0
        %4870 = vmatprep.subr.mxu0 0.0
        %4871 = vmatpush2.xpose.msra.mxu0 0.0
        %4872 = vmatprep.subr.mxu0 0.0
        %4873 = vmatpush2.xpose.msra.mxu0 0.0
        %4874 = vmatprep.subr.mxu0 0.0
        %4875 = vmatpush2.xpose.msra.mxu0 0.0
        %4876 = vmatprep.subr.mxu0 0.0
        %4877 = vmatpush2.xpose.msra.mxu0 0.0
        %4878 = vmatprep.subr.mxu0 0.0
        %4879 = vmatpush2.xpose.msra.mxu0 0.0
        %4880 = vmatprep.subr.mxu0 0.0
        %4881 = vmatpush2.xpose.msra.mxu0 0.0
        %4882 = vmatprep.subr.mxu0 0.0
        %4883 = vmatpush2.xpose.msra.mxu0 0.0
        %4884 = vmatprep.subr.mxu0 0.0
        %4885 = vmatpush2.xpose.msra.mxu0 0.0
        %4886 = vmatprep.subr.mxu0 0.0
        %4887 = vmatpush2.xpose.msra.mxu0 0.0
        %4888 = vmatprep.subr.mxu0 0.0
        %4889 = vmatpush2.xpose.msra.mxu0 0.0
        %4890 = vmatprep.subr.mxu0 0.0
        %4891 = vmatpush2.xpose.msra.mxu0 0.0
        %4892 = vmatprep.subr.mxu0 0.0
        %4893 = vmatpush2.xpose.msra.mxu0 0.0
        %4894 = vmatprep.subr.mxu0 0.0
        %4895 = vmatpush2.xpose.msra.mxu0 0.0
        %v4896 = vand.u32 %v583, 4294901760
        %4897 = vmatprep.mubr.f32.mxu0 %v4896
        %v4898 = vand.u32 %v582, 4294901760
        %4899 = vmatmul.mubr.f32.gmra.mxu0 %v4898
        %v4900 = vpop.f32.mrf.mxu0
        %v4901 = vadd.f32 %v4827, %v4900
        %v4902 = vpop.f32.mrf.mxu0
        %4903 = vdwg.mxu0
        %4904 = vmatprep.subr.mxu0 0.0
        %4905 = vmatpush1.xpose.msra.mxu0 0.0
        %4906 = vmatprep.subr.mxu0 0.0
        %4907 = vmatpush1.xpose.msra.mxu0 0.0
        %4908 = vmatprep.subr.mxu0 0.0
        %4909 = vmatpush1.xpose.msra.mxu0 0.0
        %4910 = vmatprep.subr.mxu0 0.0
        %4911 = vmatpush1.xpose.msra.mxu0 0.0
        %4912 = vmatprep.subr.mxu0 0.0
        %4913 = vmatpush1.xpose.msra.mxu0 0.0
        %4914 = vmatprep.subr.mxu0 0.0
        %4915 = vmatpush1.xpose.msra.mxu0 0.0
        %4916 = vmatprep.subr.mxu0 0.0
        %4917 = vmatpush1.xpose.msra.mxu0 0.0
        %4918 = vmatprep.subr.mxu0 0.0
        %4919 = vmatpush1.xpose.msra.mxu0 0.0
        %4920 = vmatprep.subr.mxu0 0.0
        %4921 = vmatpush1.xpose.msra.mxu0 0.0
        %4922 = vmatprep.subr.mxu0 0.0
        %4923 = vmatpush1.xpose.msra.mxu0 0.0
        %4924 = vmatprep.subr.mxu0 0.0
        %4925 = vmatpush1.xpose.msra.mxu0 0.0
        %4926 = vmatprep.subr.mxu0 0.0
        %4927 = vmatpush1.xpose.msra.mxu0 0.0
        %4928 = vmatprep.subr.mxu0 0.0
        %4929 = vmatpush1.xpose.msra.mxu0 0.0
        %4930 = vmatprep.subr.mxu0 0.0
        %4931 = vmatpush1.xpose.msra.mxu0 0.0
        %4932 = vmatprep.subr.mxu0 0.0
        %4933 = vmatpush1.xpose.msra.mxu0 0.0
        %v4934 = vand.u32 %v630, 4294901760
        %4935 = vmatprep.subr.mxu0 %v4934
        %v4936 = vand.u32 %v628, 4294901760
        %4937 = vmatpush1.xpose.msra.mxu0 %v4936
        %4938 = vmatprep.subr.mxu0 0.0
        %4939 = vmatpush2.xpose.msra.mxu0 0.0
        %4940 = vmatprep.subr.mxu0 0.0
        %4941 = vmatpush2.xpose.msra.mxu0 0.0
        %4942 = vmatprep.subr.mxu0 0.0
        %4943 = vmatpush2.xpose.msra.mxu0 0.0
        %4944 = vmatprep.subr.mxu0 0.0
        %4945 = vmatpush2.xpose.msra.mxu0 0.0
        %4946 = vmatprep.subr.mxu0 0.0
        %4947 = vmatpush2.xpose.msra.mxu0 0.0
        %4948 = vmatprep.subr.mxu0 0.0
        %4949 = vmatpush2.xpose.msra.mxu0 0.0
        %4950 = vmatprep.subr.mxu0 0.0
        %4951 = vmatpush2.xpose.msra.mxu0 0.0
        %4952 = vmatprep.subr.mxu0 0.0
        %4953 = vmatpush2.xpose.msra.mxu0 0.0
        %4954 = vmatprep.subr.mxu0 0.0
        %4955 = vmatpush2.xpose.msra.mxu0 0.0
        %4956 = vmatprep.subr.mxu0 0.0
        %4957 = vmatpush2.xpose.msra.mxu0 0.0
        %4958 = vmatprep.subr.mxu0 0.0
        %4959 = vmatpush2.xpose.msra.mxu0 0.0
        %4960 = vmatprep.subr.mxu0 0.0
        %4961 = vmatpush2.xpose.msra.mxu0 0.0
        %4962 = vmatprep.subr.mxu0 0.0
        %4963 = vmatpush2.xpose.msra.mxu0 0.0
        %4964 = vmatprep.subr.mxu0 0.0
        %4965 = vmatpush2.xpose.msra.mxu0 0.0
        %4966 = vmatprep.subr.mxu0 0.0
        %4967 = vmatpush2.xpose.msra.mxu0 0.0
        %4968 = vmatprep.subr.mxu0 0.0
        %4969 = vmatpush2.xpose.msra.mxu0 0.0
        %v4970 = vand.u32 %v585, 4294901760
        %v4971 = vsub.f32 %v585, %v4970
        %v4972 = vand.u32 %v4971, 4294901760
        %v4973 = vsub.f32 %v4971, %v4972
        %v4974 = vand.u32 %v4973, 4294901760
        %4975 = vmatprep.mubr.f32.mxu0 %v4974
        %v4976 = vand.u32 %v584, 4294901760
        %v4977 = vsub.f32 %v584, %v4976
        %v4978 = vand.u32 %v4977, 4294901760
        %v4979 = vsub.f32 %v4977, %v4978
        %v4980 = vand.u32 %v4979, 4294901760
        %4981 = vmatmul.mubr.f32.gmra.mxu0 %v4980
        %v4982 = vpop.f32.mrf.mxu0
        %v4983 = vadd.f32 %v4901, %v4982
        %v4984 = vpop.f32.mrf.mxu0
        %4985 = vdwg.mxu0
        %4986 = vmatprep.subr.mxu0 0.0
        %4987 = vmatpush1.xpose.msra.mxu0 0.0
        %4988 = vmatprep.subr.mxu0 0.0
        %4989 = vmatpush1.xpose.msra.mxu0 0.0
        %4990 = vmatprep.subr.mxu0 0.0
        %4991 = vmatpush1.xpose.msra.mxu0 0.0
        %4992 = vmatprep.subr.mxu0 0.0
        %4993 = vmatpush1.xpose.msra.mxu0 0.0
        %4994 = vmatprep.subr.mxu0 0.0
        %4995 = vmatpush1.xpose.msra.mxu0 0.0
        %4996 = vmatprep.subr.mxu0 0.0
        %4997 = vmatpush1.xpose.msra.mxu0 0.0
        %4998 = vmatprep.subr.mxu0 0.0
        %4999 = vmatpush1.xpose.msra.mxu0 0.0
        %5000 = vmatprep.subr.mxu0 0.0
        %5001 = vmatpush1.xpose.msra.mxu0 0.0
        %5002 = vmatprep.subr.mxu0 0.0
        %5003 = vmatpush1.xpose.msra.mxu0 0.0
        %5004 = vmatprep.subr.mxu0 0.0
        %5005 = vmatpush1.xpose.msra.mxu0 0.0
        %5006 = vmatprep.subr.mxu0 0.0
        %5007 = vmatpush1.xpose.msra.mxu0 0.0
        %5008 = vmatprep.subr.mxu0 0.0
        %5009 = vmatpush1.xpose.msra.mxu0 0.0
        %5010 = vmatprep.subr.mxu0 0.0
        %5011 = vmatpush1.xpose.msra.mxu0 0.0
        %5012 = vmatprep.subr.mxu0 0.0
        %5013 = vmatpush1.xpose.msra.mxu0 0.0
        %5014 = vmatprep.subr.mxu0 0.0
        %5015 = vmatpush1.xpose.msra.mxu0 0.0
        %v5016 = vand.u32 %v630, 4294901760
        %v5017 = vsub.f32 %v630, %v5016
        %v5018 = vand.u32 %v5017, 4294901760
        %v5019 = vsub.f32 %v5017, %v5018
        %v5020 = vand.u32 %v5019, 4294901760
        %5021 = vmatprep.subr.mxu0 %v5020
        %v5022 = vand.u32 %v628, 4294901760
        %v5023 = vsub.f32 %v628, %v5022
        %v5024 = vand.u32 %v5023, 4294901760
        %v5025 = vsub.f32 %v5023, %v5024
        %v5026 = vand.u32 %v5025, 4294901760
        %5027 = vmatpush1.xpose.msra.mxu0 %v5026
        %5028 = vmatprep.subr.mxu0 0.0
        %5029 = vmatpush2.xpose.msra.mxu0 0.0
        %5030 = vmatprep.subr.mxu0 0.0
        %5031 = vmatpush2.xpose.msra.mxu0 0.0
        %5032 = vmatprep.subr.mxu0 0.0
        %5033 = vmatpush2.xpose.msra.mxu0 0.0
        %5034 = vmatprep.subr.mxu0 0.0
        %5035 = vmatpush2.xpose.msra.mxu0 0.0
        %5036 = vmatprep.subr.mxu0 0.0
        %5037 = vmatpush2.xpose.msra.mxu0 0.0
        %5038 = vmatprep.subr.mxu0 0.0
        %5039 = vmatpush2.xpose.msra.mxu0 0.0
        %5040 = vmatprep.subr.mxu0 0.0
        %5041 = vmatpush2.xpose.msra.mxu0 0.0
        %5042 = vmatprep.subr.mxu0 0.0
        %5043 = vmatpush2.xpose.msra.mxu0 0.0
        %5044 = vmatprep.subr.mxu0 0.0
        %5045 = vmatpush2.xpose.msra.mxu0 0.0
        %5046 = vmatprep.subr.mxu0 0.0
        %5047 = vmatpush2.xpose.msra.mxu0 0.0
        %5048 = vmatprep.subr.mxu0 0.0
        %5049 = vmatpush2.xpose.msra.mxu0 0.0
        %5050 = vmatprep.subr.mxu0 0.0
        %5051 = vmatpush2.xpose.msra.mxu0 0.0
        %5052 = vmatprep.subr.mxu0 0.0
        %5053 = vmatpush2.xpose.msra.mxu0 0.0
        %5054 = vmatprep.subr.mxu0 0.0
        %5055 = vmatpush2.xpose.msra.mxu0 0.0
        %5056 = vmatprep.subr.mxu0 0.0
        %5057 = vmatpush2.xpose.msra.mxu0 0.0
        %5058 = vmatprep.subr.mxu0 0.0
        %5059 = vmatpush2.xpose.msra.mxu0 0.0
        %v5060 = vand.u32 %v585, 4294901760
        %5061 = vmatprep.mubr.f32.mxu0 %v5060
        %v5062 = vand.u32 %v584, 4294901760
        %5063 = vmatmul.mubr.f32.gmra.mxu0 %v5062
        %v5064 = vpop.f32.mrf.mxu0
        %v5065 = vadd.f32 %v4983, %v5064
        %v5066 = vpop.f32.mrf.mxu0
        %5067 = vdwg.mxu0
        %5068 = vmatprep.subr.mxu0 0.0
        %5069 = vmatpush1.xpose.msra.mxu0 0.0
        %5070 = vmatprep.subr.mxu0 0.0
        %5071 = vmatpush1.xpose.msra.mxu0 0.0
        %5072 = vmatprep.subr.mxu0 0.0
        %5073 = vmatpush1.xpose.msra.mxu0 0.0
        %5074 = vmatprep.subr.mxu0 0.0
        %5075 = vmatpush1.xpose.msra.mxu0 0.0
        %5076 = vmatprep.subr.mxu0 0.0
        %5077 = vmatpush1.xpose.msra.mxu0 0.0
        %5078 = vmatprep.subr.mxu0 0.0
        %5079 = vmatpush1.xpose.msra.mxu0 0.0
        %5080 = vmatprep.subr.mxu0 0.0
        %5081 = vmatpush1.xpose.msra.mxu0 0.0
        %5082 = vmatprep.subr.mxu0 0.0
        %5083 = vmatpush1.xpose.msra.mxu0 0.0
        %5084 = vmatprep.subr.mxu0 0.0
        %5085 = vmatpush1.xpose.msra.mxu0 0.0
        %5086 = vmatprep.subr.mxu0 0.0
        %5087 = vmatpush1.xpose.msra.mxu0 0.0
        %5088 = vmatprep.subr.mxu0 0.0
        %5089 = vmatpush1.xpose.msra.mxu0 0.0
        %5090 = vmatprep.subr.mxu0 0.0
        %5091 = vmatpush1.xpose.msra.mxu0 0.0
        %5092 = vmatprep.subr.mxu0 0.0
        %5093 = vmatpush1.xpose.msra.mxu0 0.0
        %5094 = vmatprep.subr.mxu0 0.0
        %5095 = vmatpush1.xpose.msra.mxu0 0.0
        %5096 = vmatprep.subr.mxu0 0.0
        %5097 = vmatpush1.xpose.msra.mxu0 0.0
        %v5098 = vand.u32 %v630, 4294901760
        %v5099 = vsub.f32 %v630, %v5098
        %5100 = vmatprep.subr.mxu0 %v5099
        %v5101 = vand.u32 %v628, 4294901760
        %v5102 = vsub.f32 %v628, %v5101
        %5103 = vmatpush1.xpose.msra.mxu0 %v5102
        %5104 = vmatprep.subr.mxu0 0.0
        %5105 = vmatpush2.xpose.msra.mxu0 0.0
        %5106 = vmatprep.subr.mxu0 0.0
        %5107 = vmatpush2.xpose.msra.mxu0 0.0
        %5108 = vmatprep.subr.mxu0 0.0
        %5109 = vmatpush2.xpose.msra.mxu0 0.0
        %5110 = vmatprep.subr.mxu0 0.0
        %5111 = vmatpush2.xpose.msra.mxu0 0.0
        %5112 = vmatprep.subr.mxu0 0.0
        %5113 = vmatpush2.xpose.msra.mxu0 0.0
        %5114 = vmatprep.subr.mxu0 0.0
        %5115 = vmatpush2.xpose.msra.mxu0 0.0
        %5116 = vmatprep.subr.mxu0 0.0
        %5117 = vmatpush2.xpose.msra.mxu0 0.0
        %5118 = vmatprep.subr.mxu0 0.0
        %5119 = vmatpush2.xpose.msra.mxu0 0.0
        %5120 = vmatprep.subr.mxu0 0.0
        %5121 = vmatpush2.xpose.msra.mxu0 0.0
        %5122 = vmatprep.subr.mxu0 0.0
        %5123 = vmatpush2.xpose.msra.mxu0 0.0
        %5124 = vmatprep.subr.mxu0 0.0
        %5125 = vmatpush2.xpose.msra.mxu0 0.0
        %5126 = vmatprep.subr.mxu0 0.0
        %5127 = vmatpush2.xpose.msra.mxu0 0.0
        %5128 = vmatprep.subr.mxu0 0.0
        %5129 = vmatpush2.xpose.msra.mxu0 0.0
        %5130 = vmatprep.subr.mxu0 0.0
        %5131 = vmatpush2.xpose.msra.mxu0 0.0
        %5132 = vmatprep.subr.mxu0 0.0
        %5133 = vmatpush2.xpose.msra.mxu0 0.0
        %5134 = vmatprep.subr.mxu0 0.0
        %5135 = vmatpush2.xpose.msra.mxu0 0.0
        %v5136 = vand.u32 %v585, 4294901760
        %v5137 = vsub.f32 %v585, %v5136
        %5138 = vmatprep.mubr.f32.mxu0 %v5137
        %v5139 = vand.u32 %v584, 4294901760
        %v5140 = vsub.f32 %v584, %v5139
        %5141 = vmatmul.mubr.f32.gmra.mxu0 %v5140
        %v5142 = vpop.f32.mrf.mxu0
        %v5143 = vadd.f32 %v5065, %v5142
        %v5144 = vpop.f32.mrf.mxu0
        %5145 = vdwg.mxu0
        %5146 = vmatprep.subr.mxu0 0.0
        %5147 = vmatpush1.xpose.msra.mxu0 0.0
        %5148 = vmatprep.subr.mxu0 0.0
        %5149 = vmatpush1.xpose.msra.mxu0 0.0
        %5150 = vmatprep.subr.mxu0 0.0
        %5151 = vmatpush1.xpose.msra.mxu0 0.0
        %5152 = vmatprep.subr.mxu0 0.0
        %5153 = vmatpush1.xpose.msra.mxu0 0.0
        %5154 = vmatprep.subr.mxu0 0.0
        %5155 = vmatpush1.xpose.msra.mxu0 0.0
        %5156 = vmatprep.subr.mxu0 0.0
        %5157 = vmatpush1.xpose.msra.mxu0 0.0
        %5158 = vmatprep.subr.mxu0 0.0
        %5159 = vmatpush1.xpose.msra.mxu0 0.0
        %5160 = vmatprep.subr.mxu0 0.0
        %5161 = vmatpush1.xpose.msra.mxu0 0.0
        %5162 = vmatprep.subr.mxu0 0.0
        %5163 = vmatpush1.xpose.msra.mxu0 0.0
        %5164 = vmatprep.subr.mxu0 0.0
        %5165 = vmatpush1.xpose.msra.mxu0 0.0
        %5166 = vmatprep.subr.mxu0 0.0
        %5167 = vmatpush1.xpose.msra.mxu0 0.0
        %5168 = vmatprep.subr.mxu0 0.0
        %5169 = vmatpush1.xpose.msra.mxu0 0.0
        %5170 = vmatprep.subr.mxu0 0.0
        %5171 = vmatpush1.xpose.msra.mxu0 0.0
        %5172 = vmatprep.subr.mxu0 0.0
        %5173 = vmatpush1.xpose.msra.mxu0 0.0
        %5174 = vmatprep.subr.mxu0 0.0
        %5175 = vmatpush1.xpose.msra.mxu0 0.0
        %v5176 = vand.u32 %v630, 4294901760
        %5177 = vmatprep.subr.mxu0 %v5176
        %v5178 = vand.u32 %v628, 4294901760
        %5179 = vmatpush1.xpose.msra.mxu0 %v5178
        %5180 = vmatprep.subr.mxu0 0.0
        %5181 = vmatpush2.xpose.msra.mxu0 0.0
        %5182 = vmatprep.subr.mxu0 0.0
        %5183 = vmatpush2.xpose.msra.mxu0 0.0
        %5184 = vmatprep.subr.mxu0 0.0
        %5185 = vmatpush2.xpose.msra.mxu0 0.0
        %5186 = vmatprep.subr.mxu0 0.0
        %5187 = vmatpush2.xpose.msra.mxu0 0.0
        %5188 = vmatprep.subr.mxu0 0.0
        %5189 = vmatpush2.xpose.msra.mxu0 0.0
        %5190 = vmatprep.subr.mxu0 0.0
        %5191 = vmatpush2.xpose.msra.mxu0 0.0
        %5192 = vmatprep.subr.mxu0 0.0
        %5193 = vmatpush2.xpose.msra.mxu0 0.0
        %5194 = vmatprep.subr.mxu0 0.0
        %5195 = vmatpush2.xpose.msra.mxu0 0.0
        %5196 = vmatprep.subr.mxu0 0.0
        %5197 = vmatpush2.xpose.msra.mxu0 0.0
        %5198 = vmatprep.subr.mxu0 0.0
        %5199 = vmatpush2.xpose.msra.mxu0 0.0
        %5200 = vmatprep.subr.mxu0 0.0
        %5201 = vmatpush2.xpose.msra.mxu0 0.0
        %5202 = vmatprep.subr.mxu0 0.0
        %5203 = vmatpush2.xpose.msra.mxu0 0.0
        %5204 = vmatprep.subr.mxu0 0.0
        %5205 = vmatpush2.xpose.msra.mxu0 0.0
        %5206 = vmatprep.subr.mxu0 0.0
        %5207 = vmatpush2.xpose.msra.mxu0 0.0
        %5208 = vmatprep.subr.mxu0 0.0
        %5209 = vmatpush2.xpose.msra.mxu0 0.0
        %5210 = vmatprep.subr.mxu0 0.0
        %5211 = vmatpush2.xpose.msra.mxu0 0.0
        %v5212 = vand.u32 %v585, 4294901760
        %v5213 = vsub.f32 %v585, %v5212
        %v5214 = vand.u32 %v5213, 4294901760
        %5215 = vmatprep.mubr.f32.mxu0 %v5214
        %v5216 = vand.u32 %v584, 4294901760
        %v5217 = vsub.f32 %v584, %v5216
        %v5218 = vand.u32 %v5217, 4294901760
        %5219 = vmatmul.mubr.f32.gmra.mxu0 %v5218
        %v5220 = vpop.f32.mrf.mxu0
        %v5221 = vadd.f32 %v5143, %v5220
        %v5222 = vpop.f32.mrf.mxu0
        %5223 = vdwg.mxu0
        %5224 = vmatprep.subr.mxu0 0.0
        %5225 = vmatpush1.xpose.msra.mxu0 0.0
        %5226 = vmatprep.subr.mxu0 0.0
        %5227 = vmatpush1.xpose.msra.mxu0 0.0
        %5228 = vmatprep.subr.mxu0 0.0
        %5229 = vmatpush1.xpose.msra.mxu0 0.0
        %5230 = vmatprep.subr.mxu0 0.0
        %5231 = vmatpush1.xpose.msra.mxu0 0.0
        %5232 = vmatprep.subr.mxu0 0.0
        %5233 = vmatpush1.xpose.msra.mxu0 0.0
        %5234 = vmatprep.subr.mxu0 0.0
        %5235 = vmatpush1.xpose.msra.mxu0 0.0
        %5236 = vmatprep.subr.mxu0 0.0
        %5237 = vmatpush1.xpose.msra.mxu0 0.0
        %5238 = vmatprep.subr.mxu0 0.0
        %5239 = vmatpush1.xpose.msra.mxu0 0.0
        %5240 = vmatprep.subr.mxu0 0.0
        %5241 = vmatpush1.xpose.msra.mxu0 0.0
        %5242 = vmatprep.subr.mxu0 0.0
        %5243 = vmatpush1.xpose.msra.mxu0 0.0
        %5244 = vmatprep.subr.mxu0 0.0
        %5245 = vmatpush1.xpose.msra.mxu0 0.0
        %5246 = vmatprep.subr.mxu0 0.0
        %5247 = vmatpush1.xpose.msra.mxu0 0.0
        %5248 = vmatprep.subr.mxu0 0.0
        %5249 = vmatpush1.xpose.msra.mxu0 0.0
        %5250 = vmatprep.subr.mxu0 0.0
        %5251 = vmatpush1.xpose.msra.mxu0 0.0
        %5252 = vmatprep.subr.mxu0 0.0
        %5253 = vmatpush1.xpose.msra.mxu0 0.0
        %v5254 = vand.u32 %v630, 4294901760
        %v5255 = vsub.f32 %v630, %v5254
        %v5256 = vand.u32 %v5255, 4294901760
        %5257 = vmatprep.subr.mxu0 %v5256
        %v5258 = vand.u32 %v628, 4294901760
        %v5259 = vsub.f32 %v628, %v5258
        %v5260 = vand.u32 %v5259, 4294901760
        %5261 = vmatpush1.xpose.msra.mxu0 %v5260
        %5262 = vmatprep.subr.mxu0 0.0
        %5263 = vmatpush2.xpose.msra.mxu0 0.0
        %5264 = vmatprep.subr.mxu0 0.0
        %5265 = vmatpush2.xpose.msra.mxu0 0.0
        %5266 = vmatprep.subr.mxu0 0.0
        %5267 = vmatpush2.xpose.msra.mxu0 0.0
        %5268 = vmatprep.subr.mxu0 0.0
        %5269 = vmatpush2.xpose.msra.mxu0 0.0
        %5270 = vmatprep.subr.mxu0 0.0
        %5271 = vmatpush2.xpose.msra.mxu0 0.0
        %5272 = vmatprep.subr.mxu0 0.0
        %5273 = vmatpush2.xpose.msra.mxu0 0.0
        %5274 = vmatprep.subr.mxu0 0.0
        %5275 = vmatpush2.xpose.msra.mxu0 0.0
        %5276 = vmatprep.subr.mxu0 0.0
        %5277 = vmatpush2.xpose.msra.mxu0 0.0
        %5278 = vmatprep.subr.mxu0 0.0
        %5279 = vmatpush2.xpose.msra.mxu0 0.0
        %5280 = vmatprep.subr.mxu0 0.0
        %5281 = vmatpush2.xpose.msra.mxu0 0.0
        %5282 = vmatprep.subr.mxu0 0.0
        %5283 = vmatpush2.xpose.msra.mxu0 0.0
        %5284 = vmatprep.subr.mxu0 0.0
        %5285 = vmatpush2.xpose.msra.mxu0 0.0
        %5286 = vmatprep.subr.mxu0 0.0
        %5287 = vmatpush2.xpose.msra.mxu0 0.0
        %5288 = vmatprep.subr.mxu0 0.0
        %5289 = vmatpush2.xpose.msra.mxu0 0.0
        %5290 = vmatprep.subr.mxu0 0.0
        %5291 = vmatpush2.xpose.msra.mxu0 0.0
        %5292 = vmatprep.subr.mxu0 0.0
        %5293 = vmatpush2.xpose.msra.mxu0 0.0
        %v5294 = vand.u32 %v585, 4294901760
        %5295 = vmatprep.mubr.f32.mxu0 %v5294
        %v5296 = vand.u32 %v584, 4294901760
        %5297 = vmatmul.mubr.f32.gmra.mxu0 %v5296
        %v5298 = vpop.f32.mrf.mxu0
        %v5299 = vadd.f32 %v5221, %v5298
        %v5300 = vpop.f32.mrf.mxu0
        %5301 = vdwg.mxu0
        %5302 = vmatprep.subr.mxu0 0.0
        %5303 = vmatpush1.xpose.msra.mxu0 0.0
        %5304 = vmatprep.subr.mxu0 0.0
        %5305 = vmatpush1.xpose.msra.mxu0 0.0
        %5306 = vmatprep.subr.mxu0 0.0
        %5307 = vmatpush1.xpose.msra.mxu0 0.0
        %5308 = vmatprep.subr.mxu0 0.0
        %5309 = vmatpush1.xpose.msra.mxu0 0.0
        %5310 = vmatprep.subr.mxu0 0.0
        %5311 = vmatpush1.xpose.msra.mxu0 0.0
        %5312 = vmatprep.subr.mxu0 0.0
        %5313 = vmatpush1.xpose.msra.mxu0 0.0
        %5314 = vmatprep.subr.mxu0 0.0
        %5315 = vmatpush1.xpose.msra.mxu0 0.0
        %5316 = vmatprep.subr.mxu0 0.0
        %5317 = vmatpush1.xpose.msra.mxu0 0.0
        %5318 = vmatprep.subr.mxu0 0.0
        %5319 = vmatpush1.xpose.msra.mxu0 0.0
        %5320 = vmatprep.subr.mxu0 0.0
        %5321 = vmatpush1.xpose.msra.mxu0 0.0
        %5322 = vmatprep.subr.mxu0 0.0
        %5323 = vmatpush1.xpose.msra.mxu0 0.0
        %5324 = vmatprep.subr.mxu0 0.0
        %5325 = vmatpush1.xpose.msra.mxu0 0.0
        %5326 = vmatprep.subr.mxu0 0.0
        %5327 = vmatpush1.xpose.msra.mxu0 0.0
        %5328 = vmatprep.subr.mxu0 0.0
        %5329 = vmatpush1.xpose.msra.mxu0 0.0
        %5330 = vmatprep.subr.mxu0 0.0
        %5331 = vmatpush1.xpose.msra.mxu0 0.0
        %v5332 = vand.u32 %v630, 4294901760
        %5333 = vmatprep.subr.mxu0 %v5332
        %v5334 = vand.u32 %v628, 4294901760
        %5335 = vmatpush1.xpose.msra.mxu0 %v5334
        %5336 = vmatprep.subr.mxu0 0.0
        %5337 = vmatpush2.xpose.msra.mxu0 0.0
        %5338 = vmatprep.subr.mxu0 0.0
        %5339 = vmatpush2.xpose.msra.mxu0 0.0
        %5340 = vmatprep.subr.mxu0 0.0
        %5341 = vmatpush2.xpose.msra.mxu0 0.0
        %5342 = vmatprep.subr.mxu0 0.0
        %5343 = vmatpush2.xpose.msra.mxu0 0.0
        %5344 = vmatprep.subr.mxu0 0.0
        %5345 = vmatpush2.xpose.msra.mxu0 0.0
        %5346 = vmatprep.subr.mxu0 0.0
        %5347 = vmatpush2.xpose.msra.mxu0 0.0
        %5348 = vmatprep.subr.mxu0 0.0
        %5349 = vmatpush2.xpose.msra.mxu0 0.0
        %5350 = vmatprep.subr.mxu0 0.0
        %5351 = vmatpush2.xpose.msra.mxu0 0.0
        %5352 = vmatprep.subr.mxu0 0.0
        %5353 = vmatpush2.xpose.msra.mxu0 0.0
        %5354 = vmatprep.subr.mxu0 0.0
        %5355 = vmatpush2.xpose.msra.mxu0 0.0
        %5356 = vmatprep.subr.mxu0 0.0
        %5357 = vmatpush2.xpose.msra.mxu0 0.0
        %5358 = vmatprep.subr.mxu0 0.0
        %5359 = vmatpush2.xpose.msra.mxu0 0.0
        %5360 = vmatprep.subr.mxu0 0.0
        %5361 = vmatpush2.xpose.msra.mxu0 0.0
        %5362 = vmatprep.subr.mxu0 0.0
        %5363 = vmatpush2.xpose.msra.mxu0 0.0
        %5364 = vmatprep.subr.mxu0 0.0
        %5365 = vmatpush2.xpose.msra.mxu0 0.0
        %5366 = vmatprep.subr.mxu0 0.0
        %5367 = vmatpush2.xpose.msra.mxu0 0.0
        %v5368 = vand.u32 %v585, 4294901760
        %5369 = vmatprep.mubr.f32.mxu0 %v5368
        %v5370 = vand.u32 %v584, 4294901760
        %5371 = vmatmul.mubr.f32.gmra.mxu0 %v5370
        %v5372 = vpop.f32.mrf.mxu0
        %v5373 = vadd.f32 %v5299, %v5372
        %v5374 = vpop.f32.mrf.mxu0
        %5375 = vdwg.mxu0
        %5376 = vmatprep.subr.mxu0 0.0
        %5377 = vmatpush1.xpose.msra.mxu0 0.0
        %5378 = vmatprep.subr.mxu0 0.0
        %5379 = vmatpush1.xpose.msra.mxu0 0.0
        %5380 = vmatprep.subr.mxu0 0.0
        %5381 = vmatpush1.xpose.msra.mxu0 0.0
        %5382 = vmatprep.subr.mxu0 0.0
        %5383 = vmatpush1.xpose.msra.mxu0 0.0
        %5384 = vmatprep.subr.mxu0 0.0
        %5385 = vmatpush1.xpose.msra.mxu0 0.0
        %5386 = vmatprep.subr.mxu0 0.0
        %5387 = vmatpush1.xpose.msra.mxu0 0.0
        %5388 = vmatprep.subr.mxu0 0.0
        %5389 = vmatpush1.xpose.msra.mxu0 0.0
        %5390 = vmatprep.subr.mxu0 0.0
        %5391 = vmatpush1.xpose.msra.mxu0 0.0
        %5392 = vmatprep.subr.mxu0 0.0
        %5393 = vmatpush1.xpose.msra.mxu0 0.0
        %5394 = vmatprep.subr.mxu0 0.0
        %5395 = vmatpush1.xpose.msra.mxu0 0.0
        %5396 = vmatprep.subr.mxu0 0.0
        %5397 = vmatpush1.xpose.msra.mxu0 0.0
        %5398 = vmatprep.subr.mxu0 0.0
        %5399 = vmatpush1.xpose.msra.mxu0 0.0
        %5400 = vmatprep.subr.mxu0 0.0
        %5401 = vmatpush1.xpose.msra.mxu0 0.0
        %5402 = vmatprep.subr.mxu0 0.0
        %5403 = vmatpush1.xpose.msra.mxu0 0.0
        %5404 = vmatprep.subr.mxu0 0.0
        %5405 = vmatpush1.xpose.msra.mxu0 0.0
        %v5406 = vand.u32 %v646, 4294901760
        %5407 = vmatprep.subr.mxu0 %v5406
        %v5408 = vand.u32 %v638, 4294901760
        %5409 = vmatpush1.xpose.msra.mxu0 %v5408
        %5410 = vmatprep.subr.mxu0 0.0
        %5411 = vmatpush2.xpose.msra.mxu0 0.0
        %5412 = vmatprep.subr.mxu0 0.0
        %5413 = vmatpush2.xpose.msra.mxu0 0.0
        %5414 = vmatprep.subr.mxu0 0.0
        %5415 = vmatpush2.xpose.msra.mxu0 0.0
        %5416 = vmatprep.subr.mxu0 0.0
        %5417 = vmatpush2.xpose.msra.mxu0 0.0
        %5418 = vmatprep.subr.mxu0 0.0
        %5419 = vmatpush2.xpose.msra.mxu0 0.0
        %5420 = vmatprep.subr.mxu0 0.0
        %5421 = vmatpush2.xpose.msra.mxu0 0.0
        %5422 = vmatprep.subr.mxu0 0.0
        %5423 = vmatpush2.xpose.msra.mxu0 0.0
        %5424 = vmatprep.subr.mxu0 0.0
        %5425 = vmatpush2.xpose.msra.mxu0 0.0
        %5426 = vmatprep.subr.mxu0 0.0
        %5427 = vmatpush2.xpose.msra.mxu0 0.0
        %5428 = vmatprep.subr.mxu0 0.0
        %5429 = vmatpush2.xpose.msra.mxu0 0.0
        %5430 = vmatprep.subr.mxu0 0.0
        %5431 = vmatpush2.xpose.msra.mxu0 0.0
        %5432 = vmatprep.subr.mxu0 0.0
        %5433 = vmatpush2.xpose.msra.mxu0 0.0
        %5434 = vmatprep.subr.mxu0 0.0
        %5435 = vmatpush2.xpose.msra.mxu0 0.0
        %5436 = vmatprep.subr.mxu0 0.0
        %5437 = vmatpush2.xpose.msra.mxu0 0.0
        %5438 = vmatprep.subr.mxu0 0.0
        %5439 = vmatpush2.xpose.msra.mxu0 0.0
        %5440 = vmatprep.subr.mxu0 0.0
        %5441 = vmatpush2.xpose.msra.mxu0 0.0
        %v5442 = vand.u32 %v587, 4294901760
        %v5443 = vsub.f32 %v587, %v5442
        %v5444 = vand.u32 %v5443, 4294901760
        %v5445 = vsub.f32 %v5443, %v5444
        %v5446 = vand.u32 %v5445, 4294901760
        %5447 = vmatprep.mubr.f32.mxu0 %v5446
        %v5448 = vand.u32 %v586, 4294901760
        %v5449 = vsub.f32 %v586, %v5448
        %v5450 = vand.u32 %v5449, 4294901760
        %v5451 = vsub.f32 %v5449, %v5450
        %v5452 = vand.u32 %v5451, 4294901760
        %5453 = vmatmul.mubr.f32.gmra.mxu0 %v5452
        %v5454 = vpop.f32.mrf.mxu0
        %v5455 = vadd.f32 %v5373, %v5454
        %v5456 = vpop.f32.mrf.mxu0
        %5457 = vdwg.mxu0
        %5458 = vmatprep.subr.mxu0 0.0
        %5459 = vmatpush1.xpose.msra.mxu0 0.0
        %5460 = vmatprep.subr.mxu0 0.0
        %5461 = vmatpush1.xpose.msra.mxu0 0.0
        %5462 = vmatprep.subr.mxu0 0.0
        %5463 = vmatpush1.xpose.msra.mxu0 0.0
        %5464 = vmatprep.subr.mxu0 0.0
        %5465 = vmatpush1.xpose.msra.mxu0 0.0
        %5466 = vmatprep.subr.mxu0 0.0
        %5467 = vmatpush1.xpose.msra.mxu0 0.0
        %5468 = vmatprep.subr.mxu0 0.0
        %5469 = vmatpush1.xpose.msra.mxu0 0.0
        %5470 = vmatprep.subr.mxu0 0.0
        %5471 = vmatpush1.xpose.msra.mxu0 0.0
        %5472 = vmatprep.subr.mxu0 0.0
        %5473 = vmatpush1.xpose.msra.mxu0 0.0
        %5474 = vmatprep.subr.mxu0 0.0
        %5475 = vmatpush1.xpose.msra.mxu0 0.0
        %5476 = vmatprep.subr.mxu0 0.0
        %5477 = vmatpush1.xpose.msra.mxu0 0.0
        %5478 = vmatprep.subr.mxu0 0.0
        %5479 = vmatpush1.xpose.msra.mxu0 0.0
        %5480 = vmatprep.subr.mxu0 0.0
        %5481 = vmatpush1.xpose.msra.mxu0 0.0
        %5482 = vmatprep.subr.mxu0 0.0
        %5483 = vmatpush1.xpose.msra.mxu0 0.0
        %5484 = vmatprep.subr.mxu0 0.0
        %5485 = vmatpush1.xpose.msra.mxu0 0.0
        %5486 = vmatprep.subr.mxu0 0.0
        %5487 = vmatpush1.xpose.msra.mxu0 0.0
        %v5488 = vand.u32 %v646, 4294901760
        %v5489 = vsub.f32 %v646, %v5488
        %v5490 = vand.u32 %v5489, 4294901760
        %v5491 = vsub.f32 %v5489, %v5490
        %v5492 = vand.u32 %v5491, 4294901760
        %5493 = vmatprep.subr.mxu0 %v5492
        %v5494 = vand.u32 %v638, 4294901760
        %v5495 = vsub.f32 %v638, %v5494
        %v5496 = vand.u32 %v5495, 4294901760
        %v5497 = vsub.f32 %v5495, %v5496
        %v5498 = vand.u32 %v5497, 4294901760
        %5499 = vmatpush1.xpose.msra.mxu0 %v5498
        %5500 = vmatprep.subr.mxu0 0.0
        %5501 = vmatpush2.xpose.msra.mxu0 0.0
        %5502 = vmatprep.subr.mxu0 0.0
        %5503 = vmatpush2.xpose.msra.mxu0 0.0
        %5504 = vmatprep.subr.mxu0 0.0
        %5505 = vmatpush2.xpose.msra.mxu0 0.0
        %5506 = vmatprep.subr.mxu0 0.0
        %5507 = vmatpush2.xpose.msra.mxu0 0.0
        %5508 = vmatprep.subr.mxu0 0.0
        %5509 = vmatpush2.xpose.msra.mxu0 0.0
        %5510 = vmatprep.subr.mxu0 0.0
        %5511 = vmatpush2.xpose.msra.mxu0 0.0
        %5512 = vmatprep.subr.mxu0 0.0
        %5513 = vmatpush2.xpose.msra.mxu0 0.0
        %5514 = vmatprep.subr.mxu0 0.0
        %5515 = vmatpush2.xpose.msra.mxu0 0.0
        %5516 = vmatprep.subr.mxu0 0.0
        %5517 = vmatpush2.xpose.msra.mxu0 0.0
        %5518 = vmatprep.subr.mxu0 0.0
        %5519 = vmatpush2.xpose.msra.mxu0 0.0
        %5520 = vmatprep.subr.mxu0 0.0
        %5521 = vmatpush2.xpose.msra.mxu0 0.0
        %5522 = vmatprep.subr.mxu0 0.0
        %5523 = vmatpush2.xpose.msra.mxu0 0.0
        %5524 = vmatprep.subr.mxu0 0.0
        %5525 = vmatpush2.xpose.msra.mxu0 0.0
        %5526 = vmatprep.subr.mxu0 0.0
        %5527 = vmatpush2.xpose.msra.mxu0 0.0
        %5528 = vmatprep.subr.mxu0 0.0
        %5529 = vmatpush2.xpose.msra.mxu0 0.0
        %5530 = vmatprep.subr.mxu0 0.0
        %5531 = vmatpush2.xpose.msra.mxu0 0.0
        %v5532 = vand.u32 %v587, 4294901760
        %5533 = vmatprep.mubr.f32.mxu0 %v5532
        %v5534 = vand.u32 %v586, 4294901760
        %5535 = vmatmul.mubr.f32.gmra.mxu0 %v5534
        %v5536 = vpop.f32.mrf.mxu0
        %v5537 = vadd.f32 %v5455, %v5536
        %v5538 = vpop.f32.mrf.mxu0
        %5539 = vdwg.mxu0
        %5540 = vmatprep.subr.mxu0 0.0
        %5541 = vmatpush1.xpose.msra.mxu0 0.0
        %5542 = vmatprep.subr.mxu0 0.0
        %5543 = vmatpush1.xpose.msra.mxu0 0.0
        %5544 = vmatprep.subr.mxu0 0.0
        %5545 = vmatpush1.xpose.msra.mxu0 0.0
        %5546 = vmatprep.subr.mxu0 0.0
        %5547 = vmatpush1.xpose.msra.mxu0 0.0
        %5548 = vmatprep.subr.mxu0 0.0
        %5549 = vmatpush1.xpose.msra.mxu0 0.0
        %5550 = vmatprep.subr.mxu0 0.0
        %5551 = vmatpush1.xpose.msra.mxu0 0.0
        %5552 = vmatprep.subr.mxu0 0.0
        %5553 = vmatpush1.xpose.msra.mxu0 0.0
        %5554 = vmatprep.subr.mxu0 0.0
        %5555 = vmatpush1.xpose.msra.mxu0 0.0
        %5556 = vmatprep.subr.mxu0 0.0
        %5557 = vmatpush1.xpose.msra.mxu0 0.0
        %5558 = vmatprep.subr.mxu0 0.0
        %5559 = vmatpush1.xpose.msra.mxu0 0.0
        %5560 = vmatprep.subr.mxu0 0.0
        %5561 = vmatpush1.xpose.msra.mxu0 0.0
        %5562 = vmatprep.subr.mxu0 0.0
        %5563 = vmatpush1.xpose.msra.mxu0 0.0
        %5564 = vmatprep.subr.mxu0 0.0
        %5565 = vmatpush1.xpose.msra.mxu0 0.0
        %5566 = vmatprep.subr.mxu0 0.0
        %5567 = vmatpush1.xpose.msra.mxu0 0.0
        %5568 = vmatprep.subr.mxu0 0.0
        %5569 = vmatpush1.xpose.msra.mxu0 0.0
        %v5570 = vand.u32 %v646, 4294901760
        %v5571 = vsub.f32 %v646, %v5570
        %5572 = vmatprep.subr.mxu0 %v5571
        %v5573 = vand.u32 %v638, 4294901760
        %v5574 = vsub.f32 %v638, %v5573
        %5575 = vmatpush1.xpose.msra.mxu0 %v5574
        %5576 = vmatprep.subr.mxu0 0.0
        %5577 = vmatpush2.xpose.msra.mxu0 0.0
        %5578 = vmatprep.subr.mxu0 0.0
        %5579 = vmatpush2.xpose.msra.mxu0 0.0
        %5580 = vmatprep.subr.mxu0 0.0
        %5581 = vmatpush2.xpose.msra.mxu0 0.0
        %5582 = vmatprep.subr.mxu0 0.0
        %5583 = vmatpush2.xpose.msra.mxu0 0.0
        %5584 = vmatprep.subr.mxu0 0.0
        %5585 = vmatpush2.xpose.msra.mxu0 0.0
        %5586 = vmatprep.subr.mxu0 0.0
        %5587 = vmatpush2.xpose.msra.mxu0 0.0
        %5588 = vmatprep.subr.mxu0 0.0
        %5589 = vmatpush2.xpose.msra.mxu0 0.0
        %5590 = vmatprep.subr.mxu0 0.0
        %5591 = vmatpush2.xpose.msra.mxu0 0.0
        %5592 = vmatprep.subr.mxu0 0.0
        %5593 = vmatpush2.xpose.msra.mxu0 0.0
        %5594 = vmatprep.subr.mxu0 0.0
        %5595 = vmatpush2.xpose.msra.mxu0 0.0
        %5596 = vmatprep.subr.mxu0 0.0
        %5597 = vmatpush2.xpose.msra.mxu0 0.0
        %5598 = vmatprep.subr.mxu0 0.0
        %5599 = vmatpush2.xpose.msra.mxu0 0.0
        %5600 = vmatprep.subr.mxu0 0.0
        %5601 = vmatpush2.xpose.msra.mxu0 0.0
        %5602 = vmatprep.subr.mxu0 0.0
        %5603 = vmatpush2.xpose.msra.mxu0 0.0
        %5604 = vmatprep.subr.mxu0 0.0
        %5605 = vmatpush2.xpose.msra.mxu0 0.0
        %5606 = vmatprep.subr.mxu0 0.0
        %5607 = vmatpush2.xpose.msra.mxu0 0.0
        %v5608 = vand.u32 %v587, 4294901760
        %v5609 = vsub.f32 %v587, %v5608
        %5610 = vmatprep.mubr.f32.mxu0 %v5609
        %v5611 = vand.u32 %v586, 4294901760
        %v5612 = vsub.f32 %v586, %v5611
        %5613 = vmatmul.mubr.f32.gmra.mxu0 %v5612
        %v5614 = vpop.f32.mrf.mxu0
        %v5615 = vadd.f32 %v5537, %v5614
        %v5616 = vpop.f32.mrf.mxu0
        %5617 = vdwg.mxu0
        %5618 = vmatprep.subr.mxu0 0.0
        %5619 = vmatpush1.xpose.msra.mxu0 0.0
        %5620 = vmatprep.subr.mxu0 0.0
        %5621 = vmatpush1.xpose.msra.mxu0 0.0
        %5622 = vmatprep.subr.mxu0 0.0
        %5623 = vmatpush1.xpose.msra.mxu0 0.0
        %5624 = vmatprep.subr.mxu0 0.0
        %5625 = vmatpush1.xpose.msra.mxu0 0.0
        %5626 = vmatprep.subr.mxu0 0.0
        %5627 = vmatpush1.xpose.msra.mxu0 0.0
        %5628 = vmatprep.subr.mxu0 0.0
        %5629 = vmatpush1.xpose.msra.mxu0 0.0
        %5630 = vmatprep.subr.mxu0 0.0
        %5631 = vmatpush1.xpose.msra.mxu0 0.0
        %5632 = vmatprep.subr.mxu0 0.0
        %5633 = vmatpush1.xpose.msra.mxu0 0.0
        %5634 = vmatprep.subr.mxu0 0.0
        %5635 = vmatpush1.xpose.msra.mxu0 0.0
        %5636 = vmatprep.subr.mxu0 0.0
        %5637 = vmatpush1.xpose.msra.mxu0 0.0
        %5638 = vmatprep.subr.mxu0 0.0
        %5639 = vmatpush1.xpose.msra.mxu0 0.0
        %5640 = vmatprep.subr.mxu0 0.0
        %5641 = vmatpush1.xpose.msra.mxu0 0.0
        %5642 = vmatprep.subr.mxu0 0.0
        %5643 = vmatpush1.xpose.msra.mxu0 0.0
        %5644 = vmatprep.subr.mxu0 0.0
        %5645 = vmatpush1.xpose.msra.mxu0 0.0
        %5646 = vmatprep.subr.mxu0 0.0
        %5647 = vmatpush1.xpose.msra.mxu0 0.0
        %v5648 = vand.u32 %v646, 4294901760
        %5649 = vmatprep.subr.mxu0 %v5648
        %v5650 = vand.u32 %v638, 4294901760
        %5651 = vmatpush1.xpose.msra.mxu0 %v5650
        %5652 = vmatprep.subr.mxu0 0.0
        %5653 = vmatpush2.xpose.msra.mxu0 0.0
        %5654 = vmatprep.subr.mxu0 0.0
        %5655 = vmatpush2.xpose.msra.mxu0 0.0
        %5656 = vmatprep.subr.mxu0 0.0
        %5657 = vmatpush2.xpose.msra.mxu0 0.0
        %5658 = vmatprep.subr.mxu0 0.0
        %5659 = vmatpush2.xpose.msra.mxu0 0.0
        %5660 = vmatprep.subr.mxu0 0.0
        %5661 = vmatpush2.xpose.msra.mxu0 0.0
        %5662 = vmatprep.subr.mxu0 0.0
        %5663 = vmatpush2.xpose.msra.mxu0 0.0
        %5664 = vmatprep.subr.mxu0 0.0
        %5665 = vmatpush2.xpose.msra.mxu0 0.0
        %5666 = vmatprep.subr.mxu0 0.0
        %5667 = vmatpush2.xpose.msra.mxu0 0.0
        %5668 = vmatprep.subr.mxu0 0.0
        %5669 = vmatpush2.xpose.msra.mxu0 0.0
        %5670 = vmatprep.subr.mxu0 0.0
        %5671 = vmatpush2.xpose.msra.mxu0 0.0
        %5672 = vmatprep.subr.mxu0 0.0
        %5673 = vmatpush2.xpose.msra.mxu0 0.0
        %5674 = vmatprep.subr.mxu0 0.0
        %5675 = vmatpush2.xpose.msra.mxu0 0.0
        %5676 = vmatprep.subr.mxu0 0.0
        %5677 = vmatpush2.xpose.msra.mxu0 0.0
        %5678 = vmatprep.subr.mxu0 0.0
        %5679 = vmatpush2.xpose.msra.mxu0 0.0
        %5680 = vmatprep.subr.mxu0 0.0
        %5681 = vmatpush2.xpose.msra.mxu0 0.0
        %5682 = vmatprep.subr.mxu0 0.0
        %5683 = vmatpush2.xpose.msra.mxu0 0.0
        %v5684 = vand.u32 %v587, 4294901760
        %v5685 = vsub.f32 %v587, %v5684
        %v5686 = vand.u32 %v5685, 4294901760
        %5687 = vmatprep.mubr.f32.mxu0 %v5686
        %v5688 = vand.u32 %v586, 4294901760
        %v5689 = vsub.f32 %v586, %v5688
        %v5690 = vand.u32 %v5689, 4294901760
        %5691 = vmatmul.mubr.f32.gmra.mxu0 %v5690
        %v5692 = vpop.f32.mrf.mxu0
        %v5693 = vadd.f32 %v5615, %v5692
        %v5694 = vpop.f32.mrf.mxu0
        %5695 = vdwg.mxu0
        %5696 = vmatprep.subr.mxu0 0.0
        %5697 = vmatpush1.xpose.msra.mxu0 0.0
        %5698 = vmatprep.subr.mxu0 0.0
        %5699 = vmatpush1.xpose.msra.mxu0 0.0
        %5700 = vmatprep.subr.mxu0 0.0
        %5701 = vmatpush1.xpose.msra.mxu0 0.0
        %5702 = vmatprep.subr.mxu0 0.0
        %5703 = vmatpush1.xpose.msra.mxu0 0.0
        %5704 = vmatprep.subr.mxu0 0.0
        %5705 = vmatpush1.xpose.msra.mxu0 0.0
        %5706 = vmatprep.subr.mxu0 0.0
        %5707 = vmatpush1.xpose.msra.mxu0 0.0
        %5708 = vmatprep.subr.mxu0 0.0
        %5709 = vmatpush1.xpose.msra.mxu0 0.0
        %5710 = vmatprep.subr.mxu0 0.0
        %5711 = vmatpush1.xpose.msra.mxu0 0.0
        %5712 = vmatprep.subr.mxu0 0.0
        %5713 = vmatpush1.xpose.msra.mxu0 0.0
        %5714 = vmatprep.subr.mxu0 0.0
        %5715 = vmatpush1.xpose.msra.mxu0 0.0
        %5716 = vmatprep.subr.mxu0 0.0
        %5717 = vmatpush1.xpose.msra.mxu0 0.0
        %5718 = vmatprep.subr.mxu0 0.0
        %5719 = vmatpush1.xpose.msra.mxu0 0.0
        %5720 = vmatprep.subr.mxu0 0.0
        %5721 = vmatpush1.xpose.msra.mxu0 0.0
        %5722 = vmatprep.subr.mxu0 0.0
        %5723 = vmatpush1.xpose.msra.mxu0 0.0
        %5724 = vmatprep.subr.mxu0 0.0
        %5725 = vmatpush1.xpose.msra.mxu0 0.0
        %v5726 = vand.u32 %v646, 4294901760
        %v5727 = vsub.f32 %v646, %v5726
        %v5728 = vand.u32 %v5727, 4294901760
        %5729 = vmatprep.subr.mxu0 %v5728
        %v5730 = vand.u32 %v638, 4294901760
        %v5731 = vsub.f32 %v638, %v5730
        %v5732 = vand.u32 %v5731, 4294901760
        %5733 = vmatpush1.xpose.msra.mxu0 %v5732
        %5734 = vmatprep.subr.mxu0 0.0
        %5735 = vmatpush2.xpose.msra.mxu0 0.0
        %5736 = vmatprep.subr.mxu0 0.0
        %5737 = vmatpush2.xpose.msra.mxu0 0.0
        %5738 = vmatprep.subr.mxu0 0.0
        %5739 = vmatpush2.xpose.msra.mxu0 0.0
        %5740 = vmatprep.subr.mxu0 0.0
        %5741 = vmatpush2.xpose.msra.mxu0 0.0
        %5742 = vmatprep.subr.mxu0 0.0
        %5743 = vmatpush2.xpose.msra.mxu0 0.0
        %5744 = vmatprep.subr.mxu0 0.0
        %5745 = vmatpush2.xpose.msra.mxu0 0.0
        %5746 = vmatprep.subr.mxu0 0.0
        %5747 = vmatpush2.xpose.msra.mxu0 0.0
        %5748 = vmatprep.subr.mxu0 0.0
        %5749 = vmatpush2.xpose.msra.mxu0 0.0
        %5750 = vmatprep.subr.mxu0 0.0
        %5751 = vmatpush2.xpose.msra.mxu0 0.0
        %5752 = vmatprep.subr.mxu0 0.0
        %5753 = vmatpush2.xpose.msra.mxu0 0.0
        %5754 = vmatprep.subr.mxu0 0.0
        %5755 = vmatpush2.xpose.msra.mxu0 0.0
        %5756 = vmatprep.subr.mxu0 0.0
        %5757 = vmatpush2.xpose.msra.mxu0 0.0
        %5758 = vmatprep.subr.mxu0 0.0
        %5759 = vmatpush2.xpose.msra.mxu0 0.0
        %5760 = vmatprep.subr.mxu0 0.0
        %5761 = vmatpush2.xpose.msra.mxu0 0.0
        %5762 = vmatprep.subr.mxu0 0.0
        %5763 = vmatpush2.xpose.msra.mxu0 0.0
        %5764 = vmatprep.subr.mxu0 0.0
        %5765 = vmatpush2.xpose.msra.mxu0 0.0
        %v5766 = vand.u32 %v587, 4294901760
        %5767 = vmatprep.mubr.f32.mxu0 %v5766
        %v5768 = vand.u32 %v586, 4294901760
        %5769 = vmatmul.mubr.f32.gmra.mxu0 %v5768
        %v5770 = vpop.f32.mrf.mxu0
        %v5771 = vadd.f32 %v5693, %v5770
        %v5772 = vpop.f32.mrf.mxu0
        %5773 = vdwg.mxu0
        %5774 = vmatprep.subr.mxu0 0.0
        %5775 = vmatpush1.xpose.msra.mxu0 0.0
        %5776 = vmatprep.subr.mxu0 0.0
        %5777 = vmatpush1.xpose.msra.mxu0 0.0
        %5778 = vmatprep.subr.mxu0 0.0
        %5779 = vmatpush1.xpose.msra.mxu0 0.0
        %5780 = vmatprep.subr.mxu0 0.0
        %5781 = vmatpush1.xpose.msra.mxu0 0.0
        %5782 = vmatprep.subr.mxu0 0.0
        %5783 = vmatpush1.xpose.msra.mxu0 0.0
        %5784 = vmatprep.subr.mxu0 0.0
        %5785 = vmatpush1.xpose.msra.mxu0 0.0
        %5786 = vmatprep.subr.mxu0 0.0
        %5787 = vmatpush1.xpose.msra.mxu0 0.0
        %5788 = vmatprep.subr.mxu0 0.0
        %5789 = vmatpush1.xpose.msra.mxu0 0.0
        %5790 = vmatprep.subr.mxu0 0.0
        %5791 = vmatpush1.xpose.msra.mxu0 0.0
        %5792 = vmatprep.subr.mxu0 0.0
        %5793 = vmatpush1.xpose.msra.mxu0 0.0
        %5794 = vmatprep.subr.mxu0 0.0
        %5795 = vmatpush1.xpose.msra.mxu0 0.0
        %5796 = vmatprep.subr.mxu0 0.0
        %5797 = vmatpush1.xpose.msra.mxu0 0.0
        %5798 = vmatprep.subr.mxu0 0.0
        %5799 = vmatpush1.xpose.msra.mxu0 0.0
        %5800 = vmatprep.subr.mxu0 0.0
        %5801 = vmatpush1.xpose.msra.mxu0 0.0
        %5802 = vmatprep.subr.mxu0 0.0
        %5803 = vmatpush1.xpose.msra.mxu0 0.0
        %v5804 = vand.u32 %v646, 4294901760
        %5805 = vmatprep.subr.mxu0 %v5804
        %v5806 = vand.u32 %v638, 4294901760
        %5807 = vmatpush1.xpose.msra.mxu0 %v5806
        %5808 = vmatprep.subr.mxu0 0.0
        %5809 = vmatpush2.xpose.msra.mxu0 0.0
        %5810 = vmatprep.subr.mxu0 0.0
        %5811 = vmatpush2.xpose.msra.mxu0 0.0
        %5812 = vmatprep.subr.mxu0 0.0
        %5813 = vmatpush2.xpose.msra.mxu0 0.0
        %5814 = vmatprep.subr.mxu0 0.0
        %5815 = vmatpush2.xpose.msra.mxu0 0.0
        %5816 = vmatprep.subr.mxu0 0.0
        %5817 = vmatpush2.xpose.msra.mxu0 0.0
        %5818 = vmatprep.subr.mxu0 0.0
        %5819 = vmatpush2.xpose.msra.mxu0 0.0
        %5820 = vmatprep.subr.mxu0 0.0
        %5821 = vmatpush2.xpose.msra.mxu0 0.0
        %5822 = vmatprep.subr.mxu0 0.0
        %5823 = vmatpush2.xpose.msra.mxu0 0.0
        %5824 = vmatprep.subr.mxu0 0.0
        %5825 = vmatpush2.xpose.msra.mxu0 0.0
        %5826 = vmatprep.subr.mxu0 0.0
        %5827 = vmatpush2.xpose.msra.mxu0 0.0
        %5828 = vmatprep.subr.mxu0 0.0
        %5829 = vmatpush2.xpose.msra.mxu0 0.0
        %5830 = vmatprep.subr.mxu0 0.0
        %5831 = vmatpush2.xpose.msra.mxu0 0.0
        %5832 = vmatprep.subr.mxu0 0.0
        %5833 = vmatpush2.xpose.msra.mxu0 0.0
        %5834 = vmatprep.subr.mxu0 0.0
        %5835 = vmatpush2.xpose.msra.mxu0 0.0
        %5836 = vmatprep.subr.mxu0 0.0
        %5837 = vmatpush2.xpose.msra.mxu0 0.0
        %5838 = vmatprep.subr.mxu0 0.0
        %5839 = vmatpush2.xpose.msra.mxu0 0.0
        %v5840 = vand.u32 %v587, 4294901760
        %5841 = vmatprep.mubr.f32.mxu0 %v5840
        %v5842 = vand.u32 %v586, 4294901760
        %5843 = vmatmul.mubr.f32.gmra.mxu0 %v5842
        %v5844 = vpop.f32.mrf.mxu0
        %v5845 = vadd.f32 %v5771, %v5844
        %v5846 = vpop.f32.mrf.mxu0
        %5847 = vdwg.mxu0
        %5848 = vmatprep.subr.mxu0 0.0
        %5849 = vmatpush1.xpose.msra.mxu0 0.0
        %5850 = vmatprep.subr.mxu0 0.0
        %5851 = vmatpush1.xpose.msra.mxu0 0.0
        %5852 = vmatprep.subr.mxu0 0.0
        %5853 = vmatpush1.xpose.msra.mxu0 0.0
        %5854 = vmatprep.subr.mxu0 0.0
        %5855 = vmatpush1.xpose.msra.mxu0 0.0
        %5856 = vmatprep.subr.mxu0 0.0
        %5857 = vmatpush1.xpose.msra.mxu0 0.0
        %5858 = vmatprep.subr.mxu0 0.0
        %5859 = vmatpush1.xpose.msra.mxu0 0.0
        %5860 = vmatprep.subr.mxu0 0.0
        %5861 = vmatpush1.xpose.msra.mxu0 0.0
        %5862 = vmatprep.subr.mxu0 0.0
        %5863 = vmatpush1.xpose.msra.mxu0 0.0
        %5864 = vmatprep.subr.mxu0 0.0
        %5865 = vmatpush1.xpose.msra.mxu0 0.0
        %5866 = vmatprep.subr.mxu0 0.0
        %5867 = vmatpush1.xpose.msra.mxu0 0.0
        %5868 = vmatprep.subr.mxu0 0.0
        %5869 = vmatpush1.xpose.msra.mxu0 0.0
        %5870 = vmatprep.subr.mxu0 0.0
        %5871 = vmatpush1.xpose.msra.mxu0 0.0
        %5872 = vmatprep.subr.mxu0 0.0
        %5873 = vmatpush1.xpose.msra.mxu0 0.0
        %5874 = vmatprep.subr.mxu0 0.0
        %5875 = vmatpush1.xpose.msra.mxu0 0.0
        %5876 = vmatprep.subr.mxu0 0.0
        %5877 = vmatpush1.xpose.msra.mxu0 0.0
        %v5878 = vand.u32 %v647, 4294901760
        %5879 = vmatprep.subr.mxu0 %v5878
        %v5880 = vand.u32 %v645, 4294901760
        %5881 = vmatpush1.xpose.msra.mxu0 %v5880
        %5882 = vmatprep.subr.mxu0 0.0
        %5883 = vmatpush2.xpose.msra.mxu0 0.0
        %5884 = vmatprep.subr.mxu0 0.0
        %5885 = vmatpush2.xpose.msra.mxu0 0.0
        %5886 = vmatprep.subr.mxu0 0.0
        %5887 = vmatpush2.xpose.msra.mxu0 0.0
        %5888 = vmatprep.subr.mxu0 0.0
        %5889 = vmatpush2.xpose.msra.mxu0 0.0
        %5890 = vmatprep.subr.mxu0 0.0
        %5891 = vmatpush2.xpose.msra.mxu0 0.0
        %5892 = vmatprep.subr.mxu0 0.0
        %5893 = vmatpush2.xpose.msra.mxu0 0.0
        %5894 = vmatprep.subr.mxu0 0.0
        %5895 = vmatpush2.xpose.msra.mxu0 0.0
        %5896 = vmatprep.subr.mxu0 0.0
        %5897 = vmatpush2.xpose.msra.mxu0 0.0
        %5898 = vmatprep.subr.mxu0 0.0
        %5899 = vmatpush2.xpose.msra.mxu0 0.0
        %5900 = vmatprep.subr.mxu0 0.0
        %5901 = vmatpush2.xpose.msra.mxu0 0.0
        %5902 = vmatprep.subr.mxu0 0.0
        %5903 = vmatpush2.xpose.msra.mxu0 0.0
        %5904 = vmatprep.subr.mxu0 0.0
        %5905 = vmatpush2.xpose.msra.mxu0 0.0
        %5906 = vmatprep.subr.mxu0 0.0
        %5907 = vmatpush2.xpose.msra.mxu0 0.0
        %5908 = vmatprep.subr.mxu0 0.0
        %5909 = vmatpush2.xpose.msra.mxu0 0.0
        %5910 = vmatprep.subr.mxu0 0.0
        %5911 = vmatpush2.xpose.msra.mxu0 0.0
        %5912 = vmatprep.subr.mxu0 0.0
        %5913 = vmatpush2.xpose.msra.mxu0 0.0
        %v5914 = vand.u32 %v589, 4294901760
        %v5915 = vsub.f32 %v589, %v5914
        %v5916 = vand.u32 %v5915, 4294901760
        %v5917 = vsub.f32 %v5915, %v5916
        %v5918 = vand.u32 %v5917, 4294901760
        %5919 = vmatprep.mubr.f32.mxu0 %v5918
        %v5920 = vand.u32 %v588, 4294901760
        %v5921 = vsub.f32 %v588, %v5920
        %v5922 = vand.u32 %v5921, 4294901760
        %v5923 = vsub.f32 %v5921, %v5922
        %v5924 = vand.u32 %v5923, 4294901760
        %5925 = vmatmul.mubr.f32.gmra.mxu0 %v5924
        %v5926 = vpop.f32.mrf.mxu0
        %v5927 = vadd.f32 %v5845, %v5926
        %v5928 = vpop.f32.mrf.mxu0
        %5929 = vdwg.mxu0
        %5930 = vmatprep.subr.mxu0 0.0
        %5931 = vmatpush1.xpose.msra.mxu0 0.0
        %5932 = vmatprep.subr.mxu0 0.0
        %5933 = vmatpush1.xpose.msra.mxu0 0.0
        %5934 = vmatprep.subr.mxu0 0.0
        %5935 = vmatpush1.xpose.msra.mxu0 0.0
        %5936 = vmatprep.subr.mxu0 0.0
        %5937 = vmatpush1.xpose.msra.mxu0 0.0
        %5938 = vmatprep.subr.mxu0 0.0
        %5939 = vmatpush1.xpose.msra.mxu0 0.0
        %5940 = vmatprep.subr.mxu0 0.0
        %5941 = vmatpush1.xpose.msra.mxu0 0.0
        %5942 = vmatprep.subr.mxu0 0.0
        %5943 = vmatpush1.xpose.msra.mxu0 0.0
        %5944 = vmatprep.subr.mxu0 0.0
        %5945 = vmatpush1.xpose.msra.mxu0 0.0
        %5946 = vmatprep.subr.mxu0 0.0
        %5947 = vmatpush1.xpose.msra.mxu0 0.0
        %5948 = vmatprep.subr.mxu0 0.0
        %5949 = vmatpush1.xpose.msra.mxu0 0.0
        %5950 = vmatprep.subr.mxu0 0.0
        %5951 = vmatpush1.xpose.msra.mxu0 0.0
        %5952 = vmatprep.subr.mxu0 0.0
        %5953 = vmatpush1.xpose.msra.mxu0 0.0
        %5954 = vmatprep.subr.mxu0 0.0
        %5955 = vmatpush1.xpose.msra.mxu0 0.0
        %5956 = vmatprep.subr.mxu0 0.0
        %5957 = vmatpush1.xpose.msra.mxu0 0.0
        %5958 = vmatprep.subr.mxu0 0.0
        %5959 = vmatpush1.xpose.msra.mxu0 0.0
        %v5960 = vand.u32 %v647, 4294901760
        %v5961 = vsub.f32 %v647, %v5960
        %v5962 = vand.u32 %v5961, 4294901760
        %v5963 = vsub.f32 %v5961, %v5962
        %v5964 = vand.u32 %v5963, 4294901760
        %5965 = vmatprep.subr.mxu0 %v5964
        %v5966 = vand.u32 %v645, 4294901760
        %v5967 = vsub.f32 %v645, %v5966
        %v5968 = vand.u32 %v5967, 4294901760
        %v5969 = vsub.f32 %v5967, %v5968
        %v5970 = vand.u32 %v5969, 4294901760
        %5971 = vmatpush1.xpose.msra.mxu0 %v5970
        %5972 = vmatprep.subr.mxu0 0.0
        %5973 = vmatpush2.xpose.msra.mxu0 0.0
        %5974 = vmatprep.subr.mxu0 0.0
        %5975 = vmatpush2.xpose.msra.mxu0 0.0
        %5976 = vmatprep.subr.mxu0 0.0
        %5977 = vmatpush2.xpose.msra.mxu0 0.0
        %5978 = vmatprep.subr.mxu0 0.0
        %5979 = vmatpush2.xpose.msra.mxu0 0.0
        %5980 = vmatprep.subr.mxu0 0.0
        %5981 = vmatpush2.xpose.msra.mxu0 0.0
        %5982 = vmatprep.subr.mxu0 0.0
        %5983 = vmatpush2.xpose.msra.mxu0 0.0
        %5984 = vmatprep.subr.mxu0 0.0
        %5985 = vmatpush2.xpose.msra.mxu0 0.0
        %5986 = vmatprep.subr.mxu0 0.0
        %5987 = vmatpush2.xpose.msra.mxu0 0.0
        %5988 = vmatprep.subr.mxu0 0.0
        %5989 = vmatpush2.xpose.msra.mxu0 0.0
        %5990 = vmatprep.subr.mxu0 0.0
        %5991 = vmatpush2.xpose.msra.mxu0 0.0
        %5992 = vmatprep.subr.mxu0 0.0
        %5993 = vmatpush2.xpose.msra.mxu0 0.0
        %5994 = vmatprep.subr.mxu0 0.0
        %5995 = vmatpush2.xpose.msra.mxu0 0.0
        %5996 = vmatprep.subr.mxu0 0.0
        %5997 = vmatpush2.xpose.msra.mxu0 0.0
        %5998 = vmatprep.subr.mxu0 0.0
        %5999 = vmatpush2.xpose.msra.mxu0 0.0
        %6000 = vmatprep.subr.mxu0 0.0
        %6001 = vmatpush2.xpose.msra.mxu0 0.0
        %6002 = vmatprep.subr.mxu0 0.0
        %6003 = vmatpush2.xpose.msra.mxu0 0.0
        %v6004 = vand.u32 %v589, 4294901760
        %6005 = vmatprep.mubr.f32.mxu0 %v6004
        %v6006 = vand.u32 %v588, 4294901760
        %6007 = vmatmul.mubr.f32.gmra.mxu0 %v6006
        %v6008 = vpop.f32.mrf.mxu0
        %v6009 = vadd.f32 %v5927, %v6008
        %v6010 = vpop.f32.mrf.mxu0
        %6011 = vdwg.mxu0
        %6012 = vmatprep.subr.mxu0 0.0
        %6013 = vmatpush1.xpose.msra.mxu0 0.0
        %6014 = vmatprep.subr.mxu0 0.0
        %6015 = vmatpush1.xpose.msra.mxu0 0.0
        %6016 = vmatprep.subr.mxu0 0.0
        %6017 = vmatpush1.xpose.msra.mxu0 0.0
        %6018 = vmatprep.subr.mxu0 0.0
        %6019 = vmatpush1.xpose.msra.mxu0 0.0
        %6020 = vmatprep.subr.mxu0 0.0
        %6021 = vmatpush1.xpose.msra.mxu0 0.0
        %6022 = vmatprep.subr.mxu0 0.0
        %6023 = vmatpush1.xpose.msra.mxu0 0.0
        %6024 = vmatprep.subr.mxu0 0.0
        %6025 = vmatpush1.xpose.msra.mxu0 0.0
        %6026 = vmatprep.subr.mxu0 0.0
        %6027 = vmatpush1.xpose.msra.mxu0 0.0
        %6028 = vmatprep.subr.mxu0 0.0
        %6029 = vmatpush1.xpose.msra.mxu0 0.0
        %6030 = vmatprep.subr.mxu0 0.0
        %6031 = vmatpush1.xpose.msra.mxu0 0.0
        %6032 = vmatprep.subr.mxu0 0.0
        %6033 = vmatpush1.xpose.msra.mxu0 0.0
        %6034 = vmatprep.subr.mxu0 0.0
        %6035 = vmatpush1.xpose.msra.mxu0 0.0
        %6036 = vmatprep.subr.mxu0 0.0
        %6037 = vmatpush1.xpose.msra.mxu0 0.0
        %6038 = vmatprep.subr.mxu0 0.0
        %6039 = vmatpush1.xpose.msra.mxu0 0.0
        %6040 = vmatprep.subr.mxu0 0.0
        %6041 = vmatpush1.xpose.msra.mxu0 0.0
        %v6042 = vand.u32 %v647, 4294901760
        %v6043 = vsub.f32 %v647, %v6042
        %6044 = vmatprep.subr.mxu0 %v6043
        %v6045 = vand.u32 %v645, 4294901760
        %v6046 = vsub.f32 %v645, %v6045
        %6047 = vmatpush1.xpose.msra.mxu0 %v6046
        %6048 = vmatprep.subr.mxu0 0.0
        %6049 = vmatpush2.xpose.msra.mxu0 0.0
        %6050 = vmatprep.subr.mxu0 0.0
        %6051 = vmatpush2.xpose.msra.mxu0 0.0
        %6052 = vmatprep.subr.mxu0 0.0
        %6053 = vmatpush2.xpose.msra.mxu0 0.0
        %6054 = vmatprep.subr.mxu0 0.0
        %6055 = vmatpush2.xpose.msra.mxu0 0.0
        %6056 = vmatprep.subr.mxu0 0.0
        %6057 = vmatpush2.xpose.msra.mxu0 0.0
        %6058 = vmatprep.subr.mxu0 0.0
        %6059 = vmatpush2.xpose.msra.mxu0 0.0
        %6060 = vmatprep.subr.mxu0 0.0
        %6061 = vmatpush2.xpose.msra.mxu0 0.0
        %6062 = vmatprep.subr.mxu0 0.0
        %6063 = vmatpush2.xpose.msra.mxu0 0.0
        %6064 = vmatprep.subr.mxu0 0.0
        %6065 = vmatpush2.xpose.msra.mxu0 0.0
        %6066 = vmatprep.subr.mxu0 0.0
        %6067 = vmatpush2.xpose.msra.mxu0 0.0
        %6068 = vmatprep.subr.mxu0 0.0
        %6069 = vmatpush2.xpose.msra.mxu0 0.0
        %6070 = vmatprep.subr.mxu0 0.0
        %6071 = vmatpush2.xpose.msra.mxu0 0.0
        %6072 = vmatprep.subr.mxu0 0.0
        %6073 = vmatpush2.xpose.msra.mxu0 0.0
        %6074 = vmatprep.subr.mxu0 0.0
        %6075 = vmatpush2.xpose.msra.mxu0 0.0
        %6076 = vmatprep.subr.mxu0 0.0
        %6077 = vmatpush2.xpose.msra.mxu0 0.0
        %6078 = vmatprep.subr.mxu0 0.0
        %6079 = vmatpush2.xpose.msra.mxu0 0.0
        %v6080 = vand.u32 %v589, 4294901760
        %v6081 = vsub.f32 %v589, %v6080
        %6082 = vmatprep.mubr.f32.mxu0 %v6081
        %v6083 = vand.u32 %v588, 4294901760
        %v6084 = vsub.f32 %v588, %v6083
        %6085 = vmatmul.mubr.f32.gmra.mxu0 %v6084
        %v6086 = vpop.f32.mrf.mxu0
        %v6087 = vadd.f32 %v6009, %v6086
        %v6088 = vpop.f32.mrf.mxu0
        %6089 = vdwg.mxu0
        %6090 = vmatprep.subr.mxu0 0.0
        %6091 = vmatpush1.xpose.msra.mxu0 0.0
        %6092 = vmatprep.subr.mxu0 0.0
        %6093 = vmatpush1.xpose.msra.mxu0 0.0
        %6094 = vmatprep.subr.mxu0 0.0
        %6095 = vmatpush1.xpose.msra.mxu0 0.0
        %6096 = vmatprep.subr.mxu0 0.0
        %6097 = vmatpush1.xpose.msra.mxu0 0.0
        %6098 = vmatprep.subr.mxu0 0.0
        %6099 = vmatpush1.xpose.msra.mxu0 0.0
        %6100 = vmatprep.subr.mxu0 0.0
        %6101 = vmatpush1.xpose.msra.mxu0 0.0
        %6102 = vmatprep.subr.mxu0 0.0
        %6103 = vmatpush1.xpose.msra.mxu0 0.0
        %6104 = vmatprep.subr.mxu0 0.0
        %6105 = vmatpush1.xpose.msra.mxu0 0.0
        %6106 = vmatprep.subr.mxu0 0.0
        %6107 = vmatpush1.xpose.msra.mxu0 0.0
        %6108 = vmatprep.subr.mxu0 0.0
        %6109 = vmatpush1.xpose.msra.mxu0 0.0
        %6110 = vmatprep.subr.mxu0 0.0
        %6111 = vmatpush1.xpose.msra.mxu0 0.0
        %6112 = vmatprep.subr.mxu0 0.0
        %6113 = vmatpush1.xpose.msra.mxu0 0.0
        %6114 = vmatprep.subr.mxu0 0.0
        %6115 = vmatpush1.xpose.msra.mxu0 0.0
        %6116 = vmatprep.subr.mxu0 0.0
        %6117 = vmatpush1.xpose.msra.mxu0 0.0
        %6118 = vmatprep.subr.mxu0 0.0
        %6119 = vmatpush1.xpose.msra.mxu0 0.0
        %v6120 = vand.u32 %v647, 4294901760
        %6121 = vmatprep.subr.mxu0 %v6120
        %v6122 = vand.u32 %v645, 4294901760
        %6123 = vmatpush1.xpose.msra.mxu0 %v6122
        %6124 = vmatprep.subr.mxu0 0.0
        %6125 = vmatpush2.xpose.msra.mxu0 0.0
        %6126 = vmatprep.subr.mxu0 0.0
        %6127 = vmatpush2.xpose.msra.mxu0 0.0
        %6128 = vmatprep.subr.mxu0 0.0
        %6129 = vmatpush2.xpose.msra.mxu0 0.0
        %6130 = vmatprep.subr.mxu0 0.0
        %6131 = vmatpush2.xpose.msra.mxu0 0.0
        %6132 = vmatprep.subr.mxu0 0.0
        %6133 = vmatpush2.xpose.msra.mxu0 0.0
        %6134 = vmatprep.subr.mxu0 0.0
        %6135 = vmatpush2.xpose.msra.mxu0 0.0
        %6136 = vmatprep.subr.mxu0 0.0
        %6137 = vmatpush2.xpose.msra.mxu0 0.0
        %6138 = vmatprep.subr.mxu0 0.0
        %6139 = vmatpush2.xpose.msra.mxu0 0.0
        %6140 = vmatprep.subr.mxu0 0.0
        %6141 = vmatpush2.xpose.msra.mxu0 0.0
        %6142 = vmatprep.subr.mxu0 0.0
        %6143 = vmatpush2.xpose.msra.mxu0 0.0
        %6144 = vmatprep.subr.mxu0 0.0
        %6145 = vmatpush2.xpose.msra.mxu0 0.0
        %6146 = vmatprep.subr.mxu0 0.0
        %6147 = vmatpush2.xpose.msra.mxu0 0.0
        %6148 = vmatprep.subr.mxu0 0.0
        %6149 = vmatpush2.xpose.msra.mxu0 0.0
        %6150 = vmatprep.subr.mxu0 0.0
        %6151 = vmatpush2.xpose.msra.mxu0 0.0
        %6152 = vmatprep.subr.mxu0 0.0
        %6153 = vmatpush2.xpose.msra.mxu0 0.0
        %6154 = vmatprep.subr.mxu0 0.0
        %6155 = vmatpush2.xpose.msra.mxu0 0.0
        %v6156 = vand.u32 %v589, 4294901760
        %v6157 = vsub.f32 %v589, %v6156
        %v6158 = vand.u32 %v6157, 4294901760
        %6159 = vmatprep.mubr.f32.mxu0 %v6158
        %v6160 = vand.u32 %v588, 4294901760
        %v6161 = vsub.f32 %v588, %v6160
        %v6162 = vand.u32 %v6161, 4294901760
        %6163 = vmatmul.mubr.f32.gmra.mxu0 %v6162
        %v6164 = vpop.f32.mrf.mxu0
        %v6165 = vadd.f32 %v6087, %v6164
        %v6166 = vpop.f32.mrf.mxu0
        %6167 = vdwg.mxu0
        %6168 = vmatprep.subr.mxu0 0.0
        %6169 = vmatpush1.xpose.msra.mxu0 0.0
        %6170 = vmatprep.subr.mxu0 0.0
        %6171 = vmatpush1.xpose.msra.mxu0 0.0
        %6172 = vmatprep.subr.mxu0 0.0
        %6173 = vmatpush1.xpose.msra.mxu0 0.0
        %6174 = vmatprep.subr.mxu0 0.0
        %6175 = vmatpush1.xpose.msra.mxu0 0.0
        %6176 = vmatprep.subr.mxu0 0.0
        %6177 = vmatpush1.xpose.msra.mxu0 0.0
        %6178 = vmatprep.subr.mxu0 0.0
        %6179 = vmatpush1.xpose.msra.mxu0 0.0
        %6180 = vmatprep.subr.mxu0 0.0
        %6181 = vmatpush1.xpose.msra.mxu0 0.0
        %6182 = vmatprep.subr.mxu0 0.0
        %6183 = vmatpush1.xpose.msra.mxu0 0.0
        %6184 = vmatprep.subr.mxu0 0.0
        %6185 = vmatpush1.xpose.msra.mxu0 0.0
        %6186 = vmatprep.subr.mxu0 0.0
        %6187 = vmatpush1.xpose.msra.mxu0 0.0
        %6188 = vmatprep.subr.mxu0 0.0
        %6189 = vmatpush1.xpose.msra.mxu0 0.0
        %6190 = vmatprep.subr.mxu0 0.0
        %6191 = vmatpush1.xpose.msra.mxu0 0.0
        %6192 = vmatprep.subr.mxu0 0.0
        %6193 = vmatpush1.xpose.msra.mxu0 0.0
        %6194 = vmatprep.subr.mxu0 0.0
        %6195 = vmatpush1.xpose.msra.mxu0 0.0
        %6196 = vmatprep.subr.mxu0 0.0
        %6197 = vmatpush1.xpose.msra.mxu0 0.0
        %v6198 = vand.u32 %v647, 4294901760
        %v6199 = vsub.f32 %v647, %v6198
        %v6200 = vand.u32 %v6199, 4294901760
        %6201 = vmatprep.subr.mxu0 %v6200
        %v6202 = vand.u32 %v645, 4294901760
        %v6203 = vsub.f32 %v645, %v6202
        %v6204 = vand.u32 %v6203, 4294901760
        %6205 = vmatpush1.xpose.msra.mxu0 %v6204
        %6206 = vmatprep.subr.mxu0 0.0
        %6207 = vmatpush2.xpose.msra.mxu0 0.0
        %6208 = vmatprep.subr.mxu0 0.0
        %6209 = vmatpush2.xpose.msra.mxu0 0.0
        %6210 = vmatprep.subr.mxu0 0.0
        %6211 = vmatpush2.xpose.msra.mxu0 0.0
        %6212 = vmatprep.subr.mxu0 0.0
        %6213 = vmatpush2.xpose.msra.mxu0 0.0
        %6214 = vmatprep.subr.mxu0 0.0
        %6215 = vmatpush2.xpose.msra.mxu0 0.0
        %6216 = vmatprep.subr.mxu0 0.0
        %6217 = vmatpush2.xpose.msra.mxu0 0.0
        %6218 = vmatprep.subr.mxu0 0.0
        %6219 = vmatpush2.xpose.msra.mxu0 0.0
        %6220 = vmatprep.subr.mxu0 0.0
        %6221 = vmatpush2.xpose.msra.mxu0 0.0
        %6222 = vmatprep.subr.mxu0 0.0
        %6223 = vmatpush2.xpose.msra.mxu0 0.0
        %6224 = vmatprep.subr.mxu0 0.0
        %6225 = vmatpush2.xpose.msra.mxu0 0.0
        %6226 = vmatprep.subr.mxu0 0.0
        %6227 = vmatpush2.xpose.msra.mxu0 0.0
        %6228 = vmatprep.subr.mxu0 0.0
        %6229 = vmatpush2.xpose.msra.mxu0 0.0
        %6230 = vmatprep.subr.mxu0 0.0
        %6231 = vmatpush2.xpose.msra.mxu0 0.0
        %6232 = vmatprep.subr.mxu0 0.0
        %6233 = vmatpush2.xpose.msra.mxu0 0.0
        %6234 = vmatprep.subr.mxu0 0.0
        %6235 = vmatpush2.xpose.msra.mxu0 0.0
        %6236 = vmatprep.subr.mxu0 0.0
        %6237 = vmatpush2.xpose.msra.mxu0 0.0
        %v6238 = vand.u32 %v589, 4294901760
        %6239 = vmatprep.mubr.f32.mxu0 %v6238
        %v6240 = vand.u32 %v588, 4294901760
        %6241 = vmatmul.mubr.f32.gmra.mxu0 %v6240
        %v6242 = vpop.f32.mrf.mxu0
        %v6243 = vadd.f32 %v6165, %v6242
        %v6244 = vpop.f32.mrf.mxu0
        %6245 = vdwg.mxu0
        %6246 = vmatprep.subr.mxu0 0.0
        %6247 = vmatpush1.xpose.msra.mxu0 0.0
        %6248 = vmatprep.subr.mxu0 0.0
        %6249 = vmatpush1.xpose.msra.mxu0 0.0
        %6250 = vmatprep.subr.mxu0 0.0
        %6251 = vmatpush1.xpose.msra.mxu0 0.0
        %6252 = vmatprep.subr.mxu0 0.0
        %6253 = vmatpush1.xpose.msra.mxu0 0.0
        %6254 = vmatprep.subr.mxu0 0.0
        %6255 = vmatpush1.xpose.msra.mxu0 0.0
        %6256 = vmatprep.subr.mxu0 0.0
        %6257 = vmatpush1.xpose.msra.mxu0 0.0
        %6258 = vmatprep.subr.mxu0 0.0
        %6259 = vmatpush1.xpose.msra.mxu0 0.0
        %6260 = vmatprep.subr.mxu0 0.0
        %6261 = vmatpush1.xpose.msra.mxu0 0.0
        %6262 = vmatprep.subr.mxu0 0.0
        %6263 = vmatpush1.xpose.msra.mxu0 0.0
        %6264 = vmatprep.subr.mxu0 0.0
        %6265 = vmatpush1.xpose.msra.mxu0 0.0
        %6266 = vmatprep.subr.mxu0 0.0
        %6267 = vmatpush1.xpose.msra.mxu0 0.0
        %6268 = vmatprep.subr.mxu0 0.0
        %6269 = vmatpush1.xpose.msra.mxu0 0.0
        %6270 = vmatprep.subr.mxu0 0.0
        %6271 = vmatpush1.xpose.msra.mxu0 0.0
        %6272 = vmatprep.subr.mxu0 0.0
        %6273 = vmatpush1.xpose.msra.mxu0 0.0
        %6274 = vmatprep.subr.mxu0 0.0
        %6275 = vmatpush1.xpose.msra.mxu0 0.0
        %v6276 = vand.u32 %v647, 4294901760
        %6277 = vmatprep.subr.mxu0 %v6276
        %v6278 = vand.u32 %v645, 4294901760
        %6279 = vmatpush1.xpose.msra.mxu0 %v6278
        %6280 = vmatprep.subr.mxu0 0.0
        %6281 = vmatpush2.xpose.msra.mxu0 0.0
        %6282 = vmatprep.subr.mxu0 0.0
        %6283 = vmatpush2.xpose.msra.mxu0 0.0
        %6284 = vmatprep.subr.mxu0 0.0
        %6285 = vmatpush2.xpose.msra.mxu0 0.0
        %6286 = vmatprep.subr.mxu0 0.0
        %6287 = vmatpush2.xpose.msra.mxu0 0.0
        %6288 = vmatprep.subr.mxu0 0.0
        %6289 = vmatpush2.xpose.msra.mxu0 0.0
        %6290 = vmatprep.subr.mxu0 0.0
        %6291 = vmatpush2.xpose.msra.mxu0 0.0
        %6292 = vmatprep.subr.mxu0 0.0
        %6293 = vmatpush2.xpose.msra.mxu0 0.0
        %6294 = vmatprep.subr.mxu0 0.0
        %6295 = vmatpush2.xpose.msra.mxu0 0.0
        %6296 = vmatprep.subr.mxu0 0.0
        %6297 = vmatpush2.xpose.msra.mxu0 0.0
        %6298 = vmatprep.subr.mxu0 0.0
        %6299 = vmatpush2.xpose.msra.mxu0 0.0
        %6300 = vmatprep.subr.mxu0 0.0
        %6301 = vmatpush2.xpose.msra.mxu0 0.0
        %6302 = vmatprep.subr.mxu0 0.0
        %6303 = vmatpush2.xpose.msra.mxu0 0.0
        %6304 = vmatprep.subr.mxu0 0.0
        %6305 = vmatpush2.xpose.msra.mxu0 0.0
        %6306 = vmatprep.subr.mxu0 0.0
        %6307 = vmatpush2.xpose.msra.mxu0 0.0
        %6308 = vmatprep.subr.mxu0 0.0
        %6309 = vmatpush2.xpose.msra.mxu0 0.0
        %6310 = vmatprep.subr.mxu0 0.0
        %6311 = vmatpush2.xpose.msra.mxu0 0.0
        %v6312 = vand.u32 %v589, 4294901760
        %6313 = vmatprep.mubr.f32.mxu0 %v6312
        %v6314 = vand.u32 %v588, 4294901760
        %6315 = vmatmul.mubr.f32.gmra.mxu0 %v6314
        %v6316 = vpop.f32.mrf.mxu0
        %v6317 = vadd.f32 %v6243, %v6316
        %v6318 = vpop.f32.mrf.mxu0
        %6319 = vdwg.mxu0
        %v6320 = vld [vmem:[#allocation2] sm:$0xf]
        %6322 = vrot.lane.b32.xlu0 %v4429, 2
        %v6323 = vpop.permute.xlu0 %6322
        %6326 = vrot.lane.b32.xlu0 %v6317, 4
        %v6327 = vpop.permute.xlu0 %6326
        %vm6329 = vcmask 15360
        %v6330 = vsel %vm6329, %v2541, %v6323
        %vm6331 = vcmask 31744
        %v6332 = vsel %vm6331, %v6330, %v6327
        %vm6333 = vcmask 48128
        %v6334 = vsel %vm6333, %v6332, 0.0
        %v6335 = vadd.f32 %v6320, %v6334
        %vm6336 = vcmask 60416
        %6337 = vst.msk [vmem:[#allocation2] sm:$0xf] %vm6336, %v6335
        %p6338 = scmp.eq.s32.totalorder %s30, 1
        %p6339 = pnand %p302, %p6338
        %p6340 = pneg %p6339
        // Predicated region
        $region49: #{tpu_custom_call.1} parent=31 // pred_check
          _
        $region50: #{tpu_custom_call.1} parent=31 // pred_check_branch
          %6342 = sbr.rel (%p6339) target = $region52
        $region51: #{tpu_custom_call.1} parent=31 // pred_region
          %v6343 = vld [vmem:[#allocation2] sm:$0xf]
          %6344 = vst.msk [vmem:[%s295] sm:$0xf] %vm6336, %v6343
        $region52: #{tpu_custom_call.1} parent=31 // pred_fallthru
          _
        %s6345 = sand.u32 %s138, 1
        %s6346 = scalar_lea.sflag [#allocation5], %s6345
        %s6347 = sand.u32 %s138, 1
        %s6348 = smul.addr %s6347, 4
        %s6349 = scalar_lea.vmem [#allocation9], %s6348
        // Predicated region
        $region53: #{tpu_custom_call.1} parent=31 // pred_check
          %p6350 = pneg %p148
        $region54: #{tpu_custom_call.1} parent=31 // pred_check_branch
          %6352 = sbr.rel (%p6350) target = $region56
        $region55: #{tpu_custom_call.1} parent=31 // pred_region
          %s6354 = ssub.s32 64, 64
          %6355 = vsyncadd %s6346, %s6354
          %s6356 = smul.addr %s28, 64
          %s6357 = scalar_lea.hbm %s3, %s6356
          %s6359 = sshll.u32 %s6349, 4
          %s6360 = int_to_ptr.vmem [resolvable:$true] %s6359
          %6362 = dma.vmem_to_hbm [thread:$0]  %s6360, 64, %s6357, %s6346
        $region56: #{tpu_custom_call.1} parent=31 // pred_fallthru
          _
      $region32: #{tpu_custom_call.1} parent=5 // pred_fallthru
        _
      %p6363 = scmp.le.s32.totalorder 2, %s18
      // Predicated region
      $region57: #{tpu_custom_call.1} parent=5 // pred_check
        %p6364 = pneg %p6363
      $region58: #{tpu_custom_call.1} parent=5 // pred_check_branch
        %6366 = sbr.rel (%p6364) target = $region60
      $region59: #{tpu_custom_call.1} parent=5 // pred_region
        %s6367 = ssub.s32 %s18, 2
        // Predicated region
        $region61: #{tpu_custom_call.1} parent=59 // pred_check
          %p6368 = pneg %p154
        $region62: #{tpu_custom_call.1} parent=59 // pred_check_branch
          %6370 = sbr.rel (%p6368) target = $region64
        $region63: #{tpu_custom_call.1} parent=59 // pred_region
          %s6371 = sand.u32 %s139, 1
          %s6372 = scalar_lea.sflag [#allocation5], %s6371
          %s6373 = sand.u32 %s139, 1
          %s6374 = smul.addr %s6373, 4
          %s6375 = scalar_lea.vmem [#allocation9], %s6374
          %6376 = dma.done %s6372, 64
        $region64: #{tpu_custom_call.1} parent=59 // pred_fallthru
          _
      $region60: #{tpu_custom_call.1} parent=5 // pred_fallthru
        _
    $region6: #{tpu_custom_call.1} parent=1 // loop_footer
      %s22 = sadd.s32 1, %s18
    $region7: #{tpu_custom_call.1} parent=1 // loop_footer_branch
      %17 = sbr.rel target = $region3
    $region8: #{tpu_custom_call.1} parent=1 // loop_exit
      _
    %6377 = vsyncpa [#allocation4], 1
    %s6378 = scalar_lea.sflag [#allocation4], 1
    %6379 = vsyncpa %s6378, 1
    %6380 = vsyncpa [#allocation7], 1
    %s6381 = scalar_lea.sflag [#allocation7], 1
    %6382 = vsyncpa %s6381, 1
    %6383 = vsyncpa [#allocation5], 1
    %s6384 = scalar_lea.sflag [#allocation5], 1
    %6385 = vsyncpa %s6384, 1

</llo_original>
